<compile_context>
chip_gen: v7x
topology: tpu7x:2x2x1
jax: 0.10.0
libtpu: 0.0.40
codegen_flags: <defaults>
</compile_context>

<pallas_src>
import numpy as np
import jax
import jax.numpy as jnp
from jax.experimental import pallas as pl
from jax.experimental.pallas import tpu as pltpu

# Channel widths fixed by the module.
C1, C2, C3 = 64, 32, 2
# Column offset of the data interior inside the padded scratch planes
# (sublane-aligned interior stores; the +/-1 halo reads are cheap loads).
PAD0 = 8

# ---------------------------------------------------------------------------
# Tap tables: single source of truth for the kernel and the weight packing.
# ConvTranspose2d: o = s*i - p + k'.  Per output phase this becomes a small
# stride-1 conv; entries are (read offset d into a 1-zero-padded plane,
# ConvT kernel index k').
# ---------------------------------------------------------------------------
# layers 2/3: k=4, s=2, p=1; output phase r in {0,1} of the 2x upsampled grid
L2_TAPS = {0: ((0, 3), (1, 1)), 1: ((1, 2), (2, 0))}            # r -> ((d, k'),)
# layer 3 consumes layer-2's output kept as 2x2 phase planes, so its phases
# compound to 4 per axis; entries are (source phase plane s, d, k').
L3_TAPS = {
    0: ((1, 0, 3), (0, 1, 1)),
    1: ((1, 1, 0), (0, 1, 2)),
    2: ((1, 1, 1), (0, 1, 3)),
    3: ((0, 2, 0), (1, 1, 2)),
}


# ------------------------- host-side weight packing -------------------------
def _pack_w1(w1, k_pad):
    # (C0, 64, 3, 3) -> (k_pad, 64); row = (dh*3 + dw)*C0 + cin, k' = 2 - d.
    c0 = w1.shape[0]
    rows = [w1[:, :, 2 - dh, 2 - dw] for dh in range(3) for dw in range(3)]
    wm = jnp.concatenate(rows, axis=0)                          # (9*C0, 64)
    return jnp.pad(wm, ((0, k_pad - 9 * c0), (0, 0)))


def _pack_w2(w2):
    # (64, 32, 4, 4) -> (576, 128) block-sparse union-tap matrix.
    # row = (dh*3 + dw)*64 + cin ; col = (2*rh + rw)*32 + cout.
    wp = jnp.zeros((3, 3, C1, 2, 2, C2), w2.dtype)
    for rh, taps_h in L2_TAPS.items():
        for dh, kh in taps_h:
            for rw, taps_w in L2_TAPS.items():
                for dw, kw in taps_w:
                    wp = wp.at[dh, dw, :, rh, rw, :].set(w2[:, :, kh, kw])
    return wp.reshape(9 * C1, 4 * C2)


def _pack_w3(w3):
    # (32, 2, 4, 4) -> (1152, 32) block-sparse union-tap matrix over the
    # phase-packed layer-2 scratch.
    # row = (dh*3 + dw)*128 + (2*sh + sw)*32 + cin ; col = (pr*4 + pc)*2 + cout.
    wp = jnp.zeros((3, 3, 2, 2, C2, 4, 4, C3), w3.dtype)
    for pr, taps_h in L3_TAPS.items():
        for sh, dh, kh in taps_h:
            for pc, taps_w in L3_TAPS.items():
                for sw, dw, kw in taps_w:
                    wp = wp.at[dh, dw, sh, sw, :, pr, pc, :].set(w3[:, :, kh, kw])
    return wp.reshape(9 * 4 * C2, 16 * C3)


# ------------------------------- the kernel ---------------------------------
def _make_decoder_kernel(H, W):
    M = H * W
    WS = W + 2 * PAD0
    bf16 = jnp.bfloat16

    def kernel(p1_ref, w1_ref, b1_ref, w2_ref, b2_ref, w3_ref, b3_ref,
               o_ref, y1p_ref, y2p_ref):
        # ---- halo-only zeroing (per step: scratch is per-TensorCore private;
        # only rows 0 / H+1 and columns PAD0-1 / PAD0+W are ever read as halo,
        # the interior is fully overwritten below). --------------------------
        y1p_ref[0:1, :, :] = jnp.zeros((1, WS, C1), bf16)
        y1p_ref[H + 1:H + 2, :, :] = jnp.zeros((1, WS, C1), bf16)
        y1p_ref[:, PAD0 - 1:PAD0, :] = jnp.zeros((H + 2, 1, C1), bf16)
        y1p_ref[:, PAD0 + W:PAD0 + W + 1, :] = jnp.zeros((H + 2, 1, C1), bf16)
        y2p_ref[0:1, :, :] = jnp.zeros((1, WS, 4 * C2), bf16)
        y2p_ref[H + 1:H + 2, :, :] = jnp.zeros((1, WS, 4 * C2), bf16)
        y2p_ref[:, PAD0 - 1:PAD0, :] = jnp.zeros((H + 2, 1, 4 * C2), bf16)
        y2p_ref[:, PAD0 + W:PAD0 + W + 1, :] = jnp.zeros((H + 2, 1, 4 * C2), bf16)

        # ---- layer 1: ConvT(C0->64, k3, s1, p1) + ReLU  (im2col from host) --
        y1 = jnp.dot(p1_ref[0], w1_ref[...], preferred_element_type=jnp.float32)
        y1 = jnp.maximum(y1 + b1_ref[...], 0.0)                   # (M, 64) f32
        y1p_ref[1:1 + H, PAD0:PAD0 + W, :] = y1.astype(bf16).reshape(H, W, C1)

        # ---- layer 2: ConvT(64->32, k4, s2, p1) + ReLU, 4 phases in 1 matmul
        parts = [
            y1p_ref[dh:dh + H, PAD0 - 1 + dw:PAD0 - 1 + dw + W, :].reshape(M, C1)
            for dh in range(3) for dw in range(3)
        ]
        p2 = jnp.concatenate(parts, axis=-1)                      # (M, 576) bf16
        y2 = jnp.dot(p2, w2_ref[...], preferred_element_type=jnp.float32)
        y2 = jnp.maximum(y2 + b2_ref[...], 0.0)                   # (M, 128) f32
        y2p_ref[1:1 + H, PAD0:PAD0 + W, :] = y2.astype(bf16).reshape(H, W, 4 * C2)

        # ---- layer 3: ConvT(32->2, k4, s2, p1), 16 compound phases in 1 matmul
        parts = [
            y2p_ref[dh:dh + H, PAD0 - 1 + dw:PAD0 - 1 + dw + W, :].reshape(M, 4 * C2)
            for dh in range(3) for dw in range(3)
        ]
        p3 = jnp.concatenate(parts, axis=-1)                      # (M, 1152) bf16
        y3 = jnp.dot(p3, w3_ref[...], preferred_element_type=jnp.float32)
        o_ref[0] = y3 + b3_ref[...]                               # (M, 32) f32

    return kernel


# ------------------------------- host wrapper -------------------------------
def conv_decoder_forward(z_nchw, w1, b1, w2, b2, w3, b3):
    """ConvDecoder forward.  z_nchw: (N, latent_dim, H, W) f32 -> (N, 2, 4H, 4W)."""
    N, C0, H, W = z_nchw.shape
    assert H % 8 == 0 and W % 8 == 0, "spatial dims must be multiples of 8"
    assert w1.shape[0] == C0
    M = H * W
    K1 = 9 * C0
    K1P = 128                                 # lane-dense padded im2col depth
    assert K1 <= K1P

    # Host-side layer-1 im2col (C0 is far too narrow for lane-dense in-kernel
    # work).  Patch layout: k = (dh*3 + dw)*C0 + cin.
    x = jnp.transpose(z_nchw, (0, 2, 3, 1)).astype(jnp.float32)
    xpad = jnp.pad(x, ((0, 0), (1, 1), (1, 1), (0, 0)))
    patches = jnp.concatenate(
        [xpad[:, dh:dh + H, dw:dw + W, :] for dh in range(3) for dw in range(3)],
        axis=-1)                                               # (N, H, W, 9*C0)
    p1 = jnp.pad(patches.reshape(N, M, K1), ((0, 0), (0, 0), (0, K1P - K1)))
    p1 = p1.astype(jnp.bfloat16)

    f32 = jnp.float32
    w1m = _pack_w1(w1.astype(f32), K1P).astype(jnp.bfloat16)      # (128, 64)
    w2m = _pack_w2(w2.astype(f32)).astype(jnp.bfloat16)           # (576, 128)
    w3m = _pack_w3(w3.astype(f32)).astype(jnp.bfloat16)           # (1152, 32)
    b1m = b1.reshape(1, C1).astype(f32)
    b2m = jnp.tile(b2, 4).reshape(1, 4 * C2).astype(f32)          # phase-packed
    b3m = jnp.tile(b3, 16).reshape(1, 16 * C3).astype(f32)        # phase-packed

    grid_spec = pltpu.PrefetchScalarGridSpec(
        num_scalar_prefetch=0,
        grid=(N,),
        in_specs=[
            pl.BlockSpec((1, M, K1P), lambda n: (n, 0, 0)),
            # weights / biases: constant index maps -> fetched once, VMEM resident
            pl.BlockSpec((K1P, C1), lambda n: (0, 0)),
            pl.BlockSpec((1, C1), lambda n: (0, 0)),
            pl.BlockSpec((9 * C1, 4 * C2), lambda n: (0, 0)),
            pl.BlockSpec((1, 4 * C2), lambda n: (0, 0)),
            pl.BlockSpec((9 * 4 * C2, 16 * C3), lambda n: (0, 0)),
            pl.BlockSpec((1, 16 * C3), lambda n: (0, 0)),
        ],
        out_specs=pl.BlockSpec((1, M, 16 * C3), lambda n: (n, 0, 0)),
        scratch_shapes=[
            pltpu.VMEM((H + 2, W + 2 * PAD0, C1), jnp.bfloat16),       # y1 plane
            pltpu.VMEM((H + 2, W + 2 * PAD0, 4 * C2), jnp.bfloat16),   # y2 phases
        ],
    )

    out = pl.pallas_call(
        _make_decoder_kernel(H, W),
        out_shape=jax.ShapeDtypeStruct((N, M, 16 * C3), jnp.float32),
        grid_spec=grid_spec,
        compiler_params=pltpu.CompilerParams(
            dimension_semantics=("parallel",)),                    # 2 TCs on v7x
    )(p1, w1m, b1m, w2m, b2m, w3m, b3m)

    # final 4x4 pixel shuffle of the compound phases -> NCHW (one tiny XLA op)
    out = out.reshape(N, H, W, 4, 4, C3)
    out = jnp.transpose(out, (0, 5, 1, 3, 2, 4))
    return out.reshape(N, C3, 4 * H, 4 * W)


# ------------------------ independent XLA reference -------------------------
def convt_ref_nchw(x_nchw, w_t, b, stride, pad):
    """PyTorch ConvTranspose2d semantics via lax.conv_general_dilated."""
    Cin, Cout, KH, KW = w_t.shape
    w_flipped = jnp.flip(w_t, axis=(2, 3))                  # (Cin, Cout, KH, KW)
    out = jax.lax.conv_general_dilated(
        x_nchw, w_flipped,
        window_strides=(1, 1),
        padding=((KH - 1 - pad, KH - 1 - pad), (KW - 1 - pad, KW - 1 - pad)),
        lhs_dilation=(stride, stride),
        dimension_numbers=("NCHW", "IOHW", "NCHW"),
        precision=jax.lax.Precision.HIGHEST,
    )
    return out + b.reshape(1, Cout, 1, 1)


if __name__ == "__main__":
    latent_dim = 4
    N, H, W = 2, 16, 16

    key = jax.random.PRNGKey(0)
    ks = jax.random.split(key, 7)
    # shapes match nn.ConvTranspose2d weights: (in_channels, out_channels, kH, kW)
    z  = jax.random.normal(ks[0], (N, latent_dim, H, W), jnp.float32)
    w1 = 0.1 * jax.random.normal(ks[1], (latent_dim, C1, 3, 3), jnp.float32)
    b1 = 0.1 * jax.random.normal(ks[2], (C1,), jnp.float32)
    w2 = 0.1 * jax.random.normal(ks[3], (C1, C2, 4, 4), jnp.float32)
    b2 = 0.1 * jax.random.normal(ks[4], (C2,), jnp.float32)
    w3 = 0.1 * jax.random.normal(ks[5], (C2, C3, 4, 4), jnp.float32)
    b3 = 0.1 * jax.random.normal(ks[6], (C3,), jnp.float32)

    fwd = jax.jit(conv_decoder_forward)
    out = jax.block_until_ready(fwd(z, w1, b1, w2, b2, w3, b3))

    # reference (pure XLA, NCHW throughout, full-precision convs)
    r = jnp.maximum(convt_ref_nchw(z, w1, b1, 1, 1), 0.0)
    r = jnp.maximum(convt_ref_nchw(r, w2, b2, 2, 1), 0.0)
    r = convt_ref_nchw(r, w3, b3, 2, 1)

    assert out.shape == (N, C3, 4 * H, 4 * W), out.shape
    # tolerance covers bf16 MXU operands (f32 accumulation / epilogue)
    np.testing.assert_allclose(np.asarray(out), np.asarray(r), atol=3e-2, rtol=3e-2)
    print("KERNEL_OK")
</pallas_src>

<mosaic_0001>
module attributes {stable_mosaic.version = 11 : i64} {
  func.func @kernel(%arg0: i32, %arg1: memref<1x256x128xbf16, #tpu.memory_space<vmem>>, %arg2: memref<128x64xbf16, #tpu.memory_space<vmem>>, %arg3: memref<1x64xf32, #tpu.memory_space<vmem>>, %arg4: memref<576x128xbf16, #tpu.memory_space<vmem>>, %arg5: memref<1x128xf32, #tpu.memory_space<vmem>>, %arg6: memref<1152x32xbf16, #tpu.memory_space<vmem>>, %arg7: memref<1x32xf32, #tpu.memory_space<vmem>>, %arg8: memref<1x256x32xf32, #tpu.memory_space<vmem>>, %arg9: memref<18x32x64xbf16, #tpu.memory_space<vmem>>, %arg10: memref<18x32x128xbf16, #tpu.memory_space<vmem>>) attributes {dimension_semantics = [#tpu.dimension_semantics<parallel>], iteration_bounds = array<i64: 2>, scalar_prefetch = 0 : i64, scratch_operands = 2 : i64, tpu.core_type = #tpu.core_type<tc>, window_params = [{transform_indices = @transform_0, window_bounds = array<i64: 1, 256, 128>}, {pipeline_mode = #tpu.pipeline_mode<synchronous>, transform_indices = @transform_1, window_bounds = array<i64: 128, 64>}, {pipeline_mode = #tpu.pipeline_mode<synchronous>, transform_indices = @transform_2, window_bounds = array<i64: 1, 64>}, {pipeline_mode = #tpu.pipeline_mode<synchronous>, transform_indices = @transform_3, window_bounds = array<i64: 576, 128>}, {pipeline_mode = #tpu.pipeline_mode<synchronous>, transform_indices = @transform_4, window_bounds = array<i64: 1, 128>}, {pipeline_mode = #tpu.pipeline_mode<synchronous>, transform_indices = @transform_5, window_bounds = array<i64: 1152, 32>}, {pipeline_mode = #tpu.pipeline_mode<synchronous>, transform_indices = @transform_6, window_bounds = array<i64: 1, 32>}, {transform_indices = @transform_7, window_bounds = array<i64: 1, 256, 32>}]} {
    %cst = arith.constant 0.000000e+00 : bf16
    %0 = vector.broadcast %cst : bf16 to vector<1x32x64xbf16>
    %c0 = arith.constant 0 : index
    %c0_0 = arith.constant 0 : index
    %c0_1 = arith.constant 0 : index
    %1 = vector.load %arg9[%c0, %c0_0, %c0_1] : memref<18x32x64xbf16, #tpu.memory_space<vmem>>, vector<1x32x64xbf16>
    tpu.vector_store %arg9[%c0, %c0_0, %c0_1], %0 {strides = array<i32>} : memref<18x32x64xbf16, #tpu.memory_space<vmem>>, vector<1x32x64xbf16>,
    %cst_2 = arith.constant 0.000000e+00 : bf16
    %2 = vector.broadcast %cst_2 : bf16 to vector<1x32x64xbf16>
    %c17 = arith.constant 17 : index
    %c0_3 = arith.constant 0 : index
    %c0_4 = arith.constant 0 : index
    %3 = vector.load %arg9[%c17, %c0_3, %c0_4] : memref<18x32x64xbf16, #tpu.memory_space<vmem>>, vector<1x32x64xbf16>
    tpu.vector_store %arg9[%c17, %c0_3, %c0_4], %2 {strides = array<i32>} : memref<18x32x64xbf16, #tpu.memory_space<vmem>>, vector<1x32x64xbf16>,
    %cst_5 = arith.constant 0.000000e+00 : bf16
    %4 = vector.broadcast %cst_5 : bf16 to vector<18x1x64xbf16>
    %c0_6 = arith.constant 0 : index
    %c7 = arith.constant 7 : index
    %c0_7 = arith.constant 0 : index
    %5 = vector.load %arg9[%c0_6, %c7, %c0_7] : memref<18x32x64xbf16, #tpu.memory_space<vmem>>, vector<18x1x64xbf16>
    tpu.vector_store %arg9[%c0_6, %c7, %c0_7], %4 {strides = array<i32>} : memref<18x32x64xbf16, #tpu.memory_space<vmem>>, vector<18x1x64xbf16>,
    %cst_8 = arith.constant 0.000000e+00 : bf16
    %6 = vector.broadcast %cst_8 : bf16 to vector<18x1x64xbf16>
    %c0_9 = arith.constant 0 : index
    %c24 = arith.constant 24 : index
    %c0_10 = arith.constant 0 : index
    %7 = vector.load %arg9[%c0_9, %c24, %c0_10] : memref<18x32x64xbf16, #tpu.memory_space<vmem>>, vector<18x1x64xbf16>
    tpu.vector_store %arg9[%c0_9, %c24, %c0_10], %6 {strides = array<i32>} : memref<18x32x64xbf16, #tpu.memory_space<vmem>>, vector<18x1x64xbf16>,
    %cst_11 = arith.constant 0.000000e+00 : bf16
    %8 = vector.broadcast %cst_11 : bf16 to vector<1x32x128xbf16>
    %c0_12 = arith.constant 0 : index
    %c0_13 = arith.constant 0 : index
    %c0_14 = arith.constant 0 : index
    %9 = vector.load %arg10[%c0_12, %c0_13, %c0_14] : memref<18x32x128xbf16, #tpu.memory_space<vmem>>, vector<1x32x128xbf16>
    tpu.vector_store %arg10[%c0_12, %c0_13, %c0_14], %8 {strides = array<i32>} : memref<18x32x128xbf16, #tpu.memory_space<vmem>>, vector<1x32x128xbf16>,
    %cst_15 = arith.constant 0.000000e+00 : bf16
    %10 = vector.broadcast %cst_15 : bf16 to vector<1x32x128xbf16>
    %c17_16 = arith.constant 17 : index
    %c0_17 = arith.constant 0 : index
    %c0_18 = arith.constant 0 : index
    %11 = vector.load %arg10[%c17_16, %c0_17, %c0_18] : memref<18x32x128xbf16, #tpu.memory_space<vmem>>, vector<1x32x128xbf16>
    tpu.vector_store %arg10[%c17_16, %c0_17, %c0_18], %10 {strides = array<i32>} : memref<18x32x128xbf16, #tpu.memory_space<vmem>>, vector<1x32x128xbf16>,
    %cst_19 = arith.constant 0.000000e+00 : bf16
    %12 = vector.broadcast %cst_19 : bf16 to vector<18x1x128xbf16>
    %c0_20 = arith.constant 0 : index
    %c7_21 = arith.constant 7 : index
    %c0_22 = arith.constant 0 : index
    %13 = vector.load %arg10[%c0_20, %c7_21, %c0_22] : memref<18x32x128xbf16, #tpu.memory_space<vmem>>, vector<18x1x128xbf16>
    tpu.vector_store %arg10[%c0_20, %c7_21, %c0_22], %12 {strides = array<i32>} : memref<18x32x128xbf16, #tpu.memory_space<vmem>>, vector<18x1x128xbf16>,
    %cst_23 = arith.constant 0.000000e+00 : bf16
    %14 = vector.broadcast %cst_23 : bf16 to vector<18x1x128xbf16>
    %c0_24 = arith.constant 0 : index
    %c24_25 = arith.constant 24 : index
    %c0_26 = arith.constant 0 : index
    %15 = vector.load %arg10[%c0_24, %c24_25, %c0_26] : memref<18x32x128xbf16, #tpu.memory_space<vmem>>, vector<18x1x128xbf16>
    tpu.vector_store %arg10[%c0_24, %c24_25, %c0_26], %14 {strides = array<i32>} : memref<18x32x128xbf16, #tpu.memory_space<vmem>>, vector<18x1x128xbf16>,
    %c0_27 = arith.constant 0 : index
    %c0_28 = arith.constant 0 : index
    %c0_29 = arith.constant 0 : index
    %16 = vector.load %arg1[%c0_27, %c0_28, %c0_29] : memref<1x256x128xbf16, #tpu.memory_space<vmem>>, vector<1x256x128xbf16>
    %17 = vector.shape_cast %16 : vector<1x256x128xbf16> to vector<256x128xbf16>
    %c0_30 = arith.constant 0 : index
    %c0_31 = arith.constant 0 : index
    %18 = vector.load %arg2[%c0_30, %c0_31] : memref<128x64xbf16, #tpu.memory_space<vmem>>, vector<128x64xbf16>
    %cst_32 = arith.constant dense<0.000000e+00> : vector<256x64xf32>
    %19 = tpu.matmul %17, %18, %cst_32 {dimension_numbers = #tpu.dot_dimension_numbers<[1], [0], [0], [1], [0, 0, 1, 1], [], []>} : vector<256x128xbf16>, vector<128x64xbf16>, vector<256x64xf32> -> vector<256x64xf32>
    %c0_33 = arith.constant 0 : index
    %c0_34 = arith.constant 0 : index
    %20 = vector.load %arg3[%c0_33, %c0_34] : memref<1x64xf32, #tpu.memory_space<vmem>>, vector<1x64xf32>
    %21 = vector.broadcast %20 : vector<1x64xf32> to vector<256x64xf32>
    %22 = arith.addf %19, %21 : vector<256x64xf32>
    %cst_35 = arith.constant 0.000000e+00 : f32
    %23 = vector.broadcast %cst_35 : f32 to vector<256x64xf32>
    %24 = arith.maximumf %22, %23 : vector<256x64xf32>
    %25 = arith.truncf %24 : vector<256x64xf32> to vector<256x64xbf16>
    %26 = vector.shape_cast %25 : vector<256x64xbf16> to vector<16x16x64xbf16>
    %c1 = arith.constant 1 : index
    %c8 = arith.constant 8 : index
    %c0_36 = arith.constant 0 : index
    %27 = vector.load %arg9[%c1, %c8, %c0_36] : memref<18x32x64xbf16, #tpu.memory_space<vmem>>, vector<16x16x64xbf16>
    tpu.vector_store %arg9[%c1, %c8, %c0_36], %26 {strides = array<i32>} : memref<18x32x64xbf16, #tpu.memory_space<vmem>>, vector<16x16x64xbf16>,
    %c0_37 = arith.constant 0 : index
    %c7_38 = arith.constant 7 : index
    %c0_39 = arith.constant 0 : index
    %28 = vector.load %arg9[%c0_37, %c7_38, %c0_39] : memref<18x32x64xbf16, #tpu.memory_space<vmem>>, vector<16x16x64xbf16>
    %29 = vector.shape_cast %28 : vector<16x16x64xbf16> to vector<256x64xbf16>
    %c0_40 = arith.constant 0 : index
    %c8_41 = arith.constant 8 : index
    %c0_42 = arith.constant 0 : index
    %30 = vector.load %arg9[%c0_40, %c8_41, %c0_42] : memref<18x32x64xbf16, #tpu.memory_space<vmem>>, vector<16x16x64xbf16>
    %31 = vector.shape_cast %30 : vector<16x16x64xbf16> to vector<256x64xbf16>
    %c0_43 = arith.constant 0 : index
    %c9 = arith.constant 9 : index
    %c0_44 = arith.constant 0 : index
    %32 = vector.load %arg9[%c0_43, %c9, %c0_44] : memref<18x32x64xbf16, #tpu.memory_space<vmem>>, vector<16x16x64xbf16>
    %33 = vector.shape_cast %32 : vector<16x16x64xbf16> to vector<256x64xbf16>
    %c1_45 = arith.constant 1 : index
    %c7_46 = arith.constant 7 : index
    %c0_47 = arith.constant 0 : index
    %34 = vector.load %arg9[%c1_45, %c7_46, %c0_47] : memref<18x32x64xbf16, #tpu.memory_space<vmem>>, vector<16x16x64xbf16>
    %35 = vector.shape_cast %34 : vector<16x16x64xbf16> to vector<256x64xbf16>
    %c1_48 = arith.constant 1 : index
    %c8_49 = arith.constant 8 : index
    %c0_50 = arith.constant 0 : index
    %36 = vector.load %arg9[%c1_48, %c8_49, %c0_50] : memref<18x32x64xbf16, #tpu.memory_space<vmem>>, vector<16x16x64xbf16>
    %37 = vector.shape_cast %36 : vector<16x16x64xbf16> to vector<256x64xbf16>
    %c1_51 = arith.constant 1 : index
    %c9_52 = arith.constant 9 : index
    %c0_53 = arith.constant 0 : index
    %38 = vector.load %arg9[%c1_51, %c9_52, %c0_53] : memref<18x32x64xbf16, #tpu.memory_space<vmem>>, vector<16x16x64xbf16>
    %39 = vector.shape_cast %38 : vector<16x16x64xbf16> to vector<256x64xbf16>
    %c2 = arith.constant 2 : index
    %c7_54 = arith.constant 7 : index
    %c0_55 = arith.constant 0 : index
    %40 = vector.load %arg9[%c2, %c7_54, %c0_55] : memref<18x32x64xbf16, #tpu.memory_space<vmem>>, vector<16x16x64xbf16>
    %41 = vector.shape_cast %40 : vector<16x16x64xbf16> to vector<256x64xbf16>
    %c2_56 = arith.constant 2 : index
    %c8_57 = arith.constant 8 : index
    %c0_58 = arith.constant 0 : index
    %42 = vector.load %arg9[%c2_56, %c8_57, %c0_58] : memref<18x32x64xbf16, #tpu.memory_space<vmem>>, vector<16x16x64xbf16>
    %43 = vector.shape_cast %42 : vector<16x16x64xbf16> to vector<256x64xbf16>
    %c2_59 = arith.constant 2 : index
    %c9_60 = arith.constant 9 : index
    %c0_61 = arith.constant 0 : index
    %44 = vector.load %arg9[%c2_59, %c9_60, %c0_61] : memref<18x32x64xbf16, #tpu.memory_space<vmem>>, vector<16x16x64xbf16>
    %45 = vector.shape_cast %44 : vector<16x16x64xbf16> to vector<256x64xbf16>
    %46 = tpu.concatenate %29, %31, %33, %35, %37, %39, %41, %43, %45 in 1 : vector<256x64xbf16>, vector<256x64xbf16>, vector<256x64xbf16>, vector<256x64xbf16>, vector<256x64xbf16>, vector<256x64xbf16>, vector<256x64xbf16>, vector<256x64xbf16>, vector<256x64xbf16> -> vector<256x576xbf16>
    %c0_62 = arith.constant 0 : index
    %c0_63 = arith.constant 0 : index
    %47 = vector.load %arg4[%c0_62, %c0_63] : memref<576x128xbf16, #tpu.memory_space<vmem>>, vector<576x128xbf16>
    %cst_64 = arith.constant dense<0.000000e+00> : vector<256x128xf32>
    %48 = tpu.matmul %46, %47, %cst_64 {dimension_numbers = #tpu.dot_dimension_numbers<[1], [0], [0], [1], [0, 0, 1, 1], [], []>} : vector<256x576xbf16>, vector<576x128xbf16>, vector<256x128xf32> -> vector<256x128xf32>
    %c0_65 = arith.constant 0 : index
    %c0_66 = arith.constant 0 : index
    %49 = vector.load %arg5[%c0_65, %c0_66] : memref<1x128xf32, #tpu.memory_space<vmem>>, vector<1x128xf32>
    %50 = vector.broadcast %49 : vector<1x128xf32> to vector<256x128xf32>
    %51 = arith.addf %48, %50 : vector<256x128xf32>
    %cst_67 = arith.constant 0.000000e+00 : f32
    %52 = vector.broadcast %cst_67 : f32 to vector<256x128xf32>
    %53 = arith.maximumf %51, %52 : vector<256x128xf32>
    %54 = arith.truncf %53 : vector<256x128xf32> to vector<256x128xbf16>
    %55 = vector.shape_cast %54 : vector<256x128xbf16> to vector<16x16x128xbf16>
    %c1_68 = arith.constant 1 : index
    %c8_69 = arith.constant 8 : index
    %c0_70 = arith.constant 0 : index
    %56 = vector.load %arg10[%c1_68, %c8_69, %c0_70] : memref<18x32x128xbf16, #tpu.memory_space<vmem>>, vector<16x16x128xbf16>
    tpu.vector_store %arg10[%c1_68, %c8_69, %c0_70], %55 {strides = array<i32>} : memref<18x32x128xbf16, #tpu.memory_space<vmem>>, vector<16x16x128xbf16>,
    %c0_71 = arith.constant 0 : index
    %c7_72 = arith.constant 7 : index
    %c0_73 = arith.constant 0 : index
    %57 = vector.load %arg10[%c0_71, %c7_72, %c0_73] : memref<18x32x128xbf16, #tpu.memory_space<vmem>>, vector<16x16x128xbf16>
    %58 = vector.shape_cast %57 : vector<16x16x128xbf16> to vector<256x128xbf16>
    %c0_74 = arith.constant 0 : index
    %c8_75 = arith.constant 8 : index
    %c0_76 = arith.constant 0 : index
    %59 = vector.load %arg10[%c0_74, %c8_75, %c0_76] : memref<18x32x128xbf16, #tpu.memory_space<vmem>>, vector<16x16x128xbf16>
    %60 = vector.shape_cast %59 : vector<16x16x128xbf16> to vector<256x128xbf16>
    %c0_77 = arith.constant 0 : index
    %c9_78 = arith.constant 9 : index
    %c0_79 = arith.constant 0 : index
    %61 = vector.load %arg10[%c0_77, %c9_78, %c0_79] : memref<18x32x128xbf16, #tpu.memory_space<vmem>>, vector<16x16x128xbf16>
    %62 = vector.shape_cast %61 : vector<16x16x128xbf16> to vector<256x128xbf16>
    %c1_80 = arith.constant 1 : index
    %c7_81 = arith.constant 7 : index
    %c0_82 = arith.constant 0 : index
    %63 = vector.load %arg10[%c1_80, %c7_81, %c0_82] : memref<18x32x128xbf16, #tpu.memory_space<vmem>>, vector<16x16x128xbf16>
    %64 = vector.shape_cast %63 : vector<16x16x128xbf16> to vector<256x128xbf16>
    %c1_83 = arith.constant 1 : index
    %c8_84 = arith.constant 8 : index
    %c0_85 = arith.constant 0 : index
    %65 = vector.load %arg10[%c1_83, %c8_84, %c0_85] : memref<18x32x128xbf16, #tpu.memory_space<vmem>>, vector<16x16x128xbf16>
    %66 = vector.shape_cast %65 : vector<16x16x128xbf16> to vector<256x128xbf16>
    %c1_86 = arith.constant 1 : index
    %c9_87 = arith.constant 9 : index
    %c0_88 = arith.constant 0 : index
    %67 = vector.load %arg10[%c1_86, %c9_87, %c0_88] : memref<18x32x128xbf16, #tpu.memory_space<vmem>>, vector<16x16x128xbf16>
    %68 = vector.shape_cast %67 : vector<16x16x128xbf16> to vector<256x128xbf16>
    %c2_89 = arith.constant 2 : index
    %c7_90 = arith.constant 7 : index
    %c0_91 = arith.constant 0 : index
    %69 = vector.load %arg10[%c2_89, %c7_90, %c0_91] : memref<18x32x128xbf16, #tpu.memory_space<vmem>>, vector<16x16x128xbf16>
    %70 = vector.shape_cast %69 : vector<16x16x128xbf16> to vector<256x128xbf16>
    %c2_92 = arith.constant 2 : index
    %c8_93 = arith.constant 8 : index
    %c0_94 = arith.constant 0 : index
    %71 = vector.load %arg10[%c2_92, %c8_93, %c0_94] : memref<18x32x128xbf16, #tpu.memory_space<vmem>>, vector<16x16x128xbf16>
    %72 = vector.shape_cast %71 : vector<16x16x128xbf16> to vector<256x128xbf16>
    %c2_95 = arith.constant 2 : index
    %c9_96 = arith.constant 9 : index
    %c0_97 = arith.constant 0 : index
    %73 = vector.load %arg10[%c2_95, %c9_96, %c0_97] : memref<18x32x128xbf16, #tpu.memory_space<vmem>>, vector<16x16x128xbf16>
    %74 = vector.shape_cast %73 : vector<16x16x128xbf16> to vector<256x128xbf16>
    %75 = tpu.concatenate %58, %60, %62, %64, %66, %68, %70, %72, %74 in 1 : vector<256x128xbf16>, vector<256x128xbf16>, vector<256x128xbf16>, vector<256x128xbf16>, vector<256x128xbf16>, vector<256x128xbf16>, vector<256x128xbf16>, vector<256x128xbf16>, vector<256x128xbf16> -> vector<256x1152xbf16>
    %c0_98 = arith.constant 0 : index
    %c0_99 = arith.constant 0 : index
    %76 = vector.load %arg6[%c0_98, %c0_99] : memref<1152x32xbf16, #tpu.memory_space<vmem>>, vector<1152x32xbf16>
    %cst_100 = arith.constant dense<0.000000e+00> : vector<256x32xf32>
    %77 = tpu.matmul %75, %76, %cst_100 {dimension_numbers = #tpu.dot_dimension_numbers<[1], [0], [0], [1], [0, 0, 1, 1], [], []>} : vector<256x1152xbf16>, vector<1152x32xbf16>, vector<256x32xf32> -> vector<256x32xf32>
    %c0_101 = arith.constant 0 : index
    %c0_102 = arith.constant 0 : index
    %78 = vector.load %arg7[%c0_101, %c0_102] : memref<1x32xf32, #tpu.memory_space<vmem>>, vector<1x32xf32>
    %79 = vector.broadcast %78 : vector<1x32xf32> to vector<256x32xf32>
    %80 = arith.addf %77, %79 : vector<256x32xf32>
    %c0_103 = arith.constant 0 : index
    %c0_104 = arith.constant 0 : index
    %c0_105 = arith.constant 0 : index
    %81 = vector.load %arg8[%c0_103, %c0_104, %c0_105] : memref<1x256x32xf32, #tpu.memory_space<vmem>>, vector<1x256x32xf32>
    %82 = vector.shape_cast %81 : vector<1x256x32xf32> to vector<256x32xf32>
    %83 = vector.shape_cast %80 : vector<256x32xf32> to vector<1x256x32xf32>
    tpu.vector_store %arg8[%c0_103, %c0_104, %c0_105], %83 {strides = array<i32>} : memref<1x256x32xf32, #tpu.memory_space<vmem>>, vector<1x256x32xf32>,
    return
  }
  func.func @transform_0(%arg0: i32) -> (i32, i32, i32) {
    %c0_i32 = arith.constant 0 : i32
    %c0_i32_0 = arith.constant 0 : i32
    %c0_i32_1 = arith.constant 0 : i32
    return %arg0, %c0_i32, %c0_i32_0 : i32, i32, i32
  }
  func.func @transform_1(%arg0: i32) -> (i32, i32) {
    %c0_i32 = arith.constant 0 : i32
    %c0_i32_0 = arith.constant 0 : i32
    %c0_i32_1 = arith.constant 0 : i32
    return %c0_i32, %c0_i32_0 : i32, i32
  }
  func.func @transform_2(%arg0: i32) -> (i32, i32) {
    %c0_i32 = arith.constant 0 : i32
    %c0_i32_0 = arith.constant 0 : i32
    %c0_i32_1 = arith.constant 0 : i32
    return %c0_i32, %c0_i32_0 : i32, i32
  }
  func.func @transform_3(%arg0: i32) -> (i32, i32) {
    %c0_i32 = arith.constant 0 : i32
    %c0_i32_0 = arith.constant 0 : i32
    %c0_i32_1 = arith.constant 0 : i32
    return %c0_i32, %c0_i32_0 : i32, i32
  }
  func.func @transform_4(%arg0: i32) -> (i32, i32) {
    %c0_i32 = arith.constant 0 : i32
    %c0_i32_0 = arith.constant 0 : i32
    %c0_i32_1 = arith.constant 0 : i32
    return %c0_i32, %c0_i32_0 : i32, i32
  }
  func.func @transform_5(%arg0: i32) -> (i32, i32) {
    %c0_i32 = arith.constant 0 : i32
    %c0_i32_0 = arith.constant 0 : i32
    %c0_i32_1 = arith.constant 0 : i32
    return %c0_i32, %c0_i32_0 : i32, i32
  }
  func.func @transform_6(%arg0: i32) -> (i32, i32) {
    %c0_i32 = arith.constant 0 : i32
    %c0_i32_0 = arith.constant 0 : i32
    %c0_i32_1 = arith.constant 0 : i32
    return %c0_i32, %c0_i32_0 : i32, i32
  }
  func.func @transform_7(%arg0: i32) -> (i32, i32, i32) {
    %c0_i32 = arith.constant 0 : i32
    %c0_i32_0 = arith.constant 0 : i32
    %c0_i32_1 = arith.constant 0 : i32
    return %arg0, %c0_i32, %c0_i32_0 : i32, i32, i32
  }
}

</mosaic_0001>

<llo_original>
// kernel: tile.14
$region0: #{tile.14}
  %s0 = inlined_call_operand.vmem [shape: f32[4,32], index: 0, kind: input, shape index: {}]
  %s1 = inlined_call_operand.vmem [shape: f32[1,128], index: 1, kind: output, shape index: {}]
  $region1: #{tile.14} parent=0
    #allocation0 [shape = 'u8[4096]{0}', space=vmem, size = 0x1000, scoped, tag = 'scoped mem for output reshape']
    #allocation1 [shape = 'u8[4096]{0}', space=vmem, size = 0x1000, scoped, tag = 'scoped mem for input reshape']
    %s3 = sshllo.u32 0, 4
    %v4 = vld [vmem:[%s0] sm:%s3]
    %5 = vst [vmem:[#allocation1] sm:%s3] %v4
    %v6 = vld [vmem:[#allocation1] sm:$0x1]
    %vm7 = vcmask 261120
    %8 = vst.msk [vmem:[#allocation0] sm:$0x1] %vm7, %v6
    %s9 = scalar_lea.vmem [#allocation1], 3
    %v10 = vld [vmem:[%s9] sm:$0x1]
    %11 = vrot.lane.b32.xlu0 %v10, 96
    %v12 = vpop.permute.xlu0 %11
    %vm13 = vcmask 1048320
    %14 = vst.msk [vmem:[#allocation0] sm:$0x1] %vm13, %v12
    %s15 = scalar_lea.vmem [#allocation1], 2
    %v16 = vld [vmem:[%s15] sm:$0x1]
    %17 = vrot.lane.b32.xlu0 %v16, 64
    %v18 = vpop.permute.xlu0 %17
    %vm19 = vcmask 785920
    %20 = vst.msk [vmem:[#allocation0] sm:$0x1] %vm19, %v18
    %s21 = scalar_lea.vmem [#allocation1], 1
    %v22 = vld [vmem:[%s21] sm:$0x1]
    %23 = vrot.lane.b32.xlu0 %v22, 32
    %v24 = vpop.permute.xlu0 %23
    %vm25 = vcmask 523520
    %26 = vst.msk [vmem:[#allocation0] sm:$0x1] %vm25, %v24
    %s28 = sshllo.u32 0, 1
    %v30 = vld [vmem:[#allocation0] sm:%s28]
    %s31 = sshllo.u32 0, 1
    %32 = vst [vmem:[%s1] sm:%s31] %v30

// kernel: tile.19
$region0: #{tile.19}
  %s0 = inlined_call_operand.vmem [shape: f32[16,2], index: 0, kind: input, shape index: {}]
  %s1 = inlined_call_operand.vmem [shape: f32[1,32], index: 1, kind: output, shape index: {}]
  $region1: #{tile.19} parent=0
    #allocation0 [shape = 'u8[4096]{0}', space=vmem, size = 0x1000, scoped, tag = 'scoped mem for output reshape']
    %v2 = vld [vmem:[%s0] sm:$0x1]
    %vm3 = vcmask 15360
    %4 = vst.msk [vmem:[#allocation0] sm:$0x1] %vm3, %v2
    %s5 = scalar_lea.vmem %s0, 15
    %v6 = vld [vmem:[%s5] sm:$0x1]
    %7 = vrot.lane.b32.xlu0 %v6, 30
    %v8 = vpop.permute.xlu0 %7
    %vm9 = vcmask 261360
    %10 = vst.msk [vmem:[#allocation0] sm:$0x1] %vm9, %v8
    %s11 = scalar_lea.vmem %s0, 14
    %v12 = vld [vmem:[%s11] sm:$0x1]
    %13 = vrot.lane.b32.xlu0 %v12, 28
    %v14 = vpop.permute.xlu0 %13
    %vm15 = vcmask 244960
    %16 = vst.msk [vmem:[#allocation0] sm:$0x1] %vm15, %v14
    %s17 = scalar_lea.vmem %s0, 13
    %v18 = vld [vmem:[%s17] sm:$0x1]
    %19 = vrot.lane.b32.xlu0 %v18, 26
    %v20 = vpop.permute.xlu0 %19
    %vm21 = vcmask 228560
    %22 = vst.msk [vmem:[#allocation0] sm:$0x1] %vm21, %v20
    %s23 = scalar_lea.vmem %s0, 12
    %v24 = vld [vmem:[%s23] sm:$0x1]
    %25 = vrot.lane.b32.xlu0 %v24, 24
    %v26 = vpop.permute.xlu0 %25
    %vm27 = vcmask 212160
    %28 = vst.msk [vmem:[#allocation0] sm:$0x1] %vm27, %v26
    %s29 = scalar_lea.vmem %s0, 11
    %v30 = vld [vmem:[%s29] sm:$0x1]
    %31 = vrot.lane.b32.xlu0 %v30, 22
    %v32 = vpop.permute.xlu0 %31
    %vm33 = vcmask 195760
    %34 = vst.msk [vmem:[#allocation0] sm:$0x1] %vm33, %v32
    %s35 = scalar_lea.vmem %s0, 10
    %v36 = vld [vmem:[%s35] sm:$0x1]
    %37 = vrot.lane.b32.xlu0 %v36, 20
    %v38 = vpop.permute.xlu0 %37
    %vm39 = vcmask 179360
    %40 = vst.msk [vmem:[#allocation0] sm:$0x1] %vm39, %v38
    %s41 = scalar_lea.vmem %s0, 9
    %v42 = vld [vmem:[%s41] sm:$0x1]
    %43 = vrot.lane.b32.xlu0 %v42, 18
    %v44 = vpop.permute.xlu0 %43
    %vm45 = vcmask 162960
    %46 = vst.msk [vmem:[#allocation0] sm:$0x1] %vm45, %v44
    %s47 = scalar_lea.vmem %s0, 8
    %v48 = vld [vmem:[%s47] sm:$0x1]
    %49 = vrot.lane.b32.xlu0 %v48, 16
    %v50 = vpop.permute.xlu0 %49
    %vm51 = vcmask 146560
    %52 = vst.msk [vmem:[#allocation0] sm:$0x1] %vm51, %v50
    %s53 = scalar_lea.vmem %s0, 7
    %v54 = vld [vmem:[%s53] sm:$0x1]
    %55 = vrot.lane.b32.xlu0 %v54, 14
    %v56 = vpop.permute.xlu0 %55
    %vm57 = vcmask 130160
    %58 = vst.msk [vmem:[#allocation0] sm:$0x1] %vm57, %v56
    %s59 = scalar_lea.vmem %s0, 6
    %v60 = vld [vmem:[%s59] sm:$0x1]
    %61 = vrot.lane.b32.xlu0 %v60, 12
    %v62 = vpop.permute.xlu0 %61
    %vm63 = vcmask 113760
    %64 = vst.msk [vmem:[#allocation0] sm:$0x1] %vm63, %v62
    %s65 = scalar_lea.vmem %s0, 5
    %v66 = vld [vmem:[%s65] sm:$0x1]
    %67 = vrot.lane.b32.xlu0 %v66, 10
    %v68 = vpop.permute.xlu0 %67
    %vm69 = vcmask 97360
    %70 = vst.msk [vmem:[#allocation0] sm:$0x1] %vm69, %v68
    %s71 = scalar_lea.vmem %s0, 4
    %v72 = vld [vmem:[%s71] sm:$0x1]
    %73 = vrot.lane.b32.xlu0 %v72, 8
    %v74 = vpop.permute.xlu0 %73
    %vm75 = vcmask 80960
    %76 = vst.msk [vmem:[#allocation0] sm:$0x1] %vm75, %v74
    %s77 = scalar_lea.vmem %s0, 3
    %v78 = vld [vmem:[%s77] sm:$0x1]
    %79 = vrot.lane.b32.xlu0 %v78, 6
    %v80 = vpop.permute.xlu0 %79
    %vm81 = vcmask 64560
    %82 = vst.msk [vmem:[#allocation0] sm:$0x1] %vm81, %v80
    %s83 = scalar_lea.vmem %s0, 2
    %v84 = vld [vmem:[%s83] sm:$0x1]
    %85 = vrot.lane.b32.xlu0 %v84, 4
    %v86 = vpop.permute.xlu0 %85
    %vm87 = vcmask 48160
    %88 = vst.msk [vmem:[#allocation0] sm:$0x1] %vm87, %v86
    %s89 = scalar_lea.vmem %s0, 1
    %v90 = vld [vmem:[%s89] sm:$0x1]
    %91 = vrot.lane.b32.xlu0 %v90, 2
    %v92 = vpop.permute.xlu0 %91
    %vm93 = vcmask 31760
    %94 = vst.msk [vmem:[#allocation0] sm:$0x1] %vm93, %v92
    %s96 = sshllo.u32 0, 1
    %v98 = vld [vmem:[#allocation0] sm:%s96]
    %s99 = sshllo.u32 0, 1
    %100 = vst [vmem:[%s1] sm:%s99] %v98

// kernel: tile.18
$region0: #{tile.18}
  #allocation2 [shape = 's32[1]{0}', space=sflag, size = 0x4, scoped, tag = 'scoped memory for tile.18']
  %s0 = inlined_call_operand.hbm [shape: f32[2], index: 0, kind: input, shape index: {}]
  %s1 = inlined_call_operand.vmem [shape: f32[16,2], index: 1, kind: output, shape index: {}]
  $region1: #{tile.18} parent=0
    #allocation0 [shape = 'u8[512]{0}', space=vmem, size = 0x400, scoped, tag = 'operand span for operand 0']
    #allocation1 [shape = 's32[1]{0}', space=sflag, size = 0x4, scoped, tag = 'scoped memory for tile.18']
    %2 = vsyncpa [#allocation1], 0
    // Predicated region
    $region2: #{tile.18} parent=1 // pred_check
      _
    $region3: #{tile.18} parent=1 // pred_check_branch
      %4 = sbr.rel (0) target = $region5
    $region4: #{tile.18} parent=1 // pred_region
      %s6 = ssub.s32 16, 16
      %7 = vsyncadd [#allocation1], %s6
      %s9 = sshll.u32 [#allocation0], 4
      %s10 = int_to_ptr.vmem [resolvable:$true] %s9
      %12 = dma.hbm_to_vmem [thread:$0]  %s0, 16, %s10, [#allocation1]
    $region5: #{tile.18} parent=1 // pred_fallthru
      _
    // Predicated region
    $region6: #{tile.18} parent=1 // pred_check
      _
    $region7: #{tile.18} parent=1 // pred_check_branch
      %14 = sbr.rel (0) target = $region9
    $region8: #{tile.18} parent=1 // pred_region
      %15 = dma.done [#allocation1], 16
    $region9: #{tile.18} parent=1 // pred_fallthru
      _
    %v16 = vld [vmem:[#allocation0] ss:$0 sm:$0xff]
    %17 = vst [vmem:[%s1] sm:$0xff] %v16
    %s18 = scalar_lea.vmem %s1, 8
    %19 = vst [vmem:[%s18] sm:$0xff] %v16
    %20 = vsyncpa [#allocation1], 1

// kernel: tile.13
$region0: #{tile.13}
  #allocation2 [shape = 's32[1]{0}', space=sflag, size = 0x4, scoped, tag = 'scoped memory for tile.13']
  %s0 = inlined_call_operand.hbm [shape: f32[32], index: 0, kind: input, shape index: {}]
  %s1 = inlined_call_operand.vmem [shape: f32[4,32], index: 1, kind: output, shape index: {}]
  $region1: #{tile.13} parent=0
    #allocation0 [shape = 'u8[512]{0}', space=vmem, size = 0x400, scoped, tag = 'operand span for operand 0']
    #allocation1 [shape = 's32[1]{0}', space=sflag, size = 0x4, scoped, tag = 'scoped memory for tile.13']
    %2 = vsyncpa [#allocation1], 0
    // Predicated region
    $region2: #{tile.13} parent=1 // pred_check
      _
    $region3: #{tile.13} parent=1 // pred_check_branch
      %4 = sbr.rel (0) target = $region5
    $region4: #{tile.13} parent=1 // pred_region
      %s6 = ssub.s32 16, 16
      %7 = vsyncadd [#allocation1], %s6
      %s9 = sshll.u32 [#allocation0], 4
      %s10 = int_to_ptr.vmem [resolvable:$true] %s9
      %12 = dma.hbm_to_vmem [thread:$0]  %s0, 16, %s10, [#allocation1]
    $region5: #{tile.13} parent=1 // pred_fallthru
      _
    // Predicated region
    $region6: #{tile.13} parent=1 // pred_check
      _
    $region7: #{tile.13} parent=1 // pred_check_branch
      %14 = sbr.rel (0) target = $region9
    $region8: #{tile.13} parent=1 // pred_region
      %15 = dma.done [#allocation1], 16
    $region9: #{tile.13} parent=1 // pred_fallthru
      _
    %v16 = vld [vmem:[#allocation0] ss:$0 sm:$0xff]
    %17 = vst [vmem:[%s1] sm:$0xf] %v16
    %18 = vsyncpa [#allocation1], 1

// kernel: conv_decoder_forward.1
$region0: #{conv_decoder_forward.1}
  #allocation0 [shape = 'u32[]', space=smem, size = 0x4, offset = 0x4, fixed_abs, tag = 'smem constant byte address 0x4 - core index']
  #allocation1 [shape = 'u32[144,128]{1,0:T(1,128)}', space=vmem, size = 0x12000, scoped, tag = 'internal scratch']
  #allocation2 [shape = 'bf16[18,32,64]{2,1,0:T(16,128)(2,1)}', space=vmem, size = 0x24000, scoped, tag = 'scratch operand']
  #allocation3 [shape = 'bf16[18,32,128]{2,1,0:T(16,128)(2,1)}', space=vmem, size = 0x24000, scoped, tag = 'scratch operand']
  %s0 = inlined_call_operand.vmem [shape: bf16[2,256,128], index: 0, kind: input, shape index: {}]
  %s1 = inlined_call_operand.vmem [shape: bf16[128,64], index: 1, kind: input, shape index: {}]
  %s2 = inlined_call_operand.vmem [shape: f32[1,64], index: 2, kind: input, shape index: {}]
  %s3 = inlined_call_operand.vmem [shape: bf16[576,128], index: 3, kind: input, shape index: {}]
  %s4 = inlined_call_operand.vmem [shape: f32[1,128], index: 4, kind: input, shape index: {}]
  %s5 = inlined_call_operand.vmem [shape: bf16[1152,32], index: 5, kind: input, shape index: {}]
  %s6 = inlined_call_operand.vmem [shape: f32[1,32], index: 6, kind: input, shape index: {}]
  %s7 = inlined_call_operand.vmem [shape: f32[2,256,32], index: 7, kind: output, shape index: {}]
  %s8 = sld [smem:[#allocation0]]
  $region61: #{conv_decoder_forward.1} parent=0
    _
  %s10 = ssub.s32 1, %s8
  %s11 = scalar_select 0, %s10, %s8
  loop: start=0, step=1, limit=4
  $region2: #{conv_decoder_forward.1} parent=0 // loop_pre_header
    _
  $region3: #{conv_decoder_forward.1} parent=0 // loop_header
    %s13 = sphi 0, %s17
    %p14 = scmp.ge.s32.totalorder %s13, 4
    %s23 = sphi 0, %s25
    %s26 = sphi 0, %s23
    %s27 = sphi 0, %s26
    %s43 = sphi 0, %s27
    %s47 = sphi 0, %s47
    %s49 = sphi 0, %s47
    %s50 = sphi 0, %s49
    %s64 = sphi 0, %s50
    %s68 = sphi 0, %s68
    %s70 = sphi 0, %s68
    %s71 = sphi 0, %s70
    %s85 = sphi 0, %s71
    %s89 = sphi 0, %s89
    %s91 = sphi 0, %s89
    %s92 = sphi 0, %s91
    %s106 = sphi 0, %s92
    %s110 = sphi 0, %s110
    %s112 = sphi 0, %s110
    %s113 = sphi 0, %s112
    %s127 = sphi 0, %s113
    %s131 = sphi 0, %s131
    %s133 = sphi 0, %s131
    %s134 = sphi 0, %s133
    %s148 = sphi 0, %s134
    %s152 = sphi 0, %s152
    %s154 = sphi 0, %s152
    %s155 = sphi 0, %s154
    %s169 = sphi 0, %s155
    %s175 = sphi 0, %s177
    %s178 = sphi 0, %s175
    %s179 = sphi 0, %s178
    %s195 = sphi 0, %s179
  $region4: #{conv_decoder_forward.1} parent=0 // loop_header_branch
    %16 = sbr.rel (%p14) target = $region8
  $region5: #{conv_decoder_forward.1} parent=0 // loop_body
    %s18 = ssub.s32 %s13, 1
    %s19 = ssub.s32 %s13, 2
    %s20 = sadd.s32 %s13, 1
    %s21 = ssub.s32 %s13, %s20
    %p22 = scmp.eq.s32.totalorder %s21, 0
    %s24 = sadd.s32 %s23, 1
    %s25 = scalar_select %p22, %s23, %s24
    %p28 = pneg %p22
    %p29 = scmp.eq.s32.totalorder %s13, 1
    %p30 = por %p28, %p29
    %p31 = scmp.ne.s32.totalorder %s23, %s26
    %p32 = scmp.eq.s32.totalorder %s13, 0
    %p33 = por %p31, %p32
    %p34 = scmp.ne.s32.totalorder %s23, %s26
    %p35 = scmp.eq.s32.totalorder %s18, 1
    %p36 = por %p34, %p35
    %p37 = scmp.ne.s32.totalorder %s26, %s27
    %p38 = scmp.eq.s32.totalorder %s18, 0
    %p39 = por %p37, %p38
    %p40 = scmp.ne.s32.totalorder %s26, %s27
    %p41 = scmp.eq.s32.totalorder %s19, 1
    %p42 = por %p40, %p41
    %p44 = scmp.ne.s32.totalorder %s27, %s43
    %p45 = scmp.eq.s32.totalorder %s19, 0
    %p46 = por %p44, %p45
    %s48 = sadd.s32 %s47, 1
    %p51 = scmp.eq.s32.totalorder %s13, 1
    %p52 = scmp.ne.s32.totalorder %s47, %s49
    %p53 = scmp.eq.s32.totalorder %s13, 0
    %p54 = por %p52, %p53
    %p55 = scmp.ne.s32.totalorder %s47, %s49
    %p56 = scmp.eq.s32.totalorder %s18, 1
    %p57 = por %p55, %p56
    %p58 = scmp.ne.s32.totalorder %s49, %s50
    %p59 = scmp.eq.s32.totalorder %s18, 0
    %p60 = por %p58, %p59
    %p61 = scmp.ne.s32.totalorder %s49, %s50
    %p62 = scmp.eq.s32.totalorder %s19, 1
    %p63 = por %p61, %p62
    %p65 = scmp.ne.s32.totalorder %s50, %s64
    %p66 = scmp.eq.s32.totalorder %s19, 0
    %p67 = por %p65, %p66
    %s69 = sadd.s32 %s68, 1
    %p72 = scmp.eq.s32.totalorder %s13, 1
    %p73 = scmp.ne.s32.totalorder %s68, %s70
    %p74 = scmp.eq.s32.totalorder %s13, 0
    %p75 = por %p73, %p74
    %p76 = scmp.ne.s32.totalorder %s68, %s70
    %p77 = scmp.eq.s32.totalorder %s18, 1
    %p78 = por %p76, %p77
    %p79 = scmp.ne.s32.totalorder %s70, %s71
    %p80 = scmp.eq.s32.totalorder %s18, 0
    %p81 = por %p79, %p80
    %p82 = scmp.ne.s32.totalorder %s70, %s71
    %p83 = scmp.eq.s32.totalorder %s19, 1
    %p84 = por %p82, %p83
    %p86 = scmp.ne.s32.totalorder %s71, %s85
    %p87 = scmp.eq.s32.totalorder %s19, 0
    %p88 = por %p86, %p87
    %s90 = sadd.s32 %s89, 1
    %p93 = scmp.eq.s32.totalorder %s13, 1
    %p94 = scmp.ne.s32.totalorder %s89, %s91
    %p95 = scmp.eq.s32.totalorder %s13, 0
    %p96 = por %p94, %p95
    %p97 = scmp.ne.s32.totalorder %s89, %s91
    %p98 = scmp.eq.s32.totalorder %s18, 1
    %p99 = por %p97, %p98
    %p100 = scmp.ne.s32.totalorder %s91, %s92
    %p101 = scmp.eq.s32.totalorder %s18, 0
    %p102 = por %p100, %p101
    %p103 = scmp.ne.s32.totalorder %s91, %s92
    %p104 = scmp.eq.s32.totalorder %s19, 1
    %p105 = por %p103, %p104
    %p107 = scmp.ne.s32.totalorder %s92, %s106
    %p108 = scmp.eq.s32.totalorder %s19, 0
    %p109 = por %p107, %p108
    %s111 = sadd.s32 %s110, 1
    %p114 = scmp.eq.s32.totalorder %s13, 1
    %p115 = scmp.ne.s32.totalorder %s110, %s112
    %p116 = scmp.eq.s32.totalorder %s13, 0
    %p117 = por %p115, %p116
    %p118 = scmp.ne.s32.totalorder %s110, %s112
    %p119 = scmp.eq.s32.totalorder %s18, 1
    %p120 = por %p118, %p119
    %p121 = scmp.ne.s32.totalorder %s112, %s113
    %p122 = scmp.eq.s32.totalorder %s18, 0
    %p123 = por %p121, %p122
    %p124 = scmp.ne.s32.totalorder %s112, %s113
    %p125 = scmp.eq.s32.totalorder %s19, 1
    %p126 = por %p124, %p125
    %p128 = scmp.ne.s32.totalorder %s113, %s127
    %p129 = scmp.eq.s32.totalorder %s19, 0
    %p130 = por %p128, %p129
    %s132 = sadd.s32 %s131, 1
    %p135 = scmp.eq.s32.totalorder %s13, 1
    %p136 = scmp.ne.s32.totalorder %s131, %s133
    %p137 = scmp.eq.s32.totalorder %s13, 0
    %p138 = por %p136, %p137
    %p139 = scmp.ne.s32.totalorder %s131, %s133
    %p140 = scmp.eq.s32.totalorder %s18, 1
    %p141 = por %p139, %p140
    %p142 = scmp.ne.s32.totalorder %s133, %s134
    %p143 = scmp.eq.s32.totalorder %s18, 0
    %p144 = por %p142, %p143
    %p145 = scmp.ne.s32.totalorder %s133, %s134
    %p146 = scmp.eq.s32.totalorder %s19, 1
    %p147 = por %p145, %p146
    %p149 = scmp.ne.s32.totalorder %s134, %s148
    %p150 = scmp.eq.s32.totalorder %s19, 0
    %p151 = por %p149, %p150
    %s153 = sadd.s32 %s152, 1
    %p156 = scmp.eq.s32.totalorder %s13, 1
    %p157 = scmp.ne.s32.totalorder %s152, %s154
    %p158 = scmp.eq.s32.totalorder %s13, 0
    %p159 = por %p157, %p158
    %p160 = scmp.ne.s32.totalorder %s152, %s154
    %p161 = scmp.eq.s32.totalorder %s18, 1
    %p162 = por %p160, %p161
    %p163 = scmp.ne.s32.totalorder %s154, %s155
    %p164 = scmp.eq.s32.totalorder %s18, 0
    %p165 = por %p163, %p164
    %p166 = scmp.ne.s32.totalorder %s154, %s155
    %p167 = scmp.eq.s32.totalorder %s19, 1
    %p168 = por %p166, %p167
    %p170 = scmp.ne.s32.totalorder %s155, %s169
    %p171 = scmp.eq.s32.totalorder %s19, 0
    %p172 = por %p170, %p171
    %s173 = ssub.s32 %s13, %s20
    %p174 = scmp.eq.s32.totalorder %s173, 0
    %s176 = sadd.s32 %s175, 1
    %s177 = scalar_select %p174, %s175, %s176
    %p180 = pneg %p174
    %p181 = scmp.eq.s32.totalorder %s13, 1
    %p182 = por %p180, %p181
    %p183 = scmp.ne.s32.totalorder %s175, %s178
    %p184 = scmp.eq.s32.totalorder %s13, 0
    %p185 = por %p183, %p184
    %p186 = scmp.ne.s32.totalorder %s175, %s178
    %p187 = scmp.eq.s32.totalorder %s18, 1
    %p188 = por %p186, %p187
    %p189 = scmp.ne.s32.totalorder %s178, %s179
    %p190 = scmp.eq.s32.totalorder %s18, 0
    %p191 = por %p189, %p190
    %p192 = scmp.ne.s32.totalorder %s178, %s179
    %p193 = scmp.eq.s32.totalorder %s19, 1
    %p194 = por %p192, %p193
    %p196 = scmp.ne.s32.totalorder %s179, %s195
    %p197 = scmp.eq.s32.totalorder %s19, 0
    %p198 = por %p196, %p197
    %p199 = scmp.le.s32.totalorder 1, %s13
    %p200 = scmp.lt.s32.totalorder %s13, 3
    %p201 = pnand %p199, %p200
    %p202 = pneg %p201
    // Predicated region
    $region9: #{conv_decoder_forward.1} parent=5 // pred_check
      _
    $region10: #{conv_decoder_forward.1} parent=5 // pred_check_branch
      %204 = sbr.rel (%p201) target = $region12
    $region11: #{conv_decoder_forward.1} parent=5 // pred_region
      %s205 = ssub.s32 %s13, 1
      // Predicated region
      $region13: #{conv_decoder_forward.1} parent=11 // pred_check
        %p206 = pneg %p60
      $region14: #{conv_decoder_forward.1} parent=11 // pred_check_branch
        %208 = sbr.rel (%p206) target = $region16
      $region15: #{conv_decoder_forward.1} parent=11 // pred_region
        _
      $region16: #{conv_decoder_forward.1} parent=11 // pred_fallthru
        _
      // Predicated region
      $region17: #{conv_decoder_forward.1} parent=11 // pred_check
        %p209 = pneg %p81
      $region18: #{conv_decoder_forward.1} parent=11 // pred_check_branch
        %211 = sbr.rel (%p209) target = $region20
      $region19: #{conv_decoder_forward.1} parent=11 // pred_region
        _
      $region20: #{conv_decoder_forward.1} parent=11 // pred_fallthru
        _
      // Predicated region
      $region21: #{conv_decoder_forward.1} parent=11 // pred_check
        %p212 = pneg %p102
      $region22: #{conv_decoder_forward.1} parent=11 // pred_check_branch
        %214 = sbr.rel (%p212) target = $region24
      $region23: #{conv_decoder_forward.1} parent=11 // pred_region
        _
      $region24: #{conv_decoder_forward.1} parent=11 // pred_fallthru
        _
      // Predicated region
      $region25: #{conv_decoder_forward.1} parent=11 // pred_check
        %p215 = pneg %p123
      $region26: #{conv_decoder_forward.1} parent=11 // pred_check_branch
        %217 = sbr.rel (%p215) target = $region28
      $region27: #{conv_decoder_forward.1} parent=11 // pred_region
        _
      $region28: #{conv_decoder_forward.1} parent=11 // pred_fallthru
        _
      // Predicated region
      $region29: #{conv_decoder_forward.1} parent=11 // pred_check
        %p218 = pneg %p144
      $region30: #{conv_decoder_forward.1} parent=11 // pred_check_branch
        %220 = sbr.rel (%p218) target = $region32
      $region31: #{conv_decoder_forward.1} parent=11 // pred_region
        _
      $region32: #{conv_decoder_forward.1} parent=11 // pred_fallthru
        _
      // Predicated region
      $region33: #{conv_decoder_forward.1} parent=11 // pred_check
        %p221 = pneg %p165
      $region34: #{conv_decoder_forward.1} parent=11 // pred_check_branch
        %223 = sbr.rel (%p221) target = $region36
      $region35: #{conv_decoder_forward.1} parent=11 // pred_region
        _
      $region36: #{conv_decoder_forward.1} parent=11 // pred_fallthru
        _
    $region12: #{conv_decoder_forward.1} parent=5 // pred_fallthru
      _
    %p224 = scmp.lt.s32.totalorder %s13, 2
    // Predicated region
    $region37: #{conv_decoder_forward.1} parent=5 // pred_check
      %p225 = pneg %p224
    $region38: #{conv_decoder_forward.1} parent=5 // pred_check_branch
      %227 = sbr.rel (%p225) target = $region40
    $region39: #{conv_decoder_forward.1} parent=5 // pred_region
      // Predicated region
      $region41: #{conv_decoder_forward.1} parent=39 // pred_check
        %p228 = pneg %p33
      $region42: #{conv_decoder_forward.1} parent=39 // pred_check_branch
        %230 = sbr.rel (%p228) target = $region44
      $region43: #{conv_decoder_forward.1} parent=39 // pred_region
        %p231 = scmp.lt.s32.totalorder %s13, 1
        %s232 = scalar_select %p231, %s13, 1
        %s233 = smul.addr %s232, 32
        %s234 = smul.addr %s233, 4
        %s235 = scalar_lea.vmem %s0, %s234
      $region44: #{conv_decoder_forward.1} parent=39 // pred_fallthru
        _
    $region40: #{conv_decoder_forward.1} parent=5 // pred_fallthru
      _
    %p236 = scmp.le.s32.totalorder 1, %s13
    %p237 = scmp.lt.s32.totalorder %s13, 3
    %p238 = pnand %p236, %p237
    %p239 = pneg %p238
    // Predicated region
    $region45: #{conv_decoder_forward.1} parent=5 // pred_check
      _
    $region46: #{conv_decoder_forward.1} parent=5 // pred_check_branch
      %241 = sbr.rel (%p238) target = $region48
    $region47: #{conv_decoder_forward.1} parent=5 // pred_region
      %s242 = ssub.s32 %s13, 1
      %p243 = scmp.lt.s32.totalorder %s18, 1
      %s244 = scalar_select %p243, %s18, 1
      %s245 = smul.addr %s244, 32
      %s246 = smul.addr %s245, 4
      %s247 = scalar_lea.vmem %s0, %s246
      %p248 = pneg %p39
      %p249 = pneg %p36
      %p250 = pneg %p60
      %p251 = pneg %p57
      %p252 = pneg %p81
      %p253 = pneg %p78
      %p254 = pneg %p102
      %p255 = pneg %p99
      %p256 = pneg %p123
      %p257 = pneg %p120
      %p258 = pneg %p144
      %p259 = pneg %p141
      %p260 = pneg %p165
      %p261 = pneg %p162
      %p262 = pneg %p191
      %p263 = pneg %p188
      %p264 = scmp.lt.s32.totalorder %s18, 1
      %s265 = scalar_select %p264, %s18, 1
      %s266 = smul.addr %s265, 32
      %s267 = smul.addr %s266, 8
      %s268 = scalar_lea.vmem %s7, %s267
      %p269 = scmp.lt.s32.totalorder %s18, 1
      %s270 = scalar_select %p269, %s18, 1
      %s271 = smul.addr %s270, 32
      %s272 = smul.addr %s271, 4
      %s273 = scalar_lea.vmem %s0, %s272
      %p274 = scmp.lt.s32.totalorder %s18, 1
      %s275 = scalar_select %p274, %s18, 1
      %s276 = smul.addr %s275, 32
      %s277 = smul.addr %s276, 8
      %s278 = scalar_lea.vmem %s7, %s277
      %vm280 = vcmask 523264
      %281 = vst.msk [vmem:[#allocation2] sm:$0xff] %vm280, 0
      %282 = vst.msk [vmem:[#allocation2 + $0x8] sm:$0xff] %vm280, 0
      %s283 = scalar_lea.vmem [#allocation2], 272
      %284 = vst.msk [vmem:[%s283] sm:$0xff] %vm280, 0
      %285 = vst.msk [vmem:[%s283 + $0x8] sm:$0xff] %vm280, 0
      %vm286 = vcmask 519171
      %vm287 = vsmask.f32 7950
      %vm288 = vmand %vm286, %vm287
      %v289 = vld [vmem:[#allocation2] sm:$0x8]
      %v290 = vsel %vm288, 0, %v289
      %291 = vst [vmem:[#allocation2] sm:$0x8] %v290
      %v292 = vld [vmem:[#allocation2 + $0x10] sm:$0x8]
      %v293 = vsel %vm288, 0, %v292
      %294 = vst [vmem:[#allocation2 + $0x10] sm:$0x8] %v293
      %v295 = vld [vmem:[#allocation2 + $0x20] sm:$0x8]
      %v296 = vsel %vm288, 0, %v295
      %297 = vst [vmem:[#allocation2 + $0x20] sm:$0x8] %v296
      %v298 = vld [vmem:[#allocation2 + $0x30] sm:$0x8]
      %v299 = vsel %vm288, 0, %v298
      %300 = vst [vmem:[#allocation2 + $0x30] sm:$0x8] %v299
      %v301 = vld [vmem:[#allocation2 + $0x40] sm:$0x8]
      %v302 = vsel %vm288, 0, %v301
      %303 = vst [vmem:[#allocation2 + $0x40] sm:$0x8] %v302
      %v304 = vld [vmem:[#allocation2 + $0x50] sm:$0x8]
      %v305 = vsel %vm288, 0, %v304
      %306 = vst [vmem:[#allocation2 + $0x50] sm:$0x8] %v305
      %v307 = vld [vmem:[#allocation2 + $0x60] sm:$0x8]
      %v308 = vsel %vm288, 0, %v307
      %309 = vst [vmem:[#allocation2 + $0x60] sm:$0x8] %v308
      %v310 = vld [vmem:[#allocation2 + $0x70] sm:$0x8]
      %v311 = vsel %vm288, 0, %v310
      %312 = vst [vmem:[#allocation2 + $0x70] sm:$0x8] %v311
      %v313 = vld [vmem:[#allocation2 + $0x80] sm:$0x8]
      %v314 = vsel %vm288, 0, %v313
      %315 = vst [vmem:[#allocation2 + $0x80] sm:$0x8] %v314
      %v316 = vld [vmem:[#allocation2 + $0x90] sm:$0x8]
      %v317 = vsel %vm288, 0, %v316
      %318 = vst [vmem:[#allocation2 + $0x90] sm:$0x8] %v317
      %v319 = vld [vmem:[#allocation2 + $0xa0] sm:$0x8]
      %v320 = vsel %vm288, 0, %v319
      %321 = vst [vmem:[#allocation2 + $0xa0] sm:$0x8] %v320
      %v322 = vld [vmem:[#allocation2 + $0xb0] sm:$0x8]
      %v323 = vsel %vm288, 0, %v322
      %324 = vst [vmem:[#allocation2 + $0xb0] sm:$0x8] %v323
      %v325 = vld [vmem:[#allocation2 + $0xc0] sm:$0x8]
      %v326 = vsel %vm288, 0, %v325
      %327 = vst [vmem:[#allocation2 + $0xc0] sm:$0x8] %v326
      %v328 = vld [vmem:[#allocation2 + $0xd0] sm:$0x8]
      %v329 = vsel %vm288, 0, %v328
      %330 = vst [vmem:[#allocation2 + $0xd0] sm:$0x8] %v329
      %v331 = vld [vmem:[#allocation2 + $0xe0] sm:$0x8]
      %v332 = vsel %vm288, 0, %v331
      %333 = vst [vmem:[#allocation2 + $0xe0] sm:$0x8] %v332
      %v334 = vld [vmem:[#allocation2 + $0xf0] sm:$0x8]
      %v335 = vsel %vm288, 0, %v334
      %336 = vst [vmem:[#allocation2 + $0xf0] sm:$0x8] %v335
      %v337 = vld [vmem:[#allocation2 + $0x100] sm:$0x8]
      %v338 = vsel %vm288, 0, %v337
      %339 = vst [vmem:[#allocation2 + $0x100] sm:$0x8] %v338
      %v340 = vld [vmem:[#allocation2 + $0x110] sm:$0x8]
      %v341 = vsel %vm288, 0, %v340
      %342 = vst [vmem:[#allocation2 + $0x110] sm:$0x8] %v341
      %vm343 = vcmask 520196
      %vm344 = vsmask.f32 4352
      %vm345 = vmand %vm343, %vm344
      %v346 = vld [vmem:[#allocation2 + $0x8] sm:$0x10]
      %v347 = vsel %vm345, 0, %v346
      %348 = vst [vmem:[#allocation2 + $0x8] sm:$0x10] %v347
      %v349 = vld [vmem:[#allocation2 + $0x18] sm:$0x10]
      %v350 = vsel %vm345, 0, %v349
      %351 = vst [vmem:[#allocation2 + $0x18] sm:$0x10] %v350
      %v352 = vld [vmem:[#allocation2 + $0x28] sm:$0x10]
      %v353 = vsel %vm345, 0, %v352
      %354 = vst [vmem:[#allocation2 + $0x28] sm:$0x10] %v353
      %v355 = vld [vmem:[#allocation2 + $0x38] sm:$0x10]
      %v356 = vsel %vm345, 0, %v355
      %357 = vst [vmem:[#allocation2 + $0x38] sm:$0x10] %v356
      %v358 = vld [vmem:[#allocation2 + $0x48] sm:$0x10]
      %v359 = vsel %vm345, 0, %v358
      %360 = vst [vmem:[#allocation2 + $0x48] sm:$0x10] %v359
      %v361 = vld [vmem:[#allocation2 + $0x58] sm:$0x10]
      %v362 = vsel %vm345, 0, %v361
      %363 = vst [vmem:[#allocation2 + $0x58] sm:$0x10] %v362
      %v364 = vld [vmem:[#allocation2 + $0x68] sm:$0x10]
      %v365 = vsel %vm345, 0, %v364
      %366 = vst [vmem:[#allocation2 + $0x68] sm:$0x10] %v365
      %v367 = vld [vmem:[#allocation2 + $0x78] sm:$0x10]
      %v368 = vsel %vm345, 0, %v367
      %369 = vst [vmem:[#allocation2 + $0x78] sm:$0x10] %v368
      %v370 = vld [vmem:[#allocation2 + $0x88] sm:$0x10]
      %v371 = vsel %vm345, 0, %v370
      %372 = vst [vmem:[#allocation2 + $0x88] sm:$0x10] %v371
      %v373 = vld [vmem:[#allocation2 + $0x98] sm:$0x10]
      %v374 = vsel %vm345, 0, %v373
      %375 = vst [vmem:[#allocation2 + $0x98] sm:$0x10] %v374
      %v376 = vld [vmem:[#allocation2 + $0xa8] sm:$0x10]
      %v377 = vsel %vm345, 0, %v376
      %378 = vst [vmem:[#allocation2 + $0xa8] sm:$0x10] %v377
      %v379 = vld [vmem:[#allocation2 + $0xb8] sm:$0x10]
      %v380 = vsel %vm345, 0, %v379
      %381 = vst [vmem:[#allocation2 + $0xb8] sm:$0x10] %v380
      %v382 = vld [vmem:[#allocation2 + $0xc8] sm:$0x10]
      %v383 = vsel %vm345, 0, %v382
      %384 = vst [vmem:[#allocation2 + $0xc8] sm:$0x10] %v383
      %v385 = vld [vmem:[#allocation2 + $0xd8] sm:$0x10]
      %v386 = vsel %vm345, 0, %v385
      %387 = vst [vmem:[#allocation2 + $0xd8] sm:$0x10] %v386
      %v388 = vld [vmem:[#allocation2 + $0xe8] sm:$0x10]
      %v389 = vsel %vm345, 0, %v388
      %390 = vst [vmem:[#allocation2 + $0xe8] sm:$0x10] %v389
      %v391 = vld [vmem:[#allocation2 + $0xf8] sm:$0x10]
      %v392 = vsel %vm345, 0, %v391
      %393 = vst [vmem:[#allocation2 + $0xf8] sm:$0x10] %v392
      %v394 = vld [vmem:[#allocation2 + $0x108] sm:$0x10]
      %v395 = vsel %vm345, 0, %v394
      %396 = vst [vmem:[#allocation2 + $0x108] sm:$0x10] %v395
      %v397 = vld [vmem:[#allocation2 + $0x118] sm:$0x10]
      %v398 = vsel %vm345, 0, %v397
      %399 = vst [vmem:[#allocation2 + $0x118] sm:$0x10] %v398
      %400 = vst [vmem:[#allocation3] sm:$0xff] 0
      %401 = vst [vmem:[#allocation3 + $0x8] sm:$0xff] 0
      %s402 = scalar_lea.vmem [#allocation3], 272
      %403 = vst [vmem:[%s402] sm:$0xff] 0
      %404 = vst [vmem:[%s402 + $0x8] sm:$0xff] 0
      %vm405 = vcmask 1043459
      %vm406 = vmand %vm405, %vm287
      %v407 = vld [vmem:[#allocation3] sm:$0x8]
      %v408 = vsel %vm406, 0, %v407
      %409 = vst [vmem:[#allocation3] sm:$0x8] %v408
      %v410 = vld [vmem:[#allocation3 + $0x10] sm:$0x8]
      %v411 = vsel %vm406, 0, %v410
      %412 = vst [vmem:[#allocation3 + $0x10] sm:$0x8] %v411
      %v413 = vld [vmem:[#allocation3 + $0x20] sm:$0x8]
      %v414 = vsel %vm406, 0, %v413
      %415 = vst [vmem:[#allocation3 + $0x20] sm:$0x8] %v414
      %v416 = vld [vmem:[#allocation3 + $0x30] sm:$0x8]
      %v417 = vsel %vm406, 0, %v416
      %418 = vst [vmem:[#allocation3 + $0x30] sm:$0x8] %v417
      %v419 = vld [vmem:[#allocation3 + $0x40] sm:$0x8]
      %v420 = vsel %vm406, 0, %v419
      %421 = vst [vmem:[#allocation3 + $0x40] sm:$0x8] %v420
      %v422 = vld [vmem:[#allocation3 + $0x50] sm:$0x8]
      %v423 = vsel %vm406, 0, %v422
      %424 = vst [vmem:[#allocation3 + $0x50] sm:$0x8] %v423
      %v425 = vld [vmem:[#allocation3 + $0x60] sm:$0x8]
      %v426 = vsel %vm406, 0, %v425
      %427 = vst [vmem:[#allocation3 + $0x60] sm:$0x8] %v426
      %v428 = vld [vmem:[#allocation3 + $0x70] sm:$0x8]
      %v429 = vsel %vm406, 0, %v428
      %430 = vst [vmem:[#allocation3 + $0x70] sm:$0x8] %v429
      %v431 = vld [vmem:[#allocation3 + $0x80] sm:$0x8]
      %v432 = vsel %vm406, 0, %v431
      %433 = vst [vmem:[#allocation3 + $0x80] sm:$0x8] %v432
      %v434 = vld [vmem:[#allocation3 + $0x90] sm:$0x8]
      %v435 = vsel %vm406, 0, %v434
      %436 = vst [vmem:[#allocation3 + $0x90] sm:$0x8] %v435
      %v437 = vld [vmem:[#allocation3 + $0xa0] sm:$0x8]
      %v438 = vsel %vm406, 0, %v437
      %439 = vst [vmem:[#allocation3 + $0xa0] sm:$0x8] %v438
      %v440 = vld [vmem:[#allocation3 + $0xb0] sm:$0x8]
      %v441 = vsel %vm406, 0, %v440
      %442 = vst [vmem:[#allocation3 + $0xb0] sm:$0x8] %v441
      %v443 = vld [vmem:[#allocation3 + $0xc0] sm:$0x8]
      %v444 = vsel %vm406, 0, %v443
      %445 = vst [vmem:[#allocation3 + $0xc0] sm:$0x8] %v444
      %v446 = vld [vmem:[#allocation3 + $0xd0] sm:$0x8]
      %v447 = vsel %vm406, 0, %v446
      %448 = vst [vmem:[#allocation3 + $0xd0] sm:$0x8] %v447
      %v449 = vld [vmem:[#allocation3 + $0xe0] sm:$0x8]
      %v450 = vsel %vm406, 0, %v449
      %451 = vst [vmem:[#allocation3 + $0xe0] sm:$0x8] %v450
      %v452 = vld [vmem:[#allocation3 + $0xf0] sm:$0x8]
      %v453 = vsel %vm406, 0, %v452
      %454 = vst [vmem:[#allocation3 + $0xf0] sm:$0x8] %v453
      %v455 = vld [vmem:[#allocation3 + $0x100] sm:$0x8]
      %v456 = vsel %vm406, 0, %v455
      %457 = vst [vmem:[#allocation3 + $0x100] sm:$0x8] %v456
      %v458 = vld [vmem:[#allocation3 + $0x110] sm:$0x8]
      %v459 = vsel %vm406, 0, %v458
      %460 = vst [vmem:[#allocation3 + $0x110] sm:$0x8] %v459
      %vm461 = vcmask 1044484
      %vm462 = vmand %vm461, %vm344
      %v463 = vld [vmem:[#allocation3 + $0x8] sm:$0x10]
      %v464 = vsel %vm462, 0, %v463
      %465 = vst [vmem:[#allocation3 + $0x8] sm:$0x10] %v464
      %v466 = vld [vmem:[#allocation3 + $0x18] sm:$0x10]
      %v467 = vsel %vm462, 0, %v466
      %468 = vst [vmem:[#allocation3 + $0x18] sm:$0x10] %v467
      %v469 = vld [vmem:[#allocation3 + $0x28] sm:$0x10]
      %v470 = vsel %vm462, 0, %v469
      %471 = vst [vmem:[#allocation3 + $0x28] sm:$0x10] %v470
      %v472 = vld [vmem:[#allocation3 + $0x38] sm:$0x10]
      %v473 = vsel %vm462, 0, %v472
      %474 = vst [vmem:[#allocation3 + $0x38] sm:$0x10] %v473
      %v475 = vld [vmem:[#allocation3 + $0x48] sm:$0x10]
      %v476 = vsel %vm462, 0, %v475
      %477 = vst [vmem:[#allocation3 + $0x48] sm:$0x10] %v476
      %v478 = vld [vmem:[#allocation3 + $0x58] sm:$0x10]
      %v479 = vsel %vm462, 0, %v478
      %480 = vst [vmem:[#allocation3 + $0x58] sm:$0x10] %v479
      %v481 = vld [vmem:[#allocation3 + $0x68] sm:$0x10]
      %v482 = vsel %vm462, 0, %v481
      %483 = vst [vmem:[#allocation3 + $0x68] sm:$0x10] %v482
      %v484 = vld [vmem:[#allocation3 + $0x78] sm:$0x10]
      %v485 = vsel %vm462, 0, %v484
      %486 = vst [vmem:[#allocation3 + $0x78] sm:$0x10] %v485
      %v487 = vld [vmem:[#allocation3 + $0x88] sm:$0x10]
      %v488 = vsel %vm462, 0, %v487
      %489 = vst [vmem:[#allocation3 + $0x88] sm:$0x10] %v488
      %v490 = vld [vmem:[#allocation3 + $0x98] sm:$0x10]
      %v491 = vsel %vm462, 0, %v490
      %492 = vst [vmem:[#allocation3 + $0x98] sm:$0x10] %v491
      %v493 = vld [vmem:[#allocation3 + $0xa8] sm:$0x10]
      %v494 = vsel %vm462, 0, %v493
      %495 = vst [vmem:[#allocation3 + $0xa8] sm:$0x10] %v494
      %v496 = vld [vmem:[#allocation3 + $0xb8] sm:$0x10]
      %v497 = vsel %vm462, 0, %v496
      %498 = vst [vmem:[#allocation3 + $0xb8] sm:$0x10] %v497
      %v499 = vld [vmem:[#allocation3 + $0xc8] sm:$0x10]
      %v500 = vsel %vm462, 0, %v499
      %501 = vst [vmem:[#allocation3 + $0xc8] sm:$0x10] %v500
      %v502 = vld [vmem:[#allocation3 + $0xd8] sm:$0x10]
      %v503 = vsel %vm462, 0, %v502
      %504 = vst [vmem:[#allocation3 + $0xd8] sm:$0x10] %v503
      %v505 = vld [vmem:[#allocation3 + $0xe8] sm:$0x10]
      %v506 = vsel %vm462, 0, %v505
      %507 = vst [vmem:[#allocation3 + $0xe8] sm:$0x10] %v506
      %v508 = vld [vmem:[#allocation3 + $0xf8] sm:$0x10]
      %v509 = vsel %vm462, 0, %v508
      %510 = vst [vmem:[#allocation3 + $0xf8] sm:$0x10] %v509
      %v511 = vld [vmem:[#allocation3 + $0x108] sm:$0x10]
      %v512 = vsel %vm462, 0, %v511
      %513 = vst [vmem:[#allocation3 + $0x108] sm:$0x10] %v512
      %v514 = vld [vmem:[#allocation3 + $0x118] sm:$0x10]
      %v515 = vsel %vm462, 0, %v514
      %516 = vst [vmem:[#allocation3 + $0x118] sm:$0x10] %v515
      %v517 = vld [vmem:[%s273] sm:$0xf]
      %v518 = vld [vmem:[%s273 + $0x4] sm:$0xf]
      %v519 = vld [vmem:[%s273 + $0x8] sm:$0xf]
      %v520 = vld [vmem:[%s273 + $0xc] sm:$0xf]
      %v521 = vld [vmem:[%s273 + $0x10] sm:$0xf]
      %v522 = vld [vmem:[%s273 + $0x14] sm:$0xf]
      %v523 = vld [vmem:[%s273 + $0x18] sm:$0xf]
      %v524 = vld [vmem:[%s273 + $0x1c] sm:$0xf]
      %v525 = vld [vmem:[%s273 + $0x20] sm:$0xf]
      %v526 = vld [vmem:[%s273 + $0x24] sm:$0xf]
      %v527 = vld [vmem:[%s273 + $0x28] sm:$0xf]
      %v528 = vld [vmem:[%s273 + $0x2c] sm:$0xf]
      %v529 = vld [vmem:[%s273 + $0x30] sm:$0xf]
      %v530 = vld [vmem:[%s273 + $0x34] sm:$0xf]
      %v531 = vld [vmem:[%s273 + $0x38] sm:$0xf]
      %v532 = vld [vmem:[%s273 + $0x3c] sm:$0xf]
      %v533 = vld [vmem:[%s273 + $0x40] sm:$0xf]
      %v534 = vld [vmem:[%s273 + $0x44] sm:$0xf]
      %v535 = vld [vmem:[%s273 + $0x48] sm:$0xf]
      %v536 = vld [vmem:[%s273 + $0x4c] sm:$0xf]
      %v537 = vld [vmem:[%s273 + $0x50] sm:$0xf]
      %v538 = vld [vmem:[%s273 + $0x54] sm:$0xf]
      %v539 = vld [vmem:[%s273 + $0x58] sm:$0xf]
      %v540 = vld [vmem:[%s273 + $0x5c] sm:$0xf]
      %v541 = vld [vmem:[%s273 + $0x60] sm:$0xf]
      %v542 = vld [vmem:[%s273 + $0x64] sm:$0xf]
      %v543 = vld [vmem:[%s273 + $0x68] sm:$0xf]
      %v544 = vld [vmem:[%s273 + $0x6c] sm:$0xf]
      %v545 = vld [vmem:[%s273 + $0x70] sm:$0xf]
      %v546 = vld [vmem:[%s273 + $0x74] sm:$0xf]
      %v547 = vld [vmem:[%s273 + $0x78] sm:$0xf]
      %v548 = vld [vmem:[%s273 + $0x7c] sm:$0xf]
      %v549 = vld [vmem:[%s1] sm:$0xf]
      %v550 = vld [vmem:[%s1 + $0x4] sm:$0xf]
      %v551 = vld [vmem:[%s1 + $0x8] sm:$0xf]
      %v552 = vld [vmem:[%s1 + $0xc] sm:$0xf]
      %v553 = vld [vmem:[%s1 + $0x10] sm:$0xf]
      %v554 = vld [vmem:[%s1 + $0x14] sm:$0xf]
      %v555 = vld [vmem:[%s1 + $0x18] sm:$0xf]
      %v556 = vld [vmem:[%s1 + $0x1c] sm:$0xf]
      %v557 = vld [vmem:[%s1 + $0x20] sm:$0xf]
      %v558 = vld [vmem:[%s1 + $0x24] sm:$0xf]
      %v559 = vld [vmem:[%s1 + $0x28] sm:$0xf]
      %v560 = vld [vmem:[%s1 + $0x2c] sm:$0xf]
      %v561 = vld [vmem:[%s1 + $0x30] sm:$0xf]
      %v562 = vld [vmem:[%s1 + $0x34] sm:$0xf]
      %v563 = vld [vmem:[%s1 + $0x38] sm:$0xf]
      %v564 = vld [vmem:[%s1 + $0x3c] sm:$0xf]
      %v565 = vld [vmem:[%s2] sm:$0x1]
      %v567 = vlaneseq
      %v568 = vshrl.u32 %v567, 7
      %v569 = vsub.s32 0, %v568
      %v570 = vrot.slane %v565, %v569
      %v604 = vunpack.c.l.b16 %v517
      %v605 = vunpack.c.l.b16 %v518
      %v606 = vunpack.c.l.b16 %v519
      %v607 = vunpack.c.l.b16 %v520
      %v608 = vunpack.c.l.b16 %v521
      %v609 = vunpack.c.l.b16 %v522
      %v610 = vunpack.c.l.b16 %v523
      %v611 = vunpack.c.l.b16 %v524
      %v612 = vunpack.c.l.b16 %v525
      %v613 = vunpack.c.l.b16 %v526
      %v614 = vunpack.c.l.b16 %v527
      %v615 = vunpack.c.l.b16 %v528
      %v616 = vunpack.c.l.b16 %v529
      %v617 = vunpack.c.l.b16 %v530
      %v618 = vunpack.c.l.b16 %v531
      %v619 = vunpack.c.l.b16 %v532
      %v620 = vunpack.c.l.b16 %v533
      %v621 = vunpack.c.l.b16 %v534
      %v622 = vunpack.c.l.b16 %v535
      %v623 = vunpack.c.l.b16 %v536
      %v624 = vunpack.c.l.b16 %v537
      %v625 = vunpack.c.l.b16 %v538
      %v626 = vunpack.c.l.b16 %v539
      %v627 = vunpack.c.l.b16 %v540
      %v628 = vunpack.c.l.b16 %v541
      %v629 = vunpack.c.l.b16 %v542
      %v630 = vunpack.c.l.b16 %v543
      %v631 = vunpack.c.l.b16 %v544
      %v632 = vunpack.c.l.b16 %v545
      %v633 = vunpack.c.l.b16 %v546
      %v634 = vunpack.c.l.b16 %v547
      %v635 = vunpack.c.l.b16 %v548
      %v636 = vpack.c.b16 %v605, %v604
      %v637 = vpack.c.b16 %v607, %v606
      %v638 = vpack.c.b16 %v609, %v608
      %v639 = vpack.c.b16 %v611, %v610
      %v640 = vpack.c.b16 %v613, %v612
      %v641 = vpack.c.b16 %v615, %v614
      %v642 = vpack.c.b16 %v617, %v616
      %v643 = vpack.c.b16 %v619, %v618
      %v644 = vpack.c.b16 %v621, %v620
      %v645 = vpack.c.b16 %v623, %v622
      %v646 = vpack.c.b16 %v625, %v624
      %v647 = vpack.c.b16 %v627, %v626
      %v648 = vpack.c.b16 %v629, %v628
      %v649 = vpack.c.b16 %v631, %v630
      %v650 = vpack.c.b16 %v633, %v632
      %v651 = vpack.c.b16 %v635, %v634
      %v684 = vunpack.c.l.b16 %v549
      %v685 = vunpack.c.l.b16 %v550
      %v686 = vunpack.c.l.b16 %v551
      %v687 = vunpack.c.l.b16 %v552
      %v688 = vunpack.c.l.b16 %v553
      %v689 = vunpack.c.l.b16 %v554
      %v690 = vunpack.c.l.b16 %v555
      %v691 = vunpack.c.l.b16 %v556
      %v692 = vunpack.c.l.b16 %v557
      %v693 = vunpack.c.l.b16 %v558
      %v694 = vunpack.c.l.b16 %v559
      %v695 = vunpack.c.l.b16 %v560
      %v696 = vunpack.c.l.b16 %v561
      %v697 = vunpack.c.l.b16 %v562
      %v698 = vunpack.c.l.b16 %v563
      %v699 = vunpack.c.l.b16 %v564
      %v700 = vpack.c.b16 %v685, %v684
      %v701 = vpack.c.b16 %v687, %v686
      %v702 = vpack.c.b16 %v689, %v688
      %v703 = vpack.c.b16 %v691, %v690
      %v704 = vpack.c.b16 %v693, %v692
      %v705 = vpack.c.b16 %v695, %v694
      %v706 = vpack.c.b16 %v697, %v696
      %v707 = vpack.c.b16 %v699, %v698
      %716 = vmatprep.subr.bf16.mxu0 0
      %717 = vmatpush1.bf16.msra.mxu0 %v700
      %718 = vmatprep.subr.bf16.mxu0 0
      %719 = vmatpush1.bf16.msra.mxu0 %v701
      %720 = vmatprep.subr.bf16.mxu0 0
      %721 = vmatpush1.bf16.msra.mxu0 %v702
      %722 = vmatprep.subr.bf16.mxu0 0
      %723 = vmatpush1.bf16.msra.mxu0 %v703
      %724 = vmatprep.subr.bf16.mxu0 0
      %725 = vmatpush1.bf16.msra.mxu0 %v704
      %726 = vmatprep.subr.bf16.mxu0 0
      %727 = vmatpush1.bf16.msra.mxu0 %v705
      %728 = vmatprep.subr.bf16.mxu0 0
      %729 = vmatpush1.bf16.msra.mxu0 %v706
      %730 = vmatprep.subr.bf16.mxu0 0
      %731 = vmatpush1.bf16.msra.mxu0 %v707
      %732 = vmatprep.subr.bf16.mxu0 0
      %733 = vmatpush1.bf16.msra.mxu0 0
      %734 = vmatprep.subr.bf16.mxu0 0
      %735 = vmatpush1.bf16.msra.mxu0 0
      %736 = vmatprep.subr.bf16.mxu0 0
      %737 = vmatpush1.bf16.msra.mxu0 0
      %738 = vmatprep.subr.bf16.mxu0 0
      %739 = vmatpush1.bf16.msra.mxu0 0
      %740 = vmatprep.subr.bf16.mxu0 0
      %741 = vmatpush1.bf16.msra.mxu0 0
      %742 = vmatprep.subr.bf16.mxu0 0
      %743 = vmatpush1.bf16.msra.mxu0 0
      %744 = vmatprep.subr.bf16.mxu0 0
      %745 = vmatpush1.bf16.msra.mxu0 0
      %746 = vmatprep.subr.bf16.mxu0 0
      %747 = vmatpush1.bf16.msra.mxu0 0
      %748 = vmatprep.mubr.bf16.mxu0 0
      %749 = vmatmul.mubr.bf16.gmra.mrb[0].mxu0 %v636
      %v750 = vpop.f32.mrb[0].mxu0
      %v751 = vadd.f32 %v570, %v750
      %v752 = vpop.f32.mrb[0].mxu0
      %v753 = vpop.f32.mrb[0].mxu0
      %v754 = vadd.f32 %v570, %v753
      %v755 = vpop.f32.mrb[0].mxu0
      %756 = vmatprep.mubr.bf16.mxu0 0
      %757 = vmatmul.mubr.bf16.gmra.mrb[0].mxu0 %v637
      %v758 = vpop.f32.mrb[0].mxu0
      %v759 = vadd.f32 %v570, %v758
      %v760 = vpop.f32.mrb[0].mxu0
      %v761 = vpop.f32.mrb[0].mxu0
      %v762 = vadd.f32 %v570, %v761
      %v763 = vpop.f32.mrb[0].mxu0
      %764 = vmatprep.mubr.bf16.mxu0 0
      %765 = vmatmul.mubr.bf16.gmra.mrb[0].mxu0 %v638
      %v766 = vpop.f32.mrb[0].mxu0
      %v767 = vadd.f32 %v570, %v766
      %v768 = vpop.f32.mrb[0].mxu0
      %v769 = vpop.f32.mrb[0].mxu0
      %v770 = vadd.f32 %v570, %v769
      %v771 = vpop.f32.mrb[0].mxu0
      %772 = vmatprep.mubr.bf16.mxu0 0
      %773 = vmatmul.mubr.bf16.gmra.mrb[0].mxu0 %v639
      %v774 = vpop.f32.mrb[0].mxu0
      %v775 = vadd.f32 %v570, %v774
      %v776 = vpop.f32.mrb[0].mxu0
      %v777 = vpop.f32.mrb[0].mxu0
      %v778 = vadd.f32 %v570, %v777
      %v779 = vpop.f32.mrb[0].mxu0
      %780 = vmatprep.mubr.bf16.mxu0 0
      %781 = vmatmul.mubr.bf16.gmra.mrb[0].mxu0 %v640
      %v782 = vpop.f32.mrb[0].mxu0
      %v783 = vadd.f32 %v570, %v782
      %v784 = vpop.f32.mrb[0].mxu0
      %v785 = vpop.f32.mrb[0].mxu0
      %v786 = vadd.f32 %v570, %v785
      %v787 = vpop.f32.mrb[0].mxu0
      %788 = vmatprep.mubr.bf16.mxu0 0
      %789 = vmatmul.mubr.bf16.gmra.mrb[0].mxu0 %v641
      %v790 = vpop.f32.mrb[0].mxu0
      %v791 = vadd.f32 %v570, %v790
      %v792 = vpop.f32.mrb[0].mxu0
      %v793 = vpop.f32.mrb[0].mxu0
      %v794 = vadd.f32 %v570, %v793
      %v795 = vpop.f32.mrb[0].mxu0
      %796 = vmatprep.mubr.bf16.mxu0 0
      %797 = vmatmul.mubr.bf16.gmra.mrb[0].mxu0 %v642
      %v798 = vpop.f32.mrb[0].mxu0
      %v799 = vadd.f32 %v570, %v798
      %v800 = vpop.f32.mrb[0].mxu0
      %v801 = vpop.f32.mrb[0].mxu0
      %v802 = vadd.f32 %v570, %v801
      %v803 = vpop.f32.mrb[0].mxu0
      %804 = vmatprep.mubr.bf16.mxu0 0
      %805 = vmatmul.mubr.bf16.gmra.mrb[0].mxu0 %v643
      %v806 = vpop.f32.mrb[0].mxu0
      %v807 = vadd.f32 %v570, %v806
      %v808 = vpop.f32.mrb[0].mxu0
      %v809 = vpop.f32.mrb[0].mxu0
      %v810 = vadd.f32 %v570, %v809
      %v811 = vpop.f32.mrb[0].mxu0
      %812 = vmatprep.mubr.bf16.mxu0 0
      %813 = vmatmul.mubr.bf16.gmra.mrb[0].mxu0 %v644
      %v814 = vpop.f32.mrb[0].mxu0
      %v815 = vadd.f32 %v570, %v814
      %v816 = vpop.f32.mrb[0].mxu0
      %v817 = vpop.f32.mrb[0].mxu0
      %v818 = vadd.f32 %v570, %v817
      %v819 = vpop.f32.mrb[0].mxu0
      %820 = vmatprep.mubr.bf16.mxu0 0
      %821 = vmatmul.mubr.bf16.gmra.mrb[0].mxu0 %v645
      %v822 = vpop.f32.mrb[0].mxu0
      %v823 = vadd.f32 %v570, %v822
      %v824 = vpop.f32.mrb[0].mxu0
      %v825 = vpop.f32.mrb[0].mxu0
      %v826 = vadd.f32 %v570, %v825
      %v827 = vpop.f32.mrb[0].mxu0
      %828 = vmatprep.mubr.bf16.mxu0 0
      %829 = vmatmul.mubr.bf16.gmra.mrb[0].mxu0 %v646
      %v830 = vpop.f32.mrb[0].mxu0
      %v831 = vadd.f32 %v570, %v830
      %v832 = vpop.f32.mrb[0].mxu0
      %v833 = vpop.f32.mrb[0].mxu0
      %v834 = vadd.f32 %v570, %v833
      %v835 = vpop.f32.mrb[0].mxu0
      %836 = vmatprep.mubr.bf16.mxu0 0
      %837 = vmatmul.mubr.bf16.gmra.mrb[0].mxu0 %v647
      %v838 = vpop.f32.mrb[0].mxu0
      %v839 = vadd.f32 %v570, %v838
      %v840 = vpop.f32.mrb[0].mxu0
      %v841 = vpop.f32.mrb[0].mxu0
      %v842 = vadd.f32 %v570, %v841
      %v843 = vpop.f32.mrb[0].mxu0
      %844 = vmatprep.mubr.bf16.mxu0 0
      %845 = vmatmul.mubr.bf16.gmra.mrb[0].mxu0 %v648
      %v846 = vpop.f32.mrb[0].mxu0
      %v847 = vadd.f32 %v570, %v846
      %v848 = vpop.f32.mrb[0].mxu0
      %v849 = vpop.f32.mrb[0].mxu0
      %v850 = vadd.f32 %v570, %v849
      %v851 = vpop.f32.mrb[0].mxu0
      %852 = vmatprep.mubr.bf16.mxu0 0
      %853 = vmatmul.mubr.bf16.gmra.mrb[0].mxu0 %v649
      %v854 = vpop.f32.mrb[0].mxu0
      %v855 = vadd.f32 %v570, %v854
      %v856 = vpop.f32.mrb[0].mxu0
      %v857 = vpop.f32.mrb[0].mxu0
      %v858 = vadd.f32 %v570, %v857
      %v859 = vpop.f32.mrb[0].mxu0
      %860 = vmatprep.mubr.bf16.mxu0 0
      %861 = vmatmul.mubr.bf16.gmra.mrb[0].mxu0 %v650
      %v862 = vpop.f32.mrb[0].mxu0
      %v863 = vadd.f32 %v570, %v862
      %v864 = vpop.f32.mrb[0].mxu0
      %v865 = vpop.f32.mrb[0].mxu0
      %v866 = vadd.f32 %v570, %v865
      %v867 = vpop.f32.mrb[0].mxu0
      %868 = vmatprep.mubr.bf16.mxu0 0
      %869 = vmatmul.mubr.bf16.gmra.mrb[0].mxu0 %v651
      %v870 = vpop.f32.mrb[0].mxu0
      %v871 = vadd.f32 %v570, %v870
      %v872 = vpop.f32.mrb[0].mxu0
      %v873 = vpop.f32.mrb[0].mxu0
      %v874 = vadd.f32 %v570, %v873
      %v875 = vpop.f32.mrb[0].mxu0
      %876 = vdwg.mxu0
      %v877 = vmax.f32 %v751, 0.0
      %v878 = vmax.f32 %v754, 0.0
      %v879 = vmax.f32 %v759, 0.0
      %v880 = vmax.f32 %v762, 0.0
      %v881 = vmax.f32 %v767, 0.0
      %v882 = vmax.f32 %v770, 0.0
      %v883 = vmax.f32 %v775, 0.0
      %v884 = vmax.f32 %v778, 0.0
      %v885 = vmax.f32 %v783, 0.0
      %v886 = vmax.f32 %v786, 0.0
      %v887 = vmax.f32 %v791, 0.0
      %v888 = vmax.f32 %v794, 0.0
      %v889 = vmax.f32 %v799, 0.0
      %v890 = vmax.f32 %v802, 0.0
      %v891 = vmax.f32 %v807, 0.0
      %v892 = vmax.f32 %v810, 0.0
      %v893 = vmax.f32 %v815, 0.0
      %v894 = vmax.f32 %v818, 0.0
      %v895 = vmax.f32 %v823, 0.0
      %v896 = vmax.f32 %v826, 0.0
      %v897 = vmax.f32 %v831, 0.0
      %v898 = vmax.f32 %v834, 0.0
      %v899 = vmax.f32 %v839, 0.0
      %v900 = vmax.f32 %v842, 0.0
      %v901 = vmax.f32 %v847, 0.0
      %v902 = vmax.f32 %v850, 0.0
      %v903 = vmax.f32 %v855, 0.0
      %v904 = vmax.f32 %v858, 0.0
      %v905 = vmax.f32 %v863, 0.0
      %v906 = vmax.f32 %v866, 0.0
      %v907 = vmax.f32 %v871, 0.0
      %v908 = vmax.f32 %v874, 0.0
      %v909 = vpack.c.bf16 %v878, %v877
      %v910 = vpack.c.bf16 %v880, %v879
      %v911 = vpack.c.bf16 %v882, %v881
      %v912 = vpack.c.bf16 %v884, %v883
      %v913 = vpack.c.bf16 %v886, %v885
      %v914 = vpack.c.bf16 %v888, %v887
      %v915 = vpack.c.bf16 %v890, %v889
      %v916 = vpack.c.bf16 %v892, %v891
      %v917 = vpack.c.bf16 %v894, %v893
      %v918 = vpack.c.bf16 %v896, %v895
      %v919 = vpack.c.bf16 %v898, %v897
      %v920 = vpack.c.bf16 %v900, %v899
      %v921 = vpack.c.bf16 %v902, %v901
      %v922 = vpack.c.bf16 %v904, %v903
      %v923 = vpack.c.bf16 %v906, %v905
      %v924 = vpack.c.bf16 %v908, %v907
      %v941 = vrot.slane %v909, 4
      %v942 = vrot.slane %v910, 4
      %v943 = vrot.slane %v911, 4
      %v944 = vrot.slane %v912, 4
      %v945 = vrot.slane %v913, 4
      %v946 = vrot.slane %v914, 4
      %v947 = vrot.slane %v915, 4
      %v948 = vrot.slane %v916, 4
      %v949 = vrot.slane %v917, 4
      %v950 = vrot.slane %v918, 4
      %v951 = vrot.slane %v919, 4
      %v952 = vrot.slane %v920, 4
      %v953 = vrot.slane %v921, 4
      %v954 = vrot.slane %v922, 4
      %v955 = vrot.slane %v923, 4
      %v956 = vrot.slane %v924, 4
      %s973 = scalar_lea.vmem [#allocation2], 16
      %vm974 = vcmask 523268
      %975 = vst.msk [vmem:[%s973] sm:$0xf0] %vm974, %v941
      %vm976 = vcmask 519168
      %977 = vst.msk [vmem:[%s973 + $0x8] sm:$0xf] %vm976, %v941
      %978 = vst.msk [vmem:[%s973 + $0x10] sm:$0xf0] %vm974, %v942
      %979 = vst.msk [vmem:[%s973 + $0x18] sm:$0xf] %vm976, %v942
      %980 = vst.msk [vmem:[%s973 + $0x20] sm:$0xf0] %vm974, %v943
      %981 = vst.msk [vmem:[%s973 + $0x28] sm:$0xf] %vm976, %v943
      %982 = vst.msk [vmem:[%s973 + $0x30] sm:$0xf0] %vm974, %v944
      %983 = vst.msk [vmem:[%s973 + $0x38] sm:$0xf] %vm976, %v944
      %984 = vst.msk [vmem:[%s973 + $0x40] sm:$0xf0] %vm974, %v945
      %985 = vst.msk [vmem:[%s973 + $0x48] sm:$0xf] %vm976, %v945
      %986 = vst.msk [vmem:[%s973 + $0x50] sm:$0xf0] %vm974, %v946
      %987 = vst.msk [vmem:[%s973 + $0x58] sm:$0xf] %vm976, %v946
      %988 = vst.msk [vmem:[%s973 + $0x60] sm:$0xf0] %vm974, %v947
      %989 = vst.msk [vmem:[%s973 + $0x68] sm:$0xf] %vm976, %v947
      %990 = vst.msk [vmem:[%s973 + $0x70] sm:$0xf0] %vm974, %v948
      %991 = vst.msk [vmem:[%s973 + $0x78] sm:$0xf] %vm976, %v948
      %992 = vst.msk [vmem:[%s973 + $0x80] sm:$0xf0] %vm974, %v949
      %993 = vst.msk [vmem:[%s973 + $0x88] sm:$0xf] %vm976, %v949
      %994 = vst.msk [vmem:[%s973 + $0x90] sm:$0xf0] %vm974, %v950
      %995 = vst.msk [vmem:[%s973 + $0x98] sm:$0xf] %vm976, %v950
      %996 = vst.msk [vmem:[%s973 + $0xa0] sm:$0xf0] %vm974, %v951
      %997 = vst.msk [vmem:[%s973 + $0xa8] sm:$0xf] %vm976, %v951
      %998 = vst.msk [vmem:[%s973 + $0xb0] sm:$0xf0] %vm974, %v952
      %999 = vst.msk [vmem:[%s973 + $0xb8] sm:$0xf] %vm976, %v952
      %1000 = vst.msk [vmem:[%s973 + $0xc0] sm:$0xf0] %vm974, %v953
      %1001 = vst.msk [vmem:[%s973 + $0xc8] sm:$0xf] %vm976, %v953
      %1002 = vst.msk [vmem:[%s973 + $0xd0] sm:$0xf0] %vm974, %v954
      %1003 = vst.msk [vmem:[%s973 + $0xd8] sm:$0xf] %vm976, %v954
      %1004 = vst.msk [vmem:[%s973 + $0xe0] sm:$0xf0] %vm974, %v955
      %1005 = vst.msk [vmem:[%s973 + $0xe8] sm:$0xf] %vm976, %v955
      %1006 = vst.msk [vmem:[%s973 + $0xf0] sm:$0xf0] %vm974, %v956
      %1007 = vst.msk [vmem:[%s973 + $0xf8] sm:$0xf] %vm976, %v956
      %v1008 = vld [vmem:[#allocation2] sm:$0xf8]
      %v1009 = vld [vmem:[#allocation2 + $0x8] sm:$0xf]
      %v1010 = vld [vmem:[#allocation2 + $0x10] sm:$0xf8]
      %v1011 = vld [vmem:[#allocation2 + $0x18] sm:$0xf]
      %v1012 = vld [vmem:[#allocation2 + $0x20] sm:$0xf8]
      %v1013 = vld [vmem:[#allocation2 + $0x28] sm:$0xf]
      %v1014 = vld [vmem:[#allocation2 + $0x30] sm:$0xf8]
      %v1015 = vld [vmem:[#allocation2 + $0x38] sm:$0xf]
      %v1016 = vld [vmem:[#allocation2 + $0x40] sm:$0xf8]
      %v1017 = vld [vmem:[#allocation2 + $0x48] sm:$0xf]
      %v1018 = vld [vmem:[#allocation2 + $0x50] sm:$0xf8]
      %v1019 = vld [vmem:[#allocation2 + $0x58] sm:$0xf]
      %v1020 = vld [vmem:[#allocation2 + $0x60] sm:$0xf8]
      %v1021 = vld [vmem:[#allocation2 + $0x68] sm:$0xf]
      %v1022 = vld [vmem:[#allocation2 + $0x70] sm:$0xf8]
      %v1023 = vld [vmem:[#allocation2 + $0x78] sm:$0xf]
      %v1024 = vld [vmem:[#allocation2 + $0x80] sm:$0xf8]
      %v1025 = vld [vmem:[#allocation2 + $0x88] sm:$0xf]
      %v1026 = vld [vmem:[#allocation2 + $0x90] sm:$0xf8]
      %v1027 = vld [vmem:[#allocation2 + $0x98] sm:$0xf]
      %v1028 = vld [vmem:[#allocation2 + $0xa0] sm:$0xf8]
      %v1029 = vld [vmem:[#allocation2 + $0xa8] sm:$0xf]
      %v1030 = vld [vmem:[#allocation2 + $0xb0] sm:$0xf8]
      %v1031 = vld [vmem:[#allocation2 + $0xb8] sm:$0xf]
      %v1032 = vld [vmem:[#allocation2 + $0xc0] sm:$0xf8]
      %v1033 = vld [vmem:[#allocation2 + $0xc8] sm:$0xf]
      %v1034 = vld [vmem:[#allocation2 + $0xd0] sm:$0xf8]
      %v1035 = vld [vmem:[#allocation2 + $0xd8] sm:$0xf]
      %v1036 = vld [vmem:[#allocation2 + $0xe0] sm:$0xf8]
      %v1037 = vld [vmem:[#allocation2 + $0xe8] sm:$0xf]
      %v1038 = vld [vmem:[#allocation2 + $0xf0] sm:$0xf8]
      %v1039 = vld [vmem:[#allocation2 + $0xf8] sm:$0xf]
      %v1041 = vshrl.u32 %v1008, 16
      %v1043 = vrot.slane %v1041, 3
      %v1044 = vshll.u32 %v1008, 16
      %v1046 = vrot.slane %v1044, 4
      %v1047 = vor.u32 %v1043, %v1046
      %v1049 = vshrl.u32 %v1009, 16
      %v1051 = vrot.slane %v1049, 3
      %v1052 = vshll.u32 %v1009, 16
      %v1054 = vrot.slane %v1052, 4
      %v1055 = vor.u32 %v1051, %v1054
      %v1056 = vsel %vm344, %v1047, %v1055
      %v1058 = vshrl.u32 %v1010, 16
      %v1060 = vrot.slane %v1058, 3
      %v1061 = vshll.u32 %v1010, 16
      %v1063 = vrot.slane %v1061, 4
      %v1064 = vor.u32 %v1060, %v1063
      %v1066 = vshrl.u32 %v1011, 16
      %v1068 = vrot.slane %v1066, 3
      %v1069 = vshll.u32 %v1011, 16
      %v1071 = vrot.slane %v1069, 4
      %v1072 = vor.u32 %v1068, %v1071
      %v1073 = vsel %vm344, %v1064, %v1072
      %v1075 = vshrl.u32 %v1012, 16
      %v1077 = vrot.slane %v1075, 3
      %v1078 = vshll.u32 %v1012, 16
      %v1080 = vrot.slane %v1078, 4
      %v1081 = vor.u32 %v1077, %v1080
      %v1083 = vshrl.u32 %v1013, 16
      %v1085 = vrot.slane %v1083, 3
      %v1086 = vshll.u32 %v1013, 16
      %v1088 = vrot.slane %v1086, 4
      %v1089 = vor.u32 %v1085, %v1088
      %v1090 = vsel %vm344, %v1081, %v1089
      %v1092 = vshrl.u32 %v1014, 16
      %v1094 = vrot.slane %v1092, 3
      %v1095 = vshll.u32 %v1014, 16
      %v1097 = vrot.slane %v1095, 4
      %v1098 = vor.u32 %v1094, %v1097
      %v1100 = vshrl.u32 %v1015, 16
      %v1102 = vrot.slane %v1100, 3
      %v1103 = vshll.u32 %v1015, 16
      %v1105 = vrot.slane %v1103, 4
      %v1106 = vor.u32 %v1102, %v1105
      %v1107 = vsel %vm344, %v1098, %v1106
      %v1109 = vshrl.u32 %v1016, 16
      %v1111 = vrot.slane %v1109, 3
      %v1112 = vshll.u32 %v1016, 16
      %v1114 = vrot.slane %v1112, 4
      %v1115 = vor.u32 %v1111, %v1114
      %v1117 = vshrl.u32 %v1017, 16
      %v1119 = vrot.slane %v1117, 3
      %v1120 = vshll.u32 %v1017, 16
      %v1122 = vrot.slane %v1120, 4
      %v1123 = vor.u32 %v1119, %v1122
      %v1124 = vsel %vm344, %v1115, %v1123
      %v1126 = vshrl.u32 %v1018, 16
      %v1128 = vrot.slane %v1126, 3
      %v1129 = vshll.u32 %v1018, 16
      %v1131 = vrot.slane %v1129, 4
      %v1132 = vor.u32 %v1128, %v1131
      %v1134 = vshrl.u32 %v1019, 16
      %v1136 = vrot.slane %v1134, 3
      %v1137 = vshll.u32 %v1019, 16
      %v1139 = vrot.slane %v1137, 4
      %v1140 = vor.u32 %v1136, %v1139
      %v1141 = vsel %vm344, %v1132, %v1140
      %v1143 = vshrl.u32 %v1020, 16
      %v1145 = vrot.slane %v1143, 3
      %v1146 = vshll.u32 %v1020, 16
      %v1148 = vrot.slane %v1146, 4
      %v1149 = vor.u32 %v1145, %v1148
      %v1151 = vshrl.u32 %v1021, 16
      %v1153 = vrot.slane %v1151, 3
      %v1154 = vshll.u32 %v1021, 16
      %v1156 = vrot.slane %v1154, 4
      %v1157 = vor.u32 %v1153, %v1156
      %v1158 = vsel %vm344, %v1149, %v1157
      %v1160 = vshrl.u32 %v1022, 16
      %v1162 = vrot.slane %v1160, 3
      %v1163 = vshll.u32 %v1022, 16
      %v1165 = vrot.slane %v1163, 4
      %v1166 = vor.u32 %v1162, %v1165
      %v1168 = vshrl.u32 %v1023, 16
      %v1170 = vrot.slane %v1168, 3
      %v1171 = vshll.u32 %v1023, 16
      %v1173 = vrot.slane %v1171, 4
      %v1174 = vor.u32 %v1170, %v1173
      %v1175 = vsel %vm344, %v1166, %v1174
      %v1177 = vshrl.u32 %v1024, 16
      %v1179 = vrot.slane %v1177, 3
      %v1180 = vshll.u32 %v1024, 16
      %v1182 = vrot.slane %v1180, 4
      %v1183 = vor.u32 %v1179, %v1182
      %v1185 = vshrl.u32 %v1025, 16
      %v1187 = vrot.slane %v1185, 3
      %v1188 = vshll.u32 %v1025, 16
      %v1190 = vrot.slane %v1188, 4
      %v1191 = vor.u32 %v1187, %v1190
      %v1192 = vsel %vm344, %v1183, %v1191
      %v1194 = vshrl.u32 %v1026, 16
      %v1196 = vrot.slane %v1194, 3
      %v1197 = vshll.u32 %v1026, 16
      %v1199 = vrot.slane %v1197, 4
      %v1200 = vor.u32 %v1196, %v1199
      %v1202 = vshrl.u32 %v1027, 16
      %v1204 = vrot.slane %v1202, 3
      %v1205 = vshll.u32 %v1027, 16
      %v1207 = vrot.slane %v1205, 4
      %v1208 = vor.u32 %v1204, %v1207
      %v1209 = vsel %vm344, %v1200, %v1208
      %v1211 = vshrl.u32 %v1028, 16
      %v1213 = vrot.slane %v1211, 3
      %v1214 = vshll.u32 %v1028, 16
      %v1216 = vrot.slane %v1214, 4
      %v1217 = vor.u32 %v1213, %v1216
      %v1219 = vshrl.u32 %v1029, 16
      %v1221 = vrot.slane %v1219, 3
      %v1222 = vshll.u32 %v1029, 16
      %v1224 = vrot.slane %v1222, 4
      %v1225 = vor.u32 %v1221, %v1224
      %v1226 = vsel %vm344, %v1217, %v1225
      %v1228 = vshrl.u32 %v1030, 16
      %v1230 = vrot.slane %v1228, 3
      %v1231 = vshll.u32 %v1030, 16
      %v1233 = vrot.slane %v1231, 4
      %v1234 = vor.u32 %v1230, %v1233
      %v1236 = vshrl.u32 %v1031, 16
      %v1238 = vrot.slane %v1236, 3
      %v1239 = vshll.u32 %v1031, 16
      %v1241 = vrot.slane %v1239, 4
      %v1242 = vor.u32 %v1238, %v1241
      %v1243 = vsel %vm344, %v1234, %v1242
      %v1245 = vshrl.u32 %v1032, 16
      %v1247 = vrot.slane %v1245, 3
      %v1248 = vshll.u32 %v1032, 16
      %v1250 = vrot.slane %v1248, 4
      %v1251 = vor.u32 %v1247, %v1250
      %v1253 = vshrl.u32 %v1033, 16
      %v1255 = vrot.slane %v1253, 3
      %v1256 = vshll.u32 %v1033, 16
      %v1258 = vrot.slane %v1256, 4
      %v1259 = vor.u32 %v1255, %v1258
      %v1260 = vsel %vm344, %v1251, %v1259
      %v1262 = vshrl.u32 %v1034, 16
      %v1264 = vrot.slane %v1262, 3
      %v1265 = vshll.u32 %v1034, 16
      %v1267 = vrot.slane %v1265, 4
      %v1268 = vor.u32 %v1264, %v1267
      %v1270 = vshrl.u32 %v1035, 16
      %v1272 = vrot.slane %v1270, 3
      %v1273 = vshll.u32 %v1035, 16
      %v1275 = vrot.slane %v1273, 4
      %v1276 = vor.u32 %v1272, %v1275
      %v1277 = vsel %vm344, %v1268, %v1276
      %v1279 = vshrl.u32 %v1036, 16
      %v1281 = vrot.slane %v1279, 3
      %v1282 = vshll.u32 %v1036, 16
      %v1284 = vrot.slane %v1282, 4
      %v1285 = vor.u32 %v1281, %v1284
      %v1287 = vshrl.u32 %v1037, 16
      %v1289 = vrot.slane %v1287, 3
      %v1290 = vshll.u32 %v1037, 16
      %v1292 = vrot.slane %v1290, 4
      %v1293 = vor.u32 %v1289, %v1292
      %v1294 = vsel %vm344, %v1285, %v1293
      %v1296 = vshrl.u32 %v1038, 16
      %v1298 = vrot.slane %v1296, 3
      %v1299 = vshll.u32 %v1038, 16
      %v1301 = vrot.slane %v1299, 4
      %v1302 = vor.u32 %v1298, %v1301
      %v1304 = vshrl.u32 %v1039, 16
      %v1306 = vrot.slane %v1304, 3
      %v1307 = vshll.u32 %v1039, 16
      %v1309 = vrot.slane %v1307, 4
      %v1310 = vor.u32 %v1306, %v1309
      %v1311 = vsel %vm344, %v1302, %v1310
      %v1312 = vld [vmem:[#allocation2] sm:$0xf0]
      %v1313 = vld [vmem:[#allocation2 + $0x10] sm:$0xf0]
      %v1314 = vld [vmem:[#allocation2 + $0x20] sm:$0xf0]
      %v1315 = vld [vmem:[#allocation2 + $0x30] sm:$0xf0]
      %v1316 = vld [vmem:[#allocation2 + $0x40] sm:$0xf0]
      %v1317 = vld [vmem:[#allocation2 + $0x50] sm:$0xf0]
      %v1318 = vld [vmem:[#allocation2 + $0x60] sm:$0xf0]
      %v1319 = vld [vmem:[#allocation2 + $0x70] sm:$0xf0]
      %v1320 = vld [vmem:[#allocation2 + $0x80] sm:$0xf0]
      %v1321 = vld [vmem:[#allocation2 + $0x90] sm:$0xf0]
      %v1322 = vld [vmem:[#allocation2 + $0xa0] sm:$0xf0]
      %v1323 = vld [vmem:[#allocation2 + $0xb0] sm:$0xf0]
      %v1324 = vld [vmem:[#allocation2 + $0xc0] sm:$0xf0]
      %v1325 = vld [vmem:[#allocation2 + $0xd0] sm:$0xf0]
      %v1326 = vld [vmem:[#allocation2 + $0xe0] sm:$0xf0]
      %v1327 = vld [vmem:[#allocation2 + $0xf0] sm:$0xf0]
      %vm1360 = vcmask 1043456
      %v1361 = vrot.slane %v1312, 4
      %v1362 = vrot.slane %v1009, 4
      %v1363 = vsel %vm1360, %v1361, %v1362
      %v1364 = vrot.slane %v1313, 4
      %v1365 = vrot.slane %v1011, 4
      %v1366 = vsel %vm1360, %v1364, %v1365
      %v1367 = vrot.slane %v1314, 4
      %v1368 = vrot.slane %v1013, 4
      %v1369 = vsel %vm1360, %v1367, %v1368
      %v1370 = vrot.slane %v1315, 4
      %v1371 = vrot.slane %v1015, 4
      %v1372 = vsel %vm1360, %v1370, %v1371
      %v1373 = vrot.slane %v1316, 4
      %v1374 = vrot.slane %v1017, 4
      %v1375 = vsel %vm1360, %v1373, %v1374
      %v1376 = vrot.slane %v1317, 4
      %v1377 = vrot.slane %v1019, 4
      %v1378 = vsel %vm1360, %v1376, %v1377
      %v1379 = vrot.slane %v1318, 4
      %v1380 = vrot.slane %v1021, 4
      %v1381 = vsel %vm1360, %v1379, %v1380
      %v1382 = vrot.slane %v1319, 4
      %v1383 = vrot.slane %v1023, 4
      %v1384 = vsel %vm1360, %v1382, %v1383
      %v1385 = vrot.slane %v1320, 4
      %v1386 = vrot.slane %v1025, 4
      %v1387 = vsel %vm1360, %v1385, %v1386
      %v1388 = vrot.slane %v1321, 4
      %v1389 = vrot.slane %v1027, 4
      %v1390 = vsel %vm1360, %v1388, %v1389
      %v1391 = vrot.slane %v1322, 4
      %v1392 = vrot.slane %v1029, 4
      %v1393 = vsel %vm1360, %v1391, %v1392
      %v1394 = vrot.slane %v1323, 4
      %v1395 = vrot.slane %v1031, 4
      %v1396 = vsel %vm1360, %v1394, %v1395
      %v1397 = vrot.slane %v1324, 4
      %v1398 = vrot.slane %v1033, 4
      %v1399 = vsel %vm1360, %v1397, %v1398
      %v1400 = vrot.slane %v1325, 4
      %v1401 = vrot.slane %v1035, 4
      %v1402 = vsel %vm1360, %v1400, %v1401
      %v1403 = vrot.slane %v1326, 4
      %v1404 = vrot.slane %v1037, 4
      %v1405 = vsel %vm1360, %v1403, %v1404
      %v1406 = vrot.slane %v1327, 4
      %v1407 = vrot.slane %v1039, 4
      %v1408 = vsel %vm1360, %v1406, %v1407
      %v1409 = vld [vmem:[#allocation2 + $0x8] sm:$0x1f]
      %v1410 = vld [vmem:[#allocation2 + $0x18] sm:$0x1f]
      %v1411 = vld [vmem:[#allocation2 + $0x28] sm:$0x1f]
      %v1412 = vld [vmem:[#allocation2 + $0x38] sm:$0x1f]
      %v1413 = vld [vmem:[#allocation2 + $0x48] sm:$0x1f]
      %v1414 = vld [vmem:[#allocation2 + $0x58] sm:$0x1f]
      %v1415 = vld [vmem:[#allocation2 + $0x68] sm:$0x1f]
      %v1416 = vld [vmem:[#allocation2 + $0x78] sm:$0x1f]
      %v1417 = vld [vmem:[#allocation2 + $0x88] sm:$0x1f]
      %v1418 = vld [vmem:[#allocation2 + $0x98] sm:$0x1f]
      %v1419 = vld [vmem:[#allocation2 + $0xa8] sm:$0x1f]
      %v1420 = vld [vmem:[#allocation2 + $0xb8] sm:$0x1f]
      %v1421 = vld [vmem:[#allocation2 + $0xc8] sm:$0x1f]
      %v1422 = vld [vmem:[#allocation2 + $0xd8] sm:$0x1f]
      %v1423 = vld [vmem:[#allocation2 + $0xe8] sm:$0x1f]
      %v1424 = vld [vmem:[#allocation2 + $0xf8] sm:$0x1f]
      %vm1425 = vsmask.f32 3328
      %v1427 = vshrl.u32 %v1312, 16
      %v1429 = vrot.slane %v1427, 4
      %v1430 = vshll.u32 %v1312, 16
      %v1432 = vrot.slane %v1430, 5
      %v1433 = vor.u32 %v1429, %v1432
      %v1435 = vshrl.u32 %v1409, 16
      %v1437 = vrot.slane %v1435, 4
      %v1438 = vshll.u32 %v1409, 16
      %v1440 = vrot.slane %v1438, 5
      %v1441 = vor.u32 %v1437, %v1440
      %v1442 = vsel %vm1425, %v1433, %v1441
      %v1444 = vshrl.u32 %v1313, 16
      %v1446 = vrot.slane %v1444, 4
      %v1447 = vshll.u32 %v1313, 16
      %v1449 = vrot.slane %v1447, 5
      %v1450 = vor.u32 %v1446, %v1449
      %v1452 = vshrl.u32 %v1410, 16
      %v1454 = vrot.slane %v1452, 4
      %v1455 = vshll.u32 %v1410, 16
      %v1457 = vrot.slane %v1455, 5
      %v1458 = vor.u32 %v1454, %v1457
      %v1459 = vsel %vm1425, %v1450, %v1458
      %v1461 = vshrl.u32 %v1314, 16
      %v1463 = vrot.slane %v1461, 4
      %v1464 = vshll.u32 %v1314, 16
      %v1466 = vrot.slane %v1464, 5
      %v1467 = vor.u32 %v1463, %v1466
      %v1469 = vshrl.u32 %v1411, 16
      %v1471 = vrot.slane %v1469, 4
      %v1472 = vshll.u32 %v1411, 16
      %v1474 = vrot.slane %v1472, 5
      %v1475 = vor.u32 %v1471, %v1474
      %v1476 = vsel %vm1425, %v1467, %v1475
      %v1478 = vshrl.u32 %v1315, 16
      %v1480 = vrot.slane %v1478, 4
      %v1481 = vshll.u32 %v1315, 16
      %v1483 = vrot.slane %v1481, 5
      %v1484 = vor.u32 %v1480, %v1483
      %v1486 = vshrl.u32 %v1412, 16
      %v1488 = vrot.slane %v1486, 4
      %v1489 = vshll.u32 %v1412, 16
      %v1491 = vrot.slane %v1489, 5
      %v1492 = vor.u32 %v1488, %v1491
      %v1493 = vsel %vm1425, %v1484, %v1492
      %v1495 = vshrl.u32 %v1316, 16
      %v1497 = vrot.slane %v1495, 4
      %v1498 = vshll.u32 %v1316, 16
      %v1500 = vrot.slane %v1498, 5
      %v1501 = vor.u32 %v1497, %v1500
      %v1503 = vshrl.u32 %v1413, 16
      %v1505 = vrot.slane %v1503, 4
      %v1506 = vshll.u32 %v1413, 16
      %v1508 = vrot.slane %v1506, 5
      %v1509 = vor.u32 %v1505, %v1508
      %v1510 = vsel %vm1425, %v1501, %v1509
      %v1512 = vshrl.u32 %v1317, 16
      %v1514 = vrot.slane %v1512, 4
      %v1515 = vshll.u32 %v1317, 16
      %v1517 = vrot.slane %v1515, 5
      %v1518 = vor.u32 %v1514, %v1517
      %v1520 = vshrl.u32 %v1414, 16
      %v1522 = vrot.slane %v1520, 4
      %v1523 = vshll.u32 %v1414, 16
      %v1525 = vrot.slane %v1523, 5
      %v1526 = vor.u32 %v1522, %v1525
      %v1527 = vsel %vm1425, %v1518, %v1526
      %v1529 = vshrl.u32 %v1318, 16
      %v1531 = vrot.slane %v1529, 4
      %v1532 = vshll.u32 %v1318, 16
      %v1534 = vrot.slane %v1532, 5
      %v1535 = vor.u32 %v1531, %v1534
      %v1537 = vshrl.u32 %v1415, 16
      %v1539 = vrot.slane %v1537, 4
      %v1540 = vshll.u32 %v1415, 16
      %v1542 = vrot.slane %v1540, 5
      %v1543 = vor.u32 %v1539, %v1542
      %v1544 = vsel %vm1425, %v1535, %v1543
      %v1546 = vshrl.u32 %v1319, 16
      %v1548 = vrot.slane %v1546, 4
      %v1549 = vshll.u32 %v1319, 16
      %v1551 = vrot.slane %v1549, 5
      %v1552 = vor.u32 %v1548, %v1551
      %v1554 = vshrl.u32 %v1416, 16
      %v1556 = vrot.slane %v1554, 4
      %v1557 = vshll.u32 %v1416, 16
      %v1559 = vrot.slane %v1557, 5
      %v1560 = vor.u32 %v1556, %v1559
      %v1561 = vsel %vm1425, %v1552, %v1560
      %v1563 = vshrl.u32 %v1320, 16
      %v1565 = vrot.slane %v1563, 4
      %v1566 = vshll.u32 %v1320, 16
      %v1568 = vrot.slane %v1566, 5
      %v1569 = vor.u32 %v1565, %v1568
      %v1571 = vshrl.u32 %v1417, 16
      %v1573 = vrot.slane %v1571, 4
      %v1574 = vshll.u32 %v1417, 16
      %v1576 = vrot.slane %v1574, 5
      %v1577 = vor.u32 %v1573, %v1576
      %v1578 = vsel %vm1425, %v1569, %v1577
      %v1580 = vshrl.u32 %v1321, 16
      %v1582 = vrot.slane %v1580, 4
      %v1583 = vshll.u32 %v1321, 16
      %v1585 = vrot.slane %v1583, 5
      %v1586 = vor.u32 %v1582, %v1585
      %v1588 = vshrl.u32 %v1418, 16
      %v1590 = vrot.slane %v1588, 4
      %v1591 = vshll.u32 %v1418, 16
      %v1593 = vrot.slane %v1591, 5
      %v1594 = vor.u32 %v1590, %v1593
      %v1595 = vsel %vm1425, %v1586, %v1594
      %v1597 = vshrl.u32 %v1322, 16
      %v1599 = vrot.slane %v1597, 4
      %v1600 = vshll.u32 %v1322, 16
      %v1602 = vrot.slane %v1600, 5
      %v1603 = vor.u32 %v1599, %v1602
      %v1605 = vshrl.u32 %v1419, 16
      %v1607 = vrot.slane %v1605, 4
      %v1608 = vshll.u32 %v1419, 16
      %v1610 = vrot.slane %v1608, 5
      %v1611 = vor.u32 %v1607, %v1610
      %v1612 = vsel %vm1425, %v1603, %v1611
      %v1614 = vshrl.u32 %v1323, 16
      %v1616 = vrot.slane %v1614, 4
      %v1617 = vshll.u32 %v1323, 16
      %v1619 = vrot.slane %v1617, 5
      %v1620 = vor.u32 %v1616, %v1619
      %v1622 = vshrl.u32 %v1420, 16
      %v1624 = vrot.slane %v1622, 4
      %v1625 = vshll.u32 %v1420, 16
      %v1627 = vrot.slane %v1625, 5
      %v1628 = vor.u32 %v1624, %v1627
      %v1629 = vsel %vm1425, %v1620, %v1628
      %v1631 = vshrl.u32 %v1324, 16
      %v1633 = vrot.slane %v1631, 4
      %v1634 = vshll.u32 %v1324, 16
      %v1636 = vrot.slane %v1634, 5
      %v1637 = vor.u32 %v1633, %v1636
      %v1639 = vshrl.u32 %v1421, 16
      %v1641 = vrot.slane %v1639, 4
      %v1642 = vshll.u32 %v1421, 16
      %v1644 = vrot.slane %v1642, 5
      %v1645 = vor.u32 %v1641, %v1644
      %v1646 = vsel %vm1425, %v1637, %v1645
      %v1648 = vshrl.u32 %v1325, 16
      %v1650 = vrot.slane %v1648, 4
      %v1651 = vshll.u32 %v1325, 16
      %v1653 = vrot.slane %v1651, 5
      %v1654 = vor.u32 %v1650, %v1653
      %v1656 = vshrl.u32 %v1422, 16
      %v1658 = vrot.slane %v1656, 4
      %v1659 = vshll.u32 %v1422, 16
      %v1661 = vrot.slane %v1659, 5
      %v1662 = vor.u32 %v1658, %v1661
      %v1663 = vsel %vm1425, %v1654, %v1662
      %v1665 = vshrl.u32 %v1326, 16
      %v1667 = vrot.slane %v1665, 4
      %v1668 = vshll.u32 %v1326, 16
      %v1670 = vrot.slane %v1668, 5
      %v1671 = vor.u32 %v1667, %v1670
      %v1673 = vshrl.u32 %v1423, 16
      %v1675 = vrot.slane %v1673, 4
      %v1676 = vshll.u32 %v1423, 16
      %v1678 = vrot.slane %v1676, 5
      %v1679 = vor.u32 %v1675, %v1678
      %v1680 = vsel %vm1425, %v1671, %v1679
      %v1682 = vshrl.u32 %v1327, 16
      %v1684 = vrot.slane %v1682, 4
      %v1685 = vshll.u32 %v1327, 16
      %v1687 = vrot.slane %v1685, 5
      %v1688 = vor.u32 %v1684, %v1687
      %v1690 = vshrl.u32 %v1424, 16
      %v1692 = vrot.slane %v1690, 4
      %v1693 = vshll.u32 %v1424, 16
      %v1695 = vrot.slane %v1693, 5
      %v1696 = vor.u32 %v1692, %v1695
      %v1697 = vsel %vm1425, %v1688, %v1696
      %v1698 = vld [vmem:[%s973] sm:$0xf8]
      %v1699 = vld [vmem:[%s973 + $0x8] sm:$0xf]
      %v1700 = vld [vmem:[%s973 + $0x10] sm:$0xf8]
      %v1701 = vld [vmem:[%s973 + $0x18] sm:$0xf]
      %v1702 = vld [vmem:[%s973 + $0x20] sm:$0xf8]
      %v1703 = vld [vmem:[%s973 + $0x28] sm:$0xf]
      %v1704 = vld [vmem:[%s973 + $0x30] sm:$0xf8]
      %v1705 = vld [vmem:[%s973 + $0x38] sm:$0xf]
      %v1706 = vld [vmem:[%s973 + $0x40] sm:$0xf8]
      %v1707 = vld [vmem:[%s973 + $0x48] sm:$0xf]
      %v1708 = vld [vmem:[%s973 + $0x50] sm:$0xf8]
      %v1709 = vld [vmem:[%s973 + $0x58] sm:$0xf]
      %v1710 = vld [vmem:[%s973 + $0x60] sm:$0xf8]
      %v1711 = vld [vmem:[%s973 + $0x68] sm:$0xf]
      %v1712 = vld [vmem:[%s973 + $0x70] sm:$0xf8]
      %v1713 = vld [vmem:[%s973 + $0x78] sm:$0xf]
      %v1714 = vld [vmem:[%s973 + $0x80] sm:$0xf8]
      %v1715 = vld [vmem:[%s973 + $0x88] sm:$0xf]
      %v1716 = vld [vmem:[%s973 + $0x90] sm:$0xf8]
      %v1717 = vld [vmem:[%s973 + $0x98] sm:$0xf]
      %v1718 = vld [vmem:[%s973 + $0xa0] sm:$0xf8]
      %v1719 = vld [vmem:[%s973 + $0xa8] sm:$0xf]
      %v1720 = vld [vmem:[%s973 + $0xb0] sm:$0xf8]
      %v1721 = vld [vmem:[%s973 + $0xb8] sm:$0xf]
      %v1722 = vld [vmem:[%s973 + $0xc0] sm:$0xf8]
      %v1723 = vld [vmem:[%s973 + $0xc8] sm:$0xf]
      %v1724 = vld [vmem:[%s973 + $0xd0] sm:$0xf8]
      %v1725 = vld [vmem:[%s973 + $0xd8] sm:$0xf]
      %v1726 = vld [vmem:[%s973 + $0xe0] sm:$0xf8]
      %v1727 = vld [vmem:[%s973 + $0xe8] sm:$0xf]
      %v1728 = vld [vmem:[%s973 + $0xf0] sm:$0xf8]
      %v1729 = vld [vmem:[%s973 + $0xf8] sm:$0xf]
      %v1731 = vshrl.u32 %v1698, 16
      %v1733 = vrot.slane %v1731, 3
      %v1734 = vshll.u32 %v1698, 16
      %v1736 = vrot.slane %v1734, 4
      %v1737 = vor.u32 %v1733, %v1736
      %v1739 = vshrl.u32 %v1699, 16
      %v1741 = vrot.slane %v1739, 3
      %v1742 = vshll.u32 %v1699, 16
      %v1744 = vrot.slane %v1742, 4
      %v1745 = vor.u32 %v1741, %v1744
      %v1746 = vsel %vm344, %v1737, %v1745
      %v1748 = vshrl.u32 %v1700, 16
      %v1750 = vrot.slane %v1748, 3
      %v1751 = vshll.u32 %v1700, 16
      %v1753 = vrot.slane %v1751, 4
      %v1754 = vor.u32 %v1750, %v1753
      %v1756 = vshrl.u32 %v1701, 16
      %v1758 = vrot.slane %v1756, 3
      %v1759 = vshll.u32 %v1701, 16
      %v1761 = vrot.slane %v1759, 4
      %v1762 = vor.u32 %v1758, %v1761
      %v1763 = vsel %vm344, %v1754, %v1762
      %v1765 = vshrl.u32 %v1702, 16
      %v1767 = vrot.slane %v1765, 3
      %v1768 = vshll.u32 %v1702, 16
      %v1770 = vrot.slane %v1768, 4
      %v1771 = vor.u32 %v1767, %v1770
      %v1773 = vshrl.u32 %v1703, 16
      %v1775 = vrot.slane %v1773, 3
      %v1776 = vshll.u32 %v1703, 16
      %v1778 = vrot.slane %v1776, 4
      %v1779 = vor.u32 %v1775, %v1778
      %v1780 = vsel %vm344, %v1771, %v1779
      %v1782 = vshrl.u32 %v1704, 16
      %v1784 = vrot.slane %v1782, 3
      %v1785 = vshll.u32 %v1704, 16
      %v1787 = vrot.slane %v1785, 4
      %v1788 = vor.u32 %v1784, %v1787
      %v1790 = vshrl.u32 %v1705, 16
      %v1792 = vrot.slane %v1790, 3
      %v1793 = vshll.u32 %v1705, 16
      %v1795 = vrot.slane %v1793, 4
      %v1796 = vor.u32 %v1792, %v1795
      %v1797 = vsel %vm344, %v1788, %v1796
      %v1799 = vshrl.u32 %v1706, 16
      %v1801 = vrot.slane %v1799, 3
      %v1802 = vshll.u32 %v1706, 16
      %v1804 = vrot.slane %v1802, 4
      %v1805 = vor.u32 %v1801, %v1804
      %v1807 = vshrl.u32 %v1707, 16
      %v1809 = vrot.slane %v1807, 3
      %v1810 = vshll.u32 %v1707, 16
      %v1812 = vrot.slane %v1810, 4
      %v1813 = vor.u32 %v1809, %v1812
      %v1814 = vsel %vm344, %v1805, %v1813
      %v1816 = vshrl.u32 %v1708, 16
      %v1818 = vrot.slane %v1816, 3
      %v1819 = vshll.u32 %v1708, 16
      %v1821 = vrot.slane %v1819, 4
      %v1822 = vor.u32 %v1818, %v1821
      %v1824 = vshrl.u32 %v1709, 16
      %v1826 = vrot.slane %v1824, 3
      %v1827 = vshll.u32 %v1709, 16
      %v1829 = vrot.slane %v1827, 4
      %v1830 = vor.u32 %v1826, %v1829
      %v1831 = vsel %vm344, %v1822, %v1830
      %v1833 = vshrl.u32 %v1710, 16
      %v1835 = vrot.slane %v1833, 3
      %v1836 = vshll.u32 %v1710, 16
      %v1838 = vrot.slane %v1836, 4
      %v1839 = vor.u32 %v1835, %v1838
      %v1841 = vshrl.u32 %v1711, 16
      %v1843 = vrot.slane %v1841, 3
      %v1844 = vshll.u32 %v1711, 16
      %v1846 = vrot.slane %v1844, 4
      %v1847 = vor.u32 %v1843, %v1846
      %v1848 = vsel %vm344, %v1839, %v1847
      %v1850 = vshrl.u32 %v1712, 16
      %v1852 = vrot.slane %v1850, 3
      %v1853 = vshll.u32 %v1712, 16
      %v1855 = vrot.slane %v1853, 4
      %v1856 = vor.u32 %v1852, %v1855
      %v1858 = vshrl.u32 %v1713, 16
      %v1860 = vrot.slane %v1858, 3
      %v1861 = vshll.u32 %v1713, 16
      %v1863 = vrot.slane %v1861, 4
      %v1864 = vor.u32 %v1860, %v1863
      %v1865 = vsel %vm344, %v1856, %v1864
      %v1867 = vshrl.u32 %v1714, 16
      %v1869 = vrot.slane %v1867, 3
      %v1870 = vshll.u32 %v1714, 16
      %v1872 = vrot.slane %v1870, 4
      %v1873 = vor.u32 %v1869, %v1872
      %v1875 = vshrl.u32 %v1715, 16
      %v1877 = vrot.slane %v1875, 3
      %v1878 = vshll.u32 %v1715, 16
      %v1880 = vrot.slane %v1878, 4
      %v1881 = vor.u32 %v1877, %v1880
      %v1882 = vsel %vm344, %v1873, %v1881
      %v1884 = vshrl.u32 %v1716, 16
      %v1886 = vrot.slane %v1884, 3
      %v1887 = vshll.u32 %v1716, 16
      %v1889 = vrot.slane %v1887, 4
      %v1890 = vor.u32 %v1886, %v1889
      %v1892 = vshrl.u32 %v1717, 16
      %v1894 = vrot.slane %v1892, 3
      %v1895 = vshll.u32 %v1717, 16
      %v1897 = vrot.slane %v1895, 4
      %v1898 = vor.u32 %v1894, %v1897
      %v1899 = vsel %vm344, %v1890, %v1898
      %v1901 = vshrl.u32 %v1718, 16
      %v1903 = vrot.slane %v1901, 3
      %v1904 = vshll.u32 %v1718, 16
      %v1906 = vrot.slane %v1904, 4
      %v1907 = vor.u32 %v1903, %v1906
      %v1909 = vshrl.u32 %v1719, 16
      %v1911 = vrot.slane %v1909, 3
      %v1912 = vshll.u32 %v1719, 16
      %v1914 = vrot.slane %v1912, 4
      %v1915 = vor.u32 %v1911, %v1914
      %v1916 = vsel %vm344, %v1907, %v1915
      %v1918 = vshrl.u32 %v1720, 16
      %v1920 = vrot.slane %v1918, 3
      %v1921 = vshll.u32 %v1720, 16
      %v1923 = vrot.slane %v1921, 4
      %v1924 = vor.u32 %v1920, %v1923
      %v1926 = vshrl.u32 %v1721, 16
      %v1928 = vrot.slane %v1926, 3
      %v1929 = vshll.u32 %v1721, 16
      %v1931 = vrot.slane %v1929, 4
      %v1932 = vor.u32 %v1928, %v1931
      %v1933 = vsel %vm344, %v1924, %v1932
      %v1935 = vshrl.u32 %v1722, 16
      %v1937 = vrot.slane %v1935, 3
      %v1938 = vshll.u32 %v1722, 16
      %v1940 = vrot.slane %v1938, 4
      %v1941 = vor.u32 %v1937, %v1940
      %v1943 = vshrl.u32 %v1723, 16
      %v1945 = vrot.slane %v1943, 3
      %v1946 = vshll.u32 %v1723, 16
      %v1948 = vrot.slane %v1946, 4
      %v1949 = vor.u32 %v1945, %v1948
      %v1950 = vsel %vm344, %v1941, %v1949
      %v1952 = vshrl.u32 %v1724, 16
      %v1954 = vrot.slane %v1952, 3
      %v1955 = vshll.u32 %v1724, 16
      %v1957 = vrot.slane %v1955, 4
      %v1958 = vor.u32 %v1954, %v1957
      %v1960 = vshrl.u32 %v1725, 16
      %v1962 = vrot.slane %v1960, 3
      %v1963 = vshll.u32 %v1725, 16
      %v1965 = vrot.slane %v1963, 4
      %v1966 = vor.u32 %v1962, %v1965
      %v1967 = vsel %vm344, %v1958, %v1966
      %v1969 = vshrl.u32 %v1726, 16
      %v1971 = vrot.slane %v1969, 3
      %v1972 = vshll.u32 %v1726, 16
      %v1974 = vrot.slane %v1972, 4
      %v1975 = vor.u32 %v1971, %v1974
      %v1977 = vshrl.u32 %v1727, 16
      %v1979 = vrot.slane %v1977, 3
      %v1980 = vshll.u32 %v1727, 16
      %v1982 = vrot.slane %v1980, 4
      %v1983 = vor.u32 %v1979, %v1982
      %v1984 = vsel %vm344, %v1975, %v1983
      %v1986 = vshrl.u32 %v1728, 16
      %v1988 = vrot.slane %v1986, 3
      %v1989 = vshll.u32 %v1728, 16
      %v1991 = vrot.slane %v1989, 4
      %v1992 = vor.u32 %v1988, %v1991
      %v1994 = vshrl.u32 %v1729, 16
      %v1996 = vrot.slane %v1994, 3
      %v1997 = vshll.u32 %v1729, 16
      %v1999 = vrot.slane %v1997, 4
      %v2000 = vor.u32 %v1996, %v1999
      %v2001 = vsel %vm344, %v1992, %v2000
      %v2002 = vld [vmem:[%s973] sm:$0xf0]
      %v2003 = vld [vmem:[%s973 + $0x10] sm:$0xf0]
      %v2004 = vld [vmem:[%s973 + $0x20] sm:$0xf0]
      %v2005 = vld [vmem:[%s973 + $0x30] sm:$0xf0]
      %v2006 = vld [vmem:[%s973 + $0x40] sm:$0xf0]
      %v2007 = vld [vmem:[%s973 + $0x50] sm:$0xf0]
      %v2008 = vld [vmem:[%s973 + $0x60] sm:$0xf0]
      %v2009 = vld [vmem:[%s973 + $0x70] sm:$0xf0]
      %v2010 = vld [vmem:[%s973 + $0x80] sm:$0xf0]
      %v2011 = vld [vmem:[%s973 + $0x90] sm:$0xf0]
      %v2012 = vld [vmem:[%s973 + $0xa0] sm:$0xf0]
      %v2013 = vld [vmem:[%s973 + $0xb0] sm:$0xf0]
      %v2014 = vld [vmem:[%s973 + $0xc0] sm:$0xf0]
      %v2015 = vld [vmem:[%s973 + $0xd0] sm:$0xf0]
      %v2016 = vld [vmem:[%s973 + $0xe0] sm:$0xf0]
      %v2017 = vld [vmem:[%s973 + $0xf0] sm:$0xf0]
      %v2050 = vrot.slane %v2002, 4
      %v2051 = vrot.slane %v1699, 4
      %v2052 = vsel %vm1360, %v2050, %v2051
      %v2053 = vrot.slane %v2003, 4
      %v2054 = vrot.slane %v1701, 4
      %v2055 = vsel %vm1360, %v2053, %v2054
      %v2056 = vrot.slane %v2004, 4
      %v2057 = vrot.slane %v1703, 4
      %v2058 = vsel %vm1360, %v2056, %v2057
      %v2059 = vrot.slane %v2005, 4
      %v2060 = vrot.slane %v1705, 4
      %v2061 = vsel %vm1360, %v2059, %v2060
      %v2062 = vrot.slane %v2006, 4
      %v2063 = vrot.slane %v1707, 4
      %v2064 = vsel %vm1360, %v2062, %v2063
      %v2065 = vrot.slane %v2007, 4
      %v2066 = vrot.slane %v1709, 4
      %v2067 = vsel %vm1360, %v2065, %v2066
      %v2068 = vrot.slane %v2008, 4
      %v2069 = vrot.slane %v1711, 4
      %v2070 = vsel %vm1360, %v2068, %v2069
      %v2071 = vrot.slane %v2009, 4
      %v2072 = vrot.slane %v1713, 4
      %v2073 = vsel %vm1360, %v2071, %v2072
      %v2074 = vrot.slane %v2010, 4
      %v2075 = vrot.slane %v1715, 4
      %v2076 = vsel %vm1360, %v2074, %v2075
      %v2077 = vrot.slane %v2011, 4
      %v2078 = vrot.slane %v1717, 4
      %v2079 = vsel %vm1360, %v2077, %v2078
      %v2080 = vrot.slane %v2012, 4
      %v2081 = vrot.slane %v1719, 4
      %v2082 = vsel %vm1360, %v2080, %v2081
      %v2083 = vrot.slane %v2013, 4
      %v2084 = vrot.slane %v1721, 4
      %v2085 = vsel %vm1360, %v2083, %v2084
      %v2086 = vrot.slane %v2014, 4
      %v2087 = vrot.slane %v1723, 4
      %v2088 = vsel %vm1360, %v2086, %v2087
      %v2089 = vrot.slane %v2015, 4
      %v2090 = vrot.slane %v1725, 4
      %v2091 = vsel %vm1360, %v2089, %v2090
      %v2092 = vrot.slane %v2016, 4
      %v2093 = vrot.slane %v1727, 4
      %v2094 = vsel %vm1360, %v2092, %v2093
      %v2095 = vrot.slane %v2017, 4
      %v2096 = vrot.slane %v1729, 4
      %v2097 = vsel %vm1360, %v2095, %v2096
      %v2098 = vld [vmem:[%s973 + $0x8] sm:$0x1f]
      %v2099 = vld [vmem:[%s973 + $0x18] sm:$0x1f]
      %v2100 = vld [vmem:[%s973 + $0x28] sm:$0x1f]
      %v2101 = vld [vmem:[%s973 + $0x38] sm:$0x1f]
      %v2102 = vld [vmem:[%s973 + $0x48] sm:$0x1f]
      %v2103 = vld [vmem:[%s973 + $0x58] sm:$0x1f]
      %v2104 = vld [vmem:[%s973 + $0x68] sm:$0x1f]
      %v2105 = vld [vmem:[%s973 + $0x78] sm:$0x1f]
      %v2106 = vld [vmem:[%s973 + $0x88] sm:$0x1f]
      %v2107 = vld [vmem:[%s973 + $0x98] sm:$0x1f]
      %v2108 = vld [vmem:[%s973 + $0xa8] sm:$0x1f]
      %v2109 = vld [vmem:[%s973 + $0xb8] sm:$0x1f]
      %v2110 = vld [vmem:[%s973 + $0xc8] sm:$0x1f]
      %v2111 = vld [vmem:[%s973 + $0xd8] sm:$0x1f]
      %v2112 = vld [vmem:[%s973 + $0xe8] sm:$0x1f]
      %v2113 = vld [vmem:[%s973 + $0xf8] sm:$0x1f]
      %v2115 = vshrl.u32 %v2002, 16
      %v2117 = vrot.slane %v2115, 4
      %v2118 = vshll.u32 %v2002, 16
      %v2120 = vrot.slane %v2118, 5
      %v2121 = vor.u32 %v2117, %v2120
      %v2123 = vshrl.u32 %v2098, 16
      %v2125 = vrot.slane %v2123, 4
      %v2126 = vshll.u32 %v2098, 16
      %v2128 = vrot.slane %v2126, 5
      %v2129 = vor.u32 %v2125, %v2128
      %v2130 = vsel %vm1425, %v2121, %v2129
      %v2132 = vshrl.u32 %v2003, 16
      %v2134 = vrot.slane %v2132, 4
      %v2135 = vshll.u32 %v2003, 16
      %v2137 = vrot.slane %v2135, 5
      %v2138 = vor.u32 %v2134, %v2137
      %v2140 = vshrl.u32 %v2099, 16
      %v2142 = vrot.slane %v2140, 4
      %v2143 = vshll.u32 %v2099, 16
      %v2145 = vrot.slane %v2143, 5
      %v2146 = vor.u32 %v2142, %v2145
      %v2147 = vsel %vm1425, %v2138, %v2146
      %v2149 = vshrl.u32 %v2004, 16
      %v2151 = vrot.slane %v2149, 4
      %v2152 = vshll.u32 %v2004, 16
      %v2154 = vrot.slane %v2152, 5
      %v2155 = vor.u32 %v2151, %v2154
      %v2157 = vshrl.u32 %v2100, 16
      %v2159 = vrot.slane %v2157, 4
      %v2160 = vshll.u32 %v2100, 16
      %v2162 = vrot.slane %v2160, 5
      %v2163 = vor.u32 %v2159, %v2162
      %v2164 = vsel %vm1425, %v2155, %v2163
      %v2166 = vshrl.u32 %v2005, 16
      %v2168 = vrot.slane %v2166, 4
      %v2169 = vshll.u32 %v2005, 16
      %v2171 = vrot.slane %v2169, 5
      %v2172 = vor.u32 %v2168, %v2171
      %v2174 = vshrl.u32 %v2101, 16
      %v2176 = vrot.slane %v2174, 4
      %v2177 = vshll.u32 %v2101, 16
      %v2179 = vrot.slane %v2177, 5
      %v2180 = vor.u32 %v2176, %v2179
      %v2181 = vsel %vm1425, %v2172, %v2180
      %v2183 = vshrl.u32 %v2006, 16
      %v2185 = vrot.slane %v2183, 4
      %v2186 = vshll.u32 %v2006, 16
      %v2188 = vrot.slane %v2186, 5
      %v2189 = vor.u32 %v2185, %v2188
      %v2191 = vshrl.u32 %v2102, 16
      %v2193 = vrot.slane %v2191, 4
      %v2194 = vshll.u32 %v2102, 16
      %v2196 = vrot.slane %v2194, 5
      %v2197 = vor.u32 %v2193, %v2196
      %v2198 = vsel %vm1425, %v2189, %v2197
      %v2200 = vshrl.u32 %v2007, 16
      %v2202 = vrot.slane %v2200, 4
      %v2203 = vshll.u32 %v2007, 16
      %v2205 = vrot.slane %v2203, 5
      %v2206 = vor.u32 %v2202, %v2205
      %v2208 = vshrl.u32 %v2103, 16
      %v2210 = vrot.slane %v2208, 4
      %v2211 = vshll.u32 %v2103, 16
      %v2213 = vrot.slane %v2211, 5
      %v2214 = vor.u32 %v2210, %v2213
      %v2215 = vsel %vm1425, %v2206, %v2214
      %v2217 = vshrl.u32 %v2008, 16
      %v2219 = vrot.slane %v2217, 4
      %v2220 = vshll.u32 %v2008, 16
      %v2222 = vrot.slane %v2220, 5
      %v2223 = vor.u32 %v2219, %v2222
      %v2225 = vshrl.u32 %v2104, 16
      %v2227 = vrot.slane %v2225, 4
      %v2228 = vshll.u32 %v2104, 16
      %v2230 = vrot.slane %v2228, 5
      %v2231 = vor.u32 %v2227, %v2230
      %v2232 = vsel %vm1425, %v2223, %v2231
      %v2234 = vshrl.u32 %v2009, 16
      %v2236 = vrot.slane %v2234, 4
      %v2237 = vshll.u32 %v2009, 16
      %v2239 = vrot.slane %v2237, 5
      %v2240 = vor.u32 %v2236, %v2239
      %v2242 = vshrl.u32 %v2105, 16
      %v2244 = vrot.slane %v2242, 4
      %v2245 = vshll.u32 %v2105, 16
      %v2247 = vrot.slane %v2245, 5
      %v2248 = vor.u32 %v2244, %v2247
      %v2249 = vsel %vm1425, %v2240, %v2248
      %v2251 = vshrl.u32 %v2010, 16
      %v2253 = vrot.slane %v2251, 4
      %v2254 = vshll.u32 %v2010, 16
      %v2256 = vrot.slane %v2254, 5
      %v2257 = vor.u32 %v2253, %v2256
      %v2259 = vshrl.u32 %v2106, 16
      %v2261 = vrot.slane %v2259, 4
      %v2262 = vshll.u32 %v2106, 16
      %v2264 = vrot.slane %v2262, 5
      %v2265 = vor.u32 %v2261, %v2264
      %v2266 = vsel %vm1425, %v2257, %v2265
      %v2268 = vshrl.u32 %v2011, 16
      %v2270 = vrot.slane %v2268, 4
      %v2271 = vshll.u32 %v2011, 16
      %v2273 = vrot.slane %v2271, 5
      %v2274 = vor.u32 %v2270, %v2273
      %v2276 = vshrl.u32 %v2107, 16
      %v2278 = vrot.slane %v2276, 4
      %v2279 = vshll.u32 %v2107, 16
      %v2281 = vrot.slane %v2279, 5
      %v2282 = vor.u32 %v2278, %v2281
      %v2283 = vsel %vm1425, %v2274, %v2282
      %v2285 = vshrl.u32 %v2012, 16
      %v2287 = vrot.slane %v2285, 4
      %v2288 = vshll.u32 %v2012, 16
      %v2290 = vrot.slane %v2288, 5
      %v2291 = vor.u32 %v2287, %v2290
      %v2293 = vshrl.u32 %v2108, 16
      %v2295 = vrot.slane %v2293, 4
      %v2296 = vshll.u32 %v2108, 16
      %v2298 = vrot.slane %v2296, 5
      %v2299 = vor.u32 %v2295, %v2298
      %v2300 = vsel %vm1425, %v2291, %v2299
      %v2302 = vshrl.u32 %v2013, 16
      %v2304 = vrot.slane %v2302, 4
      %v2305 = vshll.u32 %v2013, 16
      %v2307 = vrot.slane %v2305, 5
      %v2308 = vor.u32 %v2304, %v2307
      %v2310 = vshrl.u32 %v2109, 16
      %v2312 = vrot.slane %v2310, 4
      %v2313 = vshll.u32 %v2109, 16
      %v2315 = vrot.slane %v2313, 5
      %v2316 = vor.u32 %v2312, %v2315
      %v2317 = vsel %vm1425, %v2308, %v2316
      %v2319 = vshrl.u32 %v2014, 16
      %v2321 = vrot.slane %v2319, 4
      %v2322 = vshll.u32 %v2014, 16
      %v2324 = vrot.slane %v2322, 5
      %v2325 = vor.u32 %v2321, %v2324
      %v2327 = vshrl.u32 %v2110, 16
      %v2329 = vrot.slane %v2327, 4
      %v2330 = vshll.u32 %v2110, 16
      %v2332 = vrot.slane %v2330, 5
      %v2333 = vor.u32 %v2329, %v2332
      %v2334 = vsel %vm1425, %v2325, %v2333
      %v2336 = vshrl.u32 %v2015, 16
      %v2338 = vrot.slane %v2336, 4
      %v2339 = vshll.u32 %v2015, 16
      %v2341 = vrot.slane %v2339, 5
      %v2342 = vor.u32 %v2338, %v2341
      %v2344 = vshrl.u32 %v2111, 16
      %v2346 = vrot.slane %v2344, 4
      %v2347 = vshll.u32 %v2111, 16
      %v2349 = vrot.slane %v2347, 5
      %v2350 = vor.u32 %v2346, %v2349
      %v2351 = vsel %vm1425, %v2342, %v2350
      %v2353 = vshrl.u32 %v2016, 16
      %v2355 = vrot.slane %v2353, 4
      %v2356 = vshll.u32 %v2016, 16
      %v2358 = vrot.slane %v2356, 5
      %v2359 = vor.u32 %v2355, %v2358
      %v2361 = vshrl.u32 %v2112, 16
      %v2363 = vrot.slane %v2361, 4
      %v2364 = vshll.u32 %v2112, 16
      %v2366 = vrot.slane %v2364, 5
      %v2367 = vor.u32 %v2363, %v2366
      %v2368 = vsel %vm1425, %v2359, %v2367
      %v2370 = vshrl.u32 %v2017, 16
      %v2372 = vrot.slane %v2370, 4
      %v2373 = vshll.u32 %v2017, 16
      %v2375 = vrot.slane %v2373, 5
      %v2376 = vor.u32 %v2372, %v2375
      %v2378 = vshrl.u32 %v2113, 16
      %v2380 = vrot.slane %v2378, 4
      %v2381 = vshll.u32 %v2113, 16
      %v2383 = vrot.slane %v2381, 5
      %v2384 = vor.u32 %v2380, %v2383
      %v2385 = vsel %vm1425, %v2376, %v2384
      %s2386 = scalar_lea.vmem [#allocation2], 32
      %v2387 = vld [vmem:[%s2386] sm:$0xf8]
      %v2388 = vld [vmem:[%s2386 + $0x8] sm:$0xf]
      %v2389 = vld [vmem:[%s2386 + $0x10] sm:$0xf8]
      %v2390 = vld [vmem:[%s2386 + $0x18] sm:$0xf]
      %v2391 = vld [vmem:[%s2386 + $0x20] sm:$0xf8]
      %v2392 = vld [vmem:[%s2386 + $0x28] sm:$0xf]
      %v2393 = vld [vmem:[%s2386 + $0x30] sm:$0xf8]
      %v2394 = vld [vmem:[%s2386 + $0x38] sm:$0xf]
      %v2395 = vld [vmem:[%s2386 + $0x40] sm:$0xf8]
      %v2396 = vld [vmem:[%s2386 + $0x48] sm:$0xf]
      %v2397 = vld [vmem:[%s2386 + $0x50] sm:$0xf8]
      %v2398 = vld [vmem:[%s2386 + $0x58] sm:$0xf]
      %v2399 = vld [vmem:[%s2386 + $0x60] sm:$0xf8]
      %v2400 = vld [vmem:[%s2386 + $0x68] sm:$0xf]
      %v2401 = vld [vmem:[%s2386 + $0x70] sm:$0xf8]
      %v2402 = vld [vmem:[%s2386 + $0x78] sm:$0xf]
      %v2403 = vld [vmem:[%s2386 + $0x80] sm:$0xf8]
      %v2404 = vld [vmem:[%s2386 + $0x88] sm:$0xf]
      %v2405 = vld [vmem:[%s2386 + $0x90] sm:$0xf8]
      %v2406 = vld [vmem:[%s2386 + $0x98] sm:$0xf]
      %v2407 = vld [vmem:[%s2386 + $0xa0] sm:$0xf8]
      %v2408 = vld [vmem:[%s2386 + $0xa8] sm:$0xf]
      %v2409 = vld [vmem:[%s2386 + $0xb0] sm:$0xf8]
      %v2410 = vld [vmem:[%s2386 + $0xb8] sm:$0xf]
      %v2411 = vld [vmem:[%s2386 + $0xc0] sm:$0xf8]
      %v2412 = vld [vmem:[%s2386 + $0xc8] sm:$0xf]
      %v2413 = vld [vmem:[%s2386 + $0xd0] sm:$0xf8]
      %v2414 = vld [vmem:[%s2386 + $0xd8] sm:$0xf]
      %v2415 = vld [vmem:[%s2386 + $0xe0] sm:$0xf8]
      %v2416 = vld [vmem:[%s2386 + $0xe8] sm:$0xf]
      %v2417 = vld [vmem:[%s2386 + $0xf0] sm:$0xf8]
      %v2418 = vld [vmem:[%s2386 + $0xf8] sm:$0xf]
      %v2420 = vshrl.u32 %v2387, 16
      %v2422 = vrot.slane %v2420, 3
      %v2423 = vshll.u32 %v2387, 16
      %v2425 = vrot.slane %v2423, 4
      %v2426 = vor.u32 %v2422, %v2425
      %v2428 = vshrl.u32 %v2388, 16
      %v2430 = vrot.slane %v2428, 3
      %v2431 = vshll.u32 %v2388, 16
      %v2433 = vrot.slane %v2431, 4
      %v2434 = vor.u32 %v2430, %v2433
      %v2435 = vsel %vm344, %v2426, %v2434
      %v2437 = vshrl.u32 %v2389, 16
      %v2439 = vrot.slane %v2437, 3
      %v2440 = vshll.u32 %v2389, 16
      %v2442 = vrot.slane %v2440, 4
      %v2443 = vor.u32 %v2439, %v2442
      %v2445 = vshrl.u32 %v2390, 16
      %v2447 = vrot.slane %v2445, 3
      %v2448 = vshll.u32 %v2390, 16
      %v2450 = vrot.slane %v2448, 4
      %v2451 = vor.u32 %v2447, %v2450
      %v2452 = vsel %vm344, %v2443, %v2451
      %v2454 = vshrl.u32 %v2391, 16
      %v2456 = vrot.slane %v2454, 3
      %v2457 = vshll.u32 %v2391, 16
      %v2459 = vrot.slane %v2457, 4
      %v2460 = vor.u32 %v2456, %v2459
      %v2462 = vshrl.u32 %v2392, 16
      %v2464 = vrot.slane %v2462, 3
      %v2465 = vshll.u32 %v2392, 16
      %v2467 = vrot.slane %v2465, 4
      %v2468 = vor.u32 %v2464, %v2467
      %v2469 = vsel %vm344, %v2460, %v2468
      %v2471 = vshrl.u32 %v2393, 16
      %v2473 = vrot.slane %v2471, 3
      %v2474 = vshll.u32 %v2393, 16
      %v2476 = vrot.slane %v2474, 4
      %v2477 = vor.u32 %v2473, %v2476
      %v2479 = vshrl.u32 %v2394, 16
      %v2481 = vrot.slane %v2479, 3
      %v2482 = vshll.u32 %v2394, 16
      %v2484 = vrot.slane %v2482, 4
      %v2485 = vor.u32 %v2481, %v2484
      %v2486 = vsel %vm344, %v2477, %v2485
      %v2488 = vshrl.u32 %v2395, 16
      %v2490 = vrot.slane %v2488, 3
      %v2491 = vshll.u32 %v2395, 16
      %v2493 = vrot.slane %v2491, 4
      %v2494 = vor.u32 %v2490, %v2493
      %v2496 = vshrl.u32 %v2396, 16
      %v2498 = vrot.slane %v2496, 3
      %v2499 = vshll.u32 %v2396, 16
      %v2501 = vrot.slane %v2499, 4
      %v2502 = vor.u32 %v2498, %v2501
      %v2503 = vsel %vm344, %v2494, %v2502
      %v2505 = vshrl.u32 %v2397, 16
      %v2507 = vrot.slane %v2505, 3
      %v2508 = vshll.u32 %v2397, 16
      %v2510 = vrot.slane %v2508, 4
      %v2511 = vor.u32 %v2507, %v2510
      %v2513 = vshrl.u32 %v2398, 16
      %v2515 = vrot.slane %v2513, 3
      %v2516 = vshll.u32 %v2398, 16
      %v2518 = vrot.slane %v2516, 4
      %v2519 = vor.u32 %v2515, %v2518
      %v2520 = vsel %vm344, %v2511, %v2519
      %v2522 = vshrl.u32 %v2399, 16
      %v2524 = vrot.slane %v2522, 3
      %v2525 = vshll.u32 %v2399, 16
      %v2527 = vrot.slane %v2525, 4
      %v2528 = vor.u32 %v2524, %v2527
      %v2530 = vshrl.u32 %v2400, 16
      %v2532 = vrot.slane %v2530, 3
      %v2533 = vshll.u32 %v2400, 16
      %v2535 = vrot.slane %v2533, 4
      %v2536 = vor.u32 %v2532, %v2535
      %v2537 = vsel %vm344, %v2528, %v2536
      %v2539 = vshrl.u32 %v2401, 16
      %v2541 = vrot.slane %v2539, 3
      %v2542 = vshll.u32 %v2401, 16
      %v2544 = vrot.slane %v2542, 4
      %v2545 = vor.u32 %v2541, %v2544
      %v2547 = vshrl.u32 %v2402, 16
      %v2549 = vrot.slane %v2547, 3
      %v2550 = vshll.u32 %v2402, 16
      %v2552 = vrot.slane %v2550, 4
      %v2553 = vor.u32 %v2549, %v2552
      %v2554 = vsel %vm344, %v2545, %v2553
      %v2556 = vshrl.u32 %v2403, 16
      %v2558 = vrot.slane %v2556, 3
      %v2559 = vshll.u32 %v2403, 16
      %v2561 = vrot.slane %v2559, 4
      %v2562 = vor.u32 %v2558, %v2561
      %v2564 = vshrl.u32 %v2404, 16
      %v2566 = vrot.slane %v2564, 3
      %v2567 = vshll.u32 %v2404, 16
      %v2569 = vrot.slane %v2567, 4
      %v2570 = vor.u32 %v2566, %v2569
      %v2571 = vsel %vm344, %v2562, %v2570
      %v2573 = vshrl.u32 %v2405, 16
      %v2575 = vrot.slane %v2573, 3
      %v2576 = vshll.u32 %v2405, 16
      %v2578 = vrot.slane %v2576, 4
      %v2579 = vor.u32 %v2575, %v2578
      %v2581 = vshrl.u32 %v2406, 16
      %v2583 = vrot.slane %v2581, 3
      %v2584 = vshll.u32 %v2406, 16
      %v2586 = vrot.slane %v2584, 4
      %v2587 = vor.u32 %v2583, %v2586
      %v2588 = vsel %vm344, %v2579, %v2587
      %v2590 = vshrl.u32 %v2407, 16
      %v2592 = vrot.slane %v2590, 3
      %v2593 = vshll.u32 %v2407, 16
      %v2595 = vrot.slane %v2593, 4
      %v2596 = vor.u32 %v2592, %v2595
      %v2598 = vshrl.u32 %v2408, 16
      %v2600 = vrot.slane %v2598, 3
      %v2601 = vshll.u32 %v2408, 16
      %v2603 = vrot.slane %v2601, 4
      %v2604 = vor.u32 %v2600, %v2603
      %v2605 = vsel %vm344, %v2596, %v2604
      %v2607 = vshrl.u32 %v2409, 16
      %v2609 = vrot.slane %v2607, 3
      %v2610 = vshll.u32 %v2409, 16
      %v2612 = vrot.slane %v2610, 4
      %v2613 = vor.u32 %v2609, %v2612
      %v2615 = vshrl.u32 %v2410, 16
      %v2617 = vrot.slane %v2615, 3
      %v2618 = vshll.u32 %v2410, 16
      %v2620 = vrot.slane %v2618, 4
      %v2621 = vor.u32 %v2617, %v2620
      %v2622 = vsel %vm344, %v2613, %v2621
      %v2624 = vshrl.u32 %v2411, 16
      %v2626 = vrot.slane %v2624, 3
      %v2627 = vshll.u32 %v2411, 16
      %v2629 = vrot.slane %v2627, 4
      %v2630 = vor.u32 %v2626, %v2629
      %v2632 = vshrl.u32 %v2412, 16
      %v2634 = vrot.slane %v2632, 3
      %v2635 = vshll.u32 %v2412, 16
      %v2637 = vrot.slane %v2635, 4
      %v2638 = vor.u32 %v2634, %v2637
      %v2639 = vsel %vm344, %v2630, %v2638
      %v2641 = vshrl.u32 %v2413, 16
      %v2643 = vrot.slane %v2641, 3
      %v2644 = vshll.u32 %v2413, 16
      %v2646 = vrot.slane %v2644, 4
      %v2647 = vor.u32 %v2643, %v2646
      %v2649 = vshrl.u32 %v2414, 16
      %v2651 = vrot.slane %v2649, 3
      %v2652 = vshll.u32 %v2414, 16
      %v2654 = vrot.slane %v2652, 4
      %v2655 = vor.u32 %v2651, %v2654
      %v2656 = vsel %vm344, %v2647, %v2655
      %v2658 = vshrl.u32 %v2415, 16
      %v2660 = vrot.slane %v2658, 3
      %v2661 = vshll.u32 %v2415, 16
      %v2663 = vrot.slane %v2661, 4
      %v2664 = vor.u32 %v2660, %v2663
      %v2666 = vshrl.u32 %v2416, 16
      %v2668 = vrot.slane %v2666, 3
      %v2669 = vshll.u32 %v2416, 16
      %v2671 = vrot.slane %v2669, 4
      %v2672 = vor.u32 %v2668, %v2671
      %v2673 = vsel %vm344, %v2664, %v2672
      %v2675 = vshrl.u32 %v2417, 16
      %v2677 = vrot.slane %v2675, 3
      %v2678 = vshll.u32 %v2417, 16
      %v2680 = vrot.slane %v2678, 4
      %v2681 = vor.u32 %v2677, %v2680
      %v2683 = vshrl.u32 %v2418, 16
      %v2685 = vrot.slane %v2683, 3
      %v2686 = vshll.u32 %v2418, 16
      %v2688 = vrot.slane %v2686, 4
      %v2689 = vor.u32 %v2685, %v2688
      %v2690 = vsel %vm344, %v2681, %v2689
      %v2691 = vld [vmem:[%s2386] sm:$0xf0]
      %v2692 = vld [vmem:[%s2386 + $0x10] sm:$0xf0]
      %v2693 = vld [vmem:[%s2386 + $0x20] sm:$0xf0]
      %v2694 = vld [vmem:[%s2386 + $0x30] sm:$0xf0]
      %v2695 = vld [vmem:[%s2386 + $0x40] sm:$0xf0]
      %v2696 = vld [vmem:[%s2386 + $0x50] sm:$0xf0]
      %v2697 = vld [vmem:[%s2386 + $0x60] sm:$0xf0]
      %v2698 = vld [vmem:[%s2386 + $0x70] sm:$0xf0]
      %v2699 = vld [vmem:[%s2386 + $0x80] sm:$0xf0]
      %v2700 = vld [vmem:[%s2386 + $0x90] sm:$0xf0]
      %v2701 = vld [vmem:[%s2386 + $0xa0] sm:$0xf0]
      %v2702 = vld [vmem:[%s2386 + $0xb0] sm:$0xf0]
      %v2703 = vld [vmem:[%s2386 + $0xc0] sm:$0xf0]
      %v2704 = vld [vmem:[%s2386 + $0xd0] sm:$0xf0]
      %v2705 = vld [vmem:[%s2386 + $0xe0] sm:$0xf0]
      %v2706 = vld [vmem:[%s2386 + $0xf0] sm:$0xf0]
      %v2739 = vrot.slane %v2691, 4
      %v2740 = vrot.slane %v2388, 4
      %v2741 = vsel %vm1360, %v2739, %v2740
      %v2742 = vrot.slane %v2692, 4
      %v2743 = vrot.slane %v2390, 4
      %v2744 = vsel %vm1360, %v2742, %v2743
      %v2745 = vrot.slane %v2693, 4
      %v2746 = vrot.slane %v2392, 4
      %v2747 = vsel %vm1360, %v2745, %v2746
      %v2748 = vrot.slane %v2694, 4
      %v2749 = vrot.slane %v2394, 4
      %v2750 = vsel %vm1360, %v2748, %v2749
      %v2751 = vrot.slane %v2695, 4
      %v2752 = vrot.slane %v2396, 4
      %v2753 = vsel %vm1360, %v2751, %v2752
      %v2754 = vrot.slane %v2696, 4
      %v2755 = vrot.slane %v2398, 4
      %v2756 = vsel %vm1360, %v2754, %v2755
      %v2757 = vrot.slane %v2697, 4
      %v2758 = vrot.slane %v2400, 4
      %v2759 = vsel %vm1360, %v2757, %v2758
      %v2760 = vrot.slane %v2698, 4
      %v2761 = vrot.slane %v2402, 4
      %v2762 = vsel %vm1360, %v2760, %v2761
      %v2763 = vrot.slane %v2699, 4
      %v2764 = vrot.slane %v2404, 4
      %v2765 = vsel %vm1360, %v2763, %v2764
      %v2766 = vrot.slane %v2700, 4
      %v2767 = vrot.slane %v2406, 4
      %v2768 = vsel %vm1360, %v2766, %v2767
      %v2769 = vrot.slane %v2701, 4
      %v2770 = vrot.slane %v2408, 4
      %v2771 = vsel %vm1360, %v2769, %v2770
      %v2772 = vrot.slane %v2702, 4
      %v2773 = vrot.slane %v2410, 4
      %v2774 = vsel %vm1360, %v2772, %v2773
      %v2775 = vrot.slane %v2703, 4
      %v2776 = vrot.slane %v2412, 4
      %v2777 = vsel %vm1360, %v2775, %v2776
      %v2778 = vrot.slane %v2704, 4
      %v2779 = vrot.slane %v2414, 4
      %v2780 = vsel %vm1360, %v2778, %v2779
      %v2781 = vrot.slane %v2705, 4
      %v2782 = vrot.slane %v2416, 4
      %v2783 = vsel %vm1360, %v2781, %v2782
      %v2784 = vrot.slane %v2706, 4
      %v2785 = vrot.slane %v2418, 4
      %v2786 = vsel %vm1360, %v2784, %v2785
      %v2787 = vld [vmem:[%s2386 + $0x8] sm:$0x1f]
      %v2788 = vld [vmem:[%s2386 + $0x18] sm:$0x1f]
      %v2789 = vld [vmem:[%s2386 + $0x28] sm:$0x1f]
      %v2790 = vld [vmem:[%s2386 + $0x38] sm:$0x1f]
      %v2791 = vld [vmem:[%s2386 + $0x48] sm:$0x1f]
      %v2792 = vld [vmem:[%s2386 + $0x58] sm:$0x1f]
      %v2793 = vld [vmem:[%s2386 + $0x68] sm:$0x1f]
      %v2794 = vld [vmem:[%s2386 + $0x78] sm:$0x1f]
      %v2795 = vld [vmem:[%s2386 + $0x88] sm:$0x1f]
      %v2796 = vld [vmem:[%s2386 + $0x98] sm:$0x1f]
      %v2797 = vld [vmem:[%s2386 + $0xa8] sm:$0x1f]
      %v2798 = vld [vmem:[%s2386 + $0xb8] sm:$0x1f]
      %v2799 = vld [vmem:[%s2386 + $0xc8] sm:$0x1f]
      %v2800 = vld [vmem:[%s2386 + $0xd8] sm:$0x1f]
      %v2801 = vld [vmem:[%s2386 + $0xe8] sm:$0x1f]
      %v2802 = vld [vmem:[%s2386 + $0xf8] sm:$0x1f]
      %v2804 = vshrl.u32 %v2691, 16
      %v2806 = vrot.slane %v2804, 4
      %v2807 = vshll.u32 %v2691, 16
      %v2809 = vrot.slane %v2807, 5
      %v2810 = vor.u32 %v2806, %v2809
      %v2812 = vshrl.u32 %v2787, 16
      %v2814 = vrot.slane %v2812, 4
      %v2815 = vshll.u32 %v2787, 16
      %v2817 = vrot.slane %v2815, 5
      %v2818 = vor.u32 %v2814, %v2817
      %v2819 = vsel %vm1425, %v2810, %v2818
      %v2821 = vshrl.u32 %v2692, 16
      %v2823 = vrot.slane %v2821, 4
      %v2824 = vshll.u32 %v2692, 16
      %v2826 = vrot.slane %v2824, 5
      %v2827 = vor.u32 %v2823, %v2826
      %v2829 = vshrl.u32 %v2788, 16
      %v2831 = vrot.slane %v2829, 4
      %v2832 = vshll.u32 %v2788, 16
      %v2834 = vrot.slane %v2832, 5
      %v2835 = vor.u32 %v2831, %v2834
      %v2836 = vsel %vm1425, %v2827, %v2835
      %v2838 = vshrl.u32 %v2693, 16
      %v2840 = vrot.slane %v2838, 4
      %v2841 = vshll.u32 %v2693, 16
      %v2843 = vrot.slane %v2841, 5
      %v2844 = vor.u32 %v2840, %v2843
      %v2846 = vshrl.u32 %v2789, 16
      %v2848 = vrot.slane %v2846, 4
      %v2849 = vshll.u32 %v2789, 16
      %v2851 = vrot.slane %v2849, 5
      %v2852 = vor.u32 %v2848, %v2851
      %v2853 = vsel %vm1425, %v2844, %v2852
      %v2855 = vshrl.u32 %v2694, 16
      %v2857 = vrot.slane %v2855, 4
      %v2858 = vshll.u32 %v2694, 16
      %v2860 = vrot.slane %v2858, 5
      %v2861 = vor.u32 %v2857, %v2860
      %v2863 = vshrl.u32 %v2790, 16
      %v2865 = vrot.slane %v2863, 4
      %v2866 = vshll.u32 %v2790, 16
      %v2868 = vrot.slane %v2866, 5
      %v2869 = vor.u32 %v2865, %v2868
      %v2870 = vsel %vm1425, %v2861, %v2869
      %v2872 = vshrl.u32 %v2695, 16
      %v2874 = vrot.slane %v2872, 4
      %v2875 = vshll.u32 %v2695, 16
      %v2877 = vrot.slane %v2875, 5
      %v2878 = vor.u32 %v2874, %v2877
      %v2880 = vshrl.u32 %v2791, 16
      %v2882 = vrot.slane %v2880, 4
      %v2883 = vshll.u32 %v2791, 16
      %v2885 = vrot.slane %v2883, 5
      %v2886 = vor.u32 %v2882, %v2885
      %v2887 = vsel %vm1425, %v2878, %v2886
      %v2889 = vshrl.u32 %v2696, 16
      %v2891 = vrot.slane %v2889, 4
      %v2892 = vshll.u32 %v2696, 16
      %v2894 = vrot.slane %v2892, 5
      %v2895 = vor.u32 %v2891, %v2894
      %v2897 = vshrl.u32 %v2792, 16
      %v2899 = vrot.slane %v2897, 4
      %v2900 = vshll.u32 %v2792, 16
      %v2902 = vrot.slane %v2900, 5
      %v2903 = vor.u32 %v2899, %v2902
      %v2904 = vsel %vm1425, %v2895, %v2903
      %v2906 = vshrl.u32 %v2697, 16
      %v2908 = vrot.slane %v2906, 4
      %v2909 = vshll.u32 %v2697, 16
      %v2911 = vrot.slane %v2909, 5
      %v2912 = vor.u32 %v2908, %v2911
      %v2914 = vshrl.u32 %v2793, 16
      %v2916 = vrot.slane %v2914, 4
      %v2917 = vshll.u32 %v2793, 16
      %v2919 = vrot.slane %v2917, 5
      %v2920 = vor.u32 %v2916, %v2919
      %v2921 = vsel %vm1425, %v2912, %v2920
      %v2923 = vshrl.u32 %v2698, 16
      %v2925 = vrot.slane %v2923, 4
      %v2926 = vshll.u32 %v2698, 16
      %v2928 = vrot.slane %v2926, 5
      %v2929 = vor.u32 %v2925, %v2928
      %v2931 = vshrl.u32 %v2794, 16
      %v2933 = vrot.slane %v2931, 4
      %v2934 = vshll.u32 %v2794, 16
      %v2936 = vrot.slane %v2934, 5
      %v2937 = vor.u32 %v2933, %v2936
      %v2938 = vsel %vm1425, %v2929, %v2937
      %v2940 = vshrl.u32 %v2699, 16
      %v2942 = vrot.slane %v2940, 4
      %v2943 = vshll.u32 %v2699, 16
      %v2945 = vrot.slane %v2943, 5
      %v2946 = vor.u32 %v2942, %v2945
      %v2948 = vshrl.u32 %v2795, 16
      %v2950 = vrot.slane %v2948, 4
      %v2951 = vshll.u32 %v2795, 16
      %v2953 = vrot.slane %v2951, 5
      %v2954 = vor.u32 %v2950, %v2953
      %v2955 = vsel %vm1425, %v2946, %v2954
      %v2957 = vshrl.u32 %v2700, 16
      %v2959 = vrot.slane %v2957, 4
      %v2960 = vshll.u32 %v2700, 16
      %v2962 = vrot.slane %v2960, 5
      %v2963 = vor.u32 %v2959, %v2962
      %v2965 = vshrl.u32 %v2796, 16
      %v2967 = vrot.slane %v2965, 4
      %v2968 = vshll.u32 %v2796, 16
      %v2970 = vrot.slane %v2968, 5
      %v2971 = vor.u32 %v2967, %v2970
      %v2972 = vsel %vm1425, %v2963, %v2971
      %v2974 = vshrl.u32 %v2701, 16
      %v2976 = vrot.slane %v2974, 4
      %v2977 = vshll.u32 %v2701, 16
      %v2979 = vrot.slane %v2977, 5
      %v2980 = vor.u32 %v2976, %v2979
      %v2982 = vshrl.u32 %v2797, 16
      %v2984 = vrot.slane %v2982, 4
      %v2985 = vshll.u32 %v2797, 16
      %v2987 = vrot.slane %v2985, 5
      %v2988 = vor.u32 %v2984, %v2987
      %v2989 = vsel %vm1425, %v2980, %v2988
      %v2991 = vshrl.u32 %v2702, 16
      %v2993 = vrot.slane %v2991, 4
      %v2994 = vshll.u32 %v2702, 16
      %v2996 = vrot.slane %v2994, 5
      %v2997 = vor.u32 %v2993, %v2996
      %v2999 = vshrl.u32 %v2798, 16
      %v3001 = vrot.slane %v2999, 4
      %v3002 = vshll.u32 %v2798, 16
      %v3004 = vrot.slane %v3002, 5
      %v3005 = vor.u32 %v3001, %v3004
      %v3006 = vsel %vm1425, %v2997, %v3005
      %v3008 = vshrl.u32 %v2703, 16
      %v3010 = vrot.slane %v3008, 4
      %v3011 = vshll.u32 %v2703, 16
      %v3013 = vrot.slane %v3011, 5
      %v3014 = vor.u32 %v3010, %v3013
      %v3016 = vshrl.u32 %v2799, 16
      %v3018 = vrot.slane %v3016, 4
      %v3019 = vshll.u32 %v2799, 16
      %v3021 = vrot.slane %v3019, 5
      %v3022 = vor.u32 %v3018, %v3021
      %v3023 = vsel %vm1425, %v3014, %v3022
      %v3025 = vshrl.u32 %v2704, 16
      %v3027 = vrot.slane %v3025, 4
      %v3028 = vshll.u32 %v2704, 16
      %v3030 = vrot.slane %v3028, 5
      %v3031 = vor.u32 %v3027, %v3030
      %v3033 = vshrl.u32 %v2800, 16
      %v3035 = vrot.slane %v3033, 4
      %v3036 = vshll.u32 %v2800, 16
      %v3038 = vrot.slane %v3036, 5
      %v3039 = vor.u32 %v3035, %v3038
      %v3040 = vsel %vm1425, %v3031, %v3039
      %v3042 = vshrl.u32 %v2705, 16
      %v3044 = vrot.slane %v3042, 4
      %v3045 = vshll.u32 %v2705, 16
      %v3047 = vrot.slane %v3045, 5
      %v3048 = vor.u32 %v3044, %v3047
      %v3050 = vshrl.u32 %v2801, 16
      %v3052 = vrot.slane %v3050, 4
      %v3053 = vshll.u32 %v2801, 16
      %v3055 = vrot.slane %v3053, 5
      %v3056 = vor.u32 %v3052, %v3055
      %v3057 = vsel %vm1425, %v3048, %v3056
      %v3059 = vshrl.u32 %v2706, 16
      %v3061 = vrot.slane %v3059, 4
      %v3062 = vshll.u32 %v2706, 16
      %v3064 = vrot.slane %v3062, 5
      %v3065 = vor.u32 %v3061, %v3064
      %v3067 = vshrl.u32 %v2802, 16
      %v3069 = vrot.slane %v3067, 4
      %v3070 = vshll.u32 %v2802, 16
      %v3072 = vrot.slane %v3070, 5
      %v3073 = vor.u32 %v3069, %v3072
      %v3074 = vsel %vm1425, %v3065, %v3073
      %3075 = vrot.lane.b32.xlu0 %v1363, 64
      %v3076 = vpop.permute.xlu0 %3075
      %3077 = vrot.lane.b32.xlu0 %v1366, 64
      %v3078 = vpop.permute.xlu0 %3077
      %3079 = vrot.lane.b32.xlu0 %v1369, 64
      %v3080 = vpop.permute.xlu0 %3079
      %3081 = vrot.lane.b32.xlu0 %v1372, 64
      %v3082 = vpop.permute.xlu0 %3081
      %3083 = vrot.lane.b32.xlu0 %v1375, 64
      %v3084 = vpop.permute.xlu0 %3083
      %3085 = vrot.lane.b32.xlu0 %v1378, 64
      %v3086 = vpop.permute.xlu0 %3085
      %3087 = vrot.lane.b32.xlu0 %v1381, 64
      %v3088 = vpop.permute.xlu0 %3087
      %3089 = vrot.lane.b32.xlu0 %v1384, 64
      %v3090 = vpop.permute.xlu0 %3089
      %3091 = vrot.lane.b32.xlu0 %v1387, 64
      %v3092 = vpop.permute.xlu0 %3091
      %3093 = vrot.lane.b32.xlu0 %v1390, 64
      %v3094 = vpop.permute.xlu0 %3093
      %3095 = vrot.lane.b32.xlu0 %v1393, 64
      %v3096 = vpop.permute.xlu0 %3095
      %3097 = vrot.lane.b32.xlu0 %v1396, 64
      %v3098 = vpop.permute.xlu0 %3097
      %3099 = vrot.lane.b32.xlu0 %v1399, 64
      %v3100 = vpop.permute.xlu0 %3099
      %3101 = vrot.lane.b32.xlu0 %v1402, 64
      %v3102 = vpop.permute.xlu0 %3101
      %3103 = vrot.lane.b32.xlu0 %v1405, 64
      %v3104 = vpop.permute.xlu0 %3103
      %3105 = vrot.lane.b32.xlu0 %v1408, 64
      %v3106 = vpop.permute.xlu0 %3105
      %3107 = vrot.lane.b32.xlu0 %v1746, 64
      %v3108 = vpop.permute.xlu0 %3107
      %3109 = vrot.lane.b32.xlu0 %v1763, 64
      %v3110 = vpop.permute.xlu0 %3109
      %3111 = vrot.lane.b32.xlu0 %v1780, 64
      %v3112 = vpop.permute.xlu0 %3111
      %3113 = vrot.lane.b32.xlu0 %v1797, 64
      %v3114 = vpop.permute.xlu0 %3113
      %3115 = vrot.lane.b32.xlu0 %v1814, 64
      %v3116 = vpop.permute.xlu0 %3115
      %3117 = vrot.lane.b32.xlu0 %v1831, 64
      %v3118 = vpop.permute.xlu0 %3117
      %3119 = vrot.lane.b32.xlu0 %v1848, 64
      %v3120 = vpop.permute.xlu0 %3119
      %3121 = vrot.lane.b32.xlu0 %v1865, 64
      %v3122 = vpop.permute.xlu0 %3121
      %3123 = vrot.lane.b32.xlu0 %v1882, 64
      %v3124 = vpop.permute.xlu0 %3123
      %3125 = vrot.lane.b32.xlu0 %v1899, 64
      %v3126 = vpop.permute.xlu0 %3125
      %3127 = vrot.lane.b32.xlu0 %v1916, 64
      %v3128 = vpop.permute.xlu0 %3127
      %3129 = vrot.lane.b32.xlu0 %v1933, 64
      %v3130 = vpop.permute.xlu0 %3129
      %3131 = vrot.lane.b32.xlu0 %v1950, 64
      %v3132 = vpop.permute.xlu0 %3131
      %3133 = vrot.lane.b32.xlu0 %v1967, 64
      %v3134 = vpop.permute.xlu0 %3133
      %3135 = vrot.lane.b32.xlu0 %v1984, 64
      %v3136 = vpop.permute.xlu0 %3135
      %3137 = vrot.lane.b32.xlu0 %v2001, 64
      %v3138 = vpop.permute.xlu0 %3137
      %3139 = vrot.lane.b32.xlu0 %v2130, 64
      %v3140 = vpop.permute.xlu0 %3139
      %3141 = vrot.lane.b32.xlu0 %v2147, 64
      %v3142 = vpop.permute.xlu0 %3141
      %3143 = vrot.lane.b32.xlu0 %v2164, 64
      %v3144 = vpop.permute.xlu0 %3143
      %3145 = vrot.lane.b32.xlu0 %v2181, 64
      %v3146 = vpop.permute.xlu0 %3145
      %3147 = vrot.lane.b32.xlu0 %v2198, 64
      %v3148 = vpop.permute.xlu0 %3147
      %3149 = vrot.lane.b32.xlu0 %v2215, 64
      %v3150 = vpop.permute.xlu0 %3149
      %3151 = vrot.lane.b32.xlu0 %v2232, 64
      %v3152 = vpop.permute.xlu0 %3151
      %3153 = vrot.lane.b32.xlu0 %v2249, 64
      %v3154 = vpop.permute.xlu0 %3153
      %3155 = vrot.lane.b32.xlu0 %v2266, 64
      %v3156 = vpop.permute.xlu0 %3155
      %3157 = vrot.lane.b32.xlu0 %v2283, 64
      %v3158 = vpop.permute.xlu0 %3157
      %3159 = vrot.lane.b32.xlu0 %v2300, 64
      %v3160 = vpop.permute.xlu0 %3159
      %3161 = vrot.lane.b32.xlu0 %v2317, 64
      %v3162 = vpop.permute.xlu0 %3161
      %3163 = vrot.lane.b32.xlu0 %v2334, 64
      %v3164 = vpop.permute.xlu0 %3163
      %3165 = vrot.lane.b32.xlu0 %v2351, 64
      %v3166 = vpop.permute.xlu0 %3165
      %3167 = vrot.lane.b32.xlu0 %v2368, 64
      %v3168 = vpop.permute.xlu0 %3167
      %3169 = vrot.lane.b32.xlu0 %v2385, 64
      %v3170 = vpop.permute.xlu0 %3169
      %3171 = vrot.lane.b32.xlu0 %v2741, 64
      %v3172 = vpop.permute.xlu0 %3171
      %3173 = vrot.lane.b32.xlu0 %v2744, 64
      %v3174 = vpop.permute.xlu0 %3173
      %3175 = vrot.lane.b32.xlu0 %v2747, 64
      %v3176 = vpop.permute.xlu0 %3175
      %3177 = vrot.lane.b32.xlu0 %v2750, 64
      %v3178 = vpop.permute.xlu0 %3177
      %3179 = vrot.lane.b32.xlu0 %v2753, 64
      %v3180 = vpop.permute.xlu0 %3179
      %3181 = vrot.lane.b32.xlu0 %v2756, 64
      %v3182 = vpop.permute.xlu0 %3181
      %3183 = vrot.lane.b32.xlu0 %v2759, 64
      %v3184 = vpop.permute.xlu0 %3183
      %3185 = vrot.lane.b32.xlu0 %v2762, 64
      %v3186 = vpop.permute.xlu0 %3185
      %3187 = vrot.lane.b32.xlu0 %v2765, 64
      %v3188 = vpop.permute.xlu0 %3187
      %3189 = vrot.lane.b32.xlu0 %v2768, 64
      %v3190 = vpop.permute.xlu0 %3189
      %3191 = vrot.lane.b32.xlu0 %v2771, 64
      %v3192 = vpop.permute.xlu0 %3191
      %3193 = vrot.lane.b32.xlu0 %v2774, 64
      %v3194 = vpop.permute.xlu0 %3193
      %3195 = vrot.lane.b32.xlu0 %v2777, 64
      %v3196 = vpop.permute.xlu0 %3195
      %3197 = vrot.lane.b32.xlu0 %v2780, 64
      %v3198 = vpop.permute.xlu0 %3197
      %3199 = vrot.lane.b32.xlu0 %v2783, 64
      %v3200 = vpop.permute.xlu0 %3199
      %3201 = vrot.lane.b32.xlu0 %v2786, 64
      %v3202 = vpop.permute.xlu0 %3201
      %v3205 = vsel %vm280, %v1056, %v3076
      %v3209 = vsel %vm280, %v1073, %v3078
      %v3213 = vsel %vm280, %v1090, %v3080
      %v3217 = vsel %vm280, %v1107, %v3082
      %v3221 = vsel %vm280, %v1124, %v3084
      %v3225 = vsel %vm280, %v1141, %v3086
      %v3229 = vsel %vm280, %v1158, %v3088
      %v3233 = vsel %vm280, %v1175, %v3090
      %v3237 = vsel %vm280, %v1192, %v3092
      %v3241 = vsel %vm280, %v1209, %v3094
      %v3245 = vsel %vm280, %v1226, %v3096
      %v3249 = vsel %vm280, %v1243, %v3098
      %v3253 = vsel %vm280, %v1260, %v3100
      %v3257 = vsel %vm280, %v1277, %v3102
      %v3261 = vsel %vm280, %v1294, %v3104
      %v3265 = vsel %vm280, %v1311, %v3106
      %v3269 = vsel %vm280, %v1442, %v3108
      %v3273 = vsel %vm280, %v1459, %v3110
      %v3277 = vsel %vm280, %v1476, %v3112
      %v3281 = vsel %vm280, %v1493, %v3114
      %v3285 = vsel %vm280, %v1510, %v3116
      %v3289 = vsel %vm280, %v1527, %v3118
      %v3293 = vsel %vm280, %v1544, %v3120
      %v3297 = vsel %vm280, %v1561, %v3122
      %v3301 = vsel %vm280, %v1578, %v3124
      %v3305 = vsel %vm280, %v1595, %v3126
      %v3309 = vsel %vm280, %v1612, %v3128
      %v3313 = vsel %vm280, %v1629, %v3130
      %v3317 = vsel %vm280, %v1646, %v3132
      %v3321 = vsel %vm280, %v1663, %v3134
      %v3325 = vsel %vm280, %v1680, %v3136
      %v3329 = vsel %vm280, %v1697, %v3138
      %v3333 = vsel %vm280, %v2052, %v3140
      %v3337 = vsel %vm280, %v2055, %v3142
      %v3341 = vsel %vm280, %v2058, %v3144
      %v3345 = vsel %vm280, %v2061, %v3146
      %v3349 = vsel %vm280, %v2064, %v3148
      %v3353 = vsel %vm280, %v2067, %v3150
      %v3357 = vsel %vm280, %v2070, %v3152
      %v3361 = vsel %vm280, %v2073, %v3154
      %v3365 = vsel %vm280, %v2076, %v3156
      %v3369 = vsel %vm280, %v2079, %v3158
      %v3373 = vsel %vm280, %v2082, %v3160
      %v3377 = vsel %vm280, %v2085, %v3162
      %v3381 = vsel %vm280, %v2088, %v3164
      %v3385 = vsel %vm280, %v2091, %v3166
      %v3389 = vsel %vm280, %v2094, %v3168
      %v3393 = vsel %vm280, %v2097, %v3170
      %v3397 = vsel %vm280, %v2435, %v3172
      %v3401 = vsel %vm280, %v2452, %v3174
      %v3405 = vsel %vm280, %v2469, %v3176
      %v3409 = vsel %vm280, %v2486, %v3178
      %v3413 = vsel %vm280, %v2503, %v3180
      %v3417 = vsel %vm280, %v2520, %v3182
      %v3421 = vsel %vm280, %v2537, %v3184
      %v3425 = vsel %vm280, %v2554, %v3186
      %v3429 = vsel %vm280, %v2571, %v3188
      %v3433 = vsel %vm280, %v2588, %v3190
      %v3437 = vsel %vm280, %v2605, %v3192
      %v3441 = vsel %vm280, %v2622, %v3194
      %v3445 = vsel %vm280, %v2639, %v3196
      %v3449 = vsel %vm280, %v2656, %v3198
      %v3453 = vsel %vm280, %v2673, %v3200
      %v3457 = vsel %vm280, %v2690, %v3202
      %v3459 = vld [vmem:[%s3] sm:$0xf]
      %v3460 = vld [vmem:[%s3 + $0x4] sm:$0xf]
      %v3461 = vld [vmem:[%s3 + $0x8] sm:$0xf]
      %v3462 = vld [vmem:[%s3 + $0xc] sm:$0xf]
      %v3463 = vld [vmem:[%s3 + $0x10] sm:$0xf]
      %v3464 = vld [vmem:[%s3 + $0x14] sm:$0xf]
      %v3465 = vld [vmem:[%s3 + $0x18] sm:$0xf]
      %v3466 = vld [vmem:[%s3 + $0x1c] sm:$0xf]
      %v3467 = vld [vmem:[%s3 + $0x20] sm:$0xf]
      %v3468 = vld [vmem:[%s3 + $0x24] sm:$0xf]
      %v3469 = vld [vmem:[%s3 + $0x28] sm:$0xf]
      %v3470 = vld [vmem:[%s3 + $0x2c] sm:$0xf]
      %v3471 = vld [vmem:[%s3 + $0x30] sm:$0xf]
      %v3472 = vld [vmem:[%s3 + $0x34] sm:$0xf]
      %v3473 = vld [vmem:[%s3 + $0x38] sm:$0xf]
      %v3474 = vld [vmem:[%s3 + $0x3c] sm:$0xf]
      %v3475 = vld [vmem:[%s3 + $0x40] sm:$0xf]
      %v3476 = vld [vmem:[%s3 + $0x44] sm:$0xf]
      %v3477 = vld [vmem:[%s3 + $0x48] sm:$0xf]
      %v3478 = vld [vmem:[%s3 + $0x4c] sm:$0xf]
      %v3479 = vld [vmem:[%s3 + $0x50] sm:$0xf]
      %v3480 = vld [vmem:[%s3 + $0x54] sm:$0xf]
      %v3481 = vld [vmem:[%s3 + $0x58] sm:$0xf]
      %v3482 = vld [vmem:[%s3 + $0x5c] sm:$0xf]
      %v3483 = vld [vmem:[%s3 + $0x60] sm:$0xf]
      %v3484 = vld [vmem:[%s3 + $0x64] sm:$0xf]
      %v3485 = vld [vmem:[%s3 + $0x68] sm:$0xf]
      %v3486 = vld [vmem:[%s3 + $0x6c] sm:$0xf]
      %v3487 = vld [vmem:[%s3 + $0x70] sm:$0xf]
      %v3488 = vld [vmem:[%s3 + $0x74] sm:$0xf]
      %v3489 = vld [vmem:[%s3 + $0x78] sm:$0xf]
      %v3490 = vld [vmem:[%s3 + $0x7c] sm:$0xf]
      %v3491 = vld [vmem:[%s3 + $0x80] sm:$0xf]
      %v3492 = vld [vmem:[%s3 + $0x84] sm:$0xf]
      %v3493 = vld [vmem:[%s3 + $0x88] sm:$0xf]
      %v3494 = vld [vmem:[%s3 + $0x8c] sm:$0xf]
      %v3495 = vld [vmem:[%s3 + $0x90] sm:$0xf]
      %v3496 = vld [vmem:[%s3 + $0x94] sm:$0xf]
      %v3497 = vld [vmem:[%s3 + $0x98] sm:$0xf]
      %v3498 = vld [vmem:[%s3 + $0x9c] sm:$0xf]
      %v3499 = vld [vmem:[%s3 + $0xa0] sm:$0xf]
      %v3500 = vld [vmem:[%s3 + $0xa4] sm:$0xf]
      %v3501 = vld [vmem:[%s3 + $0xa8] sm:$0xf]
      %v3502 = vld [vmem:[%s3 + $0xac] sm:$0xf]
      %v3503 = vld [vmem:[%s3 + $0xb0] sm:$0xf]
      %v3504 = vld [vmem:[%s3 + $0xb4] sm:$0xf]
      %v3505 = vld [vmem:[%s3 + $0xb8] sm:$0xf]
      %v3506 = vld [vmem:[%s3 + $0xbc] sm:$0xf]
      %v3507 = vld [vmem:[%s3 + $0xc0] sm:$0xf]
      %v3508 = vld [vmem:[%s3 + $0xc4] sm:$0xf]
      %v3509 = vld [vmem:[%s3 + $0xc8] sm:$0xf]
      %v3510 = vld [vmem:[%s3 + $0xcc] sm:$0xf]
      %v3511 = vld [vmem:[%s3 + $0xd0] sm:$0xf]
      %v3512 = vld [vmem:[%s3 + $0xd4] sm:$0xf]
      %v3513 = vld [vmem:[%s3 + $0xd8] sm:$0xf]
      %v3514 = vld [vmem:[%s3 + $0xdc] sm:$0xf]
      %v3515 = vld [vmem:[%s3 + $0xe0] sm:$0xf]
      %v3516 = vld [vmem:[%s3 + $0xe4] sm:$0xf]
      %v3517 = vld [vmem:[%s3 + $0xe8] sm:$0xf]
      %v3518 = vld [vmem:[%s3 + $0xec] sm:$0xf]
      %v3519 = vld [vmem:[%s3 + $0xf0] sm:$0xf]
      %v3520 = vld [vmem:[%s3 + $0xf4] sm:$0xf]
      %v3521 = vld [vmem:[%s3 + $0xf8] sm:$0xf]
      %v3522 = vld [vmem:[%s3 + $0xfc] sm:$0xf]
      %v3523 = vld [vmem:[%s3 + $0x100] sm:$0xf]
      %v3524 = vld [vmem:[%s3 + $0x104] sm:$0xf]
      %v3525 = vld [vmem:[%s3 + $0x108] sm:$0xf]
      %v3526 = vld [vmem:[%s3 + $0x10c] sm:$0xf]
      %v3527 = vld [vmem:[%s3 + $0x110] sm:$0xf]
      %v3528 = vld [vmem:[%s3 + $0x114] sm:$0xf]
      %v3529 = vld [vmem:[%s3 + $0x118] sm:$0xf]
      %v3530 = vld [vmem:[%s3 + $0x11c] sm:$0xf]
      %v3531 = vld [vmem:[%s4] sm:$0x1]
      %v3533 = vlaneseq
      %v3534 = vshrl.u32 %v3533, 7
      %v3535 = vsub.s32 0, %v3534
      %v3536 = vrot.slane %v3531, %v3535
      %v3610 = vunpack.c.l.b16 %v3459
      %v3611 = vunpack.c.l.b16 %v3460
      %v3612 = vunpack.c.l.b16 %v3461
      %v3613 = vunpack.c.l.b16 %v3462
      %v3614 = vunpack.c.l.b16 %v3463
      %v3615 = vunpack.c.l.b16 %v3464
      %v3616 = vunpack.c.l.b16 %v3465
      %v3617 = vunpack.c.l.b16 %v3466
      %v3618 = vunpack.c.l.b16 %v3467
      %v3619 = vunpack.c.l.b16 %v3468
      %v3620 = vunpack.c.l.b16 %v3469
      %v3621 = vunpack.c.l.b16 %v3470
      %v3622 = vunpack.c.l.b16 %v3471
      %v3623 = vunpack.c.l.b16 %v3472
      %v3624 = vunpack.c.l.b16 %v3473
      %v3625 = vunpack.c.l.b16 %v3474
      %v3626 = vunpack.c.l.b16 %v3475
      %v3627 = vunpack.c.l.b16 %v3476
      %v3628 = vunpack.c.l.b16 %v3477
      %v3629 = vunpack.c.l.b16 %v3478
      %v3630 = vunpack.c.l.b16 %v3479
      %v3631 = vunpack.c.l.b16 %v3480
      %v3632 = vunpack.c.l.b16 %v3481
      %v3633 = vunpack.c.l.b16 %v3482
      %v3634 = vunpack.c.l.b16 %v3483
      %v3635 = vunpack.c.l.b16 %v3484
      %v3636 = vunpack.c.l.b16 %v3485
      %v3637 = vunpack.c.l.b16 %v3486
      %v3638 = vunpack.c.l.b16 %v3487
      %v3639 = vunpack.c.l.b16 %v3488
      %v3640 = vunpack.c.l.b16 %v3489
      %v3641 = vunpack.c.l.b16 %v3490
      %v3642 = vunpack.c.l.b16 %v3491
      %v3643 = vunpack.c.l.b16 %v3492
      %v3644 = vunpack.c.l.b16 %v3493
      %v3645 = vunpack.c.l.b16 %v3494
      %v3646 = vunpack.c.l.b16 %v3495
      %v3647 = vunpack.c.l.b16 %v3496
      %v3648 = vunpack.c.l.b16 %v3497
      %v3649 = vunpack.c.l.b16 %v3498
      %v3650 = vunpack.c.l.b16 %v3499
      %v3651 = vunpack.c.l.b16 %v3500
      %v3652 = vunpack.c.l.b16 %v3501
      %v3653 = vunpack.c.l.b16 %v3502
      %v3654 = vunpack.c.l.b16 %v3503
      %v3655 = vunpack.c.l.b16 %v3504
      %v3656 = vunpack.c.l.b16 %v3505
      %v3657 = vunpack.c.l.b16 %v3506
      %v3658 = vunpack.c.l.b16 %v3507
      %v3659 = vunpack.c.l.b16 %v3508
      %v3660 = vunpack.c.l.b16 %v3509
      %v3661 = vunpack.c.l.b16 %v3510
      %v3662 = vunpack.c.l.b16 %v3511
      %v3663 = vunpack.c.l.b16 %v3512
      %v3664 = vunpack.c.l.b16 %v3513
      %v3665 = vunpack.c.l.b16 %v3514
      %v3666 = vunpack.c.l.b16 %v3515
      %v3667 = vunpack.c.l.b16 %v3516
      %v3668 = vunpack.c.l.b16 %v3517
      %v3669 = vunpack.c.l.b16 %v3518
      %v3670 = vunpack.c.l.b16 %v3519
      %v3671 = vunpack.c.l.b16 %v3520
      %v3672 = vunpack.c.l.b16 %v3521
      %v3673 = vunpack.c.l.b16 %v3522
      %v3674 = vunpack.c.l.b16 %v3523
      %v3675 = vunpack.c.l.b16 %v3524
      %v3676 = vunpack.c.l.b16 %v3525
      %v3677 = vunpack.c.l.b16 %v3526
      %v3678 = vunpack.c.l.b16 %v3527
      %v3679 = vunpack.c.l.b16 %v3528
      %v3680 = vunpack.c.l.b16 %v3529
      %v3681 = vunpack.c.l.b16 %v3530
      %v3682 = vpack.c.b16 %v3611, %v3610
      %v3683 = vpack.c.b16 %v3613, %v3612
      %v3684 = vpack.c.b16 %v3615, %v3614
      %v3685 = vpack.c.b16 %v3617, %v3616
      %v3686 = vpack.c.b16 %v3619, %v3618
      %v3687 = vpack.c.b16 %v3621, %v3620
      %v3688 = vpack.c.b16 %v3623, %v3622
      %v3689 = vpack.c.b16 %v3625, %v3624
      %v3690 = vpack.c.b16 %v3627, %v3626
      %v3691 = vpack.c.b16 %v3629, %v3628
      %v3692 = vpack.c.b16 %v3631, %v3630
      %v3693 = vpack.c.b16 %v3633, %v3632
      %v3694 = vpack.c.b16 %v3635, %v3634
      %v3695 = vpack.c.b16 %v3637, %v3636
      %v3696 = vpack.c.b16 %v3639, %v3638
      %v3697 = vpack.c.b16 %v3641, %v3640
      %v3698 = vpack.c.b16 %v3643, %v3642
      %v3699 = vpack.c.b16 %v3645, %v3644
      %v3700 = vpack.c.b16 %v3647, %v3646
      %v3701 = vpack.c.b16 %v3649, %v3648
      %v3702 = vpack.c.b16 %v3651, %v3650
      %v3703 = vpack.c.b16 %v3653, %v3652
      %v3704 = vpack.c.b16 %v3655, %v3654
      %v3705 = vpack.c.b16 %v3657, %v3656
      %v3706 = vpack.c.b16 %v3659, %v3658
      %v3707 = vpack.c.b16 %v3661, %v3660
      %v3708 = vpack.c.b16 %v3663, %v3662
      %v3709 = vpack.c.b16 %v3665, %v3664
      %v3710 = vpack.c.b16 %v3667, %v3666
      %v3711 = vpack.c.b16 %v3669, %v3668
      %v3712 = vpack.c.b16 %v3671, %v3670
      %v3713 = vpack.c.b16 %v3673, %v3672
      %v3714 = vpack.c.b16 %v3675, %v3674
      %v3715 = vpack.c.b16 %v3677, %v3676
      %v3716 = vpack.c.b16 %v3679, %v3678
      %v3717 = vpack.c.b16 %v3681, %v3680
      %v3755 = vsel %vm280, %v2819, 0
      %v3758 = vsel %vm280, %v2836, 0
      %v3761 = vsel %vm280, %v2853, 0
      %v3764 = vsel %vm280, %v2870, 0
      %v3767 = vsel %vm280, %v2887, 0
      %v3770 = vsel %vm280, %v2904, 0
      %v3773 = vsel %vm280, %v2921, 0
      %v3776 = vsel %vm280, %v2938, 0
      %v3779 = vsel %vm280, %v2955, 0
      %v3782 = vsel %vm280, %v2972, 0
      %v3785 = vsel %vm280, %v2989, 0
      %v3788 = vsel %vm280, %v3006, 0
      %v3791 = vsel %vm280, %v3023, 0
      %v3794 = vsel %vm280, %v3040, 0
      %v3797 = vsel %vm280, %v3057, 0
      %v3800 = vsel %vm280, %v3074, 0
      %3802 = vmatprep.subr.bf16.mxu0 0
      %3803 = vmatpush1.bf16.msra.mxu0 %v3682
      %3804 = vmatprep.subr.bf16.mxu0 0
      %3805 = vmatpush1.bf16.msra.mxu0 %v3683
      %3806 = vmatprep.subr.bf16.mxu0 0
      %3807 = vmatpush1.bf16.msra.mxu0 %v3684
      %3808 = vmatprep.subr.bf16.mxu0 0
      %3809 = vmatpush1.bf16.msra.mxu0 %v3685
      %3810 = vmatprep.subr.bf16.mxu0 0
      %3811 = vmatpush1.bf16.msra.mxu0 %v3686
      %3812 = vmatprep.subr.bf16.mxu0 0
      %3813 = vmatpush1.bf16.msra.mxu0 %v3687
      %3814 = vmatprep.subr.bf16.mxu0 0
      %3815 = vmatpush1.bf16.msra.mxu0 %v3688
      %3816 = vmatprep.subr.bf16.mxu0 0
      %3817 = vmatpush1.bf16.msra.mxu0 %v3689
      %3818 = vmatprep.subr.bf16.mxu0 0
      %3819 = vmatpush1.bf16.msra.mxu0 %v3690
      %3820 = vmatprep.subr.bf16.mxu0 0
      %3821 = vmatpush1.bf16.msra.mxu0 %v3691
      %3822 = vmatprep.subr.bf16.mxu0 0
      %3823 = vmatpush1.bf16.msra.mxu0 %v3692
      %3824 = vmatprep.subr.bf16.mxu0 0
      %3825 = vmatpush1.bf16.msra.mxu0 %v3693
      %3826 = vmatprep.subr.bf16.mxu0 0
      %3827 = vmatpush1.bf16.msra.mxu0 %v3694
      %3828 = vmatprep.subr.bf16.mxu0 0
      %3829 = vmatpush1.bf16.msra.mxu0 %v3695
      %3830 = vmatprep.subr.bf16.mxu0 0
      %3831 = vmatpush1.bf16.msra.mxu0 %v3696
      %3832 = vmatprep.subr.bf16.mxu0 0
      %3833 = vmatpush1.bf16.msra.mxu0 %v3697
      %3834 = vmatprep.mubr.bf16.mxu0 %v3269
      %3835 = vmatmul.mubr.bf16.gmra.mrb[0].mxu0 %v3205
      %v3836 = vpop.f32.mrb[0].mxu0
      %v3837 = vadd.f32 %v3536, %v3836
      %v3838 = vpop.f32.mrb[0].mxu0
      %v3839 = vpop.f32.mrb[0].mxu0
      %v3840 = vadd.f32 %v3536, %v3839
      %v3841 = vpop.f32.mrb[0].mxu0
      %3842 = vmatprep.mubr.bf16.mxu0 %v3273
      %3843 = vmatmul.mubr.bf16.gmra.mrb[0].mxu0 %v3209
      %v3844 = vpop.f32.mrb[0].mxu0
      %v3845 = vadd.f32 %v3536, %v3844
      %v3846 = vpop.f32.mrb[0].mxu0
      %v3847 = vpop.f32.mrb[0].mxu0
      %v3848 = vadd.f32 %v3536, %v3847
      %v3849 = vpop.f32.mrb[0].mxu0
      %3850 = vmatprep.mubr.bf16.mxu0 %v3277
      %3851 = vmatmul.mubr.bf16.gmra.mrb[0].mxu0 %v3213
      %v3852 = vpop.f32.mrb[0].mxu0
      %v3853 = vadd.f32 %v3536, %v3852
      %v3854 = vpop.f32.mrb[0].mxu0
      %v3855 = vpop.f32.mrb[0].mxu0
      %v3856 = vadd.f32 %v3536, %v3855
      %v3857 = vpop.f32.mrb[0].mxu0
      %3858 = vmatprep.mubr.bf16.mxu0 %v3281
      %3859 = vmatmul.mubr.bf16.gmra.mrb[0].mxu0 %v3217
      %v3860 = vpop.f32.mrb[0].mxu0
      %v3861 = vadd.f32 %v3536, %v3860
      %v3862 = vpop.f32.mrb[0].mxu0
      %v3863 = vpop.f32.mrb[0].mxu0
      %v3864 = vadd.f32 %v3536, %v3863
      %v3865 = vpop.f32.mrb[0].mxu0
      %3866 = vmatprep.mubr.bf16.mxu0 %v3285
      %3867 = vmatmul.mubr.bf16.gmra.mrb[0].mxu0 %v3221
      %v3868 = vpop.f32.mrb[0].mxu0
      %v3869 = vadd.f32 %v3536, %v3868
      %v3870 = vpop.f32.mrb[0].mxu0
      %v3871 = vpop.f32.mrb[0].mxu0
      %v3872 = vadd.f32 %v3536, %v3871
      %v3873 = vpop.f32.mrb[0].mxu0
      %3874 = vmatprep.mubr.bf16.mxu0 %v3289
      %3875 = vmatmul.mubr.bf16.gmra.mrb[0].mxu0 %v3225
      %v3876 = vpop.f32.mrb[0].mxu0
      %v3877 = vadd.f32 %v3536, %v3876
      %v3878 = vpop.f32.mrb[0].mxu0
      %v3879 = vpop.f32.mrb[0].mxu0
      %v3880 = vadd.f32 %v3536, %v3879
      %v3881 = vpop.f32.mrb[0].mxu0
      %3882 = vmatprep.mubr.bf16.mxu0 %v3293
      %3883 = vmatmul.mubr.bf16.gmra.mrb[0].mxu0 %v3229
      %v3884 = vpop.f32.mrb[0].mxu0
      %v3885 = vadd.f32 %v3536, %v3884
      %v3886 = vpop.f32.mrb[0].mxu0
      %v3887 = vpop.f32.mrb[0].mxu0
      %v3888 = vadd.f32 %v3536, %v3887
      %v3889 = vpop.f32.mrb[0].mxu0
      %3890 = vmatprep.mubr.bf16.mxu0 %v3297
      %3891 = vmatmul.mubr.bf16.gmra.mrb[0].mxu0 %v3233
      %v3892 = vpop.f32.mrb[0].mxu0
      %v3893 = vadd.f32 %v3536, %v3892
      %v3894 = vpop.f32.mrb[0].mxu0
      %v3895 = vpop.f32.mrb[0].mxu0
      %v3896 = vadd.f32 %v3536, %v3895
      %v3897 = vpop.f32.mrb[0].mxu0
      %3898 = vmatprep.mubr.bf16.mxu0 %v3301
      %3899 = vmatmul.mubr.bf16.gmra.mrb[0].mxu0 %v3237
      %v3900 = vpop.f32.mrb[0].mxu0
      %v3901 = vadd.f32 %v3536, %v3900
      %v3902 = vpop.f32.mrb[0].mxu0
      %v3903 = vpop.f32.mrb[0].mxu0
      %v3904 = vadd.f32 %v3536, %v3903
      %v3905 = vpop.f32.mrb[0].mxu0
      %3906 = vmatprep.mubr.bf16.mxu0 %v3305
      %3907 = vmatmul.mubr.bf16.gmra.mrb[0].mxu0 %v3241
      %v3908 = vpop.f32.mrb[0].mxu0
      %v3909 = vadd.f32 %v3536, %v3908
      %v3910 = vpop.f32.mrb[0].mxu0
      %v3911 = vpop.f32.mrb[0].mxu0
      %v3912 = vadd.f32 %v3536, %v3911
      %v3913 = vpop.f32.mrb[0].mxu0
      %3914 = vmatprep.mubr.bf16.mxu0 %v3309
      %3915 = vmatmul.mubr.bf16.gmra.mrb[0].mxu0 %v3245
      %v3916 = vpop.f32.mrb[0].mxu0
      %v3917 = vadd.f32 %v3536, %v3916
      %v3918 = vpop.f32.mrb[0].mxu0
      %v3919 = vpop.f32.mrb[0].mxu0
      %v3920 = vadd.f32 %v3536, %v3919
      %v3921 = vpop.f32.mrb[0].mxu0
      %3922 = vmatprep.mubr.bf16.mxu0 %v3313
      %3923 = vmatmul.mubr.bf16.gmra.mrb[0].mxu0 %v3249
      %v3924 = vpop.f32.mrb[0].mxu0
      %v3925 = vadd.f32 %v3536, %v3924
      %v3926 = vpop.f32.mrb[0].mxu0
      %v3927 = vpop.f32.mrb[0].mxu0
      %v3928 = vadd.f32 %v3536, %v3927
      %v3929 = vpop.f32.mrb[0].mxu0
      %3930 = vmatprep.mubr.bf16.mxu0 %v3317
      %3931 = vmatmul.mubr.bf16.gmra.mrb[0].mxu0 %v3253
      %v3932 = vpop.f32.mrb[0].mxu0
      %v3933 = vadd.f32 %v3536, %v3932
      %v3934 = vpop.f32.mrb[0].mxu0
      %v3935 = vpop.f32.mrb[0].mxu0
      %v3936 = vadd.f32 %v3536, %v3935
      %v3937 = vpop.f32.mrb[0].mxu0
      %3938 = vmatprep.mubr.bf16.mxu0 %v3321
      %3939 = vmatmul.mubr.bf16.gmra.mrb[0].mxu0 %v3257
      %v3940 = vpop.f32.mrb[0].mxu0
      %v3941 = vadd.f32 %v3536, %v3940
      %v3942 = vpop.f32.mrb[0].mxu0
      %v3943 = vpop.f32.mrb[0].mxu0
      %v3944 = vadd.f32 %v3536, %v3943
      %v3945 = vpop.f32.mrb[0].mxu0
      %3946 = vmatprep.mubr.bf16.mxu0 %v3325
      %3947 = vmatmul.mubr.bf16.gmra.mrb[0].mxu0 %v3261
      %v3948 = vpop.f32.mrb[0].mxu0
      %v3949 = vadd.f32 %v3536, %v3948
      %v3950 = vpop.f32.mrb[0].mxu0
      %v3951 = vpop.f32.mrb[0].mxu0
      %v3952 = vadd.f32 %v3536, %v3951
      %v3953 = vpop.f32.mrb[0].mxu0
      %3954 = vmatprep.mubr.bf16.mxu0 %v3329
      %3955 = vmatmul.mubr.bf16.gmra.mrb[0].mxu0 %v3265
      %v3956 = vpop.f32.mrb[0].mxu0
      %v3957 = vadd.f32 %v3536, %v3956
      %v3958 = vpop.f32.mrb[0].mxu0
      %v3959 = vpop.f32.mrb[0].mxu0
      %v3960 = vadd.f32 %v3536, %v3959
      %v3961 = vpop.f32.mrb[0].mxu0
      %3962 = vdwg.mxu0
      %3963 = vmatprep.subr.bf16.mxu0 0
      %3964 = vmatpush1.bf16.msra.mxu0 %v3698
      %3965 = vmatprep.subr.bf16.mxu0 0
      %3966 = vmatpush1.bf16.msra.mxu0 %v3699
      %3967 = vmatprep.subr.bf16.mxu0 0
      %3968 = vmatpush1.bf16.msra.mxu0 %v3700
      %3969 = vmatprep.subr.bf16.mxu0 0
      %3970 = vmatpush1.bf16.msra.mxu0 %v3701
      %3971 = vmatprep.subr.bf16.mxu0 0
      %3972 = vmatpush1.bf16.msra.mxu0 %v3702
      %3973 = vmatprep.subr.bf16.mxu0 0
      %3974 = vmatpush1.bf16.msra.mxu0 %v3703
      %3975 = vmatprep.subr.bf16.mxu0 0
      %3976 = vmatpush1.bf16.msra.mxu0 %v3704
      %3977 = vmatprep.subr.bf16.mxu0 0
      %3978 = vmatpush1.bf16.msra.mxu0 %v3705
      %3979 = vmatprep.subr.bf16.mxu0 0
      %3980 = vmatpush1.bf16.msra.mxu0 %v3706
      %3981 = vmatprep.subr.bf16.mxu0 0
      %3982 = vmatpush1.bf16.msra.mxu0 %v3707
      %3983 = vmatprep.subr.bf16.mxu0 0
      %3984 = vmatpush1.bf16.msra.mxu0 %v3708
      %3985 = vmatprep.subr.bf16.mxu0 0
      %3986 = vmatpush1.bf16.msra.mxu0 %v3709
      %3987 = vmatprep.subr.bf16.mxu0 0
      %3988 = vmatpush1.bf16.msra.mxu0 %v3710
      %3989 = vmatprep.subr.bf16.mxu0 0
      %3990 = vmatpush1.bf16.msra.mxu0 %v3711
      %3991 = vmatprep.subr.bf16.mxu0 0
      %3992 = vmatpush1.bf16.msra.mxu0 %v3712
      %3993 = vmatprep.subr.bf16.mxu0 0
      %3994 = vmatpush1.bf16.msra.mxu0 %v3713
      %3995 = vmatprep.mubr.bf16.mxu0 %v3397
      %3996 = vmatmul.mubr.bf16.gmra.mrb[0].mxu0 %v3333
      %v3997 = vpop.f32.mrb[0].mxu0
      %v3998 = vadd.f32 %v3837, %v3997
      %v3999 = vpop.f32.mrb[0].mxu0
      %v4000 = vpop.f32.mrb[0].mxu0
      %v4001 = vadd.f32 %v3840, %v4000
      %v4002 = vpop.f32.mrb[0].mxu0
      %4003 = vmatprep.mubr.bf16.mxu0 %v3401
      %4004 = vmatmul.mubr.bf16.gmra.mrb[0].mxu0 %v3337
      %v4005 = vpop.f32.mrb[0].mxu0
      %v4006 = vadd.f32 %v3845, %v4005
      %v4007 = vpop.f32.mrb[0].mxu0
      %v4008 = vpop.f32.mrb[0].mxu0
      %v4009 = vadd.f32 %v3848, %v4008
      %v4010 = vpop.f32.mrb[0].mxu0
      %4011 = vmatprep.mubr.bf16.mxu0 %v3405
      %4012 = vmatmul.mubr.bf16.gmra.mrb[0].mxu0 %v3341
      %v4013 = vpop.f32.mrb[0].mxu0
      %v4014 = vadd.f32 %v3853, %v4013
      %v4015 = vpop.f32.mrb[0].mxu0
      %v4016 = vpop.f32.mrb[0].mxu0
      %v4017 = vadd.f32 %v3856, %v4016
      %v4018 = vpop.f32.mrb[0].mxu0
      %4019 = vmatprep.mubr.bf16.mxu0 %v3409
      %4020 = vmatmul.mubr.bf16.gmra.mrb[0].mxu0 %v3345
      %v4021 = vpop.f32.mrb[0].mxu0
      %v4022 = vadd.f32 %v3861, %v4021
      %v4023 = vpop.f32.mrb[0].mxu0
      %v4024 = vpop.f32.mrb[0].mxu0
      %v4025 = vadd.f32 %v3864, %v4024
      %v4026 = vpop.f32.mrb[0].mxu0
      %4027 = vmatprep.mubr.bf16.mxu0 %v3413
      %4028 = vmatmul.mubr.bf16.gmra.mrb[0].mxu0 %v3349
      %v4029 = vpop.f32.mrb[0].mxu0
      %v4030 = vadd.f32 %v3869, %v4029
      %v4031 = vpop.f32.mrb[0].mxu0
      %v4032 = vpop.f32.mrb[0].mxu0
      %v4033 = vadd.f32 %v3872, %v4032
      %v4034 = vpop.f32.mrb[0].mxu0
      %4035 = vmatprep.mubr.bf16.mxu0 %v3417
      %4036 = vmatmul.mubr.bf16.gmra.mrb[0].mxu0 %v3353
      %v4037 = vpop.f32.mrb[0].mxu0
      %v4038 = vadd.f32 %v3877, %v4037
      %v4039 = vpop.f32.mrb[0].mxu0
      %v4040 = vpop.f32.mrb[0].mxu0
      %v4041 = vadd.f32 %v3880, %v4040
      %v4042 = vpop.f32.mrb[0].mxu0
      %4043 = vmatprep.mubr.bf16.mxu0 %v3421
      %4044 = vmatmul.mubr.bf16.gmra.mrb[0].mxu0 %v3357
      %v4045 = vpop.f32.mrb[0].mxu0
      %v4046 = vadd.f32 %v3885, %v4045
      %v4047 = vpop.f32.mrb[0].mxu0
      %v4048 = vpop.f32.mrb[0].mxu0
      %v4049 = vadd.f32 %v3888, %v4048
      %v4050 = vpop.f32.mrb[0].mxu0
      %4051 = vmatprep.mubr.bf16.mxu0 %v3425
      %4052 = vmatmul.mubr.bf16.gmra.mrb[0].mxu0 %v3361
      %v4053 = vpop.f32.mrb[0].mxu0
      %v4054 = vadd.f32 %v3893, %v4053
      %v4055 = vpop.f32.mrb[0].mxu0
      %v4056 = vpop.f32.mrb[0].mxu0
      %v4057 = vadd.f32 %v3896, %v4056
      %v4058 = vpop.f32.mrb[0].mxu0
      %4059 = vmatprep.mubr.bf16.mxu0 %v3429
      %4060 = vmatmul.mubr.bf16.gmra.mrb[0].mxu0 %v3365
      %v4061 = vpop.f32.mrb[0].mxu0
      %v4062 = vadd.f32 %v3901, %v4061
      %v4063 = vpop.f32.mrb[0].mxu0
      %v4064 = vpop.f32.mrb[0].mxu0
      %v4065 = vadd.f32 %v3904, %v4064
      %v4066 = vpop.f32.mrb[0].mxu0
      %4067 = vmatprep.mubr.bf16.mxu0 %v3433
      %4068 = vmatmul.mubr.bf16.gmra.mrb[0].mxu0 %v3369
      %v4069 = vpop.f32.mrb[0].mxu0
      %v4070 = vadd.f32 %v3909, %v4069
      %v4071 = vpop.f32.mrb[0].mxu0
      %v4072 = vpop.f32.mrb[0].mxu0
      %v4073 = vadd.f32 %v3912, %v4072
      %v4074 = vpop.f32.mrb[0].mxu0
      %4075 = vmatprep.mubr.bf16.mxu0 %v3437
      %4076 = vmatmul.mubr.bf16.gmra.mrb[0].mxu0 %v3373
      %v4077 = vpop.f32.mrb[0].mxu0
      %v4078 = vadd.f32 %v3917, %v4077
      %v4079 = vpop.f32.mrb[0].mxu0
      %v4080 = vpop.f32.mrb[0].mxu0
      %v4081 = vadd.f32 %v3920, %v4080
      %v4082 = vpop.f32.mrb[0].mxu0
      %4083 = vmatprep.mubr.bf16.mxu0 %v3441
      %4084 = vmatmul.mubr.bf16.gmra.mrb[0].mxu0 %v3377
      %v4085 = vpop.f32.mrb[0].mxu0
      %v4086 = vadd.f32 %v3925, %v4085
      %v4087 = vpop.f32.mrb[0].mxu0
      %v4088 = vpop.f32.mrb[0].mxu0
      %v4089 = vadd.f32 %v3928, %v4088
      %v4090 = vpop.f32.mrb[0].mxu0
      %4091 = vmatprep.mubr.bf16.mxu0 %v3445
      %4092 = vmatmul.mubr.bf16.gmra.mrb[0].mxu0 %v3381
      %v4093 = vpop.f32.mrb[0].mxu0
      %v4094 = vadd.f32 %v3933, %v4093
      %v4095 = vpop.f32.mrb[0].mxu0
      %v4096 = vpop.f32.mrb[0].mxu0
      %v4097 = vadd.f32 %v3936, %v4096
      %v4098 = vpop.f32.mrb[0].mxu0
      %4099 = vmatprep.mubr.bf16.mxu0 %v3449
      %4100 = vmatmul.mubr.bf16.gmra.mrb[0].mxu0 %v3385
      %v4101 = vpop.f32.mrb[0].mxu0
      %v4102 = vadd.f32 %v3941, %v4101
      %v4103 = vpop.f32.mrb[0].mxu0
      %v4104 = vpop.f32.mrb[0].mxu0
      %v4105 = vadd.f32 %v3944, %v4104
      %v4106 = vpop.f32.mrb[0].mxu0
      %4107 = vmatprep.mubr.bf16.mxu0 %v3453
      %4108 = vmatmul.mubr.bf16.gmra.mrb[0].mxu0 %v3389
      %v4109 = vpop.f32.mrb[0].mxu0
      %v4110 = vadd.f32 %v3949, %v4109
      %v4111 = vpop.f32.mrb[0].mxu0
      %v4112 = vpop.f32.mrb[0].mxu0
      %v4113 = vadd.f32 %v3952, %v4112
      %v4114 = vpop.f32.mrb[0].mxu0
      %4115 = vmatprep.mubr.bf16.mxu0 %v3457
      %4116 = vmatmul.mubr.bf16.gmra.mrb[0].mxu0 %v3393
      %v4117 = vpop.f32.mrb[0].mxu0
      %v4118 = vadd.f32 %v3957, %v4117
      %v4119 = vpop.f32.mrb[0].mxu0
      %v4120 = vpop.f32.mrb[0].mxu0
      %v4121 = vadd.f32 %v3960, %v4120
      %v4122 = vpop.f32.mrb[0].mxu0
      %4123 = vdwg.mxu0
      %4124 = vmatprep.subr.bf16.mxu0 0
      %4125 = vmatpush1.bf16.msra.mxu0 %v3714
      %4126 = vmatprep.subr.bf16.mxu0 0
      %4127 = vmatpush1.bf16.msra.mxu0 %v3715
      %4128 = vmatprep.subr.bf16.mxu0 0
      %4129 = vmatpush1.bf16.msra.mxu0 %v3716
      %4130 = vmatprep.subr.bf16.mxu0 0
      %4131 = vmatpush1.bf16.msra.mxu0 %v3717
      %4132 = vmatprep.subr.bf16.mxu0 0
      %4133 = vmatpush1.bf16.msra.mxu0 0
      %4134 = vmatprep.subr.bf16.mxu0 0
      %4135 = vmatpush1.bf16.msra.mxu0 0
      %4136 = vmatprep.subr.bf16.mxu0 0
      %4137 = vmatpush1.bf16.msra.mxu0 0
      %4138 = vmatprep.subr.bf16.mxu0 0
      %4139 = vmatpush1.bf16.msra.mxu0 0
      %4140 = vmatprep.subr.bf16.mxu0 0
      %4141 = vmatpush1.bf16.msra.mxu0 0
      %4142 = vmatprep.subr.bf16.mxu0 0
      %4143 = vmatpush1.bf16.msra.mxu0 0
      %4144 = vmatprep.subr.bf16.mxu0 0
      %4145 = vmatpush1.bf16.msra.mxu0 0
      %4146 = vmatprep.subr.bf16.mxu0 0
      %4147 = vmatpush1.bf16.msra.mxu0 0
      %4148 = vmatprep.subr.bf16.mxu0 0
      %4149 = vmatpush1.bf16.msra.mxu0 0
      %4150 = vmatprep.subr.bf16.mxu0 0
      %4151 = vmatpush1.bf16.msra.mxu0 0
      %4152 = vmatprep.subr.bf16.mxu0 0
      %4153 = vmatpush1.bf16.msra.mxu0 0
      %4154 = vmatprep.subr.bf16.mxu0 0
      %4155 = vmatpush1.bf16.msra.mxu0 0
      %4156 = vmatprep.mubr.bf16.mxu0 0
      %4157 = vmatmul.mubr.bf16.gmra.mrb[0].mxu0 %v3755
      %v4158 = vpop.f32.mrb[0].mxu0
      %v4159 = vadd.f32 %v3998, %v4158
      %v4160 = vpop.f32.mrb[0].mxu0
      %v4161 = vpop.f32.mrb[0].mxu0
      %v4162 = vadd.f32 %v4001, %v4161
      %v4163 = vpop.f32.mrb[0].mxu0
      %4164 = vmatprep.mubr.bf16.mxu0 0
      %4165 = vmatmul.mubr.bf16.gmra.mrb[0].mxu0 %v3758
      %v4166 = vpop.f32.mrb[0].mxu0
      %v4167 = vadd.f32 %v4006, %v4166
      %v4168 = vpop.f32.mrb[0].mxu0
      %v4169 = vpop.f32.mrb[0].mxu0
      %v4170 = vadd.f32 %v4009, %v4169
      %v4171 = vpop.f32.mrb[0].mxu0
      %4172 = vmatprep.mubr.bf16.mxu0 0
      %4173 = vmatmul.mubr.bf16.gmra.mrb[0].mxu0 %v3761
      %v4174 = vpop.f32.mrb[0].mxu0
      %v4175 = vadd.f32 %v4014, %v4174
      %v4176 = vpop.f32.mrb[0].mxu0
      %v4177 = vpop.f32.mrb[0].mxu0
      %v4178 = vadd.f32 %v4017, %v4177
      %v4179 = vpop.f32.mrb[0].mxu0
      %4180 = vmatprep.mubr.bf16.mxu0 0
      %4181 = vmatmul.mubr.bf16.gmra.mrb[0].mxu0 %v3764
      %v4182 = vpop.f32.mrb[0].mxu0
      %v4183 = vadd.f32 %v4022, %v4182
      %v4184 = vpop.f32.mrb[0].mxu0
      %v4185 = vpop.f32.mrb[0].mxu0
      %v4186 = vadd.f32 %v4025, %v4185
      %v4187 = vpop.f32.mrb[0].mxu0
      %4188 = vmatprep.mubr.bf16.mxu0 0
      %4189 = vmatmul.mubr.bf16.gmra.mrb[0].mxu0 %v3767
      %v4190 = vpop.f32.mrb[0].mxu0
      %v4191 = vadd.f32 %v4030, %v4190
      %v4192 = vpop.f32.mrb[0].mxu0
      %v4193 = vpop.f32.mrb[0].mxu0
      %v4194 = vadd.f32 %v4033, %v4193
      %v4195 = vpop.f32.mrb[0].mxu0
      %4196 = vmatprep.mubr.bf16.mxu0 0
      %4197 = vmatmul.mubr.bf16.gmra.mrb[0].mxu0 %v3770
      %v4198 = vpop.f32.mrb[0].mxu0
      %v4199 = vadd.f32 %v4038, %v4198
      %v4200 = vpop.f32.mrb[0].mxu0
      %v4201 = vpop.f32.mrb[0].mxu0
      %v4202 = vadd.f32 %v4041, %v4201
      %v4203 = vpop.f32.mrb[0].mxu0
      %4204 = vmatprep.mubr.bf16.mxu0 0
      %4205 = vmatmul.mubr.bf16.gmra.mrb[0].mxu0 %v3773
      %v4206 = vpop.f32.mrb[0].mxu0
      %v4207 = vadd.f32 %v4046, %v4206
      %v4208 = vpop.f32.mrb[0].mxu0
      %v4209 = vpop.f32.mrb[0].mxu0
      %v4210 = vadd.f32 %v4049, %v4209
      %v4211 = vpop.f32.mrb[0].mxu0
      %4212 = vmatprep.mubr.bf16.mxu0 0
      %4213 = vmatmul.mubr.bf16.gmra.mrb[0].mxu0 %v3776
      %v4214 = vpop.f32.mrb[0].mxu0
      %v4215 = vadd.f32 %v4054, %v4214
      %v4216 = vpop.f32.mrb[0].mxu0
      %v4217 = vpop.f32.mrb[0].mxu0
      %v4218 = vadd.f32 %v4057, %v4217
      %v4219 = vpop.f32.mrb[0].mxu0
      %4220 = vmatprep.mubr.bf16.mxu0 0
      %4221 = vmatmul.mubr.bf16.gmra.mrb[0].mxu0 %v3779
      %v4222 = vpop.f32.mrb[0].mxu0
      %v4223 = vadd.f32 %v4062, %v4222
      %v4224 = vpop.f32.mrb[0].mxu0
      %v4225 = vpop.f32.mrb[0].mxu0
      %v4226 = vadd.f32 %v4065, %v4225
      %v4227 = vpop.f32.mrb[0].mxu0
      %4228 = vmatprep.mubr.bf16.mxu0 0
      %4229 = vmatmul.mubr.bf16.gmra.mrb[0].mxu0 %v3782
      %v4230 = vpop.f32.mrb[0].mxu0
      %v4231 = vadd.f32 %v4070, %v4230
      %v4232 = vpop.f32.mrb[0].mxu0
      %v4233 = vpop.f32.mrb[0].mxu0
      %v4234 = vadd.f32 %v4073, %v4233
      %v4235 = vpop.f32.mrb[0].mxu0
      %4236 = vmatprep.mubr.bf16.mxu0 0
      %4237 = vmatmul.mubr.bf16.gmra.mrb[0].mxu0 %v3785
      %v4238 = vpop.f32.mrb[0].mxu0
      %v4239 = vadd.f32 %v4078, %v4238
      %v4240 = vpop.f32.mrb[0].mxu0
      %v4241 = vpop.f32.mrb[0].mxu0
      %v4242 = vadd.f32 %v4081, %v4241
      %v4243 = vpop.f32.mrb[0].mxu0
      %4244 = vmatprep.mubr.bf16.mxu0 0
      %4245 = vmatmul.mubr.bf16.gmra.mrb[0].mxu0 %v3788
      %v4246 = vpop.f32.mrb[0].mxu0
      %v4247 = vadd.f32 %v4086, %v4246
      %v4248 = vpop.f32.mrb[0].mxu0
      %v4249 = vpop.f32.mrb[0].mxu0
      %v4250 = vadd.f32 %v4089, %v4249
      %v4251 = vpop.f32.mrb[0].mxu0
      %4252 = vmatprep.mubr.bf16.mxu0 0
      %4253 = vmatmul.mubr.bf16.gmra.mrb[0].mxu0 %v3791
      %v4254 = vpop.f32.mrb[0].mxu0
      %v4255 = vadd.f32 %v4094, %v4254
      %v4256 = vpop.f32.mrb[0].mxu0
      %v4257 = vpop.f32.mrb[0].mxu0
      %v4258 = vadd.f32 %v4097, %v4257
      %v4259 = vpop.f32.mrb[0].mxu0
      %4260 = vmatprep.mubr.bf16.mxu0 0
      %4261 = vmatmul.mubr.bf16.gmra.mrb[0].mxu0 %v3794
      %v4262 = vpop.f32.mrb[0].mxu0
      %v4263 = vadd.f32 %v4102, %v4262
      %v4264 = vpop.f32.mrb[0].mxu0
      %v4265 = vpop.f32.mrb[0].mxu0
      %v4266 = vadd.f32 %v4105, %v4265
      %v4267 = vpop.f32.mrb[0].mxu0
      %4268 = vmatprep.mubr.bf16.mxu0 0
      %4269 = vmatmul.mubr.bf16.gmra.mrb[0].mxu0 %v3797
      %v4270 = vpop.f32.mrb[0].mxu0
      %v4271 = vadd.f32 %v4110, %v4270
      %v4272 = vpop.f32.mrb[0].mxu0
      %v4273 = vpop.f32.mrb[0].mxu0
      %v4274 = vadd.f32 %v4113, %v4273
      %v4275 = vpop.f32.mrb[0].mxu0
      %4276 = vmatprep.mubr.bf16.mxu0 0
      %4277 = vmatmul.mubr.bf16.gmra.mrb[0].mxu0 %v3800
      %v4278 = vpop.f32.mrb[0].mxu0
      %v4279 = vadd.f32 %v4118, %v4278
      %v4280 = vpop.f32.mrb[0].mxu0
      %v4281 = vpop.f32.mrb[0].mxu0
      %v4282 = vadd.f32 %v4121, %v4281
      %v4283 = vpop.f32.mrb[0].mxu0
      %4284 = vdwg.mxu0
      %v4285 = vmax.f32 %v4159, 0.0
      %v4286 = vmax.f32 %v4162, 0.0
      %v4287 = vmax.f32 %v4167, 0.0
      %v4288 = vmax.f32 %v4170, 0.0
      %v4289 = vmax.f32 %v4175, 0.0
      %v4290 = vmax.f32 %v4178, 0.0
      %v4291 = vmax.f32 %v4183, 0.0
      %v4292 = vmax.f32 %v4186, 0.0
      %v4293 = vmax.f32 %v4191, 0.0
      %v4294 = vmax.f32 %v4194, 0.0
      %v4295 = vmax.f32 %v4199, 0.0
      %v4296 = vmax.f32 %v4202, 0.0
      %v4297 = vmax.f32 %v4207, 0.0
      %v4298 = vmax.f32 %v4210, 0.0
      %v4299 = vmax.f32 %v4215, 0.0
      %v4300 = vmax.f32 %v4218, 0.0
      %v4301 = vmax.f32 %v4223, 0.0
      %v4302 = vmax.f32 %v4226, 0.0
      %v4303 = vmax.f32 %v4231, 0.0
      %v4304 = vmax.f32 %v4234, 0.0
      %v4305 = vmax.f32 %v4239, 0.0
      %v4306 = vmax.f32 %v4242, 0.0
      %v4307 = vmax.f32 %v4247, 0.0
      %v4308 = vmax.f32 %v4250, 0.0
      %v4309 = vmax.f32 %v4255, 0.0
      %v4310 = vmax.f32 %v4258, 0.0
      %v4311 = vmax.f32 %v4263, 0.0
      %v4312 = vmax.f32 %v4266, 0.0
      %v4313 = vmax.f32 %v4271, 0.0
      %v4314 = vmax.f32 %v4274, 0.0
      %v4315 = vmax.f32 %v4279, 0.0
      %v4316 = vmax.f32 %v4282, 0.0
      %v4317 = vpack.c.bf16 %v4286, %v4285
      %v4318 = vpack.c.bf16 %v4288, %v4287
      %v4319 = vpack.c.bf16 %v4290, %v4289
      %v4320 = vpack.c.bf16 %v4292, %v4291
      %v4321 = vpack.c.bf16 %v4294, %v4293
      %v4322 = vpack.c.bf16 %v4296, %v4295
      %v4323 = vpack.c.bf16 %v4298, %v4297
      %v4324 = vpack.c.bf16 %v4300, %v4299
      %v4325 = vpack.c.bf16 %v4302, %v4301
      %v4326 = vpack.c.bf16 %v4304, %v4303
      %v4327 = vpack.c.bf16 %v4306, %v4305
      %v4328 = vpack.c.bf16 %v4308, %v4307
      %v4329 = vpack.c.bf16 %v4310, %v4309
      %v4330 = vpack.c.bf16 %v4312, %v4311
      %v4331 = vpack.c.bf16 %v4314, %v4313
      %v4332 = vpack.c.bf16 %v4316, %v4315
      %v4349 = vrot.slane %v4317, 4
      %v4350 = vrot.slane %v4318, 4
      %v4351 = vrot.slane %v4319, 4
      %v4352 = vrot.slane %v4320, 4
      %v4353 = vrot.slane %v4321, 4
      %v4354 = vrot.slane %v4322, 4
      %v4355 = vrot.slane %v4323, 4
      %v4356 = vrot.slane %v4324, 4
      %v4357 = vrot.slane %v4325, 4
      %v4358 = vrot.slane %v4326, 4
      %v4359 = vrot.slane %v4327, 4
      %v4360 = vrot.slane %v4328, 4
      %v4361 = vrot.slane %v4329, 4
      %v4362 = vrot.slane %v4330, 4
      %v4363 = vrot.slane %v4331, 4
      %v4364 = vrot.slane %v4332, 4
      %s4381 = scalar_lea.vmem [#allocation3], 16
      %4382 = vst [vmem:[%s4381] sm:$0xf0] %v4349
      %4383 = vst [vmem:[%s4381 + $0x8] sm:$0xf] %v4349
      %4384 = vst [vmem:[%s4381 + $0x10] sm:$0xf0] %v4350
      %4385 = vst [vmem:[%s4381 + $0x18] sm:$0xf] %v4350
      %4386 = vst [vmem:[%s4381 + $0x20] sm:$0xf0] %v4351
      %4387 = vst [vmem:[%s4381 + $0x28] sm:$0xf] %v4351
      %4388 = vst [vmem:[%s4381 + $0x30] sm:$0xf0] %v4352
      %4389 = vst [vmem:[%s4381 + $0x38] sm:$0xf] %v4352
      %4390 = vst [vmem:[%s4381 + $0x40] sm:$0xf0] %v4353
      %4391 = vst [vmem:[%s4381 + $0x48] sm:$0xf] %v4353
      %4392 = vst [vmem:[%s4381 + $0x50] sm:$0xf0] %v4354
      %4393 = vst [vmem:[%s4381 + $0x58] sm:$0xf] %v4354
      %4394 = vst [vmem:[%s4381 + $0x60] sm:$0xf0] %v4355
      %4395 = vst [vmem:[%s4381 + $0x68] sm:$0xf] %v4355
      %4396 = vst [vmem:[%s4381 + $0x70] sm:$0xf0] %v4356
      %4397 = vst [vmem:[%s4381 + $0x78] sm:$0xf] %v4356
      %4398 = vst [vmem:[%s4381 + $0x80] sm:$0xf0] %v4357
      %4399 = vst [vmem:[%s4381 + $0x88] sm:$0xf] %v4357
      %4400 = vst [vmem:[%s4381 + $0x90] sm:$0xf0] %v4358
      %4401 = vst [vmem:[%s4381 + $0x98] sm:$0xf] %v4358
      %4402 = vst [vmem:[%s4381 + $0xa0] sm:$0xf0] %v4359
      %4403 = vst [vmem:[%s4381 + $0xa8] sm:$0xf] %v4359
      %4404 = vst [vmem:[%s4381 + $0xb0] sm:$0xf0] %v4360
      %4405 = vst [vmem:[%s4381 + $0xb8] sm:$0xf] %v4360
      %4406 = vst [vmem:[%s4381 + $0xc0] sm:$0xf0] %v4361
      %4407 = vst [vmem:[%s4381 + $0xc8] sm:$0xf] %v4361
      %4408 = vst [vmem:[%s4381 + $0xd0] sm:$0xf0] %v4362
      %4409 = vst [vmem:[%s4381 + $0xd8] sm:$0xf] %v4362
      %4410 = vst [vmem:[%s4381 + $0xe0] sm:$0xf0] %v4363
      %4411 = vst [vmem:[%s4381 + $0xe8] sm:$0xf] %v4363
      %4412 = vst [vmem:[%s4381 + $0xf0] sm:$0xf0] %v4364
      %4413 = vst [vmem:[%s4381 + $0xf8] sm:$0xf] %v4364
      %v4414 = vld [vmem:[#allocation3] sm:$0xf8]
      %v4415 = vld [vmem:[#allocation3 + $0x8] sm:$0xf]
      %v4416 = vld [vmem:[#allocation3 + $0x10] sm:$0xf8]
      %v4417 = vld [vmem:[#allocation3 + $0x18] sm:$0xf]
      %v4418 = vld [vmem:[#allocation3 + $0x20] sm:$0xf8]
      %v4419 = vld [vmem:[#allocation3 + $0x28] sm:$0xf]
      %v4420 = vld [vmem:[#allocation3 + $0x30] sm:$0xf8]
      %v4421 = vld [vmem:[#allocation3 + $0x38] sm:$0xf]
      %v4422 = vld [vmem:[#allocation3 + $0x40] sm:$0xf8]
      %v4423 = vld [vmem:[#allocation3 + $0x48] sm:$0xf]
      %v4424 = vld [vmem:[#allocation3 + $0x50] sm:$0xf8]
      %v4425 = vld [vmem:[#allocation3 + $0x58] sm:$0xf]
      %v4426 = vld [vmem:[#allocation3 + $0x60] sm:$0xf8]
      %v4427 = vld [vmem:[#allocation3 + $0x68] sm:$0xf]
      %v4428 = vld [vmem:[#allocation3 + $0x70] sm:$0xf8]
      %v4429 = vld [vmem:[#allocation3 + $0x78] sm:$0xf]
      %v4430 = vld [vmem:[#allocation3 + $0x80] sm:$0xf8]
      %v4431 = vld [vmem:[#allocation3 + $0x88] sm:$0xf]
      %v4432 = vld [vmem:[#allocation3 + $0x90] sm:$0xf8]
      %v4433 = vld [vmem:[#allocation3 + $0x98] sm:$0xf]
      %v4434 = vld [vmem:[#allocation3 + $0xa0] sm:$0xf8]
      %v4435 = vld [vmem:[#allocation3 + $0xa8] sm:$0xf]
      %v4436 = vld [vmem:[#allocation3 + $0xb0] sm:$0xf8]
      %v4437 = vld [vmem:[#allocation3 + $0xb8] sm:$0xf]
      %v4438 = vld [vmem:[#allocation3 + $0xc0] sm:$0xf8]
      %v4439 = vld [vmem:[#allocation3 + $0xc8] sm:$0xf]
      %v4440 = vld [vmem:[#allocation3 + $0xd0] sm:$0xf8]
      %v4441 = vld [vmem:[#allocation3 + $0xd8] sm:$0xf]
      %v4442 = vld [vmem:[#allocation3 + $0xe0] sm:$0xf8]
      %v4443 = vld [vmem:[#allocation3 + $0xe8] sm:$0xf]
      %v4444 = vld [vmem:[#allocation3 + $0xf0] sm:$0xf8]
      %v4445 = vld [vmem:[#allocation3 + $0xf8] sm:$0xf]
      %v4447 = vshrl.u32 %v4414, 16
      %v4449 = vrot.slane %v4447, 3
      %v4450 = vshll.u32 %v4414, 16
      %v4452 = vrot.slane %v4450, 4
      %v4453 = vor.u32 %v4449, %v4452
      %v4455 = vshrl.u32 %v4415, 16
      %v4457 = vrot.slane %v4455, 3
      %v4458 = vshll.u32 %v4415, 16
      %v4460 = vrot.slane %v4458, 4
      %v4461 = vor.u32 %v4457, %v4460
      %v4462 = vsel %vm344, %v4453, %v4461
      %v4464 = vshrl.u32 %v4416, 16
      %v4466 = vrot.slane %v4464, 3
      %v4467 = vshll.u32 %v4416, 16
      %v4469 = vrot.slane %v4467, 4
      %v4470 = vor.u32 %v4466, %v4469
      %v4472 = vshrl.u32 %v4417, 16
      %v4474 = vrot.slane %v4472, 3
      %v4475 = vshll.u32 %v4417, 16
      %v4477 = vrot.slane %v4475, 4
      %v4478 = vor.u32 %v4474, %v4477
      %v4479 = vsel %vm344, %v4470, %v4478
      %v4481 = vshrl.u32 %v4418, 16
      %v4483 = vrot.slane %v4481, 3
      %v4484 = vshll.u32 %v4418, 16
      %v4486 = vrot.slane %v4484, 4
      %v4487 = vor.u32 %v4483, %v4486
      %v4489 = vshrl.u32 %v4419, 16
      %v4491 = vrot.slane %v4489, 3
      %v4492 = vshll.u32 %v4419, 16
      %v4494 = vrot.slane %v4492, 4
      %v4495 = vor.u32 %v4491, %v4494
      %v4496 = vsel %vm344, %v4487, %v4495
      %v4498 = vshrl.u32 %v4420, 16
      %v4500 = vrot.slane %v4498, 3
      %v4501 = vshll.u32 %v4420, 16
      %v4503 = vrot.slane %v4501, 4
      %v4504 = vor.u32 %v4500, %v4503
      %v4506 = vshrl.u32 %v4421, 16
      %v4508 = vrot.slane %v4506, 3
      %v4509 = vshll.u32 %v4421, 16
      %v4511 = vrot.slane %v4509, 4
      %v4512 = vor.u32 %v4508, %v4511
      %v4513 = vsel %vm344, %v4504, %v4512
      %v4515 = vshrl.u32 %v4422, 16
      %v4517 = vrot.slane %v4515, 3
      %v4518 = vshll.u32 %v4422, 16
      %v4520 = vrot.slane %v4518, 4
      %v4521 = vor.u32 %v4517, %v4520
      %v4523 = vshrl.u32 %v4423, 16
      %v4525 = vrot.slane %v4523, 3
      %v4526 = vshll.u32 %v4423, 16
      %v4528 = vrot.slane %v4526, 4
      %v4529 = vor.u32 %v4525, %v4528
      %v4530 = vsel %vm344, %v4521, %v4529
      %v4532 = vshrl.u32 %v4424, 16
      %v4534 = vrot.slane %v4532, 3
      %v4535 = vshll.u32 %v4424, 16
      %v4537 = vrot.slane %v4535, 4
      %v4538 = vor.u32 %v4534, %v4537
      %v4540 = vshrl.u32 %v4425, 16
      %v4542 = vrot.slane %v4540, 3
      %v4543 = vshll.u32 %v4425, 16
      %v4545 = vrot.slane %v4543, 4
      %v4546 = vor.u32 %v4542, %v4545
      %v4547 = vsel %vm344, %v4538, %v4546
      %v4549 = vshrl.u32 %v4426, 16
      %v4551 = vrot.slane %v4549, 3
      %v4552 = vshll.u32 %v4426, 16
      %v4554 = vrot.slane %v4552, 4
      %v4555 = vor.u32 %v4551, %v4554
      %v4557 = vshrl.u32 %v4427, 16
      %v4559 = vrot.slane %v4557, 3
      %v4560 = vshll.u32 %v4427, 16
      %v4562 = vrot.slane %v4560, 4
      %v4563 = vor.u32 %v4559, %v4562
      %v4564 = vsel %vm344, %v4555, %v4563
      %v4566 = vshrl.u32 %v4428, 16
      %v4568 = vrot.slane %v4566, 3
      %v4569 = vshll.u32 %v4428, 16
      %v4571 = vrot.slane %v4569, 4
      %v4572 = vor.u32 %v4568, %v4571
      %v4574 = vshrl.u32 %v4429, 16
      %v4576 = vrot.slane %v4574, 3
      %v4577 = vshll.u32 %v4429, 16
      %v4579 = vrot.slane %v4577, 4
      %v4580 = vor.u32 %v4576, %v4579
      %v4581 = vsel %vm344, %v4572, %v4580
      %v4583 = vshrl.u32 %v4430, 16
      %v4585 = vrot.slane %v4583, 3
      %v4586 = vshll.u32 %v4430, 16
      %v4588 = vrot.slane %v4586, 4
      %v4589 = vor.u32 %v4585, %v4588
      %v4591 = vshrl.u32 %v4431, 16
      %v4593 = vrot.slane %v4591, 3
      %v4594 = vshll.u32 %v4431, 16
      %v4596 = vrot.slane %v4594, 4
      %v4597 = vor.u32 %v4593, %v4596
      %v4598 = vsel %vm344, %v4589, %v4597
      %v4600 = vshrl.u32 %v4432, 16
      %v4602 = vrot.slane %v4600, 3
      %v4603 = vshll.u32 %v4432, 16
      %v4605 = vrot.slane %v4603, 4
      %v4606 = vor.u32 %v4602, %v4605
      %v4608 = vshrl.u32 %v4433, 16
      %v4610 = vrot.slane %v4608, 3
      %v4611 = vshll.u32 %v4433, 16
      %v4613 = vrot.slane %v4611, 4
      %v4614 = vor.u32 %v4610, %v4613
      %v4615 = vsel %vm344, %v4606, %v4614
      %v4617 = vshrl.u32 %v4434, 16
      %v4619 = vrot.slane %v4617, 3
      %v4620 = vshll.u32 %v4434, 16
      %v4622 = vrot.slane %v4620, 4
      %v4623 = vor.u32 %v4619, %v4622
      %v4625 = vshrl.u32 %v4435, 16
      %v4627 = vrot.slane %v4625, 3
      %v4628 = vshll.u32 %v4435, 16
      %v4630 = vrot.slane %v4628, 4
      %v4631 = vor.u32 %v4627, %v4630
      %v4632 = vsel %vm344, %v4623, %v4631
      %v4634 = vshrl.u32 %v4436, 16
      %v4636 = vrot.slane %v4634, 3
      %v4637 = vshll.u32 %v4436, 16
      %v4639 = vrot.slane %v4637, 4
      %v4640 = vor.u32 %v4636, %v4639
      %v4642 = vshrl.u32 %v4437, 16
      %v4644 = vrot.slane %v4642, 3
      %v4645 = vshll.u32 %v4437, 16
      %v4647 = vrot.slane %v4645, 4
      %v4648 = vor.u32 %v4644, %v4647
      %v4649 = vsel %vm344, %v4640, %v4648
      %v4651 = vshrl.u32 %v4438, 16
      %v4653 = vrot.slane %v4651, 3
      %v4654 = vshll.u32 %v4438, 16
      %v4656 = vrot.slane %v4654, 4
      %v4657 = vor.u32 %v4653, %v4656
      %v4659 = vshrl.u32 %v4439, 16
      %v4661 = vrot.slane %v4659, 3
      %v4662 = vshll.u32 %v4439, 16
      %v4664 = vrot.slane %v4662, 4
      %v4665 = vor.u32 %v4661, %v4664
      %v4666 = vsel %vm344, %v4657, %v4665
      %v4668 = vshrl.u32 %v4440, 16
      %v4670 = vrot.slane %v4668, 3
      %v4671 = vshll.u32 %v4440, 16
      %v4673 = vrot.slane %v4671, 4
      %v4674 = vor.u32 %v4670, %v4673
      %v4676 = vshrl.u32 %v4441, 16
      %v4678 = vrot.slane %v4676, 3
      %v4679 = vshll.u32 %v4441, 16
      %v4681 = vrot.slane %v4679, 4
      %v4682 = vor.u32 %v4678, %v4681
      %v4683 = vsel %vm344, %v4674, %v4682
      %v4685 = vshrl.u32 %v4442, 16
      %v4687 = vrot.slane %v4685, 3
      %v4688 = vshll.u32 %v4442, 16
      %v4690 = vrot.slane %v4688, 4
      %v4691 = vor.u32 %v4687, %v4690
      %v4693 = vshrl.u32 %v4443, 16
      %v4695 = vrot.slane %v4693, 3
      %v4696 = vshll.u32 %v4443, 16
      %v4698 = vrot.slane %v4696, 4
      %v4699 = vor.u32 %v4695, %v4698
      %v4700 = vsel %vm344, %v4691, %v4699
      %v4702 = vshrl.u32 %v4444, 16
      %v4704 = vrot.slane %v4702, 3
      %v4705 = vshll.u32 %v4444, 16
      %v4707 = vrot.slane %v4705, 4
      %v4708 = vor.u32 %v4704, %v4707
      %v4710 = vshrl.u32 %v4445, 16
      %v4712 = vrot.slane %v4710, 3
      %v4713 = vshll.u32 %v4445, 16
      %v4715 = vrot.slane %v4713, 4
      %v4716 = vor.u32 %v4712, %v4715
      %v4717 = vsel %vm344, %v4708, %v4716
      %v4734 = vld [vmem:[#allocation3] sm:$0xf0]
      %v4735 = vld [vmem:[#allocation3 + $0x10] sm:$0xf0]
      %v4736 = vld [vmem:[#allocation3 + $0x20] sm:$0xf0]
      %v4737 = vld [vmem:[#allocation3 + $0x30] sm:$0xf0]
      %v4738 = vld [vmem:[#allocation3 + $0x40] sm:$0xf0]
      %v4739 = vld [vmem:[#allocation3 + $0x50] sm:$0xf0]
      %v4740 = vld [vmem:[#allocation3 + $0x60] sm:$0xf0]
      %v4741 = vld [vmem:[#allocation3 + $0x70] sm:$0xf0]
      %v4742 = vld [vmem:[#allocation3 + $0x80] sm:$0xf0]
      %v4743 = vld [vmem:[#allocation3 + $0x90] sm:$0xf0]
      %v4744 = vld [vmem:[#allocation3 + $0xa0] sm:$0xf0]
      %v4745 = vld [vmem:[#allocation3 + $0xb0] sm:$0xf0]
      %v4746 = vld [vmem:[#allocation3 + $0xc0] sm:$0xf0]
      %v4747 = vld [vmem:[#allocation3 + $0xd0] sm:$0xf0]
      %v4748 = vld [vmem:[#allocation3 + $0xe0] sm:$0xf0]
      %v4749 = vld [vmem:[#allocation3 + $0xf0] sm:$0xf0]
      %v4782 = vrot.slane %v4734, 4
      %v4783 = vrot.slane %v4415, 4
      %v4784 = vsel %vm1360, %v4782, %v4783
      %v4785 = vrot.slane %v4735, 4
      %v4786 = vrot.slane %v4417, 4
      %v4787 = vsel %vm1360, %v4785, %v4786
      %v4788 = vrot.slane %v4736, 4
      %v4789 = vrot.slane %v4419, 4
      %v4790 = vsel %vm1360, %v4788, %v4789
      %v4791 = vrot.slane %v4737, 4
      %v4792 = vrot.slane %v4421, 4
      %v4793 = vsel %vm1360, %v4791, %v4792
      %v4794 = vrot.slane %v4738, 4
      %v4795 = vrot.slane %v4423, 4
      %v4796 = vsel %vm1360, %v4794, %v4795
      %v4797 = vrot.slane %v4739, 4
      %v4798 = vrot.slane %v4425, 4
      %v4799 = vsel %vm1360, %v4797, %v4798
      %v4800 = vrot.slane %v4740, 4
      %v4801 = vrot.slane %v4427, 4
      %v4802 = vsel %vm1360, %v4800, %v4801
      %v4803 = vrot.slane %v4741, 4
      %v4804 = vrot.slane %v4429, 4
      %v4805 = vsel %vm1360, %v4803, %v4804
      %v4806 = vrot.slane %v4742, 4
      %v4807 = vrot.slane %v4431, 4
      %v4808 = vsel %vm1360, %v4806, %v4807
      %v4809 = vrot.slane %v4743, 4
      %v4810 = vrot.slane %v4433, 4
      %v4811 = vsel %vm1360, %v4809, %v4810
      %v4812 = vrot.slane %v4744, 4
      %v4813 = vrot.slane %v4435, 4
      %v4814 = vsel %vm1360, %v4812, %v4813
      %v4815 = vrot.slane %v4745, 4
      %v4816 = vrot.slane %v4437, 4
      %v4817 = vsel %vm1360, %v4815, %v4816
      %v4818 = vrot.slane %v4746, 4
      %v4819 = vrot.slane %v4439, 4
      %v4820 = vsel %vm1360, %v4818, %v4819
      %v4821 = vrot.slane %v4747, 4
      %v4822 = vrot.slane %v4441, 4
      %v4823 = vsel %vm1360, %v4821, %v4822
      %v4824 = vrot.slane %v4748, 4
      %v4825 = vrot.slane %v4443, 4
      %v4826 = vsel %vm1360, %v4824, %v4825
      %v4827 = vrot.slane %v4749, 4
      %v4828 = vrot.slane %v4445, 4
      %v4829 = vsel %vm1360, %v4827, %v4828
      %v4846 = vld [vmem:[#allocation3 + $0x8] sm:$0x1f]
      %v4847 = vld [vmem:[#allocation3 + $0x18] sm:$0x1f]
      %v4848 = vld [vmem:[#allocation3 + $0x28] sm:$0x1f]
      %v4849 = vld [vmem:[#allocation3 + $0x38] sm:$0x1f]
      %v4850 = vld [vmem:[#allocation3 + $0x48] sm:$0x1f]
      %v4851 = vld [vmem:[#allocation3 + $0x58] sm:$0x1f]
      %v4852 = vld [vmem:[#allocation3 + $0x68] sm:$0x1f]
      %v4853 = vld [vmem:[#allocation3 + $0x78] sm:$0x1f]
      %v4854 = vld [vmem:[#allocation3 + $0x88] sm:$0x1f]
      %v4855 = vld [vmem:[#allocation3 + $0x98] sm:$0x1f]
      %v4856 = vld [vmem:[#allocation3 + $0xa8] sm:$0x1f]
      %v4857 = vld [vmem:[#allocation3 + $0xb8] sm:$0x1f]
      %v4858 = vld [vmem:[#allocation3 + $0xc8] sm:$0x1f]
      %v4859 = vld [vmem:[#allocation3 + $0xd8] sm:$0x1f]
      %v4860 = vld [vmem:[#allocation3 + $0xe8] sm:$0x1f]
      %v4861 = vld [vmem:[#allocation3 + $0xf8] sm:$0x1f]
      %v4863 = vshrl.u32 %v4734, 16
      %v4865 = vrot.slane %v4863, 4
      %v4866 = vshll.u32 %v4734, 16
      %v4868 = vrot.slane %v4866, 5
      %v4869 = vor.u32 %v4865, %v4868
      %v4871 = vshrl.u32 %v4846, 16
      %v4873 = vrot.slane %v4871, 4
      %v4874 = vshll.u32 %v4846, 16
      %v4876 = vrot.slane %v4874, 5
      %v4877 = vor.u32 %v4873, %v4876
      %v4878 = vsel %vm1425, %v4869, %v4877
      %v4880 = vshrl.u32 %v4735, 16
      %v4882 = vrot.slane %v4880, 4
      %v4883 = vshll.u32 %v4735, 16
      %v4885 = vrot.slane %v4883, 5
      %v4886 = vor.u32 %v4882, %v4885
      %v4888 = vshrl.u32 %v4847, 16
      %v4890 = vrot.slane %v4888, 4
      %v4891 = vshll.u32 %v4847, 16
      %v4893 = vrot.slane %v4891, 5
      %v4894 = vor.u32 %v4890, %v4893
      %v4895 = vsel %vm1425, %v4886, %v4894
      %v4897 = vshrl.u32 %v4736, 16
      %v4899 = vrot.slane %v4897, 4
      %v4900 = vshll.u32 %v4736, 16
      %v4902 = vrot.slane %v4900, 5
      %v4903 = vor.u32 %v4899, %v4902
      %v4905 = vshrl.u32 %v4848, 16
      %v4907 = vrot.slane %v4905, 4
      %v4908 = vshll.u32 %v4848, 16
      %v4910 = vrot.slane %v4908, 5
      %v4911 = vor.u32 %v4907, %v4910
      %v4912 = vsel %vm1425, %v4903, %v4911
      %v4914 = vshrl.u32 %v4737, 16
      %v4916 = vrot.slane %v4914, 4
      %v4917 = vshll.u32 %v4737, 16
      %v4919 = vrot.slane %v4917, 5
      %v4920 = vor.u32 %v4916, %v4919
      %v4922 = vshrl.u32 %v4849, 16
      %v4924 = vrot.slane %v4922, 4
      %v4925 = vshll.u32 %v4849, 16
      %v4927 = vrot.slane %v4925, 5
      %v4928 = vor.u32 %v4924, %v4927
      %v4929 = vsel %vm1425, %v4920, %v4928
      %v4931 = vshrl.u32 %v4738, 16
      %v4933 = vrot.slane %v4931, 4
      %v4934 = vshll.u32 %v4738, 16
      %v4936 = vrot.slane %v4934, 5
      %v4937 = vor.u32 %v4933, %v4936
      %v4939 = vshrl.u32 %v4850, 16
      %v4941 = vrot.slane %v4939, 4
      %v4942 = vshll.u32 %v4850, 16
      %v4944 = vrot.slane %v4942, 5
      %v4945 = vor.u32 %v4941, %v4944
      %v4946 = vsel %vm1425, %v4937, %v4945
      %v4948 = vshrl.u32 %v4739, 16
      %v4950 = vrot.slane %v4948, 4
      %v4951 = vshll.u32 %v4739, 16
      %v4953 = vrot.slane %v4951, 5
      %v4954 = vor.u32 %v4950, %v4953
      %v4956 = vshrl.u32 %v4851, 16
      %v4958 = vrot.slane %v4956, 4
      %v4959 = vshll.u32 %v4851, 16
      %v4961 = vrot.slane %v4959, 5
      %v4962 = vor.u32 %v4958, %v4961
      %v4963 = vsel %vm1425, %v4954, %v4962
      %v4965 = vshrl.u32 %v4740, 16
      %v4967 = vrot.slane %v4965, 4
      %v4968 = vshll.u32 %v4740, 16
      %v4970 = vrot.slane %v4968, 5
      %v4971 = vor.u32 %v4967, %v4970
      %v4973 = vshrl.u32 %v4852, 16
      %v4975 = vrot.slane %v4973, 4
      %v4976 = vshll.u32 %v4852, 16
      %v4978 = vrot.slane %v4976, 5
      %v4979 = vor.u32 %v4975, %v4978
      %v4980 = vsel %vm1425, %v4971, %v4979
      %v4982 = vshrl.u32 %v4741, 16
      %v4984 = vrot.slane %v4982, 4
      %v4985 = vshll.u32 %v4741, 16
      %v4987 = vrot.slane %v4985, 5
      %v4988 = vor.u32 %v4984, %v4987
      %v4990 = vshrl.u32 %v4853, 16
      %v4992 = vrot.slane %v4990, 4
      %v4993 = vshll.u32 %v4853, 16
      %v4995 = vrot.slane %v4993, 5
      %v4996 = vor.u32 %v4992, %v4995
      %v4997 = vsel %vm1425, %v4988, %v4996
      %v4999 = vshrl.u32 %v4742, 16
      %v5001 = vrot.slane %v4999, 4
      %v5002 = vshll.u32 %v4742, 16
      %v5004 = vrot.slane %v5002, 5
      %v5005 = vor.u32 %v5001, %v5004
      %v5007 = vshrl.u32 %v4854, 16
      %v5009 = vrot.slane %v5007, 4
      %v5010 = vshll.u32 %v4854, 16
      %v5012 = vrot.slane %v5010, 5
      %v5013 = vor.u32 %v5009, %v5012
      %v5014 = vsel %vm1425, %v5005, %v5013
      %v5016 = vshrl.u32 %v4743, 16
      %v5018 = vrot.slane %v5016, 4
      %v5019 = vshll.u32 %v4743, 16
      %v5021 = vrot.slane %v5019, 5
      %v5022 = vor.u32 %v5018, %v5021
      %v5024 = vshrl.u32 %v4855, 16
      %v5026 = vrot.slane %v5024, 4
      %v5027 = vshll.u32 %v4855, 16
      %v5029 = vrot.slane %v5027, 5
      %v5030 = vor.u32 %v5026, %v5029
      %v5031 = vsel %vm1425, %v5022, %v5030
      %v5033 = vshrl.u32 %v4744, 16
      %v5035 = vrot.slane %v5033, 4
      %v5036 = vshll.u32 %v4744, 16
      %v5038 = vrot.slane %v5036, 5
      %v5039 = vor.u32 %v5035, %v5038
      %v5041 = vshrl.u32 %v4856, 16
      %v5043 = vrot.slane %v5041, 4
      %v5044 = vshll.u32 %v4856, 16
      %v5046 = vrot.slane %v5044, 5
      %v5047 = vor.u32 %v5043, %v5046
      %v5048 = vsel %vm1425, %v5039, %v5047
      %v5050 = vshrl.u32 %v4745, 16
      %v5052 = vrot.slane %v5050, 4
      %v5053 = vshll.u32 %v4745, 16
      %v5055 = vrot.slane %v5053, 5
      %v5056 = vor.u32 %v5052, %v5055
      %v5058 = vshrl.u32 %v4857, 16
      %v5060 = vrot.slane %v5058, 4
      %v5061 = vshll.u32 %v4857, 16
      %v5063 = vrot.slane %v5061, 5
      %v5064 = vor.u32 %v5060, %v5063
      %v5065 = vsel %vm1425, %v5056, %v5064
      %v5067 = vshrl.u32 %v4746, 16
      %v5069 = vrot.slane %v5067, 4
      %v5070 = vshll.u32 %v4746, 16
      %v5072 = vrot.slane %v5070, 5
      %v5073 = vor.u32 %v5069, %v5072
      %v5075 = vshrl.u32 %v4858, 16
      %v5077 = vrot.slane %v5075, 4
      %v5078 = vshll.u32 %v4858, 16
      %v5080 = vrot.slane %v5078, 5
      %v5081 = vor.u32 %v5077, %v5080
      %v5082 = vsel %vm1425, %v5073, %v5081
      %v5084 = vshrl.u32 %v4747, 16
      %v5086 = vrot.slane %v5084, 4
      %v5087 = vshll.u32 %v4747, 16
      %v5089 = vrot.slane %v5087, 5
      %v5090 = vor.u32 %v5086, %v5089
      %v5092 = vshrl.u32 %v4859, 16
      %v5094 = vrot.slane %v5092, 4
      %v5095 = vshll.u32 %v4859, 16
      %v5097 = vrot.slane %v5095, 5
      %v5098 = vor.u32 %v5094, %v5097
      %v5099 = vsel %vm1425, %v5090, %v5098
      %v5101 = vshrl.u32 %v4748, 16
      %v5103 = vrot.slane %v5101, 4
      %v5104 = vshll.u32 %v4748, 16
      %v5106 = vrot.slane %v5104, 5
      %v5107 = vor.u32 %v5103, %v5106
      %v5109 = vshrl.u32 %v4860, 16
      %v5111 = vrot.slane %v5109, 4
      %v5112 = vshll.u32 %v4860, 16
      %v5114 = vrot.slane %v5112, 5
      %v5115 = vor.u32 %v5111, %v5114
      %v5116 = vsel %vm1425, %v5107, %v5115
      %v5118 = vshrl.u32 %v4749, 16
      %v5120 = vrot.slane %v5118, 4
      %v5121 = vshll.u32 %v4749, 16
      %v5123 = vrot.slane %v5121, 5
      %v5124 = vor.u32 %v5120, %v5123
      %v5126 = vshrl.u32 %v4861, 16
      %v5128 = vrot.slane %v5126, 4
      %v5129 = vshll.u32 %v4861, 16
      %v5131 = vrot.slane %v5129, 5
      %v5132 = vor.u32 %v5128, %v5131
      %v5133 = vsel %vm1425, %v5124, %v5132
      %v5150 = vld [vmem:[%s4381] sm:$0xf8]
      %v5151 = vld [vmem:[%s4381 + $0x8] sm:$0xf]
      %v5152 = vld [vmem:[%s4381 + $0x10] sm:$0xf8]
      %v5153 = vld [vmem:[%s4381 + $0x18] sm:$0xf]
      %v5154 = vld [vmem:[%s4381 + $0x20] sm:$0xf8]
      %v5155 = vld [vmem:[%s4381 + $0x28] sm:$0xf]
      %v5156 = vld [vmem:[%s4381 + $0x30] sm:$0xf8]
      %v5157 = vld [vmem:[%s4381 + $0x38] sm:$0xf]
      %v5158 = vld [vmem:[%s4381 + $0x40] sm:$0xf8]
      %v5159 = vld [vmem:[%s4381 + $0x48] sm:$0xf]
      %v5160 = vld [vmem:[%s4381 + $0x50] sm:$0xf8]
      %v5161 = vld [vmem:[%s4381 + $0x58] sm:$0xf]
      %v5162 = vld [vmem:[%s4381 + $0x60] sm:$0xf8]
      %v5163 = vld [vmem:[%s4381 + $0x68] sm:$0xf]
      %v5164 = vld [vmem:[%s4381 + $0x70] sm:$0xf8]
      %v5165 = vld [vmem:[%s4381 + $0x78] sm:$0xf]
      %v5166 = vld [vmem:[%s4381 + $0x80] sm:$0xf8]
      %v5167 = vld [vmem:[%s4381 + $0x88] sm:$0xf]
      %v5168 = vld [vmem:[%s4381 + $0x90] sm:$0xf8]
      %v5169 = vld [vmem:[%s4381 + $0x98] sm:$0xf]
      %v5170 = vld [vmem:[%s4381 + $0xa0] sm:$0xf8]
      %v5171 = vld [vmem:[%s4381 + $0xa8] sm:$0xf]
      %v5172 = vld [vmem:[%s4381 + $0xb0] sm:$0xf8]
      %v5173 = vld [vmem:[%s4381 + $0xb8] sm:$0xf]
      %v5174 = vld [vmem:[%s4381 + $0xc0] sm:$0xf8]
      %v5175 = vld [vmem:[%s4381 + $0xc8] sm:$0xf]
      %v5176 = vld [vmem:[%s4381 + $0xd0] sm:$0xf8]
      %v5177 = vld [vmem:[%s4381 + $0xd8] sm:$0xf]
      %v5178 = vld [vmem:[%s4381 + $0xe0] sm:$0xf8]
      %v5179 = vld [vmem:[%s4381 + $0xe8] sm:$0xf]
      %v5180 = vld [vmem:[%s4381 + $0xf0] sm:$0xf8]
      %v5181 = vld [vmem:[%s4381 + $0xf8] sm:$0xf]
      %v5183 = vshrl.u32 %v5150, 16
      %v5185 = vrot.slane %v5183, 3
      %v5186 = vshll.u32 %v5150, 16
      %v5188 = vrot.slane %v5186, 4
      %v5189 = vor.u32 %v5185, %v5188
      %v5191 = vshrl.u32 %v5151, 16
      %v5193 = vrot.slane %v5191, 3
      %v5194 = vshll.u32 %v5151, 16
      %v5196 = vrot.slane %v5194, 4
      %v5197 = vor.u32 %v5193, %v5196
      %v5198 = vsel %vm344, %v5189, %v5197
      %v5200 = vshrl.u32 %v5152, 16
      %v5202 = vrot.slane %v5200, 3
      %v5203 = vshll.u32 %v5152, 16
      %v5205 = vrot.slane %v5203, 4
      %v5206 = vor.u32 %v5202, %v5205
      %v5208 = vshrl.u32 %v5153, 16
      %v5210 = vrot.slane %v5208, 3
      %v5211 = vshll.u32 %v5153, 16
      %v5213 = vrot.slane %v5211, 4
      %v5214 = vor.u32 %v5210, %v5213
      %v5215 = vsel %vm344, %v5206, %v5214
      %v5217 = vshrl.u32 %v5154, 16
      %v5219 = vrot.slane %v5217, 3
      %v5220 = vshll.u32 %v5154, 16
      %v5222 = vrot.slane %v5220, 4
      %v5223 = vor.u32 %v5219, %v5222
      %v5225 = vshrl.u32 %v5155, 16
      %v5227 = vrot.slane %v5225, 3
      %v5228 = vshll.u32 %v5155, 16
      %v5230 = vrot.slane %v5228, 4
      %v5231 = vor.u32 %v5227, %v5230
      %v5232 = vsel %vm344, %v5223, %v5231
      %v5234 = vshrl.u32 %v5156, 16
      %v5236 = vrot.slane %v5234, 3
      %v5237 = vshll.u32 %v5156, 16
      %v5239 = vrot.slane %v5237, 4
      %v5240 = vor.u32 %v5236, %v5239
      %v5242 = vshrl.u32 %v5157, 16
      %v5244 = vrot.slane %v5242, 3
      %v5245 = vshll.u32 %v5157, 16
      %v5247 = vrot.slane %v5245, 4
      %v5248 = vor.u32 %v5244, %v5247
      %v5249 = vsel %vm344, %v5240, %v5248
      %v5251 = vshrl.u32 %v5158, 16
      %v5253 = vrot.slane %v5251, 3
      %v5254 = vshll.u32 %v5158, 16
      %v5256 = vrot.slane %v5254, 4
      %v5257 = vor.u32 %v5253, %v5256
      %v5259 = vshrl.u32 %v5159, 16
      %v5261 = vrot.slane %v5259, 3
      %v5262 = vshll.u32 %v5159, 16
      %v5264 = vrot.slane %v5262, 4
      %v5265 = vor.u32 %v5261, %v5264
      %v5266 = vsel %vm344, %v5257, %v5265
      %v5268 = vshrl.u32 %v5160, 16
      %v5270 = vrot.slane %v5268, 3
      %v5271 = vshll.u32 %v5160, 16
      %v5273 = vrot.slane %v5271, 4
      %v5274 = vor.u32 %v5270, %v5273
      %v5276 = vshrl.u32 %v5161, 16
      %v5278 = vrot.slane %v5276, 3
      %v5279 = vshll.u32 %v5161, 16
      %v5281 = vrot.slane %v5279, 4
      %v5282 = vor.u32 %v5278, %v5281
      %v5283 = vsel %vm344, %v5274, %v5282
      %v5285 = vshrl.u32 %v5162, 16
      %v5287 = vrot.slane %v5285, 3
      %v5288 = vshll.u32 %v5162, 16
      %v5290 = vrot.slane %v5288, 4
      %v5291 = vor.u32 %v5287, %v5290
      %v5293 = vshrl.u32 %v5163, 16
      %v5295 = vrot.slane %v5293, 3
      %v5296 = vshll.u32 %v5163, 16
      %v5298 = vrot.slane %v5296, 4
      %v5299 = vor.u32 %v5295, %v5298
      %v5300 = vsel %vm344, %v5291, %v5299
      %v5302 = vshrl.u32 %v5164, 16
      %v5304 = vrot.slane %v5302, 3
      %v5305 = vshll.u32 %v5164, 16
      %v5307 = vrot.slane %v5305, 4
      %v5308 = vor.u32 %v5304, %v5307
      %v5310 = vshrl.u32 %v5165, 16
      %v5312 = vrot.slane %v5310, 3
      %v5313 = vshll.u32 %v5165, 16
      %v5315 = vrot.slane %v5313, 4
      %v5316 = vor.u32 %v5312, %v5315
      %v5317 = vsel %vm344, %v5308, %v5316
      %v5319 = vshrl.u32 %v5166, 16
      %v5321 = vrot.slane %v5319, 3
      %v5322 = vshll.u32 %v5166, 16
      %v5324 = vrot.slane %v5322, 4
      %v5325 = vor.u32 %v5321, %v5324
      %v5327 = vshrl.u32 %v5167, 16
      %v5329 = vrot.slane %v5327, 3
      %v5330 = vshll.u32 %v5167, 16
      %v5332 = vrot.slane %v5330, 4
      %v5333 = vor.u32 %v5329, %v5332
      %v5334 = vsel %vm344, %v5325, %v5333
      %v5336 = vshrl.u32 %v5168, 16
      %v5338 = vrot.slane %v5336, 3
      %v5339 = vshll.u32 %v5168, 16
      %v5341 = vrot.slane %v5339, 4
      %v5342 = vor.u32 %v5338, %v5341
      %v5344 = vshrl.u32 %v5169, 16
      %v5346 = vrot.slane %v5344, 3
      %v5347 = vshll.u32 %v5169, 16
      %v5349 = vrot.slane %v5347, 4
      %v5350 = vor.u32 %v5346, %v5349
      %v5351 = vsel %vm344, %v5342, %v5350
      %v5353 = vshrl.u32 %v5170, 16
      %v5355 = vrot.slane %v5353, 3
      %v5356 = vshll.u32 %v5170, 16
      %v5358 = vrot.slane %v5356, 4
      %v5359 = vor.u32 %v5355, %v5358
      %v5361 = vshrl.u32 %v5171, 16
      %v5363 = vrot.slane %v5361, 3
      %v5364 = vshll.u32 %v5171, 16
      %v5366 = vrot.slane %v5364, 4
      %v5367 = vor.u32 %v5363, %v5366
      %v5368 = vsel %vm344, %v5359, %v5367
      %v5370 = vshrl.u32 %v5172, 16
      %v5372 = vrot.slane %v5370, 3
      %v5373 = vshll.u32 %v5172, 16
      %v5375 = vrot.slane %v5373, 4
      %v5376 = vor.u32 %v5372, %v5375
      %v5378 = vshrl.u32 %v5173, 16
      %v5380 = vrot.slane %v5378, 3
      %v5381 = vshll.u32 %v5173, 16
      %v5383 = vrot.slane %v5381, 4
      %v5384 = vor.u32 %v5380, %v5383
      %v5385 = vsel %vm344, %v5376, %v5384
      %v5387 = vshrl.u32 %v5174, 16
      %v5389 = vrot.slane %v5387, 3
      %v5390 = vshll.u32 %v5174, 16
      %v5392 = vrot.slane %v5390, 4
      %v5393 = vor.u32 %v5389, %v5392
      %v5395 = vshrl.u32 %v5175, 16
      %v5397 = vrot.slane %v5395, 3
      %v5398 = vshll.u32 %v5175, 16
      %v5400 = vrot.slane %v5398, 4
      %v5401 = vor.u32 %v5397, %v5400
      %v5402 = vsel %vm344, %v5393, %v5401
      %v5404 = vshrl.u32 %v5176, 16
      %v5406 = vrot.slane %v5404, 3
      %v5407 = vshll.u32 %v5176, 16
      %v5409 = vrot.slane %v5407, 4
      %v5410 = vor.u32 %v5406, %v5409
      %v5412 = vshrl.u32 %v5177, 16
      %v5414 = vrot.slane %v5412, 3
      %v5415 = vshll.u32 %v5177, 16
      %v5417 = vrot.slane %v5415, 4
      %v5418 = vor.u32 %v5414, %v5417
      %v5419 = vsel %vm344, %v5410, %v5418
      %v5421 = vshrl.u32 %v5178, 16
      %v5423 = vrot.slane %v5421, 3
      %v5424 = vshll.u32 %v5178, 16
      %v5426 = vrot.slane %v5424, 4
      %v5427 = vor.u32 %v5423, %v5426
      %v5429 = vshrl.u32 %v5179, 16
      %v5431 = vrot.slane %v5429, 3
      %v5432 = vshll.u32 %v5179, 16
      %v5434 = vrot.slane %v5432, 4
      %v5435 = vor.u32 %v5431, %v5434
      %v5436 = vsel %vm344, %v5427, %v5435
      %v5438 = vshrl.u32 %v5180, 16
      %v5440 = vrot.slane %v5438, 3
      %v5441 = vshll.u32 %v5180, 16
      %v5443 = vrot.slane %v5441, 4
      %v5444 = vor.u32 %v5440, %v5443
      %v5446 = vshrl.u32 %v5181, 16
      %v5448 = vrot.slane %v5446, 3
      %v5449 = vshll.u32 %v5181, 16
      %v5451 = vrot.slane %v5449, 4
      %v5452 = vor.u32 %v5448, %v5451
      %v5453 = vsel %vm344, %v5444, %v5452
      %v5470 = vld [vmem:[%s4381] sm:$0xf0]
      %v5471 = vld [vmem:[%s4381 + $0x10] sm:$0xf0]
      %v5472 = vld [vmem:[%s4381 + $0x20] sm:$0xf0]
      %v5473 = vld [vmem:[%s4381 + $0x30] sm:$0xf0]
      %v5474 = vld [vmem:[%s4381 + $0x40] sm:$0xf0]
      %v5475 = vld [vmem:[%s4381 + $0x50] sm:$0xf0]
      %v5476 = vld [vmem:[%s4381 + $0x60] sm:$0xf0]
      %v5477 = vld [vmem:[%s4381 + $0x70] sm:$0xf0]
      %v5478 = vld [vmem:[%s4381 + $0x80] sm:$0xf0]
      %v5479 = vld [vmem:[%s4381 + $0x90] sm:$0xf0]
      %v5480 = vld [vmem:[%s4381 + $0xa0] sm:$0xf0]
      %v5481 = vld [vmem:[%s4381 + $0xb0] sm:$0xf0]
      %v5482 = vld [vmem:[%s4381 + $0xc0] sm:$0xf0]
      %v5483 = vld [vmem:[%s4381 + $0xd0] sm:$0xf0]
      %v5484 = vld [vmem:[%s4381 + $0xe0] sm:$0xf0]
      %v5485 = vld [vmem:[%s4381 + $0xf0] sm:$0xf0]
      %v5518 = vrot.slane %v5470, 4
      %v5519 = vrot.slane %v5151, 4
      %v5520 = vsel %vm1360, %v5518, %v5519
      %v5521 = vrot.slane %v5471, 4
      %v5522 = vrot.slane %v5153, 4
      %v5523 = vsel %vm1360, %v5521, %v5522
      %v5524 = vrot.slane %v5472, 4
      %v5525 = vrot.slane %v5155, 4
      %v5526 = vsel %vm1360, %v5524, %v5525
      %v5527 = vrot.slane %v5473, 4
      %v5528 = vrot.slane %v5157, 4
      %v5529 = vsel %vm1360, %v5527, %v5528
      %v5530 = vrot.slane %v5474, 4
      %v5531 = vrot.slane %v5159, 4
      %v5532 = vsel %vm1360, %v5530, %v5531
      %v5533 = vrot.slane %v5475, 4
      %v5534 = vrot.slane %v5161, 4
      %v5535 = vsel %vm1360, %v5533, %v5534
      %v5536 = vrot.slane %v5476, 4
      %v5537 = vrot.slane %v5163, 4
      %v5538 = vsel %vm1360, %v5536, %v5537
      %v5539 = vrot.slane %v5477, 4
      %v5540 = vrot.slane %v5165, 4
      %v5541 = vsel %vm1360, %v5539, %v5540
      %v5542 = vrot.slane %v5478, 4
      %v5543 = vrot.slane %v5167, 4
      %v5544 = vsel %vm1360, %v5542, %v5543
      %v5545 = vrot.slane %v5479, 4
      %v5546 = vrot.slane %v5169, 4
      %v5547 = vsel %vm1360, %v5545, %v5546
      %v5548 = vrot.slane %v5480, 4
      %v5549 = vrot.slane %v5171, 4
      %v5550 = vsel %vm1360, %v5548, %v5549
      %v5551 = vrot.slane %v5481, 4
      %v5552 = vrot.slane %v5173, 4
      %v5553 = vsel %vm1360, %v5551, %v5552
      %v5554 = vrot.slane %v5482, 4
      %v5555 = vrot.slane %v5175, 4
      %v5556 = vsel %vm1360, %v5554, %v5555
      %v5557 = vrot.slane %v5483, 4
      %v5558 = vrot.slane %v5177, 4
      %v5559 = vsel %vm1360, %v5557, %v5558
      %v5560 = vrot.slane %v5484, 4
      %v5561 = vrot.slane %v5179, 4
      %v5562 = vsel %vm1360, %v5560, %v5561
      %v5563 = vrot.slane %v5485, 4
      %v5564 = vrot.slane %v5181, 4
      %v5565 = vsel %vm1360, %v5563, %v5564
      %v5582 = vld [vmem:[%s4381 + $0x8] sm:$0x1f]
      %v5583 = vld [vmem:[%s4381 + $0x18] sm:$0x1f]
      %v5584 = vld [vmem:[%s4381 + $0x28] sm:$0x1f]
      %v5585 = vld [vmem:[%s4381 + $0x38] sm:$0x1f]
      %v5586 = vld [vmem:[%s4381 + $0x48] sm:$0x1f]
      %v5587 = vld [vmem:[%s4381 + $0x58] sm:$0x1f]
      %v5588 = vld [vmem:[%s4381 + $0x68] sm:$0x1f]
      %v5589 = vld [vmem:[%s4381 + $0x78] sm:$0x1f]
      %v5590 = vld [vmem:[%s4381 + $0x88] sm:$0x1f]
      %v5591 = vld [vmem:[%s4381 + $0x98] sm:$0x1f]
      %v5592 = vld [vmem:[%s4381 + $0xa8] sm:$0x1f]
      %v5593 = vld [vmem:[%s4381 + $0xb8] sm:$0x1f]
      %v5594 = vld [vmem:[%s4381 + $0xc8] sm:$0x1f]
      %v5595 = vld [vmem:[%s4381 + $0xd8] sm:$0x1f]
      %v5596 = vld [vmem:[%s4381 + $0xe8] sm:$0x1f]
      %v5597 = vld [vmem:[%s4381 + $0xf8] sm:$0x1f]
      %v5599 = vshrl.u32 %v5470, 16
      %v5601 = vrot.slane %v5599, 4
      %v5602 = vshll.u32 %v5470, 16
      %v5604 = vrot.slane %v5602, 5
      %v5605 = vor.u32 %v5601, %v5604
      %v5607 = vshrl.u32 %v5582, 16
      %v5609 = vrot.slane %v5607, 4
      %v5610 = vshll.u32 %v5582, 16
      %v5612 = vrot.slane %v5610, 5
      %v5613 = vor.u32 %v5609, %v5612
      %v5614 = vsel %vm1425, %v5605, %v5613
      %v5616 = vshrl.u32 %v5471, 16
      %v5618 = vrot.slane %v5616, 4
      %v5619 = vshll.u32 %v5471, 16
      %v5621 = vrot.slane %v5619, 5
      %v5622 = vor.u32 %v5618, %v5621
      %v5624 = vshrl.u32 %v5583, 16
      %v5626 = vrot.slane %v5624, 4
      %v5627 = vshll.u32 %v5583, 16
      %v5629 = vrot.slane %v5627, 5
      %v5630 = vor.u32 %v5626, %v5629
      %v5631 = vsel %vm1425, %v5622, %v5630
      %v5633 = vshrl.u32 %v5472, 16
      %v5635 = vrot.slane %v5633, 4
      %v5636 = vshll.u32 %v5472, 16
      %v5638 = vrot.slane %v5636, 5
      %v5639 = vor.u32 %v5635, %v5638
      %v5641 = vshrl.u32 %v5584, 16
      %v5643 = vrot.slane %v5641, 4
      %v5644 = vshll.u32 %v5584, 16
      %v5646 = vrot.slane %v5644, 5
      %v5647 = vor.u32 %v5643, %v5646
      %v5648 = vsel %vm1425, %v5639, %v5647
      %v5650 = vshrl.u32 %v5473, 16
      %v5652 = vrot.slane %v5650, 4
      %v5653 = vshll.u32 %v5473, 16
      %v5655 = vrot.slane %v5653, 5
      %v5656 = vor.u32 %v5652, %v5655
      %v5658 = vshrl.u32 %v5585, 16
      %v5660 = vrot.slane %v5658, 4
      %v5661 = vshll.u32 %v5585, 16
      %v5663 = vrot.slane %v5661, 5
      %v5664 = vor.u32 %v5660, %v5663
      %v5665 = vsel %vm1425, %v5656, %v5664
      %v5667 = vshrl.u32 %v5474, 16
      %v5669 = vrot.slane %v5667, 4
      %v5670 = vshll.u32 %v5474, 16
      %v5672 = vrot.slane %v5670, 5
      %v5673 = vor.u32 %v5669, %v5672
      %v5675 = vshrl.u32 %v5586, 16
      %v5677 = vrot.slane %v5675, 4
      %v5678 = vshll.u32 %v5586, 16
      %v5680 = vrot.slane %v5678, 5
      %v5681 = vor.u32 %v5677, %v5680
      %v5682 = vsel %vm1425, %v5673, %v5681
      %v5684 = vshrl.u32 %v5475, 16
      %v5686 = vrot.slane %v5684, 4
      %v5687 = vshll.u32 %v5475, 16
      %v5689 = vrot.slane %v5687, 5
      %v5690 = vor.u32 %v5686, %v5689
      %v5692 = vshrl.u32 %v5587, 16
      %v5694 = vrot.slane %v5692, 4
      %v5695 = vshll.u32 %v5587, 16
      %v5697 = vrot.slane %v5695, 5
      %v5698 = vor.u32 %v5694, %v5697
      %v5699 = vsel %vm1425, %v5690, %v5698
      %v5701 = vshrl.u32 %v5476, 16
      %v5703 = vrot.slane %v5701, 4
      %v5704 = vshll.u32 %v5476, 16
      %v5706 = vrot.slane %v5704, 5
      %v5707 = vor.u32 %v5703, %v5706
      %v5709 = vshrl.u32 %v5588, 16
      %v5711 = vrot.slane %v5709, 4
      %v5712 = vshll.u32 %v5588, 16
      %v5714 = vrot.slane %v5712, 5
      %v5715 = vor.u32 %v5711, %v5714
      %v5716 = vsel %vm1425, %v5707, %v5715
      %v5718 = vshrl.u32 %v5477, 16
      %v5720 = vrot.slane %v5718, 4
      %v5721 = vshll.u32 %v5477, 16
      %v5723 = vrot.slane %v5721, 5
      %v5724 = vor.u32 %v5720, %v5723
      %v5726 = vshrl.u32 %v5589, 16
      %v5728 = vrot.slane %v5726, 4
      %v5729 = vshll.u32 %v5589, 16
      %v5731 = vrot.slane %v5729, 5
      %v5732 = vor.u32 %v5728, %v5731
      %v5733 = vsel %vm1425, %v5724, %v5732
      %v5735 = vshrl.u32 %v5478, 16
      %v5737 = vrot.slane %v5735, 4
      %v5738 = vshll.u32 %v5478, 16
      %v5740 = vrot.slane %v5738, 5
      %v5741 = vor.u32 %v5737, %v5740
      %v5743 = vshrl.u32 %v5590, 16
      %v5745 = vrot.slane %v5743, 4
      %v5746 = vshll.u32 %v5590, 16
      %v5748 = vrot.slane %v5746, 5
      %v5749 = vor.u32 %v5745, %v5748
      %v5750 = vsel %vm1425, %v5741, %v5749
      %v5752 = vshrl.u32 %v5479, 16
      %v5754 = vrot.slane %v5752, 4
      %v5755 = vshll.u32 %v5479, 16
      %v5757 = vrot.slane %v5755, 5
      %v5758 = vor.u32 %v5754, %v5757
      %v5760 = vshrl.u32 %v5591, 16
      %v5762 = vrot.slane %v5760, 4
      %v5763 = vshll.u32 %v5591, 16
      %v5765 = vrot.slane %v5763, 5
      %v5766 = vor.u32 %v5762, %v5765
      %v5767 = vsel %vm1425, %v5758, %v5766
      %v5769 = vshrl.u32 %v5480, 16
      %v5771 = vrot.slane %v5769, 4
      %v5772 = vshll.u32 %v5480, 16
      %v5774 = vrot.slane %v5772, 5
      %v5775 = vor.u32 %v5771, %v5774
      %v5777 = vshrl.u32 %v5592, 16
      %v5779 = vrot.slane %v5777, 4
      %v5780 = vshll.u32 %v5592, 16
      %v5782 = vrot.slane %v5780, 5
      %v5783 = vor.u32 %v5779, %v5782
      %v5784 = vsel %vm1425, %v5775, %v5783
      %v5786 = vshrl.u32 %v5481, 16
      %v5788 = vrot.slane %v5786, 4
      %v5789 = vshll.u32 %v5481, 16
      %v5791 = vrot.slane %v5789, 5
      %v5792 = vor.u32 %v5788, %v5791
      %v5794 = vshrl.u32 %v5593, 16
      %v5796 = vrot.slane %v5794, 4
      %v5797 = vshll.u32 %v5593, 16
      %v5799 = vrot.slane %v5797, 5
      %v5800 = vor.u32 %v5796, %v5799
      %v5801 = vsel %vm1425, %v5792, %v5800
      %v5803 = vshrl.u32 %v5482, 16
      %v5805 = vrot.slane %v5803, 4
      %v5806 = vshll.u32 %v5482, 16
      %v5808 = vrot.slane %v5806, 5
      %v5809 = vor.u32 %v5805, %v5808
      %v5811 = vshrl.u32 %v5594, 16
      %v5813 = vrot.slane %v5811, 4
      %v5814 = vshll.u32 %v5594, 16
      %v5816 = vrot.slane %v5814, 5
      %v5817 = vor.u32 %v5813, %v5816
      %v5818 = vsel %vm1425, %v5809, %v5817
      %v5820 = vshrl.u32 %v5483, 16
      %v5822 = vrot.slane %v5820, 4
      %v5823 = vshll.u32 %v5483, 16
      %v5825 = vrot.slane %v5823, 5
      %v5826 = vor.u32 %v5822, %v5825
      %v5828 = vshrl.u32 %v5595, 16
      %v5830 = vrot.slane %v5828, 4
      %v5831 = vshll.u32 %v5595, 16
      %v5833 = vrot.slane %v5831, 5
      %v5834 = vor.u32 %v5830, %v5833
      %v5835 = vsel %vm1425, %v5826, %v5834
      %v5837 = vshrl.u32 %v5484, 16
      %v5839 = vrot.slane %v5837, 4
      %v5840 = vshll.u32 %v5484, 16
      %v5842 = vrot.slane %v5840, 5
      %v5843 = vor.u32 %v5839, %v5842
      %v5845 = vshrl.u32 %v5596, 16
      %v5847 = vrot.slane %v5845, 4
      %v5848 = vshll.u32 %v5596, 16
      %v5850 = vrot.slane %v5848, 5
      %v5851 = vor.u32 %v5847, %v5850
      %v5852 = vsel %vm1425, %v5843, %v5851
      %v5854 = vshrl.u32 %v5485, 16
      %v5856 = vrot.slane %v5854, 4
      %v5857 = vshll.u32 %v5485, 16
      %v5859 = vrot.slane %v5857, 5
      %v5860 = vor.u32 %v5856, %v5859
      %v5862 = vshrl.u32 %v5597, 16
      %v5864 = vrot.slane %v5862, 4
      %v5865 = vshll.u32 %v5597, 16
      %v5867 = vrot.slane %v5865, 5
      %v5868 = vor.u32 %v5864, %v5867
      %v5869 = vsel %vm1425, %v5860, %v5868
      %s5886 = scalar_lea.vmem [#allocation3], 32
      %v5887 = vld [vmem:[%s5886] sm:$0xf8]
      %v5888 = vld [vmem:[%s5886 + $0x8] sm:$0xf]
      %v5889 = vld [vmem:[%s5886 + $0x10] sm:$0xf8]
      %v5890 = vld [vmem:[%s5886 + $0x18] sm:$0xf]
      %v5891 = vld [vmem:[%s5886 + $0x20] sm:$0xf8]
      %v5892 = vld [vmem:[%s5886 + $0x28] sm:$0xf]
      %v5893 = vld [vmem:[%s5886 + $0x30] sm:$0xf8]
      %v5894 = vld [vmem:[%s5886 + $0x38] sm:$0xf]
      %v5895 = vld [vmem:[%s5886 + $0x40] sm:$0xf8]
      %v5896 = vld [vmem:[%s5886 + $0x48] sm:$0xf]
      %v5897 = vld [vmem:[%s5886 + $0x50] sm:$0xf8]
      %v5898 = vld [vmem:[%s5886 + $0x58] sm:$0xf]
      %v5899 = vld [vmem:[%s5886 + $0x60] sm:$0xf8]
      %v5900 = vld [vmem:[%s5886 + $0x68] sm:$0xf]
      %v5901 = vld [vmem:[%s5886 + $0x70] sm:$0xf8]
      %v5902 = vld [vmem:[%s5886 + $0x78] sm:$0xf]
      %v5903 = vld [vmem:[%s5886 + $0x80] sm:$0xf8]
      %v5904 = vld [vmem:[%s5886 + $0x88] sm:$0xf]
      %v5905 = vld [vmem:[%s5886 + $0x90] sm:$0xf8]
      %v5906 = vld [vmem:[%s5886 + $0x98] sm:$0xf]
      %v5907 = vld [vmem:[%s5886 + $0xa0] sm:$0xf8]
      %v5908 = vld [vmem:[%s5886 + $0xa8] sm:$0xf]
      %v5909 = vld [vmem:[%s5886 + $0xb0] sm:$0xf8]
      %v5910 = vld [vmem:[%s5886 + $0xb8] sm:$0xf]
      %v5911 = vld [vmem:[%s5886 + $0xc0] sm:$0xf8]
      %v5912 = vld [vmem:[%s5886 + $0xc8] sm:$0xf]
      %v5913 = vld [vmem:[%s5886 + $0xd0] sm:$0xf8]
      %v5914 = vld [vmem:[%s5886 + $0xd8] sm:$0xf]
      %v5915 = vld [vmem:[%s5886 + $0xe0] sm:$0xf8]
      %v5916 = vld [vmem:[%s5886 + $0xe8] sm:$0xf]
      %v5917 = vld [vmem:[%s5886 + $0xf0] sm:$0xf8]
      %v5918 = vld [vmem:[%s5886 + $0xf8] sm:$0xf]
      %v5920 = vshrl.u32 %v5887, 16
      %v5922 = vrot.slane %v5920, 3
      %v5923 = vshll.u32 %v5887, 16
      %v5925 = vrot.slane %v5923, 4
      %v5926 = vor.u32 %v5922, %v5925
      %v5928 = vshrl.u32 %v5888, 16
      %v5930 = vrot.slane %v5928, 3
      %v5931 = vshll.u32 %v5888, 16
      %v5933 = vrot.slane %v5931, 4
      %v5934 = vor.u32 %v5930, %v5933
      %v5935 = vsel %vm344, %v5926, %v5934
      %v5937 = vshrl.u32 %v5889, 16
      %v5939 = vrot.slane %v5937, 3
      %v5940 = vshll.u32 %v5889, 16
      %v5942 = vrot.slane %v5940, 4
      %v5943 = vor.u32 %v5939, %v5942
      %v5945 = vshrl.u32 %v5890, 16
      %v5947 = vrot.slane %v5945, 3
      %v5948 = vshll.u32 %v5890, 16
      %v5950 = vrot.slane %v5948, 4
      %v5951 = vor.u32 %v5947, %v5950
      %v5952 = vsel %vm344, %v5943, %v5951
      %v5954 = vshrl.u32 %v5891, 16
      %v5956 = vrot.slane %v5954, 3
      %v5957 = vshll.u32 %v5891, 16
      %v5959 = vrot.slane %v5957, 4
      %v5960 = vor.u32 %v5956, %v5959
      %v5962 = vshrl.u32 %v5892, 16
      %v5964 = vrot.slane %v5962, 3
      %v5965 = vshll.u32 %v5892, 16
      %v5967 = vrot.slane %v5965, 4
      %v5968 = vor.u32 %v5964, %v5967
      %v5969 = vsel %vm344, %v5960, %v5968
      %v5971 = vshrl.u32 %v5893, 16
      %v5973 = vrot.slane %v5971, 3
      %v5974 = vshll.u32 %v5893, 16
      %v5976 = vrot.slane %v5974, 4
      %v5977 = vor.u32 %v5973, %v5976
      %v5979 = vshrl.u32 %v5894, 16
      %v5981 = vrot.slane %v5979, 3
      %v5982 = vshll.u32 %v5894, 16
      %v5984 = vrot.slane %v5982, 4
      %v5985 = vor.u32 %v5981, %v5984
      %v5986 = vsel %vm344, %v5977, %v5985
      %v5988 = vshrl.u32 %v5895, 16
      %v5990 = vrot.slane %v5988, 3
      %v5991 = vshll.u32 %v5895, 16
      %v5993 = vrot.slane %v5991, 4
      %v5994 = vor.u32 %v5990, %v5993
      %v5996 = vshrl.u32 %v5896, 16
      %v5998 = vrot.slane %v5996, 3
      %v5999 = vshll.u32 %v5896, 16
      %v6001 = vrot.slane %v5999, 4
      %v6002 = vor.u32 %v5998, %v6001
      %v6003 = vsel %vm344, %v5994, %v6002
      %v6005 = vshrl.u32 %v5897, 16
      %v6007 = vrot.slane %v6005, 3
      %v6008 = vshll.u32 %v5897, 16
      %v6010 = vrot.slane %v6008, 4
      %v6011 = vor.u32 %v6007, %v6010
      %v6013 = vshrl.u32 %v5898, 16
      %v6015 = vrot.slane %v6013, 3
      %v6016 = vshll.u32 %v5898, 16
      %v6018 = vrot.slane %v6016, 4
      %v6019 = vor.u32 %v6015, %v6018
      %v6020 = vsel %vm344, %v6011, %v6019
      %v6022 = vshrl.u32 %v5899, 16
      %v6024 = vrot.slane %v6022, 3
      %v6025 = vshll.u32 %v5899, 16
      %v6027 = vrot.slane %v6025, 4
      %v6028 = vor.u32 %v6024, %v6027
      %v6030 = vshrl.u32 %v5900, 16
      %v6032 = vrot.slane %v6030, 3
      %v6033 = vshll.u32 %v5900, 16
      %v6035 = vrot.slane %v6033, 4
      %v6036 = vor.u32 %v6032, %v6035
      %v6037 = vsel %vm344, %v6028, %v6036
      %v6039 = vshrl.u32 %v5901, 16
      %v6041 = vrot.slane %v6039, 3
      %v6042 = vshll.u32 %v5901, 16
      %v6044 = vrot.slane %v6042, 4
      %v6045 = vor.u32 %v6041, %v6044
      %v6047 = vshrl.u32 %v5902, 16
      %v6049 = vrot.slane %v6047, 3
      %v6050 = vshll.u32 %v5902, 16
      %v6052 = vrot.slane %v6050, 4
      %v6053 = vor.u32 %v6049, %v6052
      %v6054 = vsel %vm344, %v6045, %v6053
      %v6056 = vshrl.u32 %v5903, 16
      %v6058 = vrot.slane %v6056, 3
      %v6059 = vshll.u32 %v5903, 16
      %v6061 = vrot.slane %v6059, 4
      %v6062 = vor.u32 %v6058, %v6061
      %v6064 = vshrl.u32 %v5904, 16
      %v6066 = vrot.slane %v6064, 3
      %v6067 = vshll.u32 %v5904, 16
      %v6069 = vrot.slane %v6067, 4
      %v6070 = vor.u32 %v6066, %v6069
      %v6071 = vsel %vm344, %v6062, %v6070
      %v6073 = vshrl.u32 %v5905, 16
      %v6075 = vrot.slane %v6073, 3
      %v6076 = vshll.u32 %v5905, 16
      %v6078 = vrot.slane %v6076, 4
      %v6079 = vor.u32 %v6075, %v6078
      %v6081 = vshrl.u32 %v5906, 16
      %v6083 = vrot.slane %v6081, 3
      %v6084 = vshll.u32 %v5906, 16
      %v6086 = vrot.slane %v6084, 4
      %v6087 = vor.u32 %v6083, %v6086
      %v6088 = vsel %vm344, %v6079, %v6087
      %v6090 = vshrl.u32 %v5907, 16
      %v6092 = vrot.slane %v6090, 3
      %v6093 = vshll.u32 %v5907, 16
      %v6095 = vrot.slane %v6093, 4
      %v6096 = vor.u32 %v6092, %v6095
      %v6098 = vshrl.u32 %v5908, 16
      %v6100 = vrot.slane %v6098, 3
      %v6101 = vshll.u32 %v5908, 16
      %v6103 = vrot.slane %v6101, 4
      %v6104 = vor.u32 %v6100, %v6103
      %v6105 = vsel %vm344, %v6096, %v6104
      %v6107 = vshrl.u32 %v5909, 16
      %v6109 = vrot.slane %v6107, 3
      %v6110 = vshll.u32 %v5909, 16
      %v6112 = vrot.slane %v6110, 4
      %v6113 = vor.u32 %v6109, %v6112
      %v6115 = vshrl.u32 %v5910, 16
      %v6117 = vrot.slane %v6115, 3
      %v6118 = vshll.u32 %v5910, 16
      %v6120 = vrot.slane %v6118, 4
      %v6121 = vor.u32 %v6117, %v6120
      %v6122 = vsel %vm344, %v6113, %v6121
      %v6124 = vshrl.u32 %v5911, 16
      %v6126 = vrot.slane %v6124, 3
      %v6127 = vshll.u32 %v5911, 16
      %v6129 = vrot.slane %v6127, 4
      %v6130 = vor.u32 %v6126, %v6129
      %v6132 = vshrl.u32 %v5912, 16
      %v6134 = vrot.slane %v6132, 3
      %v6135 = vshll.u32 %v5912, 16
      %v6137 = vrot.slane %v6135, 4
      %v6138 = vor.u32 %v6134, %v6137
      %v6139 = vsel %vm344, %v6130, %v6138
      %v6141 = vshrl.u32 %v5913, 16
      %v6143 = vrot.slane %v6141, 3
      %v6144 = vshll.u32 %v5913, 16
      %v6146 = vrot.slane %v6144, 4
      %v6147 = vor.u32 %v6143, %v6146
      %v6149 = vshrl.u32 %v5914, 16
      %v6151 = vrot.slane %v6149, 3
      %v6152 = vshll.u32 %v5914, 16
      %v6154 = vrot.slane %v6152, 4
      %v6155 = vor.u32 %v6151, %v6154
      %v6156 = vsel %vm344, %v6147, %v6155
      %v6158 = vshrl.u32 %v5915, 16
      %v6160 = vrot.slane %v6158, 3
      %v6161 = vshll.u32 %v5915, 16
      %v6163 = vrot.slane %v6161, 4
      %v6164 = vor.u32 %v6160, %v6163
      %v6166 = vshrl.u32 %v5916, 16
      %v6168 = vrot.slane %v6166, 3
      %v6169 = vshll.u32 %v5916, 16
      %v6171 = vrot.slane %v6169, 4
      %v6172 = vor.u32 %v6168, %v6171
      %v6173 = vsel %vm344, %v6164, %v6172
      %v6175 = vshrl.u32 %v5917, 16
      %v6177 = vrot.slane %v6175, 3
      %v6178 = vshll.u32 %v5917, 16
      %v6180 = vrot.slane %v6178, 4
      %v6181 = vor.u32 %v6177, %v6180
      %v6183 = vshrl.u32 %v5918, 16
      %v6185 = vrot.slane %v6183, 3
      %v6186 = vshll.u32 %v5918, 16
      %v6188 = vrot.slane %v6186, 4
      %v6189 = vor.u32 %v6185, %v6188
      %v6190 = vsel %vm344, %v6181, %v6189
      %v6207 = vld [vmem:[%s5886] sm:$0xf0]
      %v6208 = vld [vmem:[%s5886 + $0x10] sm:$0xf0]
      %v6209 = vld [vmem:[%s5886 + $0x20] sm:$0xf0]
      %v6210 = vld [vmem:[%s5886 + $0x30] sm:$0xf0]
      %v6211 = vld [vmem:[%s5886 + $0x40] sm:$0xf0]
      %v6212 = vld [vmem:[%s5886 + $0x50] sm:$0xf0]
      %v6213 = vld [vmem:[%s5886 + $0x60] sm:$0xf0]
      %v6214 = vld [vmem:[%s5886 + $0x70] sm:$0xf0]
      %v6215 = vld [vmem:[%s5886 + $0x80] sm:$0xf0]
      %v6216 = vld [vmem:[%s5886 + $0x90] sm:$0xf0]
      %v6217 = vld [vmem:[%s5886 + $0xa0] sm:$0xf0]
      %v6218 = vld [vmem:[%s5886 + $0xb0] sm:$0xf0]
      %v6219 = vld [vmem:[%s5886 + $0xc0] sm:$0xf0]
      %v6220 = vld [vmem:[%s5886 + $0xd0] sm:$0xf0]
      %v6221 = vld [vmem:[%s5886 + $0xe0] sm:$0xf0]
      %v6222 = vld [vmem:[%s5886 + $0xf0] sm:$0xf0]
      %v6255 = vrot.slane %v6207, 4
      %v6256 = vrot.slane %v5888, 4
      %v6257 = vsel %vm1360, %v6255, %v6256
      %v6258 = vrot.slane %v6208, 4
      %v6259 = vrot.slane %v5890, 4
      %v6260 = vsel %vm1360, %v6258, %v6259
      %v6261 = vrot.slane %v6209, 4
      %v6262 = vrot.slane %v5892, 4
      %v6263 = vsel %vm1360, %v6261, %v6262
      %v6264 = vrot.slane %v6210, 4
      %v6265 = vrot.slane %v5894, 4
      %v6266 = vsel %vm1360, %v6264, %v6265
      %v6267 = vrot.slane %v6211, 4
      %v6268 = vrot.slane %v5896, 4
      %v6269 = vsel %vm1360, %v6267, %v6268
      %v6270 = vrot.slane %v6212, 4
      %v6271 = vrot.slane %v5898, 4
      %v6272 = vsel %vm1360, %v6270, %v6271
      %v6273 = vrot.slane %v6213, 4
      %v6274 = vrot.slane %v5900, 4
      %v6275 = vsel %vm1360, %v6273, %v6274
      %v6276 = vrot.slane %v6214, 4
      %v6277 = vrot.slane %v5902, 4
      %v6278 = vsel %vm1360, %v6276, %v6277
      %v6279 = vrot.slane %v6215, 4
      %v6280 = vrot.slane %v5904, 4
      %v6281 = vsel %vm1360, %v6279, %v6280
      %v6282 = vrot.slane %v6216, 4
      %v6283 = vrot.slane %v5906, 4
      %v6284 = vsel %vm1360, %v6282, %v6283
      %v6285 = vrot.slane %v6217, 4
      %v6286 = vrot.slane %v5908, 4
      %v6287 = vsel %vm1360, %v6285, %v6286
      %v6288 = vrot.slane %v6218, 4
      %v6289 = vrot.slane %v5910, 4
      %v6290 = vsel %vm1360, %v6288, %v6289
      %v6291 = vrot.slane %v6219, 4
      %v6292 = vrot.slane %v5912, 4
      %v6293 = vsel %vm1360, %v6291, %v6292
      %v6294 = vrot.slane %v6220, 4
      %v6295 = vrot.slane %v5914, 4
      %v6296 = vsel %vm1360, %v6294, %v6295
      %v6297 = vrot.slane %v6221, 4
      %v6298 = vrot.slane %v5916, 4
      %v6299 = vsel %vm1360, %v6297, %v6298
      %v6300 = vrot.slane %v6222, 4
      %v6301 = vrot.slane %v5918, 4
      %v6302 = vsel %vm1360, %v6300, %v6301
      %v6319 = vld [vmem:[%s5886 + $0x8] sm:$0x1f]
      %v6320 = vld [vmem:[%s5886 + $0x18] sm:$0x1f]
      %v6321 = vld [vmem:[%s5886 + $0x28] sm:$0x1f]
      %v6322 = vld [vmem:[%s5886 + $0x38] sm:$0x1f]
      %v6323 = vld [vmem:[%s5886 + $0x48] sm:$0x1f]
      %v6324 = vld [vmem:[%s5886 + $0x58] sm:$0x1f]
      %v6325 = vld [vmem:[%s5886 + $0x68] sm:$0x1f]
      %v6326 = vld [vmem:[%s5886 + $0x78] sm:$0x1f]
      %v6327 = vld [vmem:[%s5886 + $0x88] sm:$0x1f]
      %v6328 = vld [vmem:[%s5886 + $0x98] sm:$0x1f]
      %v6329 = vld [vmem:[%s5886 + $0xa8] sm:$0x1f]
      %v6330 = vld [vmem:[%s5886 + $0xb8] sm:$0x1f]
      %v6331 = vld [vmem:[%s5886 + $0xc8] sm:$0x1f]
      %v6332 = vld [vmem:[%s5886 + $0xd8] sm:$0x1f]
      %v6333 = vld [vmem:[%s5886 + $0xe8] sm:$0x1f]
      %v6334 = vld [vmem:[%s5886 + $0xf8] sm:$0x1f]
      %v6336 = vshrl.u32 %v6207, 16
      %v6338 = vrot.slane %v6336, 4
      %v6339 = vshll.u32 %v6207, 16
      %v6341 = vrot.slane %v6339, 5
      %v6342 = vor.u32 %v6338, %v6341
      %v6344 = vshrl.u32 %v6319, 16
      %v6346 = vrot.slane %v6344, 4
      %v6347 = vshll.u32 %v6319, 16
      %v6349 = vrot.slane %v6347, 5
      %v6350 = vor.u32 %v6346, %v6349
      %v6351 = vsel %vm1425, %v6342, %v6350
      %v6353 = vshrl.u32 %v6208, 16
      %v6355 = vrot.slane %v6353, 4
      %v6356 = vshll.u32 %v6208, 16
      %v6358 = vrot.slane %v6356, 5
      %v6359 = vor.u32 %v6355, %v6358
      %v6361 = vshrl.u32 %v6320, 16
      %v6363 = vrot.slane %v6361, 4
      %v6364 = vshll.u32 %v6320, 16
      %v6366 = vrot.slane %v6364, 5
      %v6367 = vor.u32 %v6363, %v6366
      %v6368 = vsel %vm1425, %v6359, %v6367
      %v6370 = vshrl.u32 %v6209, 16
      %v6372 = vrot.slane %v6370, 4
      %v6373 = vshll.u32 %v6209, 16
      %v6375 = vrot.slane %v6373, 5
      %v6376 = vor.u32 %v6372, %v6375
      %v6378 = vshrl.u32 %v6321, 16
      %v6380 = vrot.slane %v6378, 4
      %v6381 = vshll.u32 %v6321, 16
      %v6383 = vrot.slane %v6381, 5
      %v6384 = vor.u32 %v6380, %v6383
      %v6385 = vsel %vm1425, %v6376, %v6384
      %v6387 = vshrl.u32 %v6210, 16
      %v6389 = vrot.slane %v6387, 4
      %v6390 = vshll.u32 %v6210, 16
      %v6392 = vrot.slane %v6390, 5
      %v6393 = vor.u32 %v6389, %v6392
      %v6395 = vshrl.u32 %v6322, 16
      %v6397 = vrot.slane %v6395, 4
      %v6398 = vshll.u32 %v6322, 16
      %v6400 = vrot.slane %v6398, 5
      %v6401 = vor.u32 %v6397, %v6400
      %v6402 = vsel %vm1425, %v6393, %v6401
      %v6404 = vshrl.u32 %v6211, 16
      %v6406 = vrot.slane %v6404, 4
      %v6407 = vshll.u32 %v6211, 16
      %v6409 = vrot.slane %v6407, 5
      %v6410 = vor.u32 %v6406, %v6409
      %v6412 = vshrl.u32 %v6323, 16
      %v6414 = vrot.slane %v6412, 4
      %v6415 = vshll.u32 %v6323, 16
      %v6417 = vrot.slane %v6415, 5
      %v6418 = vor.u32 %v6414, %v6417
      %v6419 = vsel %vm1425, %v6410, %v6418
      %v6421 = vshrl.u32 %v6212, 16
      %v6423 = vrot.slane %v6421, 4
      %v6424 = vshll.u32 %v6212, 16
      %v6426 = vrot.slane %v6424, 5
      %v6427 = vor.u32 %v6423, %v6426
      %v6429 = vshrl.u32 %v6324, 16
      %v6431 = vrot.slane %v6429, 4
      %v6432 = vshll.u32 %v6324, 16
      %v6434 = vrot.slane %v6432, 5
      %v6435 = vor.u32 %v6431, %v6434
      %v6436 = vsel %vm1425, %v6427, %v6435
      %v6438 = vshrl.u32 %v6213, 16
      %v6440 = vrot.slane %v6438, 4
      %v6441 = vshll.u32 %v6213, 16
      %v6443 = vrot.slane %v6441, 5
      %v6444 = vor.u32 %v6440, %v6443
      %v6446 = vshrl.u32 %v6325, 16
      %v6448 = vrot.slane %v6446, 4
      %v6449 = vshll.u32 %v6325, 16
      %v6451 = vrot.slane %v6449, 5
      %v6452 = vor.u32 %v6448, %v6451
      %v6453 = vsel %vm1425, %v6444, %v6452
      %v6455 = vshrl.u32 %v6214, 16
      %v6457 = vrot.slane %v6455, 4
      %v6458 = vshll.u32 %v6214, 16
      %v6460 = vrot.slane %v6458, 5
      %v6461 = vor.u32 %v6457, %v6460
      %v6463 = vshrl.u32 %v6326, 16
      %v6465 = vrot.slane %v6463, 4
      %v6466 = vshll.u32 %v6326, 16
      %v6468 = vrot.slane %v6466, 5
      %v6469 = vor.u32 %v6465, %v6468
      %v6470 = vsel %vm1425, %v6461, %v6469
      %v6472 = vshrl.u32 %v6215, 16
      %v6474 = vrot.slane %v6472, 4
      %v6475 = vshll.u32 %v6215, 16
      %v6477 = vrot.slane %v6475, 5
      %v6478 = vor.u32 %v6474, %v6477
      %v6480 = vshrl.u32 %v6327, 16
      %v6482 = vrot.slane %v6480, 4
      %v6483 = vshll.u32 %v6327, 16
      %v6485 = vrot.slane %v6483, 5
      %v6486 = vor.u32 %v6482, %v6485
      %v6487 = vsel %vm1425, %v6478, %v6486
      %v6489 = vshrl.u32 %v6216, 16
      %v6491 = vrot.slane %v6489, 4
      %v6492 = vshll.u32 %v6216, 16
      %v6494 = vrot.slane %v6492, 5
      %v6495 = vor.u32 %v6491, %v6494
      %v6497 = vshrl.u32 %v6328, 16
      %v6499 = vrot.slane %v6497, 4
      %v6500 = vshll.u32 %v6328, 16
      %v6502 = vrot.slane %v6500, 5
      %v6503 = vor.u32 %v6499, %v6502
      %v6504 = vsel %vm1425, %v6495, %v6503
      %v6506 = vshrl.u32 %v6217, 16
      %v6508 = vrot.slane %v6506, 4
      %v6509 = vshll.u32 %v6217, 16
      %v6511 = vrot.slane %v6509, 5
      %v6512 = vor.u32 %v6508, %v6511
      %v6514 = vshrl.u32 %v6329, 16
      %v6516 = vrot.slane %v6514, 4
      %v6517 = vshll.u32 %v6329, 16
      %v6519 = vrot.slane %v6517, 5
      %v6520 = vor.u32 %v6516, %v6519
      %v6521 = vsel %vm1425, %v6512, %v6520
      %v6523 = vshrl.u32 %v6218, 16
      %v6525 = vrot.slane %v6523, 4
      %v6526 = vshll.u32 %v6218, 16
      %v6528 = vrot.slane %v6526, 5
      %v6529 = vor.u32 %v6525, %v6528
      %v6531 = vshrl.u32 %v6330, 16
      %v6533 = vrot.slane %v6531, 4
      %v6534 = vshll.u32 %v6330, 16
      %v6536 = vrot.slane %v6534, 5
      %v6537 = vor.u32 %v6533, %v6536
      %v6538 = vsel %vm1425, %v6529, %v6537
      %v6540 = vshrl.u32 %v6219, 16
      %v6542 = vrot.slane %v6540, 4
      %v6543 = vshll.u32 %v6219, 16
      %v6545 = vrot.slane %v6543, 5
      %v6546 = vor.u32 %v6542, %v6545
      %v6548 = vshrl.u32 %v6331, 16
      %v6550 = vrot.slane %v6548, 4
      %v6551 = vshll.u32 %v6331, 16
      %v6553 = vrot.slane %v6551, 5
      %v6554 = vor.u32 %v6550, %v6553
      %v6555 = vsel %vm1425, %v6546, %v6554
      %v6557 = vshrl.u32 %v6220, 16
      %v6559 = vrot.slane %v6557, 4
      %v6560 = vshll.u32 %v6220, 16
      %v6562 = vrot.slane %v6560, 5
      %v6563 = vor.u32 %v6559, %v6562
      %v6565 = vshrl.u32 %v6332, 16
      %v6567 = vrot.slane %v6565, 4
      %v6568 = vshll.u32 %v6332, 16
      %v6570 = vrot.slane %v6568, 5
      %v6571 = vor.u32 %v6567, %v6570
      %v6572 = vsel %vm1425, %v6563, %v6571
      %v6574 = vshrl.u32 %v6221, 16
      %v6576 = vrot.slane %v6574, 4
      %v6577 = vshll.u32 %v6221, 16
      %v6579 = vrot.slane %v6577, 5
      %v6580 = vor.u32 %v6576, %v6579
      %v6582 = vshrl.u32 %v6333, 16
      %v6584 = vrot.slane %v6582, 4
      %v6585 = vshll.u32 %v6333, 16
      %v6587 = vrot.slane %v6585, 5
      %v6588 = vor.u32 %v6584, %v6587
      %v6589 = vsel %vm1425, %v6580, %v6588
      %v6591 = vshrl.u32 %v6222, 16
      %v6593 = vrot.slane %v6591, 4
      %v6594 = vshll.u32 %v6222, 16
      %v6596 = vrot.slane %v6594, 5
      %v6597 = vor.u32 %v6593, %v6596
      %v6599 = vshrl.u32 %v6334, 16
      %v6601 = vrot.slane %v6599, 4
      %v6602 = vshll.u32 %v6334, 16
      %v6604 = vrot.slane %v6602, 5
      %v6605 = vor.u32 %v6601, %v6604
      %v6606 = vsel %vm1425, %v6597, %v6605
      %v6623 = vld [vmem:[%s5] sm:$0xf]
      %v6624 = vld [vmem:[%s5 + $0x4] sm:$0xf]
      %v6625 = vld [vmem:[%s5 + $0x8] sm:$0xf]
      %v6626 = vld [vmem:[%s5 + $0xc] sm:$0xf]
      %v6627 = vld [vmem:[%s5 + $0x10] sm:$0xf]
      %v6628 = vld [vmem:[%s5 + $0x14] sm:$0xf]
      %v6629 = vld [vmem:[%s5 + $0x18] sm:$0xf]
      %v6630 = vld [vmem:[%s5 + $0x1c] sm:$0xf]
      %v6631 = vld [vmem:[%s5 + $0x20] sm:$0xf]
      %v6632 = vld [vmem:[%s5 + $0x24] sm:$0xf]
      %v6633 = vld [vmem:[%s5 + $0x28] sm:$0xf]
      %v6634 = vld [vmem:[%s5 + $0x2c] sm:$0xf]
      %v6635 = vld [vmem:[%s5 + $0x30] sm:$0xf]
      %v6636 = vld [vmem:[%s5 + $0x34] sm:$0xf]
      %v6637 = vld [vmem:[%s5 + $0x38] sm:$0xf]
      %v6638 = vld [vmem:[%s5 + $0x3c] sm:$0xf]
      %v6639 = vld [vmem:[%s5 + $0x40] sm:$0xf]
      %v6640 = vld [vmem:[%s5 + $0x44] sm:$0xf]
      %v6641 = vld [vmem:[%s5 + $0x48] sm:$0xf]
      %v6642 = vld [vmem:[%s5 + $0x4c] sm:$0xf]
      %v6643 = vld [vmem:[%s5 + $0x50] sm:$0xf]
      %v6644 = vld [vmem:[%s5 + $0x54] sm:$0xf]
      %v6645 = vld [vmem:[%s5 + $0x58] sm:$0xf]
      %v6646 = vld [vmem:[%s5 + $0x5c] sm:$0xf]
      %v6647 = vld [vmem:[%s5 + $0x60] sm:$0xf]
      %v6648 = vld [vmem:[%s5 + $0x64] sm:$0xf]
      %v6649 = vld [vmem:[%s5 + $0x68] sm:$0xf]
      %v6650 = vld [vmem:[%s5 + $0x6c] sm:$0xf]
      %v6651 = vld [vmem:[%s5 + $0x70] sm:$0xf]
      %v6652 = vld [vmem:[%s5 + $0x74] sm:$0xf]
      %v6653 = vld [vmem:[%s5 + $0x78] sm:$0xf]
      %v6654 = vld [vmem:[%s5 + $0x7c] sm:$0xf]
      %v6655 = vld [vmem:[%s5 + $0x80] sm:$0xf]
      %v6656 = vld [vmem:[%s5 + $0x84] sm:$0xf]
      %v6657 = vld [vmem:[%s5 + $0x88] sm:$0xf]
      %v6658 = vld [vmem:[%s5 + $0x8c] sm:$0xf]
      %v6659 = vld [vmem:[%s5 + $0x90] sm:$0xf]
      %v6660 = vld [vmem:[%s5 + $0x94] sm:$0xf]
      %v6661 = vld [vmem:[%s5 + $0x98] sm:$0xf]
      %v6662 = vld [vmem:[%s5 + $0x9c] sm:$0xf]
      %v6663 = vld [vmem:[%s5 + $0xa0] sm:$0xf]
      %v6664 = vld [vmem:[%s5 + $0xa4] sm:$0xf]
      %v6665 = vld [vmem:[%s5 + $0xa8] sm:$0xf]
      %v6666 = vld [vmem:[%s5 + $0xac] sm:$0xf]
      %v6667 = vld [vmem:[%s5 + $0xb0] sm:$0xf]
      %v6668 = vld [vmem:[%s5 + $0xb4] sm:$0xf]
      %v6669 = vld [vmem:[%s5 + $0xb8] sm:$0xf]
      %v6670 = vld [vmem:[%s5 + $0xbc] sm:$0xf]
      %v6671 = vld [vmem:[%s5 + $0xc0] sm:$0xf]
      %v6672 = vld [vmem:[%s5 + $0xc4] sm:$0xf]
      %v6673 = vld [vmem:[%s5 + $0xc8] sm:$0xf]
      %v6674 = vld [vmem:[%s5 + $0xcc] sm:$0xf]
      %v6675 = vld [vmem:[%s5 + $0xd0] sm:$0xf]
      %v6676 = vld [vmem:[%s5 + $0xd4] sm:$0xf]
      %v6677 = vld [vmem:[%s5 + $0xd8] sm:$0xf]
      %v6678 = vld [vmem:[%s5 + $0xdc] sm:$0xf]
      %v6679 = vld [vmem:[%s5 + $0xe0] sm:$0xf]
      %v6680 = vld [vmem:[%s5 + $0xe4] sm:$0xf]
      %v6681 = vld [vmem:[%s5 + $0xe8] sm:$0xf]
      %v6682 = vld [vmem:[%s5 + $0xec] sm:$0xf]
      %v6683 = vld [vmem:[%s5 + $0xf0] sm:$0xf]
      %v6684 = vld [vmem:[%s5 + $0xf4] sm:$0xf]
      %v6685 = vld [vmem:[%s5 + $0xf8] sm:$0xf]
      %v6686 = vld [vmem:[%s5 + $0xfc] sm:$0xf]
      %v6687 = vld [vmem:[%s5 + $0x100] sm:$0xf]
      %v6688 = vld [vmem:[%s5 + $0x104] sm:$0xf]
      %v6689 = vld [vmem:[%s5 + $0x108] sm:$0xf]
      %v6690 = vld [vmem:[%s5 + $0x10c] sm:$0xf]
      %v6691 = vld [vmem:[%s5 + $0x110] sm:$0xf]
      %v6692 = vld [vmem:[%s5 + $0x114] sm:$0xf]
      %v6693 = vld [vmem:[%s5 + $0x118] sm:$0xf]
      %v6694 = vld [vmem:[%s5 + $0x11c] sm:$0xf]
      %v6695 = vld [vmem:[%s5 + $0x120] sm:$0xf]
      %v6696 = vld [vmem:[%s5 + $0x124] sm:$0xf]
      %v6697 = vld [vmem:[%s5 + $0x128] sm:$0xf]
      %v6698 = vld [vmem:[%s5 + $0x12c] sm:$0xf]
      %v6699 = vld [vmem:[%s5 + $0x130] sm:$0xf]
      %v6700 = vld [vmem:[%s5 + $0x134] sm:$0xf]
      %v6701 = vld [vmem:[%s5 + $0x138] sm:$0xf]
      %v6702 = vld [vmem:[%s5 + $0x13c] sm:$0xf]
      %v6703 = vld [vmem:[%s5 + $0x140] sm:$0xf]
      %v6704 = vld [vmem:[%s5 + $0x144] sm:$0xf]
      %v6705 = vld [vmem:[%s5 + $0x148] sm:$0xf]
      %v6706 = vld [vmem:[%s5 + $0x14c] sm:$0xf]
      %v6707 = vld [vmem:[%s5 + $0x150] sm:$0xf]
      %v6708 = vld [vmem:[%s5 + $0x154] sm:$0xf]
      %v6709 = vld [vmem:[%s5 + $0x158] sm:$0xf]
      %v6710 = vld [vmem:[%s5 + $0x15c] sm:$0xf]
      %v6711 = vld [vmem:[%s5 + $0x160] sm:$0xf]
      %v6712 = vld [vmem:[%s5 + $0x164] sm:$0xf]
      %v6713 = vld [vmem:[%s5 + $0x168] sm:$0xf]
      %v6714 = vld [vmem:[%s5 + $0x16c] sm:$0xf]
      %v6715 = vld [vmem:[%s5 + $0x170] sm:$0xf]
      %v6716 = vld [vmem:[%s5 + $0x174] sm:$0xf]
      %v6717 = vld [vmem:[%s5 + $0x178] sm:$0xf]
      %v6718 = vld [vmem:[%s5 + $0x17c] sm:$0xf]
      %v6719 = vld [vmem:[%s5 + $0x180] sm:$0xf]
      %v6720 = vld [vmem:[%s5 + $0x184] sm:$0xf]
      %v6721 = vld [vmem:[%s5 + $0x188] sm:$0xf]
      %v6722 = vld [vmem:[%s5 + $0x18c] sm:$0xf]
      %v6723 = vld [vmem:[%s5 + $0x190] sm:$0xf]
      %v6724 = vld [vmem:[%s5 + $0x194] sm:$0xf]
      %v6725 = vld [vmem:[%s5 + $0x198] sm:$0xf]
      %v6726 = vld [vmem:[%s5 + $0x19c] sm:$0xf]
      %v6727 = vld [vmem:[%s5 + $0x1a0] sm:$0xf]
      %v6728 = vld [vmem:[%s5 + $0x1a4] sm:$0xf]
      %v6729 = vld [vmem:[%s5 + $0x1a8] sm:$0xf]
      %v6730 = vld [vmem:[%s5 + $0x1ac] sm:$0xf]
      %v6731 = vld [vmem:[%s5 + $0x1b0] sm:$0xf]
      %v6732 = vld [vmem:[%s5 + $0x1b4] sm:$0xf]
      %v6733 = vld [vmem:[%s5 + $0x1b8] sm:$0xf]
      %v6734 = vld [vmem:[%s5 + $0x1bc] sm:$0xf]
      %v6735 = vld [vmem:[%s5 + $0x1c0] sm:$0xf]
      %v6736 = vld [vmem:[%s5 + $0x1c4] sm:$0xf]
      %v6737 = vld [vmem:[%s5 + $0x1c8] sm:$0xf]
      %v6738 = vld [vmem:[%s5 + $0x1cc] sm:$0xf]
      %v6739 = vld [vmem:[%s5 + $0x1d0] sm:$0xf]
      %v6740 = vld [vmem:[%s5 + $0x1d4] sm:$0xf]
      %v6741 = vld [vmem:[%s5 + $0x1d8] sm:$0xf]
      %v6742 = vld [vmem:[%s5 + $0x1dc] sm:$0xf]
      %v6743 = vld [vmem:[%s5 + $0x1e0] sm:$0xf]
      %v6744 = vld [vmem:[%s5 + $0x1e4] sm:$0xf]
      %v6745 = vld [vmem:[%s5 + $0x1e8] sm:$0xf]
      %v6746 = vld [vmem:[%s5 + $0x1ec] sm:$0xf]
      %v6747 = vld [vmem:[%s5 + $0x1f0] sm:$0xf]
      %v6748 = vld [vmem:[%s5 + $0x1f4] sm:$0xf]
      %v6749 = vld [vmem:[%s5 + $0x1f8] sm:$0xf]
      %v6750 = vld [vmem:[%s5 + $0x1fc] sm:$0xf]
      %v6751 = vld [vmem:[%s5 + $0x200] sm:$0xf]
      %v6752 = vld [vmem:[%s5 + $0x204] sm:$0xf]
      %v6753 = vld [vmem:[%s5 + $0x208] sm:$0xf]
      %v6754 = vld [vmem:[%s5 + $0x20c] sm:$0xf]
      %v6755 = vld [vmem:[%s5 + $0x210] sm:$0xf]
      %v6756 = vld [vmem:[%s5 + $0x214] sm:$0xf]
      %v6757 = vld [vmem:[%s5 + $0x218] sm:$0xf]
      %v6758 = vld [vmem:[%s5 + $0x21c] sm:$0xf]
      %v6759 = vld [vmem:[%s5 + $0x220] sm:$0xf]
      %v6760 = vld [vmem:[%s5 + $0x224] sm:$0xf]
      %v6761 = vld [vmem:[%s5 + $0x228] sm:$0xf]
      %v6762 = vld [vmem:[%s5 + $0x22c] sm:$0xf]
      %v6763 = vld [vmem:[%s5 + $0x230] sm:$0xf]
      %v6764 = vld [vmem:[%s5 + $0x234] sm:$0xf]
      %v6765 = vld [vmem:[%s5 + $0x238] sm:$0xf]
      %v6766 = vld [vmem:[%s5 + $0x23c] sm:$0xf]
      %v6767 = vld [vmem:[%s6] sm:$0x1]
      %v6769 = vlaneseq
      %v6770 = vshrl.u32 %v6769, 7
      %v6771 = vsub.s32 0, %v6770
      %v6772 = vrot.slane %v6767, %v6771
      %v6918 = vunpack.c.l.b16 %v6623
      %v6919 = vunpack.c.l.b16 %v6624
      %v6920 = vunpack.c.l.b16 %v6625
      %v6921 = vunpack.c.l.b16 %v6626
      %v6922 = vunpack.c.l.b16 %v6627
      %v6923 = vunpack.c.l.b16 %v6628
      %v6924 = vunpack.c.l.b16 %v6629
      %v6925 = vunpack.c.l.b16 %v6630
      %v6926 = vunpack.c.l.b16 %v6631
      %v6927 = vunpack.c.l.b16 %v6632
      %v6928 = vunpack.c.l.b16 %v6633
      %v6929 = vunpack.c.l.b16 %v6634
      %v6930 = vunpack.c.l.b16 %v6635
      %v6931 = vunpack.c.l.b16 %v6636
      %v6932 = vunpack.c.l.b16 %v6637
      %v6933 = vunpack.c.l.b16 %v6638
      %v6934 = vunpack.c.l.b16 %v6639
      %v6935 = vunpack.c.l.b16 %v6640
      %v6936 = vunpack.c.l.b16 %v6641
      %v6937 = vunpack.c.l.b16 %v6642
      %v6938 = vunpack.c.l.b16 %v6643
      %v6939 = vunpack.c.l.b16 %v6644
      %v6940 = vunpack.c.l.b16 %v6645
      %v6941 = vunpack.c.l.b16 %v6646
      %v6942 = vunpack.c.l.b16 %v6647
      %v6943 = vunpack.c.l.b16 %v6648
      %v6944 = vunpack.c.l.b16 %v6649
      %v6945 = vunpack.c.l.b16 %v6650
      %v6946 = vunpack.c.l.b16 %v6651
      %v6947 = vunpack.c.l.b16 %v6652
      %v6948 = vunpack.c.l.b16 %v6653
      %v6949 = vunpack.c.l.b16 %v6654
      %v6950 = vunpack.c.l.b16 %v6655
      %v6951 = vunpack.c.l.b16 %v6656
      %v6952 = vunpack.c.l.b16 %v6657
      %v6953 = vunpack.c.l.b16 %v6658
      %v6954 = vunpack.c.l.b16 %v6659
      %v6955 = vunpack.c.l.b16 %v6660
      %v6956 = vunpack.c.l.b16 %v6661
      %v6957 = vunpack.c.l.b16 %v6662
      %v6958 = vunpack.c.l.b16 %v6663
      %v6959 = vunpack.c.l.b16 %v6664
      %v6960 = vunpack.c.l.b16 %v6665
      %v6961 = vunpack.c.l.b16 %v6666
      %v6962 = vunpack.c.l.b16 %v6667
      %v6963 = vunpack.c.l.b16 %v6668
      %v6964 = vunpack.c.l.b16 %v6669
      %v6965 = vunpack.c.l.b16 %v6670
      %v6966 = vunpack.c.l.b16 %v6671
      %v6967 = vunpack.c.l.b16 %v6672
      %v6968 = vunpack.c.l.b16 %v6673
      %v6969 = vunpack.c.l.b16 %v6674
      %v6970 = vunpack.c.l.b16 %v6675
      %v6971 = vunpack.c.l.b16 %v6676
      %v6972 = vunpack.c.l.b16 %v6677
      %v6973 = vunpack.c.l.b16 %v6678
      %v6974 = vunpack.c.l.b16 %v6679
      %v6975 = vunpack.c.l.b16 %v6680
      %v6976 = vunpack.c.l.b16 %v6681
      %v6977 = vunpack.c.l.b16 %v6682
      %v6978 = vunpack.c.l.b16 %v6683
      %v6979 = vunpack.c.l.b16 %v6684
      %v6980 = vunpack.c.l.b16 %v6685
      %v6981 = vunpack.c.l.b16 %v6686
      %v6982 = vunpack.c.l.b16 %v6687
      %v6983 = vunpack.c.l.b16 %v6688
      %v6984 = vunpack.c.l.b16 %v6689
      %v6985 = vunpack.c.l.b16 %v6690
      %v6986 = vunpack.c.l.b16 %v6691
      %v6987 = vunpack.c.l.b16 %v6692
      %v6988 = vunpack.c.l.b16 %v6693
      %v6989 = vunpack.c.l.b16 %v6694
      %v6990 = vunpack.c.l.b16 %v6695
      %v6991 = vunpack.c.l.b16 %v6696
      %v6992 = vunpack.c.l.b16 %v6697
      %v6993 = vunpack.c.l.b16 %v6698
      %v6994 = vunpack.c.l.b16 %v6699
      %v6995 = vunpack.c.l.b16 %v6700
      %v6996 = vunpack.c.l.b16 %v6701
      %v6997 = vunpack.c.l.b16 %v6702
      %v6998 = vunpack.c.l.b16 %v6703
      %v6999 = vunpack.c.l.b16 %v6704
      %v7000 = vunpack.c.l.b16 %v6705
      %v7001 = vunpack.c.l.b16 %v6706
      %v7002 = vunpack.c.l.b16 %v6707
      %v7003 = vunpack.c.l.b16 %v6708
      %v7004 = vunpack.c.l.b16 %v6709
      %v7005 = vunpack.c.l.b16 %v6710
      %v7006 = vunpack.c.l.b16 %v6711
      %v7007 = vunpack.c.l.b16 %v6712
      %v7008 = vunpack.c.l.b16 %v6713
      %v7009 = vunpack.c.l.b16 %v6714
      %v7010 = vunpack.c.l.b16 %v6715
      %v7011 = vunpack.c.l.b16 %v6716
      %v7012 = vunpack.c.l.b16 %v6717
      %v7013 = vunpack.c.l.b16 %v6718
      %v7014 = vunpack.c.l.b16 %v6719
      %v7015 = vunpack.c.l.b16 %v6720
      %v7016 = vunpack.c.l.b16 %v6721
      %v7017 = vunpack.c.l.b16 %v6722
      %v7018 = vunpack.c.l.b16 %v6723
      %v7019 = vunpack.c.l.b16 %v6724
      %v7020 = vunpack.c.l.b16 %v6725
      %v7021 = vunpack.c.l.b16 %v6726
      %v7022 = vunpack.c.l.b16 %v6727
      %v7023 = vunpack.c.l.b16 %v6728
      %v7024 = vunpack.c.l.b16 %v6729
      %v7025 = vunpack.c.l.b16 %v6730
      %v7026 = vunpack.c.l.b16 %v6731
      %v7027 = vunpack.c.l.b16 %v6732
      %v7028 = vunpack.c.l.b16 %v6733
      %v7029 = vunpack.c.l.b16 %v6734
      %v7030 = vunpack.c.l.b16 %v6735
      %v7031 = vunpack.c.l.b16 %v6736
      %v7032 = vunpack.c.l.b16 %v6737
      %v7033 = vunpack.c.l.b16 %v6738
      %v7034 = vunpack.c.l.b16 %v6739
      %v7035 = vunpack.c.l.b16 %v6740
      %v7036 = vunpack.c.l.b16 %v6741
      %v7037 = vunpack.c.l.b16 %v6742
      %v7038 = vunpack.c.l.b16 %v6743
      %v7039 = vunpack.c.l.b16 %v6744
      %v7040 = vunpack.c.l.b16 %v6745
      %v7041 = vunpack.c.l.b16 %v6746
      %v7042 = vunpack.c.l.b16 %v6747
      %v7043 = vunpack.c.l.b16 %v6748
      %v7044 = vunpack.c.l.b16 %v6749
      %v7045 = vunpack.c.l.b16 %v6750
      %v7046 = vunpack.c.l.b16 %v6751
      %v7047 = vunpack.c.l.b16 %v6752
      %v7048 = vunpack.c.l.b16 %v6753
      %v7049 = vunpack.c.l.b16 %v6754
      %v7050 = vunpack.c.l.b16 %v6755
      %v7051 = vunpack.c.l.b16 %v6756
      %v7052 = vunpack.c.l.b16 %v6757
      %v7053 = vunpack.c.l.b16 %v6758
      %v7054 = vunpack.c.l.b16 %v6759
      %v7055 = vunpack.c.l.b16 %v6760
      %v7056 = vunpack.c.l.b16 %v6761
      %v7057 = vunpack.c.l.b16 %v6762
      %v7058 = vunpack.c.l.b16 %v6763
      %v7059 = vunpack.c.l.b16 %v6764
      %v7060 = vunpack.c.l.b16 %v6765
      %v7061 = vunpack.c.l.b16 %v6766
      %v7062 = vpack.c.b16 %v6919, %v6918
      %v7063 = vpack.c.b16 %v6921, %v6920
      %v7064 = vpack.c.b16 %v6923, %v6922
      %v7065 = vpack.c.b16 %v6925, %v6924
      %v7066 = vpack.c.b16 %v6927, %v6926
      %v7067 = vpack.c.b16 %v6929, %v6928
      %v7068 = vpack.c.b16 %v6931, %v6930
      %v7069 = vpack.c.b16 %v6933, %v6932
      %v7070 = vpack.c.b16 %v6935, %v6934
      %v7071 = vpack.c.b16 %v6937, %v6936
      %v7072 = vpack.c.b16 %v6939, %v6938
      %v7073 = vpack.c.b16 %v6941, %v6940
      %v7074 = vpack.c.b16 %v6943, %v6942
      %v7075 = vpack.c.b16 %v6945, %v6944
      %v7076 = vpack.c.b16 %v6947, %v6946
      %v7077 = vpack.c.b16 %v6949, %v6948
      %v7078 = vpack.c.b16 %v6951, %v6950
      %v7079 = vpack.c.b16 %v6953, %v6952
      %v7080 = vpack.c.b16 %v6955, %v6954
      %v7081 = vpack.c.b16 %v6957, %v6956
      %v7082 = vpack.c.b16 %v6959, %v6958
      %v7083 = vpack.c.b16 %v6961, %v6960
      %v7084 = vpack.c.b16 %v6963, %v6962
      %v7085 = vpack.c.b16 %v6965, %v6964
      %v7086 = vpack.c.b16 %v6967, %v6966
      %v7087 = vpack.c.b16 %v6969, %v6968
      %v7088 = vpack.c.b16 %v6971, %v6970
      %v7089 = vpack.c.b16 %v6973, %v6972
      %v7090 = vpack.c.b16 %v6975, %v6974
      %v7091 = vpack.c.b16 %v6977, %v6976
      %v7092 = vpack.c.b16 %v6979, %v6978
      %v7093 = vpack.c.b16 %v6981, %v6980
      %v7094 = vpack.c.b16 %v6983, %v6982
      %v7095 = vpack.c.b16 %v6985, %v6984
      %v7096 = vpack.c.b16 %v6987, %v6986
      %v7097 = vpack.c.b16 %v6989, %v6988
      %v7098 = vpack.c.b16 %v6991, %v6990
      %v7099 = vpack.c.b16 %v6993, %v6992
      %v7100 = vpack.c.b16 %v6995, %v6994
      %v7101 = vpack.c.b16 %v6997, %v6996
      %v7102 = vpack.c.b16 %v6999, %v6998
      %v7103 = vpack.c.b16 %v7001, %v7000
      %v7104 = vpack.c.b16 %v7003, %v7002
      %v7105 = vpack.c.b16 %v7005, %v7004
      %v7106 = vpack.c.b16 %v7007, %v7006
      %v7107 = vpack.c.b16 %v7009, %v7008
      %v7108 = vpack.c.b16 %v7011, %v7010
      %v7109 = vpack.c.b16 %v7013, %v7012
      %v7110 = vpack.c.b16 %v7015, %v7014
      %v7111 = vpack.c.b16 %v7017, %v7016
      %v7112 = vpack.c.b16 %v7019, %v7018
      %v7113 = vpack.c.b16 %v7021, %v7020
      %v7114 = vpack.c.b16 %v7023, %v7022
      %v7115 = vpack.c.b16 %v7025, %v7024
      %v7116 = vpack.c.b16 %v7027, %v7026
      %v7117 = vpack.c.b16 %v7029, %v7028
      %v7118 = vpack.c.b16 %v7031, %v7030
      %v7119 = vpack.c.b16 %v7033, %v7032
      %v7120 = vpack.c.b16 %v7035, %v7034
      %v7121 = vpack.c.b16 %v7037, %v7036
      %v7122 = vpack.c.b16 %v7039, %v7038
      %v7123 = vpack.c.b16 %v7041, %v7040
      %v7124 = vpack.c.b16 %v7043, %v7042
      %v7125 = vpack.c.b16 %v7045, %v7044
      %v7126 = vpack.c.b16 %v7047, %v7046
      %v7127 = vpack.c.b16 %v7049, %v7048
      %v7128 = vpack.c.b16 %v7051, %v7050
      %v7129 = vpack.c.b16 %v7053, %v7052
      %v7130 = vpack.c.b16 %v7055, %v7054
      %v7131 = vpack.c.b16 %v7057, %v7056
      %v7132 = vpack.c.b16 %v7059, %v7058
      %v7133 = vpack.c.b16 %v7061, %v7060
      %7206 = vmatprep.subr.bf16.mxu0 0
      %7207 = vmatpush1.bf16.msra.mxu0 %v7062
      %7208 = vmatprep.subr.bf16.mxu0 0
      %7209 = vmatpush1.bf16.msra.mxu0 %v7063
      %7210 = vmatprep.subr.bf16.mxu0 0
      %7211 = vmatpush1.bf16.msra.mxu0 %v7064
      %7212 = vmatprep.subr.bf16.mxu0 0
      %7213 = vmatpush1.bf16.msra.mxu0 %v7065
      %7214 = vmatprep.subr.bf16.mxu0 0
      %7215 = vmatpush1.bf16.msra.mxu0 %v7066
      %7216 = vmatprep.subr.bf16.mxu0 0
      %7217 = vmatpush1.bf16.msra.mxu0 %v7067
      %7218 = vmatprep.subr.bf16.mxu0 0
      %7219 = vmatpush1.bf16.msra.mxu0 %v7068
      %7220 = vmatprep.subr.bf16.mxu0 0
      %7221 = vmatpush1.bf16.msra.mxu0 %v7069
      %7222 = vmatprep.subr.bf16.mxu0 0
      %7223 = vmatpush1.bf16.msra.mxu0 %v7070
      %7224 = vmatprep.subr.bf16.mxu0 0
      %7225 = vmatpush1.bf16.msra.mxu0 %v7071
      %7226 = vmatprep.subr.bf16.mxu0 0
      %7227 = vmatpush1.bf16.msra.mxu0 %v7072
      %7228 = vmatprep.subr.bf16.mxu0 0
      %7229 = vmatpush1.bf16.msra.mxu0 %v7073
      %7230 = vmatprep.subr.bf16.mxu0 0
      %7231 = vmatpush1.bf16.msra.mxu0 %v7074
      %7232 = vmatprep.subr.bf16.mxu0 0
      %7233 = vmatpush1.bf16.msra.mxu0 %v7075
      %7234 = vmatprep.subr.bf16.mxu0 0
      %7235 = vmatpush1.bf16.msra.mxu0 %v7076
      %7236 = vmatprep.subr.bf16.mxu0 0
      %7237 = vmatpush1.bf16.msra.mxu0 %v7077
      %7238 = vmatprep.mubr.bf16.mxu0 %v4784
      %7239 = vmatmul.mubr.bf16.gmra.mrb[0].mxu0 %v4462
      %v7240 = vpop.f32.mrb[0].mxu0
      %v7241 = vadd.f32 %v6772, %v7240
      %v7242 = vpop.f32.mrb[0].mxu0
      %v7243 = vpop.f32.mrb[0].mxu0
      %v7244 = vadd.f32 %v6772, %v7243
      %v7245 = vpop.f32.mrb[0].mxu0
      %7246 = vmatprep.mubr.bf16.mxu0 %v4787
      %7247 = vmatmul.mubr.bf16.gmra.mrb[0].mxu0 %v4479
      %v7248 = vpop.f32.mrb[0].mxu0
      %v7249 = vadd.f32 %v6772, %v7248
      %v7250 = vpop.f32.mrb[0].mxu0
      %v7251 = vpop.f32.mrb[0].mxu0
      %v7252 = vadd.f32 %v6772, %v7251
      %v7253 = vpop.f32.mrb[0].mxu0
      %7254 = vmatprep.mubr.bf16.mxu0 %v4790
      %7255 = vmatmul.mubr.bf16.gmra.mrb[0].mxu0 %v4496
      %v7256 = vpop.f32.mrb[0].mxu0
      %v7257 = vadd.f32 %v6772, %v7256
      %v7258 = vpop.f32.mrb[0].mxu0
      %v7259 = vpop.f32.mrb[0].mxu0
      %v7260 = vadd.f32 %v6772, %v7259
      %v7261 = vpop.f32.mrb[0].mxu0
      %7262 = vmatprep.mubr.bf16.mxu0 %v4793
      %7263 = vmatmul.mubr.bf16.gmra.mrb[0].mxu0 %v4513
      %v7264 = vpop.f32.mrb[0].mxu0
      %v7265 = vadd.f32 %v6772, %v7264
      %v7266 = vpop.f32.mrb[0].mxu0
      %v7267 = vpop.f32.mrb[0].mxu0
      %v7268 = vadd.f32 %v6772, %v7267
      %v7269 = vpop.f32.mrb[0].mxu0
      %7270 = vmatprep.mubr.bf16.mxu0 %v4796
      %7271 = vmatmul.mubr.bf16.gmra.mrb[0].mxu0 %v4530
      %v7272 = vpop.f32.mrb[0].mxu0
      %v7273 = vadd.f32 %v6772, %v7272
      %v7274 = vpop.f32.mrb[0].mxu0
      %v7275 = vpop.f32.mrb[0].mxu0
      %v7276 = vadd.f32 %v6772, %v7275
      %v7277 = vpop.f32.mrb[0].mxu0
      %7278 = vmatprep.mubr.bf16.mxu0 %v4799
      %7279 = vmatmul.mubr.bf16.gmra.mrb[0].mxu0 %v4547
      %v7280 = vpop.f32.mrb[0].mxu0
      %v7281 = vadd.f32 %v6772, %v7280
      %v7282 = vpop.f32.mrb[0].mxu0
      %v7283 = vpop.f32.mrb[0].mxu0
      %v7284 = vadd.f32 %v6772, %v7283
      %v7285 = vpop.f32.mrb[0].mxu0
      %7286 = vmatprep.mubr.bf16.mxu0 %v4802
      %7287 = vmatmul.mubr.bf16.gmra.mrb[0].mxu0 %v4564
      %v7288 = vpop.f32.mrb[0].mxu0
      %v7289 = vadd.f32 %v6772, %v7288
      %v7290 = vpop.f32.mrb[0].mxu0
      %v7291 = vpop.f32.mrb[0].mxu0
      %v7292 = vadd.f32 %v6772, %v7291
      %v7293 = vpop.f32.mrb[0].mxu0
      %7294 = vmatprep.mubr.bf16.mxu0 %v4805
      %7295 = vmatmul.mubr.bf16.gmra.mrb[0].mxu0 %v4581
      %v7296 = vpop.f32.mrb[0].mxu0
      %v7297 = vadd.f32 %v6772, %v7296
      %v7298 = vpop.f32.mrb[0].mxu0
      %v7299 = vpop.f32.mrb[0].mxu0
      %v7300 = vadd.f32 %v6772, %v7299
      %v7301 = vpop.f32.mrb[0].mxu0
      %7302 = vmatprep.mubr.bf16.mxu0 %v4808
      %7303 = vmatmul.mubr.bf16.gmra.mrb[0].mxu0 %v4598
      %v7304 = vpop.f32.mrb[0].mxu0
      %v7305 = vadd.f32 %v6772, %v7304
      %v7306 = vpop.f32.mrb[0].mxu0
      %v7307 = vpop.f32.mrb[0].mxu0
      %v7308 = vadd.f32 %v6772, %v7307
      %v7309 = vpop.f32.mrb[0].mxu0
      %7310 = vmatprep.mubr.bf16.mxu0 %v4811
      %7311 = vmatmul.mubr.bf16.gmra.mrb[0].mxu0 %v4615
      %v7312 = vpop.f32.mrb[0].mxu0
      %v7313 = vadd.f32 %v6772, %v7312
      %v7314 = vpop.f32.mrb[0].mxu0
      %v7315 = vpop.f32.mrb[0].mxu0
      %v7316 = vadd.f32 %v6772, %v7315
      %v7317 = vpop.f32.mrb[0].mxu0
      %7318 = vmatprep.mubr.bf16.mxu0 %v4814
      %7319 = vmatmul.mubr.bf16.gmra.mrb[0].mxu0 %v4632
      %v7320 = vpop.f32.mrb[0].mxu0
      %v7321 = vadd.f32 %v6772, %v7320
      %v7322 = vpop.f32.mrb[0].mxu0
      %v7323 = vpop.f32.mrb[0].mxu0
      %v7324 = vadd.f32 %v6772, %v7323
      %v7325 = vpop.f32.mrb[0].mxu0
      %7326 = vmatprep.mubr.bf16.mxu0 %v4817
      %7327 = vmatmul.mubr.bf16.gmra.mrb[0].mxu0 %v4649
      %v7328 = vpop.f32.mrb[0].mxu0
      %v7329 = vadd.f32 %v6772, %v7328
      %v7330 = vpop.f32.mrb[0].mxu0
      %v7331 = vpop.f32.mrb[0].mxu0
      %v7332 = vadd.f32 %v6772, %v7331
      %v7333 = vpop.f32.mrb[0].mxu0
      %7334 = vmatprep.mubr.bf16.mxu0 %v4820
      %7335 = vmatmul.mubr.bf16.gmra.mrb[0].mxu0 %v4666
      %v7336 = vpop.f32.mrb[0].mxu0
      %v7337 = vadd.f32 %v6772, %v7336
      %v7338 = vpop.f32.mrb[0].mxu0
      %v7339 = vpop.f32.mrb[0].mxu0
      %v7340 = vadd.f32 %v6772, %v7339
      %v7341 = vpop.f32.mrb[0].mxu0
      %7342 = vmatprep.mubr.bf16.mxu0 %v4823
      %7343 = vmatmul.mubr.bf16.gmra.mrb[0].mxu0 %v4683
      %v7344 = vpop.f32.mrb[0].mxu0
      %v7345 = vadd.f32 %v6772, %v7344
      %v7346 = vpop.f32.mrb[0].mxu0
      %v7347 = vpop.f32.mrb[0].mxu0
      %v7348 = vadd.f32 %v6772, %v7347
      %v7349 = vpop.f32.mrb[0].mxu0
      %7350 = vmatprep.mubr.bf16.mxu0 %v4826
      %7351 = vmatmul.mubr.bf16.gmra.mrb[0].mxu0 %v4700
      %v7352 = vpop.f32.mrb[0].mxu0
      %v7353 = vadd.f32 %v6772, %v7352
      %v7354 = vpop.f32.mrb[0].mxu0
      %v7355 = vpop.f32.mrb[0].mxu0
      %v7356 = vadd.f32 %v6772, %v7355
      %v7357 = vpop.f32.mrb[0].mxu0
      %7358 = vmatprep.mubr.bf16.mxu0 %v4829
      %7359 = vmatmul.mubr.bf16.gmra.mrb[0].mxu0 %v4717
      %v7360 = vpop.f32.mrb[0].mxu0
      %v7361 = vadd.f32 %v6772, %v7360
      %v7362 = vpop.f32.mrb[0].mxu0
      %v7363 = vpop.f32.mrb[0].mxu0
      %v7364 = vadd.f32 %v6772, %v7363
      %v7365 = vpop.f32.mrb[0].mxu0
      %7366 = vdwg.mxu0
      %7367 = vmatprep.subr.bf16.mxu0 0
      %7368 = vmatpush1.bf16.msra.mxu0 %v7078
      %7369 = vmatprep.subr.bf16.mxu0 0
      %7370 = vmatpush1.bf16.msra.mxu0 %v7079
      %7371 = vmatprep.subr.bf16.mxu0 0
      %7372 = vmatpush1.bf16.msra.mxu0 %v7080
      %7373 = vmatprep.subr.bf16.mxu0 0
      %7374 = vmatpush1.bf16.msra.mxu0 %v7081
      %7375 = vmatprep.subr.bf16.mxu0 0
      %7376 = vmatpush1.bf16.msra.mxu0 %v7082
      %7377 = vmatprep.subr.bf16.mxu0 0
      %7378 = vmatpush1.bf16.msra.mxu0 %v7083
      %7379 = vmatprep.subr.bf16.mxu0 0
      %7380 = vmatpush1.bf16.msra.mxu0 %v7084
      %7381 = vmatprep.subr.bf16.mxu0 0
      %7382 = vmatpush1.bf16.msra.mxu0 %v7085
      %7383 = vmatprep.subr.bf16.mxu0 0
      %7384 = vmatpush1.bf16.msra.mxu0 %v7086
      %7385 = vmatprep.subr.bf16.mxu0 0
      %7386 = vmatpush1.bf16.msra.mxu0 %v7087
      %7387 = vmatprep.subr.bf16.mxu0 0
      %7388 = vmatpush1.bf16.msra.mxu0 %v7088
      %7389 = vmatprep.subr.bf16.mxu0 0
      %7390 = vmatpush1.bf16.msra.mxu0 %v7089
      %7391 = vmatprep.subr.bf16.mxu0 0
      %7392 = vmatpush1.bf16.msra.mxu0 %v7090
      %7393 = vmatprep.subr.bf16.mxu0 0
      %7394 = vmatpush1.bf16.msra.mxu0 %v7091
      %7395 = vmatprep.subr.bf16.mxu0 0
      %7396 = vmatpush1.bf16.msra.mxu0 %v7092
      %7397 = vmatprep.subr.bf16.mxu0 0
      %7398 = vmatpush1.bf16.msra.mxu0 %v7093
      %7399 = vmatprep.mubr.bf16.mxu0 %v5198
      %7400 = vmatmul.mubr.bf16.gmra.mrb[0].mxu0 %v4878
      %v7401 = vpop.f32.mrb[0].mxu0
      %v7402 = vadd.f32 %v7241, %v7401
      %v7403 = vpop.f32.mrb[0].mxu0
      %v7404 = vpop.f32.mrb[0].mxu0
      %v7405 = vadd.f32 %v7244, %v7404
      %v7406 = vpop.f32.mrb[0].mxu0
      %7407 = vmatprep.mubr.bf16.mxu0 %v5215
      %7408 = vmatmul.mubr.bf16.gmra.mrb[0].mxu0 %v4895
      %v7409 = vpop.f32.mrb[0].mxu0
      %v7410 = vadd.f32 %v7249, %v7409
      %v7411 = vpop.f32.mrb[0].mxu0
      %v7412 = vpop.f32.mrb[0].mxu0
      %v7413 = vadd.f32 %v7252, %v7412
      %v7414 = vpop.f32.mrb[0].mxu0
      %7415 = vmatprep.mubr.bf16.mxu0 %v5232
      %7416 = vmatmul.mubr.bf16.gmra.mrb[0].mxu0 %v4912
      %v7417 = vpop.f32.mrb[0].mxu0
      %v7418 = vadd.f32 %v7257, %v7417
      %v7419 = vpop.f32.mrb[0].mxu0
      %v7420 = vpop.f32.mrb[0].mxu0
      %v7421 = vadd.f32 %v7260, %v7420
      %v7422 = vpop.f32.mrb[0].mxu0
      %7423 = vmatprep.mubr.bf16.mxu0 %v5249
      %7424 = vmatmul.mubr.bf16.gmra.mrb[0].mxu0 %v4929
      %v7425 = vpop.f32.mrb[0].mxu0
      %v7426 = vadd.f32 %v7265, %v7425
      %v7427 = vpop.f32.mrb[0].mxu0
      %v7428 = vpop.f32.mrb[0].mxu0
      %v7429 = vadd.f32 %v7268, %v7428
      %v7430 = vpop.f32.mrb[0].mxu0
      %7431 = vmatprep.mubr.bf16.mxu0 %v5266
      %7432 = vmatmul.mubr.bf16.gmra.mrb[0].mxu0 %v4946
      %v7433 = vpop.f32.mrb[0].mxu0
      %v7434 = vadd.f32 %v7273, %v7433
      %v7435 = vpop.f32.mrb[0].mxu0
      %v7436 = vpop.f32.mrb[0].mxu0
      %v7437 = vadd.f32 %v7276, %v7436
      %v7438 = vpop.f32.mrb[0].mxu0
      %7439 = vmatprep.mubr.bf16.mxu0 %v5283
      %7440 = vmatmul.mubr.bf16.gmra.mrb[0].mxu0 %v4963
      %v7441 = vpop.f32.mrb[0].mxu0
      %v7442 = vadd.f32 %v7281, %v7441
      %v7443 = vpop.f32.mrb[0].mxu0
      %v7444 = vpop.f32.mrb[0].mxu0
      %v7445 = vadd.f32 %v7284, %v7444
      %v7446 = vpop.f32.mrb[0].mxu0
      %7447 = vmatprep.mubr.bf16.mxu0 %v5300
      %7448 = vmatmul.mubr.bf16.gmra.mrb[0].mxu0 %v4980
      %v7449 = vpop.f32.mrb[0].mxu0
      %v7450 = vadd.f32 %v7289, %v7449
      %v7451 = vpop.f32.mrb[0].mxu0
      %v7452 = vpop.f32.mrb[0].mxu0
      %v7453 = vadd.f32 %v7292, %v7452
      %v7454 = vpop.f32.mrb[0].mxu0
      %7455 = vmatprep.mubr.bf16.mxu0 %v5317
      %7456 = vmatmul.mubr.bf16.gmra.mrb[0].mxu0 %v4997
      %v7457 = vpop.f32.mrb[0].mxu0
      %v7458 = vadd.f32 %v7297, %v7457
      %v7459 = vpop.f32.mrb[0].mxu0
      %v7460 = vpop.f32.mrb[0].mxu0
      %v7461 = vadd.f32 %v7300, %v7460
      %v7462 = vpop.f32.mrb[0].mxu0
      %7463 = vmatprep.mubr.bf16.mxu0 %v5334
      %7464 = vmatmul.mubr.bf16.gmra.mrb[0].mxu0 %v5014
      %v7465 = vpop.f32.mrb[0].mxu0
      %v7466 = vadd.f32 %v7305, %v7465
      %v7467 = vpop.f32.mrb[0].mxu0
      %v7468 = vpop.f32.mrb[0].mxu0
      %v7469 = vadd.f32 %v7308, %v7468
      %v7470 = vpop.f32.mrb[0].mxu0
      %7471 = vmatprep.mubr.bf16.mxu0 %v5351
      %7472 = vmatmul.mubr.bf16.gmra.mrb[0].mxu0 %v5031
      %v7473 = vpop.f32.mrb[0].mxu0
      %v7474 = vadd.f32 %v7313, %v7473
      %v7475 = vpop.f32.mrb[0].mxu0
      %v7476 = vpop.f32.mrb[0].mxu0
      %v7477 = vadd.f32 %v7316, %v7476
      %v7478 = vpop.f32.mrb[0].mxu0
      %7479 = vmatprep.mubr.bf16.mxu0 %v5368
      %7480 = vmatmul.mubr.bf16.gmra.mrb[0].mxu0 %v5048
      %v7481 = vpop.f32.mrb[0].mxu0
      %v7482 = vadd.f32 %v7321, %v7481
      %v7483 = vpop.f32.mrb[0].mxu0
      %v7484 = vpop.f32.mrb[0].mxu0
      %v7485 = vadd.f32 %v7324, %v7484
      %v7486 = vpop.f32.mrb[0].mxu0
      %7487 = vmatprep.mubr.bf16.mxu0 %v5385
      %7488 = vmatmul.mubr.bf16.gmra.mrb[0].mxu0 %v5065
      %v7489 = vpop.f32.mrb[0].mxu0
      %v7490 = vadd.f32 %v7329, %v7489
      %v7491 = vpop.f32.mrb[0].mxu0
      %v7492 = vpop.f32.mrb[0].mxu0
      %v7493 = vadd.f32 %v7332, %v7492
      %v7494 = vpop.f32.mrb[0].mxu0
      %7495 = vmatprep.mubr.bf16.mxu0 %v5402
      %7496 = vmatmul.mubr.bf16.gmra.mrb[0].mxu0 %v5082
      %v7497 = vpop.f32.mrb[0].mxu0
      %v7498 = vadd.f32 %v7337, %v7497
      %v7499 = vpop.f32.mrb[0].mxu0
      %v7500 = vpop.f32.mrb[0].mxu0
      %v7501 = vadd.f32 %v7340, %v7500
      %v7502 = vpop.f32.mrb[0].mxu0
      %7503 = vmatprep.mubr.bf16.mxu0 %v5419
      %7504 = vmatmul.mubr.bf16.gmra.mrb[0].mxu0 %v5099
      %v7505 = vpop.f32.mrb[0].mxu0
      %v7506 = vadd.f32 %v7345, %v7505
      %v7507 = vpop.f32.mrb[0].mxu0
      %v7508 = vpop.f32.mrb[0].mxu0
      %v7509 = vadd.f32 %v7348, %v7508
      %v7510 = vpop.f32.mrb[0].mxu0
      %7511 = vmatprep.mubr.bf16.mxu0 %v5436
      %7512 = vmatmul.mubr.bf16.gmra.mrb[0].mxu0 %v5116
      %v7513 = vpop.f32.mrb[0].mxu0
      %v7514 = vadd.f32 %v7353, %v7513
      %v7515 = vpop.f32.mrb[0].mxu0
      %v7516 = vpop.f32.mrb[0].mxu0
      %v7517 = vadd.f32 %v7356, %v7516
      %v7518 = vpop.f32.mrb[0].mxu0
      %7519 = vmatprep.mubr.bf16.mxu0 %v5453
      %7520 = vmatmul.mubr.bf16.gmra.mrb[0].mxu0 %v5133
      %v7521 = vpop.f32.mrb[0].mxu0
      %v7522 = vadd.f32 %v7361, %v7521
      %v7523 = vpop.f32.mrb[0].mxu0
      %v7524 = vpop.f32.mrb[0].mxu0
      %v7525 = vadd.f32 %v7364, %v7524
      %v7526 = vpop.f32.mrb[0].mxu0
      %7527 = vdwg.mxu0
      %7528 = vmatprep.subr.bf16.mxu0 0
      %7529 = vmatpush1.bf16.msra.mxu0 %v7094
      %7530 = vmatprep.subr.bf16.mxu0 0
      %7531 = vmatpush1.bf16.msra.mxu0 %v7095
      %7532 = vmatprep.subr.bf16.mxu0 0
      %7533 = vmatpush1.bf16.msra.mxu0 %v7096
      %7534 = vmatprep.subr.bf16.mxu0 0
      %7535 = vmatpush1.bf16.msra.mxu0 %v7097
      %7536 = vmatprep.subr.bf16.mxu0 0
      %7537 = vmatpush1.bf16.msra.mxu0 %v7098
      %7538 = vmatprep.subr.bf16.mxu0 0
      %7539 = vmatpush1.bf16.msra.mxu0 %v7099
      %7540 = vmatprep.subr.bf16.mxu0 0
      %7541 = vmatpush1.bf16.msra.mxu0 %v7100
      %7542 = vmatprep.subr.bf16.mxu0 0
      %7543 = vmatpush1.bf16.msra.mxu0 %v7101
      %7544 = vmatprep.subr.bf16.mxu0 0
      %7545 = vmatpush1.bf16.msra.mxu0 %v7102
      %7546 = vmatprep.subr.bf16.mxu0 0
      %7547 = vmatpush1.bf16.msra.mxu0 %v7103
      %7548 = vmatprep.subr.bf16.mxu0 0
      %7549 = vmatpush1.bf16.msra.mxu0 %v7104
      %7550 = vmatprep.subr.bf16.mxu0 0
      %7551 = vmatpush1.bf16.msra.mxu0 %v7105
      %7552 = vmatprep.subr.bf16.mxu0 0
      %7553 = vmatpush1.bf16.msra.mxu0 %v7106
      %7554 = vmatprep.subr.bf16.mxu0 0
      %7555 = vmatpush1.bf16.msra.mxu0 %v7107
      %7556 = vmatprep.subr.bf16.mxu0 0
      %7557 = vmatpush1.bf16.msra.mxu0 %v7108
      %7558 = vmatprep.subr.bf16.mxu0 0
      %7559 = vmatpush1.bf16.msra.mxu0 %v7109
      %7560 = vmatprep.mubr.bf16.mxu0 %v5614
      %7561 = vmatmul.mubr.bf16.gmra.mrb[0].mxu0 %v5520
      %v7562 = vpop.f32.mrb[0].mxu0
      %v7563 = vadd.f32 %v7402, %v7562
      %v7564 = vpop.f32.mrb[0].mxu0
      %v7565 = vpop.f32.mrb[0].mxu0
      %v7566 = vadd.f32 %v7405, %v7565
      %v7567 = vpop.f32.mrb[0].mxu0
      %7568 = vmatprep.mubr.bf16.mxu0 %v5631
      %7569 = vmatmul.mubr.bf16.gmra.mrb[0].mxu0 %v5523
      %v7570 = vpop.f32.mrb[0].mxu0
      %v7571 = vadd.f32 %v7410, %v7570
      %v7572 = vpop.f32.mrb[0].mxu0
      %v7573 = vpop.f32.mrb[0].mxu0
      %v7574 = vadd.f32 %v7413, %v7573
      %v7575 = vpop.f32.mrb[0].mxu0
      %7576 = vmatprep.mubr.bf16.mxu0 %v5648
      %7577 = vmatmul.mubr.bf16.gmra.mrb[0].mxu0 %v5526
      %v7578 = vpop.f32.mrb[0].mxu0
      %v7579 = vadd.f32 %v7418, %v7578
      %v7580 = vpop.f32.mrb[0].mxu0
      %v7581 = vpop.f32.mrb[0].mxu0
      %v7582 = vadd.f32 %v7421, %v7581
      %v7583 = vpop.f32.mrb[0].mxu0
      %7584 = vmatprep.mubr.bf16.mxu0 %v5665
      %7585 = vmatmul.mubr.bf16.gmra.mrb[0].mxu0 %v5529
      %v7586 = vpop.f32.mrb[0].mxu0
      %v7587 = vadd.f32 %v7426, %v7586
      %v7588 = vpop.f32.mrb[0].mxu0
      %v7589 = vpop.f32.mrb[0].mxu0
      %v7590 = vadd.f32 %v7429, %v7589
      %v7591 = vpop.f32.mrb[0].mxu0
      %7592 = vmatprep.mubr.bf16.mxu0 %v5682
      %7593 = vmatmul.mubr.bf16.gmra.mrb[0].mxu0 %v5532
      %v7594 = vpop.f32.mrb[0].mxu0
      %v7595 = vadd.f32 %v7434, %v7594
      %v7596 = vpop.f32.mrb[0].mxu0
      %v7597 = vpop.f32.mrb[0].mxu0
      %v7598 = vadd.f32 %v7437, %v7597
      %v7599 = vpop.f32.mrb[0].mxu0
      %7600 = vmatprep.mubr.bf16.mxu0 %v5699
      %7601 = vmatmul.mubr.bf16.gmra.mrb[0].mxu0 %v5535
      %v7602 = vpop.f32.mrb[0].mxu0
      %v7603 = vadd.f32 %v7442, %v7602
      %v7604 = vpop.f32.mrb[0].mxu0
      %v7605 = vpop.f32.mrb[0].mxu0
      %v7606 = vadd.f32 %v7445, %v7605
      %v7607 = vpop.f32.mrb[0].mxu0
      %7608 = vmatprep.mubr.bf16.mxu0 %v5716
      %7609 = vmatmul.mubr.bf16.gmra.mrb[0].mxu0 %v5538
      %v7610 = vpop.f32.mrb[0].mxu0
      %v7611 = vadd.f32 %v7450, %v7610
      %v7612 = vpop.f32.mrb[0].mxu0
      %v7613 = vpop.f32.mrb[0].mxu0
      %v7614 = vadd.f32 %v7453, %v7613
      %v7615 = vpop.f32.mrb[0].mxu0
      %7616 = vmatprep.mubr.bf16.mxu0 %v5733
      %7617 = vmatmul.mubr.bf16.gmra.mrb[0].mxu0 %v5541
      %v7618 = vpop.f32.mrb[0].mxu0
      %v7619 = vadd.f32 %v7458, %v7618
      %v7620 = vpop.f32.mrb[0].mxu0
      %v7621 = vpop.f32.mrb[0].mxu0
      %v7622 = vadd.f32 %v7461, %v7621
      %v7623 = vpop.f32.mrb[0].mxu0
      %7624 = vmatprep.mubr.bf16.mxu0 %v5750
      %7625 = vmatmul.mubr.bf16.gmra.mrb[0].mxu0 %v5544
      %v7626 = vpop.f32.mrb[0].mxu0
      %v7627 = vadd.f32 %v7466, %v7626
      %v7628 = vpop.f32.mrb[0].mxu0
      %v7629 = vpop.f32.mrb[0].mxu0
      %v7630 = vadd.f32 %v7469, %v7629
      %v7631 = vpop.f32.mrb[0].mxu0
      %7632 = vmatprep.mubr.bf16.mxu0 %v5767
      %7633 = vmatmul.mubr.bf16.gmra.mrb[0].mxu0 %v5547
      %v7634 = vpop.f32.mrb[0].mxu0
      %v7635 = vadd.f32 %v7474, %v7634
      %v7636 = vpop.f32.mrb[0].mxu0
      %v7637 = vpop.f32.mrb[0].mxu0
      %v7638 = vadd.f32 %v7477, %v7637
      %v7639 = vpop.f32.mrb[0].mxu0
      %7640 = vmatprep.mubr.bf16.mxu0 %v5784
      %7641 = vmatmul.mubr.bf16.gmra.mrb[0].mxu0 %v5550
      %v7642 = vpop.f32.mrb[0].mxu0
      %v7643 = vadd.f32 %v7482, %v7642
      %v7644 = vpop.f32.mrb[0].mxu0
      %v7645 = vpop.f32.mrb[0].mxu0
      %v7646 = vadd.f32 %v7485, %v7645
      %v7647 = vpop.f32.mrb[0].mxu0
      %7648 = vmatprep.mubr.bf16.mxu0 %v5801
      %7649 = vmatmul.mubr.bf16.gmra.mrb[0].mxu0 %v5553
      %v7650 = vpop.f32.mrb[0].mxu0
      %v7651 = vadd.f32 %v7490, %v7650
      %v7652 = vpop.f32.mrb[0].mxu0
      %v7653 = vpop.f32.mrb[0].mxu0
      %v7654 = vadd.f32 %v7493, %v7653
      %v7655 = vpop.f32.mrb[0].mxu0
      %7656 = vmatprep.mubr.bf16.mxu0 %v5818
      %7657 = vmatmul.mubr.bf16.gmra.mrb[0].mxu0 %v5556
      %v7658 = vpop.f32.mrb[0].mxu0
      %v7659 = vadd.f32 %v7498, %v7658
      %v7660 = vpop.f32.mrb[0].mxu0
      %v7661 = vpop.f32.mrb[0].mxu0
      %v7662 = vadd.f32 %v7501, %v7661
      %v7663 = vpop.f32.mrb[0].mxu0
      %7664 = vmatprep.mubr.bf16.mxu0 %v5835
      %7665 = vmatmul.mubr.bf16.gmra.mrb[0].mxu0 %v5559
      %v7666 = vpop.f32.mrb[0].mxu0
      %v7667 = vadd.f32 %v7506, %v7666
      %v7668 = vpop.f32.mrb[0].mxu0
      %v7669 = vpop.f32.mrb[0].mxu0
      %v7670 = vadd.f32 %v7509, %v7669
      %v7671 = vpop.f32.mrb[0].mxu0
      %7672 = vmatprep.mubr.bf16.mxu0 %v5852
      %7673 = vmatmul.mubr.bf16.gmra.mrb[0].mxu0 %v5562
      %v7674 = vpop.f32.mrb[0].mxu0
      %v7675 = vadd.f32 %v7514, %v7674
      %v7676 = vpop.f32.mrb[0].mxu0
      %v7677 = vpop.f32.mrb[0].mxu0
      %v7678 = vadd.f32 %v7517, %v7677
      %v7679 = vpop.f32.mrb[0].mxu0
      %7680 = vmatprep.mubr.bf16.mxu0 %v5869
      %7681 = vmatmul.mubr.bf16.gmra.mrb[0].mxu0 %v5565
      %v7682 = vpop.f32.mrb[0].mxu0
      %v7683 = vadd.f32 %v7522, %v7682
      %v7684 = vpop.f32.mrb[0].mxu0
      %v7685 = vpop.f32.mrb[0].mxu0
      %v7686 = vadd.f32 %v7525, %v7685
      %v7687 = vpop.f32.mrb[0].mxu0
      %7688 = vdwg.mxu0
      %7689 = vmatprep.subr.bf16.mxu0 0
      %7690 = vmatpush1.bf16.msra.mxu0 %v7110
      %7691 = vmatprep.subr.bf16.mxu0 0
      %7692 = vmatpush1.bf16.msra.mxu0 %v7111
      %7693 = vmatprep.subr.bf16.mxu0 0
      %7694 = vmatpush1.bf16.msra.mxu0 %v7112
      %7695 = vmatprep.subr.bf16.mxu0 0
      %7696 = vmatpush1.bf16.msra.mxu0 %v7113
      %7697 = vmatprep.subr.bf16.mxu0 0
      %7698 = vmatpush1.bf16.msra.mxu0 %v7114
      %7699 = vmatprep.subr.bf16.mxu0 0
      %7700 = vmatpush1.bf16.msra.mxu0 %v7115
      %7701 = vmatprep.subr.bf16.mxu0 0
      %7702 = vmatpush1.bf16.msra.mxu0 %v7116
      %7703 = vmatprep.subr.bf16.mxu0 0
      %7704 = vmatpush1.bf16.msra.mxu0 %v7117
      %7705 = vmatprep.subr.bf16.mxu0 0
      %7706 = vmatpush1.bf16.msra.mxu0 %v7118
      %7707 = vmatprep.subr.bf16.mxu0 0
      %7708 = vmatpush1.bf16.msra.mxu0 %v7119
      %7709 = vmatprep.subr.bf16.mxu0 0
      %7710 = vmatpush1.bf16.msra.mxu0 %v7120
      %7711 = vmatprep.subr.bf16.mxu0 0
      %7712 = vmatpush1.bf16.msra.mxu0 %v7121
      %7713 = vmatprep.subr.bf16.mxu0 0
      %7714 = vmatpush1.bf16.msra.mxu0 %v7122
      %7715 = vmatprep.subr.bf16.mxu0 0
      %7716 = vmatpush1.bf16.msra.mxu0 %v7123
      %7717 = vmatprep.subr.bf16.mxu0 0
      %7718 = vmatpush1.bf16.msra.mxu0 %v7124
      %7719 = vmatprep.subr.bf16.mxu0 0
      %7720 = vmatpush1.bf16.msra.mxu0 %v7125
      %7721 = vmatprep.mubr.bf16.mxu0 %v6257
      %7722 = vmatmul.mubr.bf16.gmra.mrb[0].mxu0 %v5935
      %v7723 = vpop.f32.mrb[0].mxu0
      %v7724 = vadd.f32 %v7563, %v7723
      %v7725 = vpop.f32.mrb[0].mxu0
      %v7726 = vpop.f32.mrb[0].mxu0
      %v7727 = vadd.f32 %v7566, %v7726
      %v7728 = vpop.f32.mrb[0].mxu0
      %7729 = vmatprep.mubr.bf16.mxu0 %v6260
      %7730 = vmatmul.mubr.bf16.gmra.mrb[0].mxu0 %v5952
      %v7731 = vpop.f32.mrb[0].mxu0
      %v7732 = vadd.f32 %v7571, %v7731
      %v7733 = vpop.f32.mrb[0].mxu0
      %v7734 = vpop.f32.mrb[0].mxu0
      %v7735 = vadd.f32 %v7574, %v7734
      %v7736 = vpop.f32.mrb[0].mxu0
      %7737 = vmatprep.mubr.bf16.mxu0 %v6263
      %7738 = vmatmul.mubr.bf16.gmra.mrb[0].mxu0 %v5969
      %v7739 = vpop.f32.mrb[0].mxu0
      %v7740 = vadd.f32 %v7579, %v7739
      %v7741 = vpop.f32.mrb[0].mxu0
      %v7742 = vpop.f32.mrb[0].mxu0
      %v7743 = vadd.f32 %v7582, %v7742
      %v7744 = vpop.f32.mrb[0].mxu0
      %7745 = vmatprep.mubr.bf16.mxu0 %v6266
      %7746 = vmatmul.mubr.bf16.gmra.mrb[0].mxu0 %v5986
      %v7747 = vpop.f32.mrb[0].mxu0
      %v7748 = vadd.f32 %v7587, %v7747
      %v7749 = vpop.f32.mrb[0].mxu0
      %v7750 = vpop.f32.mrb[0].mxu0
      %v7751 = vadd.f32 %v7590, %v7750
      %v7752 = vpop.f32.mrb[0].mxu0
      %7753 = vmatprep.mubr.bf16.mxu0 %v6269
      %7754 = vmatmul.mubr.bf16.gmra.mrb[0].mxu0 %v6003
      %v7755 = vpop.f32.mrb[0].mxu0
      %v7756 = vadd.f32 %v7595, %v7755
      %v7757 = vpop.f32.mrb[0].mxu0
      %v7758 = vpop.f32.mrb[0].mxu0
      %v7759 = vadd.f32 %v7598, %v7758
      %v7760 = vpop.f32.mrb[0].mxu0
      %7761 = vmatprep.mubr.bf16.mxu0 %v6272
      %7762 = vmatmul.mubr.bf16.gmra.mrb[0].mxu0 %v6020
      %v7763 = vpop.f32.mrb[0].mxu0
      %v7764 = vadd.f32 %v7603, %v7763
      %v7765 = vpop.f32.mrb[0].mxu0
      %v7766 = vpop.f32.mrb[0].mxu0
      %v7767 = vadd.f32 %v7606, %v7766
      %v7768 = vpop.f32.mrb[0].mxu0
      %7769 = vmatprep.mubr.bf16.mxu0 %v6275
      %7770 = vmatmul.mubr.bf16.gmra.mrb[0].mxu0 %v6037
      %v7771 = vpop.f32.mrb[0].mxu0
      %v7772 = vadd.f32 %v7611, %v7771
      %v7773 = vpop.f32.mrb[0].mxu0
      %v7774 = vpop.f32.mrb[0].mxu0
      %v7775 = vadd.f32 %v7614, %v7774
      %v7776 = vpop.f32.mrb[0].mxu0
      %7777 = vmatprep.mubr.bf16.mxu0 %v6278
      %7778 = vmatmul.mubr.bf16.gmra.mrb[0].mxu0 %v6054
      %v7779 = vpop.f32.mrb[0].mxu0
      %v7780 = vadd.f32 %v7619, %v7779
      %v7781 = vpop.f32.mrb[0].mxu0
      %v7782 = vpop.f32.mrb[0].mxu0
      %v7783 = vadd.f32 %v7622, %v7782
      %v7784 = vpop.f32.mrb[0].mxu0
      %7785 = vmatprep.mubr.bf16.mxu0 %v6281
      %7786 = vmatmul.mubr.bf16.gmra.mrb[0].mxu0 %v6071
      %v7787 = vpop.f32.mrb[0].mxu0
      %v7788 = vadd.f32 %v7627, %v7787
      %v7789 = vpop.f32.mrb[0].mxu0
      %v7790 = vpop.f32.mrb[0].mxu0
      %v7791 = vadd.f32 %v7630, %v7790
      %v7792 = vpop.f32.mrb[0].mxu0
      %7793 = vmatprep.mubr.bf16.mxu0 %v6284
      %7794 = vmatmul.mubr.bf16.gmra.mrb[0].mxu0 %v6088
      %v7795 = vpop.f32.mrb[0].mxu0
      %v7796 = vadd.f32 %v7635, %v7795
      %v7797 = vpop.f32.mrb[0].mxu0
      %v7798 = vpop.f32.mrb[0].mxu0
      %v7799 = vadd.f32 %v7638, %v7798
      %v7800 = vpop.f32.mrb[0].mxu0
      %7801 = vmatprep.mubr.bf16.mxu0 %v6287
      %7802 = vmatmul.mubr.bf16.gmra.mrb[0].mxu0 %v6105
      %v7803 = vpop.f32.mrb[0].mxu0
      %v7804 = vadd.f32 %v7643, %v7803
      %v7805 = vpop.f32.mrb[0].mxu0
      %v7806 = vpop.f32.mrb[0].mxu0
      %v7807 = vadd.f32 %v7646, %v7806
      %v7808 = vpop.f32.mrb[0].mxu0
      %7809 = vmatprep.mubr.bf16.mxu0 %v6290
      %7810 = vmatmul.mubr.bf16.gmra.mrb[0].mxu0 %v6122
      %v7811 = vpop.f32.mrb[0].mxu0
      %v7812 = vadd.f32 %v7651, %v7811
      %v7813 = vpop.f32.mrb[0].mxu0
      %v7814 = vpop.f32.mrb[0].mxu0
      %v7815 = vadd.f32 %v7654, %v7814
      %v7816 = vpop.f32.mrb[0].mxu0
      %7817 = vmatprep.mubr.bf16.mxu0 %v6293
      %7818 = vmatmul.mubr.bf16.gmra.mrb[0].mxu0 %v6139
      %v7819 = vpop.f32.mrb[0].mxu0
      %v7820 = vadd.f32 %v7659, %v7819
      %v7821 = vpop.f32.mrb[0].mxu0
      %v7822 = vpop.f32.mrb[0].mxu0
      %v7823 = vadd.f32 %v7662, %v7822
      %v7824 = vpop.f32.mrb[0].mxu0
      %7825 = vmatprep.mubr.bf16.mxu0 %v6296
      %7826 = vmatmul.mubr.bf16.gmra.mrb[0].mxu0 %v6156
      %v7827 = vpop.f32.mrb[0].mxu0
      %v7828 = vadd.f32 %v7667, %v7827
      %v7829 = vpop.f32.mrb[0].mxu0
      %v7830 = vpop.f32.mrb[0].mxu0
      %v7831 = vadd.f32 %v7670, %v7830
      %v7832 = vpop.f32.mrb[0].mxu0
      %7833 = vmatprep.mubr.bf16.mxu0 %v6299
      %7834 = vmatmul.mubr.bf16.gmra.mrb[0].mxu0 %v6173
      %v7835 = vpop.f32.mrb[0].mxu0
      %v7836 = vadd.f32 %v7675, %v7835
      %v7837 = vpop.f32.mrb[0].mxu0
      %v7838 = vpop.f32.mrb[0].mxu0
      %v7839 = vadd.f32 %v7678, %v7838
      %v7840 = vpop.f32.mrb[0].mxu0
      %7841 = vmatprep.mubr.bf16.mxu0 %v6302
      %7842 = vmatmul.mubr.bf16.gmra.mrb[0].mxu0 %v6190
      %v7843 = vpop.f32.mrb[0].mxu0
      %v7844 = vadd.f32 %v7683, %v7843
      %v7845 = vpop.f32.mrb[0].mxu0
      %v7846 = vpop.f32.mrb[0].mxu0
      %v7847 = vadd.f32 %v7686, %v7846
      %v7848 = vpop.f32.mrb[0].mxu0
      %7849 = vdwg.mxu0
      %7850 = vmatprep.subr.bf16.mxu0 0
      %7851 = vmatpush1.bf16.msra.mxu0 %v7126
      %7852 = vmatprep.subr.bf16.mxu0 0
      %7853 = vmatpush1.bf16.msra.mxu0 %v7127
      %7854 = vmatprep.subr.bf16.mxu0 0
      %7855 = vmatpush1.bf16.msra.mxu0 %v7128
      %7856 = vmatprep.subr.bf16.mxu0 0
      %7857 = vmatpush1.bf16.msra.mxu0 %v7129
      %7858 = vmatprep.subr.bf16.mxu0 0
      %7859 = vmatpush1.bf16.msra.mxu0 %v7130
      %7860 = vmatprep.subr.bf16.mxu0 0
      %7861 = vmatpush1.bf16.msra.mxu0 %v7131
      %7862 = vmatprep.subr.bf16.mxu0 0
      %7863 = vmatpush1.bf16.msra.mxu0 %v7132
      %7864 = vmatprep.subr.bf16.mxu0 0
      %7865 = vmatpush1.bf16.msra.mxu0 %v7133
      %7866 = vmatprep.subr.bf16.mxu0 0
      %7867 = vmatpush1.bf16.msra.mxu0 0
      %7868 = vmatprep.subr.bf16.mxu0 0
      %7869 = vmatpush1.bf16.msra.mxu0 0
      %7870 = vmatprep.subr.bf16.mxu0 0
      %7871 = vmatpush1.bf16.msra.mxu0 0
      %7872 = vmatprep.subr.bf16.mxu0 0
      %7873 = vmatpush1.bf16.msra.mxu0 0
      %7874 = vmatprep.subr.bf16.mxu0 0
      %7875 = vmatpush1.bf16.msra.mxu0 0
      %7876 = vmatprep.subr.bf16.mxu0 0
      %7877 = vmatpush1.bf16.msra.mxu0 0
      %7878 = vmatprep.subr.bf16.mxu0 0
      %7879 = vmatpush1.bf16.msra.mxu0 0
      %7880 = vmatprep.subr.bf16.mxu0 0
      %7881 = vmatpush1.bf16.msra.mxu0 0
      %7882 = vmatprep.mubr.bf16.mxu0 0
      %7883 = vmatmul.mubr.bf16.gmra.mrb[0].mxu0 %v6351
      %v7884 = vpop.f32.mrb[0].mxu0
      %v7885 = vadd.f32 %v7724, %v7884
      %v7886 = vpop.f32.mrb[0].mxu0
      %v7887 = vpop.f32.mrb[0].mxu0
      %v7888 = vadd.f32 %v7727, %v7887
      %v7889 = vpop.f32.mrb[0].mxu0
      %7890 = vmatprep.mubr.bf16.mxu0 0
      %7891 = vmatmul.mubr.bf16.gmra.mrb[0].mxu0 %v6368
      %v7892 = vpop.f32.mrb[0].mxu0
      %v7893 = vadd.f32 %v7732, %v7892
      %v7894 = vpop.f32.mrb[0].mxu0
      %v7895 = vpop.f32.mrb[0].mxu0
      %v7896 = vadd.f32 %v7735, %v7895
      %v7897 = vpop.f32.mrb[0].mxu0
      %7898 = vmatprep.mubr.bf16.mxu0 0
      %7899 = vmatmul.mubr.bf16.gmra.mrb[0].mxu0 %v6385
      %v7900 = vpop.f32.mrb[0].mxu0
      %v7901 = vadd.f32 %v7740, %v7900
      %v7902 = vpop.f32.mrb[0].mxu0
      %v7903 = vpop.f32.mrb[0].mxu0
      %v7904 = vadd.f32 %v7743, %v7903
      %v7905 = vpop.f32.mrb[0].mxu0
      %7906 = vmatprep.mubr.bf16.mxu0 0
      %7907 = vmatmul.mubr.bf16.gmra.mrb[0].mxu0 %v6402
      %v7908 = vpop.f32.mrb[0].mxu0
      %v7909 = vadd.f32 %v7748, %v7908
      %v7910 = vpop.f32.mrb[0].mxu0
      %v7911 = vpop.f32.mrb[0].mxu0
      %v7912 = vadd.f32 %v7751, %v7911
      %v7913 = vpop.f32.mrb[0].mxu0
      %7914 = vmatprep.mubr.bf16.mxu0 0
      %7915 = vmatmul.mubr.bf16.gmra.mrb[0].mxu0 %v6419
      %v7916 = vpop.f32.mrb[0].mxu0
      %v7917 = vadd.f32 %v7756, %v7916
      %v7918 = vpop.f32.mrb[0].mxu0
      %v7919 = vpop.f32.mrb[0].mxu0
      %v7920 = vadd.f32 %v7759, %v7919
      %v7921 = vpop.f32.mrb[0].mxu0
      %7922 = vmatprep.mubr.bf16.mxu0 0
      %7923 = vmatmul.mubr.bf16.gmra.mrb[0].mxu0 %v6436
      %v7924 = vpop.f32.mrb[0].mxu0
      %v7925 = vadd.f32 %v7764, %v7924
      %v7926 = vpop.f32.mrb[0].mxu0
      %v7927 = vpop.f32.mrb[0].mxu0
      %v7928 = vadd.f32 %v7767, %v7927
      %v7929 = vpop.f32.mrb[0].mxu0
      %7930 = vmatprep.mubr.bf16.mxu0 0
      %7931 = vmatmul.mubr.bf16.gmra.mrb[0].mxu0 %v6453
      %v7932 = vpop.f32.mrb[0].mxu0
      %v7933 = vadd.f32 %v7772, %v7932
      %v7934 = vpop.f32.mrb[0].mxu0
      %v7935 = vpop.f32.mrb[0].mxu0
      %v7936 = vadd.f32 %v7775, %v7935
      %v7937 = vpop.f32.mrb[0].mxu0
      %7938 = vmatprep.mubr.bf16.mxu0 0
      %7939 = vmatmul.mubr.bf16.gmra.mrb[0].mxu0 %v6470
      %v7940 = vpop.f32.mrb[0].mxu0
      %v7941 = vadd.f32 %v7780, %v7940
      %v7942 = vpop.f32.mrb[0].mxu0
      %v7943 = vpop.f32.mrb[0].mxu0
      %v7944 = vadd.f32 %v7783, %v7943
      %v7945 = vpop.f32.mrb[0].mxu0
      %7946 = vmatprep.mubr.bf16.mxu0 0
      %7947 = vmatmul.mubr.bf16.gmra.mrb[0].mxu0 %v6487
      %v7948 = vpop.f32.mrb[0].mxu0
      %v7949 = vadd.f32 %v7788, %v7948
      %v7950 = vpop.f32.mrb[0].mxu0
      %v7951 = vpop.f32.mrb[0].mxu0
      %v7952 = vadd.f32 %v7791, %v7951
      %v7953 = vpop.f32.mrb[0].mxu0
      %7954 = vmatprep.mubr.bf16.mxu0 0
      %7955 = vmatmul.mubr.bf16.gmra.mrb[0].mxu0 %v6504
      %v7956 = vpop.f32.mrb[0].mxu0
      %v7957 = vadd.f32 %v7796, %v7956
      %v7958 = vpop.f32.mrb[0].mxu0
      %v7959 = vpop.f32.mrb[0].mxu0
      %v7960 = vadd.f32 %v7799, %v7959
      %v7961 = vpop.f32.mrb[0].mxu0
      %7962 = vmatprep.mubr.bf16.mxu0 0
      %7963 = vmatmul.mubr.bf16.gmra.mrb[0].mxu0 %v6521
      %v7964 = vpop.f32.mrb[0].mxu0
      %v7965 = vadd.f32 %v7804, %v7964
      %v7966 = vpop.f32.mrb[0].mxu0
      %v7967 = vpop.f32.mrb[0].mxu0
      %v7968 = vadd.f32 %v7807, %v7967
      %v7969 = vpop.f32.mrb[0].mxu0
      %7970 = vmatprep.mubr.bf16.mxu0 0
      %7971 = vmatmul.mubr.bf16.gmra.mrb[0].mxu0 %v6538
      %v7972 = vpop.f32.mrb[0].mxu0
      %v7973 = vadd.f32 %v7812, %v7972
      %v7974 = vpop.f32.mrb[0].mxu0
      %v7975 = vpop.f32.mrb[0].mxu0
      %v7976 = vadd.f32 %v7815, %v7975
      %v7977 = vpop.f32.mrb[0].mxu0
      %7978 = vmatprep.mubr.bf16.mxu0 0
      %7979 = vmatmul.mubr.bf16.gmra.mrb[0].mxu0 %v6555
      %v7980 = vpop.f32.mrb[0].mxu0
      %v7981 = vadd.f32 %v7820, %v7980
      %v7982 = vpop.f32.mrb[0].mxu0
      %v7983 = vpop.f32.mrb[0].mxu0
      %v7984 = vadd.f32 %v7823, %v7983
      %v7985 = vpop.f32.mrb[0].mxu0
      %7986 = vmatprep.mubr.bf16.mxu0 0
      %7987 = vmatmul.mubr.bf16.gmra.mrb[0].mxu0 %v6572
      %v7988 = vpop.f32.mrb[0].mxu0
      %v7989 = vadd.f32 %v7828, %v7988
      %v7990 = vpop.f32.mrb[0].mxu0
      %v7991 = vpop.f32.mrb[0].mxu0
      %v7992 = vadd.f32 %v7831, %v7991
      %v7993 = vpop.f32.mrb[0].mxu0
      %7994 = vmatprep.mubr.bf16.mxu0 0
      %7995 = vmatmul.mubr.bf16.gmra.mrb[0].mxu0 %v6589
      %v7996 = vpop.f32.mrb[0].mxu0
      %v7997 = vadd.f32 %v7836, %v7996
      %v7998 = vpop.f32.mrb[0].mxu0
      %v7999 = vpop.f32.mrb[0].mxu0
      %v8000 = vadd.f32 %v7839, %v7999
      %v8001 = vpop.f32.mrb[0].mxu0
      %8002 = vmatprep.mubr.bf16.mxu0 0
      %8003 = vmatmul.mubr.bf16.gmra.mrb[0].mxu0 %v6606
      %v8004 = vpop.f32.mrb[0].mxu0
      %v8005 = vadd.f32 %v7844, %v8004
      %v8006 = vpop.f32.mrb[0].mxu0
      %v8007 = vpop.f32.mrb[0].mxu0
      %v8008 = vadd.f32 %v7847, %v8007
      %v8009 = vpop.f32.mrb[0].mxu0
      %8010 = vdwg.mxu0
      %vm8011 = vcmask 261120
      %8012 = vst.msk [vmem:[%s278] sm:$0xff] %vm8011, %v7885
      %8013 = vst.msk [vmem:[%s278 + $0x8] sm:$0xff] %vm8011, %v7888
      %8014 = vst.msk [vmem:[%s278 + $0x10] sm:$0xff] %vm8011, %v7893
      %8015 = vst.msk [vmem:[%s278 + $0x18] sm:$0xff] %vm8011, %v7896
      %8016 = vst.msk [vmem:[%s278 + $0x20] sm:$0xff] %vm8011, %v7901
      %8017 = vst.msk [vmem:[%s278 + $0x28] sm:$0xff] %vm8011, %v7904
      %8018 = vst.msk [vmem:[%s278 + $0x30] sm:$0xff] %vm8011, %v7909
      %8019 = vst.msk [vmem:[%s278 + $0x38] sm:$0xff] %vm8011, %v7912
      %8020 = vst.msk [vmem:[%s278 + $0x40] sm:$0xff] %vm8011, %v7917
      %8021 = vst.msk [vmem:[%s278 + $0x48] sm:$0xff] %vm8011, %v7920
      %8022 = vst.msk [vmem:[%s278 + $0x50] sm:$0xff] %vm8011, %v7925
      %8023 = vst.msk [vmem:[%s278 + $0x58] sm:$0xff] %vm8011, %v7928
      %8024 = vst.msk [vmem:[%s278 + $0x60] sm:$0xff] %vm8011, %v7933
      %8025 = vst.msk [vmem:[%s278 + $0x68] sm:$0xff] %vm8011, %v7936
      %8026 = vst.msk [vmem:[%s278 + $0x70] sm:$0xff] %vm8011, %v7941
      %8027 = vst.msk [vmem:[%s278 + $0x78] sm:$0xff] %vm8011, %v7944
      %8028 = vst.msk [vmem:[%s278 + $0x80] sm:$0xff] %vm8011, %v7949
      %8029 = vst.msk [vmem:[%s278 + $0x88] sm:$0xff] %vm8011, %v7952
      %8030 = vst.msk [vmem:[%s278 + $0x90] sm:$0xff] %vm8011, %v7957
      %8031 = vst.msk [vmem:[%s278 + $0x98] sm:$0xff] %vm8011, %v7960
      %8032 = vst.msk [vmem:[%s278 + $0xa0] sm:$0xff] %vm8011, %v7965
      %8033 = vst.msk [vmem:[%s278 + $0xa8] sm:$0xff] %vm8011, %v7968
      %8034 = vst.msk [vmem:[%s278 + $0xb0] sm:$0xff] %vm8011, %v7973
      %8035 = vst.msk [vmem:[%s278 + $0xb8] sm:$0xff] %vm8011, %v7976
      %8036 = vst.msk [vmem:[%s278 + $0xc0] sm:$0xff] %vm8011, %v7981
      %8037 = vst.msk [vmem:[%s278 + $0xc8] sm:$0xff] %vm8011, %v7984
      %8038 = vst.msk [vmem:[%s278 + $0xd0] sm:$0xff] %vm8011, %v7989
      %8039 = vst.msk [vmem:[%s278 + $0xd8] sm:$0xff] %vm8011, %v7992
      %8040 = vst.msk [vmem:[%s278 + $0xe0] sm:$0xff] %vm8011, %v7997
      %8041 = vst.msk [vmem:[%s278 + $0xe8] sm:$0xff] %vm8011, %v8000
      %8042 = vst.msk [vmem:[%s278 + $0xf0] sm:$0xff] %vm8011, %v8005
      %8043 = vst.msk [vmem:[%s278 + $0xf8] sm:$0xff] %vm8011, %v8008
      %p8044 = scmp.lt.s32.totalorder %s18, 1
      %s8045 = scalar_select %p8044, %s18, 1
      %s8046 = smul.addr %s8045, 32
      %s8047 = smul.addr %s8046, 8
      %s8048 = scalar_lea.vmem %s7, %s8047
      // Predicated region
      $region49: #{conv_decoder_forward.1} parent=47 // pred_check
        %p8049 = pneg %p188
      $region50: #{conv_decoder_forward.1} parent=47 // pred_check_branch
        %8051 = sbr.rel (%p8049) target = $region52
      $region51: #{conv_decoder_forward.1} parent=47 // pred_region
        _
      $region52: #{conv_decoder_forward.1} parent=47 // pred_fallthru
        _
    $region48: #{conv_decoder_forward.1} parent=5 // pred_fallthru
      _
    %p8052 = scmp.le.s32.totalorder 2, %s13
    // Predicated region
    $region53: #{conv_decoder_forward.1} parent=5 // pred_check
      %p8053 = pneg %p8052
    $region54: #{conv_decoder_forward.1} parent=5 // pred_check_branch
      %8055 = sbr.rel (%p8053) target = $region56
    $region55: #{conv_decoder_forward.1} parent=5 // pred_region
      %s8056 = ssub.s32 %s13, 2
      // Predicated region
      $region57: #{conv_decoder_forward.1} parent=55 // pred_check
        %p8057 = pneg %p194
      $region58: #{conv_decoder_forward.1} parent=55 // pred_check_branch
        %8059 = sbr.rel (%p8057) target = $region60
      $region59: #{conv_decoder_forward.1} parent=55 // pred_region
        %p8060 = scmp.lt.s32.totalorder %s19, 1
        %s8061 = scalar_select %p8060, %s19, 1
        %s8062 = smul.addr %s8061, 32
        %s8063 = smul.addr %s8062, 8
        %s8064 = scalar_lea.vmem %s7, %s8063
      $region60: #{conv_decoder_forward.1} parent=55 // pred_fallthru
        _
    $region56: #{conv_decoder_forward.1} parent=5 // pred_fallthru
      _
  $region6: #{conv_decoder_forward.1} parent=0 // loop_footer
    %s17 = sadd.s32 1, %s13
  $region7: #{conv_decoder_forward.1} parent=0 // loop_footer_branch
    %12 = sbr.rel target = $region3
  $region8: #{conv_decoder_forward.1} parent=0 // loop_exit
    _

</llo_original>
